<compile_context>
chip_gen: v7x
topology: tpu7x:2x2x1
jax: 0.10.0
libtpu: 0.0.40
codegen_flags: <defaults>
</compile_context>

<pallas_src>
import jax
import jax.numpy as jnp
from jax.experimental import pallas as pl
from jax.experimental.pallas import tpu as pltpu  # noqa: F401  (kept for easy tuning hooks)

# ----- model config -----------------------------------------------------------
BATCH = 2
SEQ = 8
HIDDEN = 32
INPUT_DIM = HIDDEN
NUM_LAYERS = 2
NUM_HEADS = 4
HEAD_DIM = HIDDEN // NUM_HEADS


# ----- single fused kernel ------------------------------------------------------
def _fused_kernel(x_ref,
                  fe_w1_ref, fe_b1_ref, fe_w2_ref, fe_b2_ref,
                  wih_ref, whh_ref, lb_ref,
                  win_ref, bin_ref, wout_ref, bout_ref,
                  rw1_ref, rb1_ref, rw2_ref, rb2_ref,
                  vw1_ref, vb1_ref, vw2_ref, vb2_ref,
                  mean_ref, var_ref, attnw_ref):
    scale = 1.0 / (HEAD_DIM ** 0.5)

    attn_last_rows = []
    x_last_rows = []

    # Static loop over the (tiny) batch: all per-batch work stays 2-D and VMEM-resident.
    for b in range(BATCH):
        xb = x_ref[b]                                   # (S, D)
        x_last_rows.append(xb[SEQ - 1:SEQ, :])          # raw input, last timestep

        # ----- feature extractor: Linear-ReLU-(Dropout)-Linear-ReLU-(Dropout) -----
        h1 = jnp.maximum(
            jnp.dot(xb, fe_w1_ref[...], preferred_element_type=jnp.float32) + fe_b1_ref[...],
            0.0)
        feat = jnp.maximum(
            jnp.dot(h1, fe_w2_ref[...], preferred_element_type=jnp.float32) + fe_b2_ref[...],
            0.0)                                         # (S, H)

        # ----- 2-layer LSTM (PyTorch gate order i, f, g, o; bias = b_ih + b_hh) -----
        layer_in = feat
        for l in range(NUM_LAYERS):
            # Hoist the input projection out of the recurrence: one matmul per layer.
            xg = (jnp.dot(layer_in, wih_ref[l], preferred_element_type=jnp.float32)
                  + lb_ref[l])                           # (S, 4H)
            whh = whh_ref[l]                             # (H, 4H)
            h = jnp.zeros((1, HIDDEN), jnp.float32)
            c = jnp.zeros((1, HIDDEN), jnp.float32)
            outs = []
            for t in range(SEQ):                         # fully unrolled (S = 8)
                g = xg[t:t + 1, :] + jnp.dot(h, whh, preferred_element_type=jnp.float32)
                i_g = jax.nn.sigmoid(g[:, 0 * HIDDEN:1 * HIDDEN])
                f_g = jax.nn.sigmoid(g[:, 1 * HIDDEN:2 * HIDDEN])
                g_g = jnp.tanh(g[:, 2 * HIDDEN:3 * HIDDEN])
                o_g = jax.nn.sigmoid(g[:, 3 * HIDDEN:4 * HIDDEN])
                c = f_g * c + i_g * g_g
                h = o_g * jnp.tanh(c)
                outs.append(h)
            layer_in = jnp.concatenate(outs, axis=0)     # (S, H)
        lstm_out = layer_in

        # ----- multi-head self-attention (4 heads, head_dim 8) -----
        qkv = (jnp.dot(lstm_out, win_ref[...], preferred_element_type=jnp.float32)
               + bin_ref[...])                           # (S, 3H)
        q = qkv[:, 0:HIDDEN]
        k = qkv[:, HIDDEN:2 * HIDDEN]
        v = qkv[:, 2 * HIDDEN:3 * HIDDEN]
        w_sum = jnp.zeros((SEQ, SEQ), jnp.float32)
        ctx_parts = []
        for hd in range(NUM_HEADS):
            lo, hi = hd * HEAD_DIM, (hd + 1) * HEAD_DIM
            qh = q[:, lo:hi] * scale
            kh = k[:, lo:hi]
            vh = v[:, lo:hi]
            scores = jnp.dot(qh, kh.T, preferred_element_type=jnp.float32)   # (S, S)
            # TODO(synk): key_padding_mask path not implemented (forward is run with mask=None).
            wts = jax.nn.softmax(scores, axis=-1)
            w_sum = w_sum + wts
            ctx_parts.append(jnp.dot(wts, vh, preferred_element_type=jnp.float32))
        ctx = jnp.concatenate(ctx_parts, axis=-1)        # (S, H)
        attn_out = (jnp.dot(ctx, wout_ref[...], preferred_element_type=jnp.float32)
                    + bout_ref[...])                     # (S, H)

        attnw_ref[b] = w_sum * (1.0 / NUM_HEADS)         # average_attn_weights=True
        attn_last_rows.append(attn_out[SEQ - 1:SEQ, :])

    # ----- batched mean / variance heads (single matmuls across the batch) -----
    a_last = jnp.concatenate(attn_last_rows, axis=0)     # (B, H)
    x_last = jnp.concatenate(x_last_rows, axis=0)        # (B, D)

    hm = jnp.maximum(
        jnp.dot(a_last, rw1_ref[...], preferred_element_type=jnp.float32) + rb1_ref[...], 0.0)
    mean_ref[...] = jnp.dot(hm, rw2_ref[...], preferred_element_type=jnp.float32) + rb2_ref[...]

    hv = jnp.maximum(
        jnp.dot(x_last, vw1_ref[...], preferred_element_type=jnp.float32) + vb1_ref[...], 0.0)
    z = jnp.dot(hv, vw2_ref[...], preferred_element_type=jnp.float32) + vb2_ref[...]
    # Softplus with PyTorch's threshold=20 numerical guard.
    var_ref[...] = jnp.where(z > 20.0, z, jnp.log1p(jnp.exp(jnp.minimum(z, 20.0))))


# ----- parameter initialization (deterministic, synthetic; weights pre-transposed) -----
def init_params(key):
    ks = jax.random.split(key, 19)

    def w(k, shape):
        return jax.random.normal(k, shape, jnp.float32) * 0.1

    p = {}
    # feature extractor (weights stored pre-transposed: (in, out))
    p['fe_w1'] = w(ks[0], (INPUT_DIM, HIDDEN)); p['fe_b1'] = w(ks[1], (1, HIDDEN))
    p['fe_w2'] = w(ks[2], (HIDDEN, HIDDEN));    p['fe_b2'] = w(ks[3], (1, HIDDEN))
    # LSTM: stacked per layer, weights pre-transposed to (H, 4H); bias = b_ih + b_hh
    p['lstm_wih'] = w(ks[4], (NUM_LAYERS, HIDDEN, 4 * HIDDEN))
    p['lstm_whh'] = w(ks[5], (NUM_LAYERS, HIDDEN, 4 * HIDDEN))
    p['lstm_b'] = w(ks[6], (NUM_LAYERS, 1, 4 * HIDDEN))
    # MultiheadAttention in/out projections (pre-transposed)
    p['attn_win'] = w(ks[7], (HIDDEN, 3 * HIDDEN)); p['attn_bin'] = w(ks[8], (1, 3 * HIDDEN))
    p['attn_wout'] = w(ks[9], (HIDDEN, HIDDEN));    p['attn_bout'] = w(ks[10], (1, HIDDEN))
    # mean regressor
    p['reg_w1'] = w(ks[11], (HIDDEN, HIDDEN // 2)); p['reg_b1'] = w(ks[12], (1, HIDDEN // 2))
    p['reg_w2'] = w(ks[13], (HIDDEN // 2, 1));      p['reg_b2'] = w(ks[14], (1, 1))
    # variance regressor
    p['var_w1'] = w(ks[15], (HIDDEN, HIDDEN // 2)); p['var_b1'] = w(ks[16], (1, HIDDEN // 2))
    p['var_w2'] = w(ks[17], (HIDDEN // 2, 1));      p['var_b2'] = w(ks[18], (1, 1))
    return p


# ----- full forward: one fused pallas_call ----------------------------------------
@jax.jit
def uncertainty_net_forward(x, p):
    # x: (B, S, INPUT_DIM), batch_first like PyTorch.
    mean, variance, attn_w = pl.pallas_call(
        _fused_kernel,
        out_shape=(
            jax.ShapeDtypeStruct((BATCH, 1), jnp.float32),
            jax.ShapeDtypeStruct((BATCH, 1), jnp.float32),
            jax.ShapeDtypeStruct((BATCH, SEQ, SEQ), jnp.float32),
        ),
    )(x,
      p['fe_w1'], p['fe_b1'], p['fe_w2'], p['fe_b2'],
      p['lstm_wih'], p['lstm_whh'], p['lstm_b'],
      p['attn_win'], p['attn_bin'], p['attn_wout'], p['attn_bout'],
      p['reg_w1'], p['reg_b1'], p['reg_w2'], p['reg_b2'],
      p['var_w1'], p['var_b1'], p['var_w2'], p['var_b2'])
    return mean, variance, attn_w


if __name__ == "__main__":
    key = jax.random.PRNGKey(0)
    kx, kp = jax.random.split(key)
    x = jax.random.normal(kx, (BATCH, SEQ, INPUT_DIM), jnp.float32)
    params = init_params(kp)

    mean, variance, attn_w = uncertainty_net_forward(x, params)
    jax.block_until_ready((mean, variance, attn_w))

    assert mean.shape == (BATCH, 1)
    assert variance.shape == (BATCH, 1)
    assert attn_w.shape == (BATCH, SEQ, SEQ)
    assert bool(jnp.all(variance >= 0.0))       # Softplus output is non-negative
    # attention weights are softmax rows averaged over heads -> each row sums to 1
    assert bool(jnp.allclose(attn_w.sum(-1), 1.0, atol=1e-5))

    print("KERNEL_OK")
</pallas_src>

<mosaic_0001>
module attributes {stable_mosaic.version = 11 : i64} {
  func.func @_fused_kernel(%arg0: memref<2x8x32xf32, #tpu.memory_space<vmem>>, %arg1: memref<32x32xf32, #tpu.memory_space<vmem>>, %arg2: memref<1x32xf32, #tpu.memory_space<vmem>>, %arg3: memref<32x32xf32, #tpu.memory_space<vmem>>, %arg4: memref<1x32xf32, #tpu.memory_space<vmem>>, %arg5: memref<2x32x128xf32, #tpu.memory_space<vmem>>, %arg6: memref<2x32x128xf32, #tpu.memory_space<vmem>>, %arg7: memref<2x1x128xf32, #tpu.memory_space<vmem>>, %arg8: memref<32x96xf32, #tpu.memory_space<vmem>>, %arg9: memref<1x96xf32, #tpu.memory_space<vmem>>, %arg10: memref<32x32xf32, #tpu.memory_space<vmem>>, %arg11: memref<1x32xf32, #tpu.memory_space<vmem>>, %arg12: memref<32x16xf32, #tpu.memory_space<vmem>>, %arg13: memref<1x16xf32, #tpu.memory_space<vmem>>, %arg14: memref<16x1xf32, #tpu.memory_space<vmem>>, %arg15: memref<1x1xf32, #tpu.memory_space<vmem>>, %arg16: memref<32x16xf32, #tpu.memory_space<vmem>>, %arg17: memref<1x16xf32, #tpu.memory_space<vmem>>, %arg18: memref<16x1xf32, #tpu.memory_space<vmem>>, %arg19: memref<1x1xf32, #tpu.memory_space<vmem>>, %arg20: memref<2x1xf32, #tpu.memory_space<vmem>>, %arg21: memref<2x1xf32, #tpu.memory_space<vmem>>, %arg22: memref<2x8x8xf32, #tpu.memory_space<vmem>>) attributes {dimension_semantics = [], scalar_prefetch = 0 : i64, scratch_operands = 0 : i64, tpu.core_type = #tpu.core_type<tc>} {
    %c0 = arith.constant 0 : index
    %c0_0 = arith.constant 0 : index
    %c0_1 = arith.constant 0 : index
    %0 = vector.load %arg0[%c0, %c0_0, %c0_1] : memref<2x8x32xf32, #tpu.memory_space<vmem>>, vector<1x8x32xf32>
    %1 = vector.shape_cast %0 : vector<1x8x32xf32> to vector<8x32xf32>
    %2 = vector.extract_strided_slice %1 {offsets = [7, 0], sizes = [1, 32], strides = [1, 1]} : vector<8x32xf32> to vector<1x32xf32>
    %c0_2 = arith.constant 0 : index
    %c0_3 = arith.constant 0 : index
    %3 = vector.load %arg1[%c0_2, %c0_3] : memref<32x32xf32, #tpu.memory_space<vmem>>, vector<32x32xf32>
    %cst = arith.constant dense<0.000000e+00> : vector<8x32xf32>
    %4 = tpu.matmul %1, %3, %cst {dimension_numbers = #tpu.dot_dimension_numbers<[1], [0], [0], [1], [0, 0, 1, 1], [], []>} : vector<8x32xf32>, vector<32x32xf32>, vector<8x32xf32> -> vector<8x32xf32>
    %c0_4 = arith.constant 0 : index
    %c0_5 = arith.constant 0 : index
    %5 = vector.load %arg2[%c0_4, %c0_5] : memref<1x32xf32, #tpu.memory_space<vmem>>, vector<1x32xf32>
    %6 = vector.broadcast %5 : vector<1x32xf32> to vector<8x32xf32>
    %7 = arith.addf %4, %6 : vector<8x32xf32>
    %cst_6 = arith.constant 0.000000e+00 : f32
    %8 = vector.broadcast %cst_6 : f32 to vector<8x32xf32>
    %9 = arith.maximumf %7, %8 : vector<8x32xf32>
    %c0_7 = arith.constant 0 : index
    %c0_8 = arith.constant 0 : index
    %10 = vector.load %arg3[%c0_7, %c0_8] : memref<32x32xf32, #tpu.memory_space<vmem>>, vector<32x32xf32>
    %cst_9 = arith.constant dense<0.000000e+00> : vector<8x32xf32>
    %11 = tpu.matmul %9, %10, %cst_9 {dimension_numbers = #tpu.dot_dimension_numbers<[1], [0], [0], [1], [0, 0, 1, 1], [], []>} : vector<8x32xf32>, vector<32x32xf32>, vector<8x32xf32> -> vector<8x32xf32>
    %c0_10 = arith.constant 0 : index
    %c0_11 = arith.constant 0 : index
    %12 = vector.load %arg4[%c0_10, %c0_11] : memref<1x32xf32, #tpu.memory_space<vmem>>, vector<1x32xf32>
    %13 = vector.broadcast %12 : vector<1x32xf32> to vector<8x32xf32>
    %14 = arith.addf %11, %13 : vector<8x32xf32>
    %cst_12 = arith.constant 0.000000e+00 : f32
    %15 = vector.broadcast %cst_12 : f32 to vector<8x32xf32>
    %16 = arith.maximumf %14, %15 : vector<8x32xf32>
    %c0_13 = arith.constant 0 : index
    %c0_14 = arith.constant 0 : index
    %c0_15 = arith.constant 0 : index
    %17 = vector.load %arg5[%c0_13, %c0_14, %c0_15] : memref<2x32x128xf32, #tpu.memory_space<vmem>>, vector<1x32x128xf32>
    %18 = vector.shape_cast %17 : vector<1x32x128xf32> to vector<32x128xf32>
    %cst_16 = arith.constant dense<0.000000e+00> : vector<8x128xf32>
    %19 = tpu.matmul %16, %18, %cst_16 {dimension_numbers = #tpu.dot_dimension_numbers<[1], [0], [0], [1], [0, 0, 1, 1], [], []>} : vector<8x32xf32>, vector<32x128xf32>, vector<8x128xf32> -> vector<8x128xf32>
    %c0_17 = arith.constant 0 : index
    %c0_18 = arith.constant 0 : index
    %c0_19 = arith.constant 0 : index
    %20 = vector.load %arg7[%c0_17, %c0_18, %c0_19] : memref<2x1x128xf32, #tpu.memory_space<vmem>>, vector<1x1x128xf32>
    %21 = vector.shape_cast %20 : vector<1x1x128xf32> to vector<1x128xf32>
    %22 = vector.broadcast %21 : vector<1x128xf32> to vector<8x128xf32>
    %23 = arith.addf %19, %22 : vector<8x128xf32>
    %c0_20 = arith.constant 0 : index
    %c0_21 = arith.constant 0 : index
    %c0_22 = arith.constant 0 : index
    %24 = vector.load %arg6[%c0_20, %c0_21, %c0_22] : memref<2x32x128xf32, #tpu.memory_space<vmem>>, vector<1x32x128xf32>
    %25 = vector.shape_cast %24 : vector<1x32x128xf32> to vector<32x128xf32>
    %cst_23 = arith.constant 0.000000e+00 : f32
    %26 = vector.broadcast %cst_23 : f32 to vector<1x32xf32>
    %cst_24 = arith.constant 0.000000e+00 : f32
    %27 = vector.broadcast %cst_24 : f32 to vector<1x32xf32>
    %28 = vector.extract_strided_slice %23 {offsets = [0, 0], sizes = [1, 128], strides = [1, 1]} : vector<8x128xf32> to vector<1x128xf32>
    %cst_25 = arith.constant dense<0.000000e+00> : vector<1x128xf32>
    %29 = tpu.matmul %26, %25, %cst_25 {dimension_numbers = #tpu.dot_dimension_numbers<[1], [0], [0], [1], [0, 0, 1, 1], [], []>} : vector<1x32xf32>, vector<32x128xf32>, vector<1x128xf32> -> vector<1x128xf32>
    %30 = arith.addf %28, %29 : vector<1x128xf32>
    %31 = vector.extract_strided_slice %30 {offsets = [0, 0], sizes = [1, 32], strides = [1, 1]} : vector<1x128xf32> to vector<1x32xf32>
    %32 = arith.negf %31 : vector<1x32xf32>
    %33 = math.exp %32 : vector<1x32xf32>
    %cst_26 = arith.constant 1.000000e+00 : f32
    %34 = vector.broadcast %cst_26 : f32 to vector<1x32xf32>
    %35 = arith.addf %34, %33 : vector<1x32xf32>
    %36 = arith.divf %34, %35 : vector<1x32xf32>
    %37 = vector.extract_strided_slice %30 {offsets = [0, 32], sizes = [1, 32], strides = [1, 1]} : vector<1x128xf32> to vector<1x32xf32>
    %38 = arith.negf %37 : vector<1x32xf32>
    %39 = math.exp %38 : vector<1x32xf32>
    %cst_27 = arith.constant 1.000000e+00 : f32
    %40 = vector.broadcast %cst_27 : f32 to vector<1x32xf32>
    %41 = arith.addf %40, %39 : vector<1x32xf32>
    %42 = arith.divf %40, %41 : vector<1x32xf32>
    %43 = vector.extract_strided_slice %30 {offsets = [0, 64], sizes = [1, 32], strides = [1, 1]} : vector<1x128xf32> to vector<1x32xf32>
    %44 = math.tanh %43 : vector<1x32xf32>
    %45 = vector.extract_strided_slice %30 {offsets = [0, 96], sizes = [1, 32], strides = [1, 1]} : vector<1x128xf32> to vector<1x32xf32>
    %46 = arith.negf %45 : vector<1x32xf32>
    %47 = math.exp %46 : vector<1x32xf32>
    %cst_28 = arith.constant 1.000000e+00 : f32
    %48 = vector.broadcast %cst_28 : f32 to vector<1x32xf32>
    %49 = arith.addf %48, %47 : vector<1x32xf32>
    %50 = arith.divf %48, %49 : vector<1x32xf32>
    %51 = arith.mulf %42, %27 : vector<1x32xf32>
    %52 = arith.mulf %36, %44 : vector<1x32xf32>
    %53 = arith.addf %51, %52 : vector<1x32xf32>
    %54 = math.tanh %53 : vector<1x32xf32>
    %55 = arith.mulf %50, %54 : vector<1x32xf32>
    %56 = vector.extract_strided_slice %23 {offsets = [1, 0], sizes = [1, 128], strides = [1, 1]} : vector<8x128xf32> to vector<1x128xf32>
    %cst_29 = arith.constant dense<0.000000e+00> : vector<1x128xf32>
    %57 = tpu.matmul %55, %25, %cst_29 {dimension_numbers = #tpu.dot_dimension_numbers<[1], [0], [0], [1], [0, 0, 1, 1], [], []>} : vector<1x32xf32>, vector<32x128xf32>, vector<1x128xf32> -> vector<1x128xf32>
    %58 = arith.addf %56, %57 : vector<1x128xf32>
    %59 = vector.extract_strided_slice %58 {offsets = [0, 0], sizes = [1, 32], strides = [1, 1]} : vector<1x128xf32> to vector<1x32xf32>
    %60 = arith.negf %59 : vector<1x32xf32>
    %61 = math.exp %60 : vector<1x32xf32>
    %cst_30 = arith.constant 1.000000e+00 : f32
    %62 = vector.broadcast %cst_30 : f32 to vector<1x32xf32>
    %63 = arith.addf %62, %61 : vector<1x32xf32>
    %64 = arith.divf %62, %63 : vector<1x32xf32>
    %65 = vector.extract_strided_slice %58 {offsets = [0, 32], sizes = [1, 32], strides = [1, 1]} : vector<1x128xf32> to vector<1x32xf32>
    %66 = arith.negf %65 : vector<1x32xf32>
    %67 = math.exp %66 : vector<1x32xf32>
    %cst_31 = arith.constant 1.000000e+00 : f32
    %68 = vector.broadcast %cst_31 : f32 to vector<1x32xf32>
    %69 = arith.addf %68, %67 : vector<1x32xf32>
    %70 = arith.divf %68, %69 : vector<1x32xf32>
    %71 = vector.extract_strided_slice %58 {offsets = [0, 64], sizes = [1, 32], strides = [1, 1]} : vector<1x128xf32> to vector<1x32xf32>
    %72 = math.tanh %71 : vector<1x32xf32>
    %73 = vector.extract_strided_slice %58 {offsets = [0, 96], sizes = [1, 32], strides = [1, 1]} : vector<1x128xf32> to vector<1x32xf32>
    %74 = arith.negf %73 : vector<1x32xf32>
    %75 = math.exp %74 : vector<1x32xf32>
    %cst_32 = arith.constant 1.000000e+00 : f32
    %76 = vector.broadcast %cst_32 : f32 to vector<1x32xf32>
    %77 = arith.addf %76, %75 : vector<1x32xf32>
    %78 = arith.divf %76, %77 : vector<1x32xf32>
    %79 = arith.mulf %70, %53 : vector<1x32xf32>
    %80 = arith.mulf %64, %72 : vector<1x32xf32>
    %81 = arith.addf %79, %80 : vector<1x32xf32>
    %82 = math.tanh %81 : vector<1x32xf32>
    %83 = arith.mulf %78, %82 : vector<1x32xf32>
    %84 = vector.extract_strided_slice %23 {offsets = [2, 0], sizes = [1, 128], strides = [1, 1]} : vector<8x128xf32> to vector<1x128xf32>
    %cst_33 = arith.constant dense<0.000000e+00> : vector<1x128xf32>
    %85 = tpu.matmul %83, %25, %cst_33 {dimension_numbers = #tpu.dot_dimension_numbers<[1], [0], [0], [1], [0, 0, 1, 1], [], []>} : vector<1x32xf32>, vector<32x128xf32>, vector<1x128xf32> -> vector<1x128xf32>
    %86 = arith.addf %84, %85 : vector<1x128xf32>
    %87 = vector.extract_strided_slice %86 {offsets = [0, 0], sizes = [1, 32], strides = [1, 1]} : vector<1x128xf32> to vector<1x32xf32>
    %88 = arith.negf %87 : vector<1x32xf32>
    %89 = math.exp %88 : vector<1x32xf32>
    %cst_34 = arith.constant 1.000000e+00 : f32
    %90 = vector.broadcast %cst_34 : f32 to vector<1x32xf32>
    %91 = arith.addf %90, %89 : vector<1x32xf32>
    %92 = arith.divf %90, %91 : vector<1x32xf32>
    %93 = vector.extract_strided_slice %86 {offsets = [0, 32], sizes = [1, 32], strides = [1, 1]} : vector<1x128xf32> to vector<1x32xf32>
    %94 = arith.negf %93 : vector<1x32xf32>
    %95 = math.exp %94 : vector<1x32xf32>
    %cst_35 = arith.constant 1.000000e+00 : f32
    %96 = vector.broadcast %cst_35 : f32 to vector<1x32xf32>
    %97 = arith.addf %96, %95 : vector<1x32xf32>
    %98 = arith.divf %96, %97 : vector<1x32xf32>
    %99 = vector.extract_strided_slice %86 {offsets = [0, 64], sizes = [1, 32], strides = [1, 1]} : vector<1x128xf32> to vector<1x32xf32>
    %100 = math.tanh %99 : vector<1x32xf32>
    %101 = vector.extract_strided_slice %86 {offsets = [0, 96], sizes = [1, 32], strides = [1, 1]} : vector<1x128xf32> to vector<1x32xf32>
    %102 = arith.negf %101 : vector<1x32xf32>
    %103 = math.exp %102 : vector<1x32xf32>
    %cst_36 = arith.constant 1.000000e+00 : f32
    %104 = vector.broadcast %cst_36 : f32 to vector<1x32xf32>
    %105 = arith.addf %104, %103 : vector<1x32xf32>
    %106 = arith.divf %104, %105 : vector<1x32xf32>
    %107 = arith.mulf %98, %81 : vector<1x32xf32>
    %108 = arith.mulf %92, %100 : vector<1x32xf32>
    %109 = arith.addf %107, %108 : vector<1x32xf32>
    %110 = math.tanh %109 : vector<1x32xf32>
    %111 = arith.mulf %106, %110 : vector<1x32xf32>
    %112 = vector.extract_strided_slice %23 {offsets = [3, 0], sizes = [1, 128], strides = [1, 1]} : vector<8x128xf32> to vector<1x128xf32>
    %cst_37 = arith.constant dense<0.000000e+00> : vector<1x128xf32>
    %113 = tpu.matmul %111, %25, %cst_37 {dimension_numbers = #tpu.dot_dimension_numbers<[1], [0], [0], [1], [0, 0, 1, 1], [], []>} : vector<1x32xf32>, vector<32x128xf32>, vector<1x128xf32> -> vector<1x128xf32>
    %114 = arith.addf %112, %113 : vector<1x128xf32>
    %115 = vector.extract_strided_slice %114 {offsets = [0, 0], sizes = [1, 32], strides = [1, 1]} : vector<1x128xf32> to vector<1x32xf32>
    %116 = arith.negf %115 : vector<1x32xf32>
    %117 = math.exp %116 : vector<1x32xf32>
    %cst_38 = arith.constant 1.000000e+00 : f32
    %118 = vector.broadcast %cst_38 : f32 to vector<1x32xf32>
    %119 = arith.addf %118, %117 : vector<1x32xf32>
    %120 = arith.divf %118, %119 : vector<1x32xf32>
    %121 = vector.extract_strided_slice %114 {offsets = [0, 32], sizes = [1, 32], strides = [1, 1]} : vector<1x128xf32> to vector<1x32xf32>
    %122 = arith.negf %121 : vector<1x32xf32>
    %123 = math.exp %122 : vector<1x32xf32>
    %cst_39 = arith.constant 1.000000e+00 : f32
    %124 = vector.broadcast %cst_39 : f32 to vector<1x32xf32>
    %125 = arith.addf %124, %123 : vector<1x32xf32>
    %126 = arith.divf %124, %125 : vector<1x32xf32>
    %127 = vector.extract_strided_slice %114 {offsets = [0, 64], sizes = [1, 32], strides = [1, 1]} : vector<1x128xf32> to vector<1x32xf32>
    %128 = math.tanh %127 : vector<1x32xf32>
    %129 = vector.extract_strided_slice %114 {offsets = [0, 96], sizes = [1, 32], strides = [1, 1]} : vector<1x128xf32> to vector<1x32xf32>
    %130 = arith.negf %129 : vector<1x32xf32>
    %131 = math.exp %130 : vector<1x32xf32>
    %cst_40 = arith.constant 1.000000e+00 : f32
    %132 = vector.broadcast %cst_40 : f32 to vector<1x32xf32>
    %133 = arith.addf %132, %131 : vector<1x32xf32>
    %134 = arith.divf %132, %133 : vector<1x32xf32>
    %135 = arith.mulf %126, %109 : vector<1x32xf32>
    %136 = arith.mulf %120, %128 : vector<1x32xf32>
    %137 = arith.addf %135, %136 : vector<1x32xf32>
    %138 = math.tanh %137 : vector<1x32xf32>
    %139 = arith.mulf %134, %138 : vector<1x32xf32>
    %140 = vector.extract_strided_slice %23 {offsets = [4, 0], sizes = [1, 128], strides = [1, 1]} : vector<8x128xf32> to vector<1x128xf32>
    %cst_41 = arith.constant dense<0.000000e+00> : vector<1x128xf32>
    %141 = tpu.matmul %139, %25, %cst_41 {dimension_numbers = #tpu.dot_dimension_numbers<[1], [0], [0], [1], [0, 0, 1, 1], [], []>} : vector<1x32xf32>, vector<32x128xf32>, vector<1x128xf32> -> vector<1x128xf32>
    %142 = arith.addf %140, %141 : vector<1x128xf32>
    %143 = vector.extract_strided_slice %142 {offsets = [0, 0], sizes = [1, 32], strides = [1, 1]} : vector<1x128xf32> to vector<1x32xf32>
    %144 = arith.negf %143 : vector<1x32xf32>
    %145 = math.exp %144 : vector<1x32xf32>
    %cst_42 = arith.constant 1.000000e+00 : f32
    %146 = vector.broadcast %cst_42 : f32 to vector<1x32xf32>
    %147 = arith.addf %146, %145 : vector<1x32xf32>
    %148 = arith.divf %146, %147 : vector<1x32xf32>
    %149 = vector.extract_strided_slice %142 {offsets = [0, 32], sizes = [1, 32], strides = [1, 1]} : vector<1x128xf32> to vector<1x32xf32>
    %150 = arith.negf %149 : vector<1x32xf32>
    %151 = math.exp %150 : vector<1x32xf32>
    %cst_43 = arith.constant 1.000000e+00 : f32
    %152 = vector.broadcast %cst_43 : f32 to vector<1x32xf32>
    %153 = arith.addf %152, %151 : vector<1x32xf32>
    %154 = arith.divf %152, %153 : vector<1x32xf32>
    %155 = vector.extract_strided_slice %142 {offsets = [0, 64], sizes = [1, 32], strides = [1, 1]} : vector<1x128xf32> to vector<1x32xf32>
    %156 = math.tanh %155 : vector<1x32xf32>
    %157 = vector.extract_strided_slice %142 {offsets = [0, 96], sizes = [1, 32], strides = [1, 1]} : vector<1x128xf32> to vector<1x32xf32>
    %158 = arith.negf %157 : vector<1x32xf32>
    %159 = math.exp %158 : vector<1x32xf32>
    %cst_44 = arith.constant 1.000000e+00 : f32
    %160 = vector.broadcast %cst_44 : f32 to vector<1x32xf32>
    %161 = arith.addf %160, %159 : vector<1x32xf32>
    %162 = arith.divf %160, %161 : vector<1x32xf32>
    %163 = arith.mulf %154, %137 : vector<1x32xf32>
    %164 = arith.mulf %148, %156 : vector<1x32xf32>
    %165 = arith.addf %163, %164 : vector<1x32xf32>
    %166 = math.tanh %165 : vector<1x32xf32>
    %167 = arith.mulf %162, %166 : vector<1x32xf32>
    %168 = vector.extract_strided_slice %23 {offsets = [5, 0], sizes = [1, 128], strides = [1, 1]} : vector<8x128xf32> to vector<1x128xf32>
    %cst_45 = arith.constant dense<0.000000e+00> : vector<1x128xf32>
    %169 = tpu.matmul %167, %25, %cst_45 {dimension_numbers = #tpu.dot_dimension_numbers<[1], [0], [0], [1], [0, 0, 1, 1], [], []>} : vector<1x32xf32>, vector<32x128xf32>, vector<1x128xf32> -> vector<1x128xf32>
    %170 = arith.addf %168, %169 : vector<1x128xf32>
    %171 = vector.extract_strided_slice %170 {offsets = [0, 0], sizes = [1, 32], strides = [1, 1]} : vector<1x128xf32> to vector<1x32xf32>
    %172 = arith.negf %171 : vector<1x32xf32>
    %173 = math.exp %172 : vector<1x32xf32>
    %cst_46 = arith.constant 1.000000e+00 : f32
    %174 = vector.broadcast %cst_46 : f32 to vector<1x32xf32>
    %175 = arith.addf %174, %173 : vector<1x32xf32>
    %176 = arith.divf %174, %175 : vector<1x32xf32>
    %177 = vector.extract_strided_slice %170 {offsets = [0, 32], sizes = [1, 32], strides = [1, 1]} : vector<1x128xf32> to vector<1x32xf32>
    %178 = arith.negf %177 : vector<1x32xf32>
    %179 = math.exp %178 : vector<1x32xf32>
    %cst_47 = arith.constant 1.000000e+00 : f32
    %180 = vector.broadcast %cst_47 : f32 to vector<1x32xf32>
    %181 = arith.addf %180, %179 : vector<1x32xf32>
    %182 = arith.divf %180, %181 : vector<1x32xf32>
    %183 = vector.extract_strided_slice %170 {offsets = [0, 64], sizes = [1, 32], strides = [1, 1]} : vector<1x128xf32> to vector<1x32xf32>
    %184 = math.tanh %183 : vector<1x32xf32>
    %185 = vector.extract_strided_slice %170 {offsets = [0, 96], sizes = [1, 32], strides = [1, 1]} : vector<1x128xf32> to vector<1x32xf32>
    %186 = arith.negf %185 : vector<1x32xf32>
    %187 = math.exp %186 : vector<1x32xf32>
    %cst_48 = arith.constant 1.000000e+00 : f32
    %188 = vector.broadcast %cst_48 : f32 to vector<1x32xf32>
    %189 = arith.addf %188, %187 : vector<1x32xf32>
    %190 = arith.divf %188, %189 : vector<1x32xf32>
    %191 = arith.mulf %182, %165 : vector<1x32xf32>
    %192 = arith.mulf %176, %184 : vector<1x32xf32>
    %193 = arith.addf %191, %192 : vector<1x32xf32>
    %194 = math.tanh %193 : vector<1x32xf32>
    %195 = arith.mulf %190, %194 : vector<1x32xf32>
    %196 = vector.extract_strided_slice %23 {offsets = [6, 0], sizes = [1, 128], strides = [1, 1]} : vector<8x128xf32> to vector<1x128xf32>
    %cst_49 = arith.constant dense<0.000000e+00> : vector<1x128xf32>
    %197 = tpu.matmul %195, %25, %cst_49 {dimension_numbers = #tpu.dot_dimension_numbers<[1], [0], [0], [1], [0, 0, 1, 1], [], []>} : vector<1x32xf32>, vector<32x128xf32>, vector<1x128xf32> -> vector<1x128xf32>
    %198 = arith.addf %196, %197 : vector<1x128xf32>
    %199 = vector.extract_strided_slice %198 {offsets = [0, 0], sizes = [1, 32], strides = [1, 1]} : vector<1x128xf32> to vector<1x32xf32>
    %200 = arith.negf %199 : vector<1x32xf32>
    %201 = math.exp %200 : vector<1x32xf32>
    %cst_50 = arith.constant 1.000000e+00 : f32
    %202 = vector.broadcast %cst_50 : f32 to vector<1x32xf32>
    %203 = arith.addf %202, %201 : vector<1x32xf32>
    %204 = arith.divf %202, %203 : vector<1x32xf32>
    %205 = vector.extract_strided_slice %198 {offsets = [0, 32], sizes = [1, 32], strides = [1, 1]} : vector<1x128xf32> to vector<1x32xf32>
    %206 = arith.negf %205 : vector<1x32xf32>
    %207 = math.exp %206 : vector<1x32xf32>
    %cst_51 = arith.constant 1.000000e+00 : f32
    %208 = vector.broadcast %cst_51 : f32 to vector<1x32xf32>
    %209 = arith.addf %208, %207 : vector<1x32xf32>
    %210 = arith.divf %208, %209 : vector<1x32xf32>
    %211 = vector.extract_strided_slice %198 {offsets = [0, 64], sizes = [1, 32], strides = [1, 1]} : vector<1x128xf32> to vector<1x32xf32>
    %212 = math.tanh %211 : vector<1x32xf32>
    %213 = vector.extract_strided_slice %198 {offsets = [0, 96], sizes = [1, 32], strides = [1, 1]} : vector<1x128xf32> to vector<1x32xf32>
    %214 = arith.negf %213 : vector<1x32xf32>
    %215 = math.exp %214 : vector<1x32xf32>
    %cst_52 = arith.constant 1.000000e+00 : f32
    %216 = vector.broadcast %cst_52 : f32 to vector<1x32xf32>
    %217 = arith.addf %216, %215 : vector<1x32xf32>
    %218 = arith.divf %216, %217 : vector<1x32xf32>
    %219 = arith.mulf %210, %193 : vector<1x32xf32>
    %220 = arith.mulf %204, %212 : vector<1x32xf32>
    %221 = arith.addf %219, %220 : vector<1x32xf32>
    %222 = math.tanh %221 : vector<1x32xf32>
    %223 = arith.mulf %218, %222 : vector<1x32xf32>
    %224 = vector.extract_strided_slice %23 {offsets = [7, 0], sizes = [1, 128], strides = [1, 1]} : vector<8x128xf32> to vector<1x128xf32>
    %cst_53 = arith.constant dense<0.000000e+00> : vector<1x128xf32>
    %225 = tpu.matmul %223, %25, %cst_53 {dimension_numbers = #tpu.dot_dimension_numbers<[1], [0], [0], [1], [0, 0, 1, 1], [], []>} : vector<1x32xf32>, vector<32x128xf32>, vector<1x128xf32> -> vector<1x128xf32>
    %226 = arith.addf %224, %225 : vector<1x128xf32>
    %227 = vector.extract_strided_slice %226 {offsets = [0, 0], sizes = [1, 32], strides = [1, 1]} : vector<1x128xf32> to vector<1x32xf32>
    %228 = arith.negf %227 : vector<1x32xf32>
    %229 = math.exp %228 : vector<1x32xf32>
    %cst_54 = arith.constant 1.000000e+00 : f32
    %230 = vector.broadcast %cst_54 : f32 to vector<1x32xf32>
    %231 = arith.addf %230, %229 : vector<1x32xf32>
    %232 = arith.divf %230, %231 : vector<1x32xf32>
    %233 = vector.extract_strided_slice %226 {offsets = [0, 32], sizes = [1, 32], strides = [1, 1]} : vector<1x128xf32> to vector<1x32xf32>
    %234 = arith.negf %233 : vector<1x32xf32>
    %235 = math.exp %234 : vector<1x32xf32>
    %cst_55 = arith.constant 1.000000e+00 : f32
    %236 = vector.broadcast %cst_55 : f32 to vector<1x32xf32>
    %237 = arith.addf %236, %235 : vector<1x32xf32>
    %238 = arith.divf %236, %237 : vector<1x32xf32>
    %239 = vector.extract_strided_slice %226 {offsets = [0, 64], sizes = [1, 32], strides = [1, 1]} : vector<1x128xf32> to vector<1x32xf32>
    %240 = math.tanh %239 : vector<1x32xf32>
    %241 = vector.extract_strided_slice %226 {offsets = [0, 96], sizes = [1, 32], strides = [1, 1]} : vector<1x128xf32> to vector<1x32xf32>
    %242 = arith.negf %241 : vector<1x32xf32>
    %243 = math.exp %242 : vector<1x32xf32>
    %cst_56 = arith.constant 1.000000e+00 : f32
    %244 = vector.broadcast %cst_56 : f32 to vector<1x32xf32>
    %245 = arith.addf %244, %243 : vector<1x32xf32>
    %246 = arith.divf %244, %245 : vector<1x32xf32>
    %247 = arith.mulf %238, %221 : vector<1x32xf32>
    %248 = arith.mulf %232, %240 : vector<1x32xf32>
    %249 = arith.addf %247, %248 : vector<1x32xf32>
    %250 = math.tanh %249 : vector<1x32xf32>
    %251 = arith.mulf %246, %250 : vector<1x32xf32>
    %252 = tpu.concatenate %55, %83, %111, %139, %167, %195, %223, %251 in 0 : vector<1x32xf32>, vector<1x32xf32>, vector<1x32xf32>, vector<1x32xf32>, vector<1x32xf32>, vector<1x32xf32>, vector<1x32xf32>, vector<1x32xf32> -> vector<8x32xf32>
    %c1 = arith.constant 1 : index
    %c0_57 = arith.constant 0 : index
    %c0_58 = arith.constant 0 : index
    %253 = vector.load %arg5[%c1, %c0_57, %c0_58] : memref<2x32x128xf32, #tpu.memory_space<vmem>>, vector<1x32x128xf32>
    %254 = vector.shape_cast %253 : vector<1x32x128xf32> to vector<32x128xf32>
    %cst_59 = arith.constant dense<0.000000e+00> : vector<8x128xf32>
    %255 = tpu.matmul %252, %254, %cst_59 {dimension_numbers = #tpu.dot_dimension_numbers<[1], [0], [0], [1], [0, 0, 1, 1], [], []>} : vector<8x32xf32>, vector<32x128xf32>, vector<8x128xf32> -> vector<8x128xf32>
    %c1_60 = arith.constant 1 : index
    %c0_61 = arith.constant 0 : index
    %c0_62 = arith.constant 0 : index
    %256 = vector.load %arg7[%c1_60, %c0_61, %c0_62] : memref<2x1x128xf32, #tpu.memory_space<vmem>>, vector<1x1x128xf32>
    %257 = vector.shape_cast %256 : vector<1x1x128xf32> to vector<1x128xf32>
    %258 = vector.broadcast %257 : vector<1x128xf32> to vector<8x128xf32>
    %259 = arith.addf %255, %258 : vector<8x128xf32>
    %c1_63 = arith.constant 1 : index
    %c0_64 = arith.constant 0 : index
    %c0_65 = arith.constant 0 : index
    %260 = vector.load %arg6[%c1_63, %c0_64, %c0_65] : memref<2x32x128xf32, #tpu.memory_space<vmem>>, vector<1x32x128xf32>
    %261 = vector.shape_cast %260 : vector<1x32x128xf32> to vector<32x128xf32>
    %cst_66 = arith.constant 0.000000e+00 : f32
    %262 = vector.broadcast %cst_66 : f32 to vector<1x32xf32>
    %cst_67 = arith.constant 0.000000e+00 : f32
    %263 = vector.broadcast %cst_67 : f32 to vector<1x32xf32>
    %264 = vector.extract_strided_slice %259 {offsets = [0, 0], sizes = [1, 128], strides = [1, 1]} : vector<8x128xf32> to vector<1x128xf32>
    %cst_68 = arith.constant dense<0.000000e+00> : vector<1x128xf32>
    %265 = tpu.matmul %262, %261, %cst_68 {dimension_numbers = #tpu.dot_dimension_numbers<[1], [0], [0], [1], [0, 0, 1, 1], [], []>} : vector<1x32xf32>, vector<32x128xf32>, vector<1x128xf32> -> vector<1x128xf32>
    %266 = arith.addf %264, %265 : vector<1x128xf32>
    %267 = vector.extract_strided_slice %266 {offsets = [0, 0], sizes = [1, 32], strides = [1, 1]} : vector<1x128xf32> to vector<1x32xf32>
    %268 = arith.negf %267 : vector<1x32xf32>
    %269 = math.exp %268 : vector<1x32xf32>
    %cst_69 = arith.constant 1.000000e+00 : f32
    %270 = vector.broadcast %cst_69 : f32 to vector<1x32xf32>
    %271 = arith.addf %270, %269 : vector<1x32xf32>
    %272 = arith.divf %270, %271 : vector<1x32xf32>
    %273 = vector.extract_strided_slice %266 {offsets = [0, 32], sizes = [1, 32], strides = [1, 1]} : vector<1x128xf32> to vector<1x32xf32>
    %274 = arith.negf %273 : vector<1x32xf32>
    %275 = math.exp %274 : vector<1x32xf32>
    %cst_70 = arith.constant 1.000000e+00 : f32
    %276 = vector.broadcast %cst_70 : f32 to vector<1x32xf32>
    %277 = arith.addf %276, %275 : vector<1x32xf32>
    %278 = arith.divf %276, %277 : vector<1x32xf32>
    %279 = vector.extract_strided_slice %266 {offsets = [0, 64], sizes = [1, 32], strides = [1, 1]} : vector<1x128xf32> to vector<1x32xf32>
    %280 = math.tanh %279 : vector<1x32xf32>
    %281 = vector.extract_strided_slice %266 {offsets = [0, 96], sizes = [1, 32], strides = [1, 1]} : vector<1x128xf32> to vector<1x32xf32>
    %282 = arith.negf %281 : vector<1x32xf32>
    %283 = math.exp %282 : vector<1x32xf32>
    %cst_71 = arith.constant 1.000000e+00 : f32
    %284 = vector.broadcast %cst_71 : f32 to vector<1x32xf32>
    %285 = arith.addf %284, %283 : vector<1x32xf32>
    %286 = arith.divf %284, %285 : vector<1x32xf32>
    %287 = arith.mulf %278, %263 : vector<1x32xf32>
    %288 = arith.mulf %272, %280 : vector<1x32xf32>
    %289 = arith.addf %287, %288 : vector<1x32xf32>
    %290 = math.tanh %289 : vector<1x32xf32>
    %291 = arith.mulf %286, %290 : vector<1x32xf32>
    %292 = vector.extract_strided_slice %259 {offsets = [1, 0], sizes = [1, 128], strides = [1, 1]} : vector<8x128xf32> to vector<1x128xf32>
    %cst_72 = arith.constant dense<0.000000e+00> : vector<1x128xf32>
    %293 = tpu.matmul %291, %261, %cst_72 {dimension_numbers = #tpu.dot_dimension_numbers<[1], [0], [0], [1], [0, 0, 1, 1], [], []>} : vector<1x32xf32>, vector<32x128xf32>, vector<1x128xf32> -> vector<1x128xf32>
    %294 = arith.addf %292, %293 : vector<1x128xf32>
    %295 = vector.extract_strided_slice %294 {offsets = [0, 0], sizes = [1, 32], strides = [1, 1]} : vector<1x128xf32> to vector<1x32xf32>
    %296 = arith.negf %295 : vector<1x32xf32>
    %297 = math.exp %296 : vector<1x32xf32>
    %cst_73 = arith.constant 1.000000e+00 : f32
    %298 = vector.broadcast %cst_73 : f32 to vector<1x32xf32>
    %299 = arith.addf %298, %297 : vector<1x32xf32>
    %300 = arith.divf %298, %299 : vector<1x32xf32>
    %301 = vector.extract_strided_slice %294 {offsets = [0, 32], sizes = [1, 32], strides = [1, 1]} : vector<1x128xf32> to vector<1x32xf32>
    %302 = arith.negf %301 : vector<1x32xf32>
    %303 = math.exp %302 : vector<1x32xf32>
    %cst_74 = arith.constant 1.000000e+00 : f32
    %304 = vector.broadcast %cst_74 : f32 to vector<1x32xf32>
    %305 = arith.addf %304, %303 : vector<1x32xf32>
    %306 = arith.divf %304, %305 : vector<1x32xf32>
    %307 = vector.extract_strided_slice %294 {offsets = [0, 64], sizes = [1, 32], strides = [1, 1]} : vector<1x128xf32> to vector<1x32xf32>
    %308 = math.tanh %307 : vector<1x32xf32>
    %309 = vector.extract_strided_slice %294 {offsets = [0, 96], sizes = [1, 32], strides = [1, 1]} : vector<1x128xf32> to vector<1x32xf32>
    %310 = arith.negf %309 : vector<1x32xf32>
    %311 = math.exp %310 : vector<1x32xf32>
    %cst_75 = arith.constant 1.000000e+00 : f32
    %312 = vector.broadcast %cst_75 : f32 to vector<1x32xf32>
    %313 = arith.addf %312, %311 : vector<1x32xf32>
    %314 = arith.divf %312, %313 : vector<1x32xf32>
    %315 = arith.mulf %306, %289 : vector<1x32xf32>
    %316 = arith.mulf %300, %308 : vector<1x32xf32>
    %317 = arith.addf %315, %316 : vector<1x32xf32>
    %318 = math.tanh %317 : vector<1x32xf32>
    %319 = arith.mulf %314, %318 : vector<1x32xf32>
    %320 = vector.extract_strided_slice %259 {offsets = [2, 0], sizes = [1, 128], strides = [1, 1]} : vector<8x128xf32> to vector<1x128xf32>
    %cst_76 = arith.constant dense<0.000000e+00> : vector<1x128xf32>
    %321 = tpu.matmul %319, %261, %cst_76 {dimension_numbers = #tpu.dot_dimension_numbers<[1], [0], [0], [1], [0, 0, 1, 1], [], []>} : vector<1x32xf32>, vector<32x128xf32>, vector<1x128xf32> -> vector<1x128xf32>
    %322 = arith.addf %320, %321 : vector<1x128xf32>
    %323 = vector.extract_strided_slice %322 {offsets = [0, 0], sizes = [1, 32], strides = [1, 1]} : vector<1x128xf32> to vector<1x32xf32>
    %324 = arith.negf %323 : vector<1x32xf32>
    %325 = math.exp %324 : vector<1x32xf32>
    %cst_77 = arith.constant 1.000000e+00 : f32
    %326 = vector.broadcast %cst_77 : f32 to vector<1x32xf32>
    %327 = arith.addf %326, %325 : vector<1x32xf32>
    %328 = arith.divf %326, %327 : vector<1x32xf32>
    %329 = vector.extract_strided_slice %322 {offsets = [0, 32], sizes = [1, 32], strides = [1, 1]} : vector<1x128xf32> to vector<1x32xf32>
    %330 = arith.negf %329 : vector<1x32xf32>
    %331 = math.exp %330 : vector<1x32xf32>
    %cst_78 = arith.constant 1.000000e+00 : f32
    %332 = vector.broadcast %cst_78 : f32 to vector<1x32xf32>
    %333 = arith.addf %332, %331 : vector<1x32xf32>
    %334 = arith.divf %332, %333 : vector<1x32xf32>
    %335 = vector.extract_strided_slice %322 {offsets = [0, 64], sizes = [1, 32], strides = [1, 1]} : vector<1x128xf32> to vector<1x32xf32>
    %336 = math.tanh %335 : vector<1x32xf32>
    %337 = vector.extract_strided_slice %322 {offsets = [0, 96], sizes = [1, 32], strides = [1, 1]} : vector<1x128xf32> to vector<1x32xf32>
    %338 = arith.negf %337 : vector<1x32xf32>
    %339 = math.exp %338 : vector<1x32xf32>
    %cst_79 = arith.constant 1.000000e+00 : f32
    %340 = vector.broadcast %cst_79 : f32 to vector<1x32xf32>
    %341 = arith.addf %340, %339 : vector<1x32xf32>
    %342 = arith.divf %340, %341 : vector<1x32xf32>
    %343 = arith.mulf %334, %317 : vector<1x32xf32>
    %344 = arith.mulf %328, %336 : vector<1x32xf32>
    %345 = arith.addf %343, %344 : vector<1x32xf32>
    %346 = math.tanh %345 : vector<1x32xf32>
    %347 = arith.mulf %342, %346 : vector<1x32xf32>
    %348 = vector.extract_strided_slice %259 {offsets = [3, 0], sizes = [1, 128], strides = [1, 1]} : vector<8x128xf32> to vector<1x128xf32>
    %cst_80 = arith.constant dense<0.000000e+00> : vector<1x128xf32>
    %349 = tpu.matmul %347, %261, %cst_80 {dimension_numbers = #tpu.dot_dimension_numbers<[1], [0], [0], [1], [0, 0, 1, 1], [], []>} : vector<1x32xf32>, vector<32x128xf32>, vector<1x128xf32> -> vector<1x128xf32>
    %350 = arith.addf %348, %349 : vector<1x128xf32>
    %351 = vector.extract_strided_slice %350 {offsets = [0, 0], sizes = [1, 32], strides = [1, 1]} : vector<1x128xf32> to vector<1x32xf32>
    %352 = arith.negf %351 : vector<1x32xf32>
    %353 = math.exp %352 : vector<1x32xf32>
    %cst_81 = arith.constant 1.000000e+00 : f32
    %354 = vector.broadcast %cst_81 : f32 to vector<1x32xf32>
    %355 = arith.addf %354, %353 : vector<1x32xf32>
    %356 = arith.divf %354, %355 : vector<1x32xf32>
    %357 = vector.extract_strided_slice %350 {offsets = [0, 32], sizes = [1, 32], strides = [1, 1]} : vector<1x128xf32> to vector<1x32xf32>
    %358 = arith.negf %357 : vector<1x32xf32>
    %359 = math.exp %358 : vector<1x32xf32>
    %cst_82 = arith.constant 1.000000e+00 : f32
    %360 = vector.broadcast %cst_82 : f32 to vector<1x32xf32>
    %361 = arith.addf %360, %359 : vector<1x32xf32>
    %362 = arith.divf %360, %361 : vector<1x32xf32>
    %363 = vector.extract_strided_slice %350 {offsets = [0, 64], sizes = [1, 32], strides = [1, 1]} : vector<1x128xf32> to vector<1x32xf32>
    %364 = math.tanh %363 : vector<1x32xf32>
    %365 = vector.extract_strided_slice %350 {offsets = [0, 96], sizes = [1, 32], strides = [1, 1]} : vector<1x128xf32> to vector<1x32xf32>
    %366 = arith.negf %365 : vector<1x32xf32>
    %367 = math.exp %366 : vector<1x32xf32>
    %cst_83 = arith.constant 1.000000e+00 : f32
    %368 = vector.broadcast %cst_83 : f32 to vector<1x32xf32>
    %369 = arith.addf %368, %367 : vector<1x32xf32>
    %370 = arith.divf %368, %369 : vector<1x32xf32>
    %371 = arith.mulf %362, %345 : vector<1x32xf32>
    %372 = arith.mulf %356, %364 : vector<1x32xf32>
    %373 = arith.addf %371, %372 : vector<1x32xf32>
    %374 = math.tanh %373 : vector<1x32xf32>
    %375 = arith.mulf %370, %374 : vector<1x32xf32>
    %376 = vector.extract_strided_slice %259 {offsets = [4, 0], sizes = [1, 128], strides = [1, 1]} : vector<8x128xf32> to vector<1x128xf32>
    %cst_84 = arith.constant dense<0.000000e+00> : vector<1x128xf32>
    %377 = tpu.matmul %375, %261, %cst_84 {dimension_numbers = #tpu.dot_dimension_numbers<[1], [0], [0], [1], [0, 0, 1, 1], [], []>} : vector<1x32xf32>, vector<32x128xf32>, vector<1x128xf32> -> vector<1x128xf32>
    %378 = arith.addf %376, %377 : vector<1x128xf32>
    %379 = vector.extract_strided_slice %378 {offsets = [0, 0], sizes = [1, 32], strides = [1, 1]} : vector<1x128xf32> to vector<1x32xf32>
    %380 = arith.negf %379 : vector<1x32xf32>
    %381 = math.exp %380 : vector<1x32xf32>
    %cst_85 = arith.constant 1.000000e+00 : f32
    %382 = vector.broadcast %cst_85 : f32 to vector<1x32xf32>
    %383 = arith.addf %382, %381 : vector<1x32xf32>
    %384 = arith.divf %382, %383 : vector<1x32xf32>
    %385 = vector.extract_strided_slice %378 {offsets = [0, 32], sizes = [1, 32], strides = [1, 1]} : vector<1x128xf32> to vector<1x32xf32>
    %386 = arith.negf %385 : vector<1x32xf32>
    %387 = math.exp %386 : vector<1x32xf32>
    %cst_86 = arith.constant 1.000000e+00 : f32
    %388 = vector.broadcast %cst_86 : f32 to vector<1x32xf32>
    %389 = arith.addf %388, %387 : vector<1x32xf32>
    %390 = arith.divf %388, %389 : vector<1x32xf32>
    %391 = vector.extract_strided_slice %378 {offsets = [0, 64], sizes = [1, 32], strides = [1, 1]} : vector<1x128xf32> to vector<1x32xf32>
    %392 = math.tanh %391 : vector<1x32xf32>
    %393 = vector.extract_strided_slice %378 {offsets = [0, 96], sizes = [1, 32], strides = [1, 1]} : vector<1x128xf32> to vector<1x32xf32>
    %394 = arith.negf %393 : vector<1x32xf32>
    %395 = math.exp %394 : vector<1x32xf32>
    %cst_87 = arith.constant 1.000000e+00 : f32
    %396 = vector.broadcast %cst_87 : f32 to vector<1x32xf32>
    %397 = arith.addf %396, %395 : vector<1x32xf32>
    %398 = arith.divf %396, %397 : vector<1x32xf32>
    %399 = arith.mulf %390, %373 : vector<1x32xf32>
    %400 = arith.mulf %384, %392 : vector<1x32xf32>
    %401 = arith.addf %399, %400 : vector<1x32xf32>
    %402 = math.tanh %401 : vector<1x32xf32>
    %403 = arith.mulf %398, %402 : vector<1x32xf32>
    %404 = vector.extract_strided_slice %259 {offsets = [5, 0], sizes = [1, 128], strides = [1, 1]} : vector<8x128xf32> to vector<1x128xf32>
    %cst_88 = arith.constant dense<0.000000e+00> : vector<1x128xf32>
    %405 = tpu.matmul %403, %261, %cst_88 {dimension_numbers = #tpu.dot_dimension_numbers<[1], [0], [0], [1], [0, 0, 1, 1], [], []>} : vector<1x32xf32>, vector<32x128xf32>, vector<1x128xf32> -> vector<1x128xf32>
    %406 = arith.addf %404, %405 : vector<1x128xf32>
    %407 = vector.extract_strided_slice %406 {offsets = [0, 0], sizes = [1, 32], strides = [1, 1]} : vector<1x128xf32> to vector<1x32xf32>
    %408 = arith.negf %407 : vector<1x32xf32>
    %409 = math.exp %408 : vector<1x32xf32>
    %cst_89 = arith.constant 1.000000e+00 : f32
    %410 = vector.broadcast %cst_89 : f32 to vector<1x32xf32>
    %411 = arith.addf %410, %409 : vector<1x32xf32>
    %412 = arith.divf %410, %411 : vector<1x32xf32>
    %413 = vector.extract_strided_slice %406 {offsets = [0, 32], sizes = [1, 32], strides = [1, 1]} : vector<1x128xf32> to vector<1x32xf32>
    %414 = arith.negf %413 : vector<1x32xf32>
    %415 = math.exp %414 : vector<1x32xf32>
    %cst_90 = arith.constant 1.000000e+00 : f32
    %416 = vector.broadcast %cst_90 : f32 to vector<1x32xf32>
    %417 = arith.addf %416, %415 : vector<1x32xf32>
    %418 = arith.divf %416, %417 : vector<1x32xf32>
    %419 = vector.extract_strided_slice %406 {offsets = [0, 64], sizes = [1, 32], strides = [1, 1]} : vector<1x128xf32> to vector<1x32xf32>
    %420 = math.tanh %419 : vector<1x32xf32>
    %421 = vector.extract_strided_slice %406 {offsets = [0, 96], sizes = [1, 32], strides = [1, 1]} : vector<1x128xf32> to vector<1x32xf32>
    %422 = arith.negf %421 : vector<1x32xf32>
    %423 = math.exp %422 : vector<1x32xf32>
    %cst_91 = arith.constant 1.000000e+00 : f32
    %424 = vector.broadcast %cst_91 : f32 to vector<1x32xf32>
    %425 = arith.addf %424, %423 : vector<1x32xf32>
    %426 = arith.divf %424, %425 : vector<1x32xf32>
    %427 = arith.mulf %418, %401 : vector<1x32xf32>
    %428 = arith.mulf %412, %420 : vector<1x32xf32>
    %429 = arith.addf %427, %428 : vector<1x32xf32>
    %430 = math.tanh %429 : vector<1x32xf32>
    %431 = arith.mulf %426, %430 : vector<1x32xf32>
    %432 = vector.extract_strided_slice %259 {offsets = [6, 0], sizes = [1, 128], strides = [1, 1]} : vector<8x128xf32> to vector<1x128xf32>
    %cst_92 = arith.constant dense<0.000000e+00> : vector<1x128xf32>
    %433 = tpu.matmul %431, %261, %cst_92 {dimension_numbers = #tpu.dot_dimension_numbers<[1], [0], [0], [1], [0, 0, 1, 1], [], []>} : vector<1x32xf32>, vector<32x128xf32>, vector<1x128xf32> -> vector<1x128xf32>
    %434 = arith.addf %432, %433 : vector<1x128xf32>
    %435 = vector.extract_strided_slice %434 {offsets = [0, 0], sizes = [1, 32], strides = [1, 1]} : vector<1x128xf32> to vector<1x32xf32>
    %436 = arith.negf %435 : vector<1x32xf32>
    %437 = math.exp %436 : vector<1x32xf32>
    %cst_93 = arith.constant 1.000000e+00 : f32
    %438 = vector.broadcast %cst_93 : f32 to vector<1x32xf32>
    %439 = arith.addf %438, %437 : vector<1x32xf32>
    %440 = arith.divf %438, %439 : vector<1x32xf32>
    %441 = vector.extract_strided_slice %434 {offsets = [0, 32], sizes = [1, 32], strides = [1, 1]} : vector<1x128xf32> to vector<1x32xf32>
    %442 = arith.negf %441 : vector<1x32xf32>
    %443 = math.exp %442 : vector<1x32xf32>
    %cst_94 = arith.constant 1.000000e+00 : f32
    %444 = vector.broadcast %cst_94 : f32 to vector<1x32xf32>
    %445 = arith.addf %444, %443 : vector<1x32xf32>
    %446 = arith.divf %444, %445 : vector<1x32xf32>
    %447 = vector.extract_strided_slice %434 {offsets = [0, 64], sizes = [1, 32], strides = [1, 1]} : vector<1x128xf32> to vector<1x32xf32>
    %448 = math.tanh %447 : vector<1x32xf32>
    %449 = vector.extract_strided_slice %434 {offsets = [0, 96], sizes = [1, 32], strides = [1, 1]} : vector<1x128xf32> to vector<1x32xf32>
    %450 = arith.negf %449 : vector<1x32xf32>
    %451 = math.exp %450 : vector<1x32xf32>
    %cst_95 = arith.constant 1.000000e+00 : f32
    %452 = vector.broadcast %cst_95 : f32 to vector<1x32xf32>
    %453 = arith.addf %452, %451 : vector<1x32xf32>
    %454 = arith.divf %452, %453 : vector<1x32xf32>
    %455 = arith.mulf %446, %429 : vector<1x32xf32>
    %456 = arith.mulf %440, %448 : vector<1x32xf32>
    %457 = arith.addf %455, %456 : vector<1x32xf32>
    %458 = math.tanh %457 : vector<1x32xf32>
    %459 = arith.mulf %454, %458 : vector<1x32xf32>
    %460 = vector.extract_strided_slice %259 {offsets = [7, 0], sizes = [1, 128], strides = [1, 1]} : vector<8x128xf32> to vector<1x128xf32>
    %cst_96 = arith.constant dense<0.000000e+00> : vector<1x128xf32>
    %461 = tpu.matmul %459, %261, %cst_96 {dimension_numbers = #tpu.dot_dimension_numbers<[1], [0], [0], [1], [0, 0, 1, 1], [], []>} : vector<1x32xf32>, vector<32x128xf32>, vector<1x128xf32> -> vector<1x128xf32>
    %462 = arith.addf %460, %461 : vector<1x128xf32>
    %463 = vector.extract_strided_slice %462 {offsets = [0, 0], sizes = [1, 32], strides = [1, 1]} : vector<1x128xf32> to vector<1x32xf32>
    %464 = arith.negf %463 : vector<1x32xf32>
    %465 = math.exp %464 : vector<1x32xf32>
    %cst_97 = arith.constant 1.000000e+00 : f32
    %466 = vector.broadcast %cst_97 : f32 to vector<1x32xf32>
    %467 = arith.addf %466, %465 : vector<1x32xf32>
    %468 = arith.divf %466, %467 : vector<1x32xf32>
    %469 = vector.extract_strided_slice %462 {offsets = [0, 32], sizes = [1, 32], strides = [1, 1]} : vector<1x128xf32> to vector<1x32xf32>
    %470 = arith.negf %469 : vector<1x32xf32>
    %471 = math.exp %470 : vector<1x32xf32>
    %cst_98 = arith.constant 1.000000e+00 : f32
    %472 = vector.broadcast %cst_98 : f32 to vector<1x32xf32>
    %473 = arith.addf %472, %471 : vector<1x32xf32>
    %474 = arith.divf %472, %473 : vector<1x32xf32>
    %475 = vector.extract_strided_slice %462 {offsets = [0, 64], sizes = [1, 32], strides = [1, 1]} : vector<1x128xf32> to vector<1x32xf32>
    %476 = math.tanh %475 : vector<1x32xf32>
    %477 = vector.extract_strided_slice %462 {offsets = [0, 96], sizes = [1, 32], strides = [1, 1]} : vector<1x128xf32> to vector<1x32xf32>
    %478 = arith.negf %477 : vector<1x32xf32>
    %479 = math.exp %478 : vector<1x32xf32>
    %cst_99 = arith.constant 1.000000e+00 : f32
    %480 = vector.broadcast %cst_99 : f32 to vector<1x32xf32>
    %481 = arith.addf %480, %479 : vector<1x32xf32>
    %482 = arith.divf %480, %481 : vector<1x32xf32>
    %483 = arith.mulf %474, %457 : vector<1x32xf32>
    %484 = arith.mulf %468, %476 : vector<1x32xf32>
    %485 = arith.addf %483, %484 : vector<1x32xf32>
    %486 = math.tanh %485 : vector<1x32xf32>
    %487 = arith.mulf %482, %486 : vector<1x32xf32>
    %488 = tpu.concatenate %291, %319, %347, %375, %403, %431, %459, %487 in 0 : vector<1x32xf32>, vector<1x32xf32>, vector<1x32xf32>, vector<1x32xf32>, vector<1x32xf32>, vector<1x32xf32>, vector<1x32xf32>, vector<1x32xf32> -> vector<8x32xf32>
    %c0_100 = arith.constant 0 : index
    %c0_101 = arith.constant 0 : index
    %489 = vector.load %arg8[%c0_100, %c0_101] : memref<32x96xf32, #tpu.memory_space<vmem>>, vector<32x96xf32>
    %cst_102 = arith.constant dense<0.000000e+00> : vector<8x96xf32>
    %490 = tpu.matmul %488, %489, %cst_102 {dimension_numbers = #tpu.dot_dimension_numbers<[1], [0], [0], [1], [0, 0, 1, 1], [], []>} : vector<8x32xf32>, vector<32x96xf32>, vector<8x96xf32> -> vector<8x96xf32>
    %c0_103 = arith.constant 0 : index
    %c0_104 = arith.constant 0 : index
    %491 = vector.load %arg9[%c0_103, %c0_104] : memref<1x96xf32, #tpu.memory_space<vmem>>, vector<1x96xf32>
    %492 = vector.broadcast %491 : vector<1x96xf32> to vector<8x96xf32>
    %493 = arith.addf %490, %492 : vector<8x96xf32>
    %494 = vector.extract_strided_slice %493 {offsets = [0, 0], sizes = [8, 32], strides = [1, 1]} : vector<8x96xf32> to vector<8x32xf32>
    %495 = vector.extract_strided_slice %493 {offsets = [0, 32], sizes = [8, 32], strides = [1, 1]} : vector<8x96xf32> to vector<8x32xf32>
    %496 = vector.extract_strided_slice %493 {offsets = [0, 64], sizes = [8, 32], strides = [1, 1]} : vector<8x96xf32> to vector<8x32xf32>
    %cst_105 = arith.constant 0.000000e+00 : f32
    %497 = vector.broadcast %cst_105 : f32 to vector<8x8xf32>
    %498 = vector.extract_strided_slice %494 {offsets = [0, 0], sizes = [8, 8], strides = [1, 1]} : vector<8x32xf32> to vector<8x8xf32>
    %cst_106 = arith.constant 0.353553385 : f32
    %499 = vector.broadcast %cst_106 : f32 to vector<8x8xf32>
    %500 = arith.mulf %498, %499 : vector<8x8xf32>
    %501 = vector.extract_strided_slice %495 {offsets = [0, 0], sizes = [8, 8], strides = [1, 1]} : vector<8x32xf32> to vector<8x8xf32>
    %502 = vector.extract_strided_slice %496 {offsets = [0, 0], sizes = [8, 8], strides = [1, 1]} : vector<8x32xf32> to vector<8x8xf32>
    %503 = tpu.transpose %501, [1, 0] : vector<8x8xf32> -> vector<8x8xf32>
    %cst_107 = arith.constant dense<0.000000e+00> : vector<8x8xf32>
    %504 = tpu.matmul %500, %503, %cst_107 {dimension_numbers = #tpu.dot_dimension_numbers<[1], [0], [0], [1], [0, 0, 1, 1], [], []>} : vector<8x8xf32>, vector<8x8xf32>, vector<8x8xf32> -> vector<8x8xf32>
    %cst_108 = arith.constant dense<0xFF800000> : vector<8xf32>
    %505 = vector.multi_reduction <maximumf>, %504, %cst_108 [1] : vector<8x8xf32> to vector<8xf32>
    %cst_109 = arith.constant 0xFF800000 : f32
    %506 = vector.broadcast %cst_109 : f32 to vector<8xf32>
    %507 = arith.maximumf %506, %505 : vector<8xf32>
    %508 = vector.shape_cast %507 : vector<8xf32> to vector<8x1xf32>
    %509 = vector.broadcast %508 : vector<8x1xf32> to vector<8x8xf32>
    %510 = arith.subf %504, %509 : vector<8x8xf32>
    %511 = math.exp %510 : vector<8x8xf32>
    %cst_110 = arith.constant dense<0.000000e+00> : vector<8xf32>
    %512 = vector.multi_reduction <add>, %511, %cst_110 [1] : vector<8x8xf32> to vector<8xf32>
    %513 = vector.shape_cast %512 : vector<8xf32> to vector<8x1xf32>
    %514 = vector.broadcast %513 : vector<8x1xf32> to vector<8x8xf32>
    %515 = arith.divf %511, %514 : vector<8x8xf32>
    %516 = arith.addf %497, %515 : vector<8x8xf32>
    %cst_111 = arith.constant dense<0.000000e+00> : vector<8x8xf32>
    %517 = tpu.matmul %515, %502, %cst_111 {dimension_numbers = #tpu.dot_dimension_numbers<[1], [0], [0], [1], [0, 0, 1, 1], [], []>} : vector<8x8xf32>, vector<8x8xf32>, vector<8x8xf32> -> vector<8x8xf32>
    %518 = vector.extract_strided_slice %494 {offsets = [0, 8], sizes = [8, 8], strides = [1, 1]} : vector<8x32xf32> to vector<8x8xf32>
    %cst_112 = arith.constant 0.353553385 : f32
    %519 = vector.broadcast %cst_112 : f32 to vector<8x8xf32>
    %520 = arith.mulf %518, %519 : vector<8x8xf32>
    %521 = vector.extract_strided_slice %495 {offsets = [0, 8], sizes = [8, 8], strides = [1, 1]} : vector<8x32xf32> to vector<8x8xf32>
    %522 = vector.extract_strided_slice %496 {offsets = [0, 8], sizes = [8, 8], strides = [1, 1]} : vector<8x32xf32> to vector<8x8xf32>
    %523 = tpu.transpose %521, [1, 0] : vector<8x8xf32> -> vector<8x8xf32>
    %cst_113 = arith.constant dense<0.000000e+00> : vector<8x8xf32>
    %524 = tpu.matmul %520, %523, %cst_113 {dimension_numbers = #tpu.dot_dimension_numbers<[1], [0], [0], [1], [0, 0, 1, 1], [], []>} : vector<8x8xf32>, vector<8x8xf32>, vector<8x8xf32> -> vector<8x8xf32>
    %cst_114 = arith.constant dense<0xFF800000> : vector<8xf32>
    %525 = vector.multi_reduction <maximumf>, %524, %cst_114 [1] : vector<8x8xf32> to vector<8xf32>
    %cst_115 = arith.constant 0xFF800000 : f32
    %526 = vector.broadcast %cst_115 : f32 to vector<8xf32>
    %527 = arith.maximumf %526, %525 : vector<8xf32>
    %528 = vector.shape_cast %527 : vector<8xf32> to vector<8x1xf32>
    %529 = vector.broadcast %528 : vector<8x1xf32> to vector<8x8xf32>
    %530 = arith.subf %524, %529 : vector<8x8xf32>
    %531 = math.exp %530 : vector<8x8xf32>
    %cst_116 = arith.constant dense<0.000000e+00> : vector<8xf32>
    %532 = vector.multi_reduction <add>, %531, %cst_116 [1] : vector<8x8xf32> to vector<8xf32>
    %533 = vector.shape_cast %532 : vector<8xf32> to vector<8x1xf32>
    %534 = vector.broadcast %533 : vector<8x1xf32> to vector<8x8xf32>
    %535 = arith.divf %531, %534 : vector<8x8xf32>
    %536 = arith.addf %516, %535 : vector<8x8xf32>
    %cst_117 = arith.constant dense<0.000000e+00> : vector<8x8xf32>
    %537 = tpu.matmul %535, %522, %cst_117 {dimension_numbers = #tpu.dot_dimension_numbers<[1], [0], [0], [1], [0, 0, 1, 1], [], []>} : vector<8x8xf32>, vector<8x8xf32>, vector<8x8xf32> -> vector<8x8xf32>
    %538 = vector.extract_strided_slice %494 {offsets = [0, 16], sizes = [8, 8], strides = [1, 1]} : vector<8x32xf32> to vector<8x8xf32>
    %cst_118 = arith.constant 0.353553385 : f32
    %539 = vector.broadcast %cst_118 : f32 to vector<8x8xf32>
    %540 = arith.mulf %538, %539 : vector<8x8xf32>
    %541 = vector.extract_strided_slice %495 {offsets = [0, 16], sizes = [8, 8], strides = [1, 1]} : vector<8x32xf32> to vector<8x8xf32>
    %542 = vector.extract_strided_slice %496 {offsets = [0, 16], sizes = [8, 8], strides = [1, 1]} : vector<8x32xf32> to vector<8x8xf32>
    %543 = tpu.transpose %541, [1, 0] : vector<8x8xf32> -> vector<8x8xf32>
    %cst_119 = arith.constant dense<0.000000e+00> : vector<8x8xf32>
    %544 = tpu.matmul %540, %543, %cst_119 {dimension_numbers = #tpu.dot_dimension_numbers<[1], [0], [0], [1], [0, 0, 1, 1], [], []>} : vector<8x8xf32>, vector<8x8xf32>, vector<8x8xf32> -> vector<8x8xf32>
    %cst_120 = arith.constant dense<0xFF800000> : vector<8xf32>
    %545 = vector.multi_reduction <maximumf>, %544, %cst_120 [1] : vector<8x8xf32> to vector<8xf32>
    %cst_121 = arith.constant 0xFF800000 : f32
    %546 = vector.broadcast %cst_121 : f32 to vector<8xf32>
    %547 = arith.maximumf %546, %545 : vector<8xf32>
    %548 = vector.shape_cast %547 : vector<8xf32> to vector<8x1xf32>
    %549 = vector.broadcast %548 : vector<8x1xf32> to vector<8x8xf32>
    %550 = arith.subf %544, %549 : vector<8x8xf32>
    %551 = math.exp %550 : vector<8x8xf32>
    %cst_122 = arith.constant dense<0.000000e+00> : vector<8xf32>
    %552 = vector.multi_reduction <add>, %551, %cst_122 [1] : vector<8x8xf32> to vector<8xf32>
    %553 = vector.shape_cast %552 : vector<8xf32> to vector<8x1xf32>
    %554 = vector.broadcast %553 : vector<8x1xf32> to vector<8x8xf32>
    %555 = arith.divf %551, %554 : vector<8x8xf32>
    %556 = arith.addf %536, %555 : vector<8x8xf32>
    %cst_123 = arith.constant dense<0.000000e+00> : vector<8x8xf32>
    %557 = tpu.matmul %555, %542, %cst_123 {dimension_numbers = #tpu.dot_dimension_numbers<[1], [0], [0], [1], [0, 0, 1, 1], [], []>} : vector<8x8xf32>, vector<8x8xf32>, vector<8x8xf32> -> vector<8x8xf32>
    %558 = vector.extract_strided_slice %494 {offsets = [0, 24], sizes = [8, 8], strides = [1, 1]} : vector<8x32xf32> to vector<8x8xf32>
    %cst_124 = arith.constant 0.353553385 : f32
    %559 = vector.broadcast %cst_124 : f32 to vector<8x8xf32>
    %560 = arith.mulf %558, %559 : vector<8x8xf32>
    %561 = vector.extract_strided_slice %495 {offsets = [0, 24], sizes = [8, 8], strides = [1, 1]} : vector<8x32xf32> to vector<8x8xf32>
    %562 = vector.extract_strided_slice %496 {offsets = [0, 24], sizes = [8, 8], strides = [1, 1]} : vector<8x32xf32> to vector<8x8xf32>
    %563 = tpu.transpose %561, [1, 0] : vector<8x8xf32> -> vector<8x8xf32>
    %cst_125 = arith.constant dense<0.000000e+00> : vector<8x8xf32>
    %564 = tpu.matmul %560, %563, %cst_125 {dimension_numbers = #tpu.dot_dimension_numbers<[1], [0], [0], [1], [0, 0, 1, 1], [], []>} : vector<8x8xf32>, vector<8x8xf32>, vector<8x8xf32> -> vector<8x8xf32>
    %cst_126 = arith.constant dense<0xFF800000> : vector<8xf32>
    %565 = vector.multi_reduction <maximumf>, %564, %cst_126 [1] : vector<8x8xf32> to vector<8xf32>
    %cst_127 = arith.constant 0xFF800000 : f32
    %566 = vector.broadcast %cst_127 : f32 to vector<8xf32>
    %567 = arith.maximumf %566, %565 : vector<8xf32>
    %568 = vector.shape_cast %567 : vector<8xf32> to vector<8x1xf32>
    %569 = vector.broadcast %568 : vector<8x1xf32> to vector<8x8xf32>
    %570 = arith.subf %564, %569 : vector<8x8xf32>
    %571 = math.exp %570 : vector<8x8xf32>
    %cst_128 = arith.constant dense<0.000000e+00> : vector<8xf32>
    %572 = vector.multi_reduction <add>, %571, %cst_128 [1] : vector<8x8xf32> to vector<8xf32>
    %573 = vector.shape_cast %572 : vector<8xf32> to vector<8x1xf32>
    %574 = vector.broadcast %573 : vector<8x1xf32> to vector<8x8xf32>
    %575 = arith.divf %571, %574 : vector<8x8xf32>
    %576 = arith.addf %556, %575 : vector<8x8xf32>
    %cst_129 = arith.constant dense<0.000000e+00> : vector<8x8xf32>
    %577 = tpu.matmul %575, %562, %cst_129 {dimension_numbers = #tpu.dot_dimension_numbers<[1], [0], [0], [1], [0, 0, 1, 1], [], []>} : vector<8x8xf32>, vector<8x8xf32>, vector<8x8xf32> -> vector<8x8xf32>
    %578 = tpu.concatenate %517, %537, %557, %577 in 1 : vector<8x8xf32>, vector<8x8xf32>, vector<8x8xf32>, vector<8x8xf32> -> vector<8x32xf32>
    %c0_130 = arith.constant 0 : index
    %c0_131 = arith.constant 0 : index
    %579 = vector.load %arg10[%c0_130, %c0_131] : memref<32x32xf32, #tpu.memory_space<vmem>>, vector<32x32xf32>
    %cst_132 = arith.constant dense<0.000000e+00> : vector<8x32xf32>
    %580 = tpu.matmul %578, %579, %cst_132 {dimension_numbers = #tpu.dot_dimension_numbers<[1], [0], [0], [1], [0, 0, 1, 1], [], []>} : vector<8x32xf32>, vector<32x32xf32>, vector<8x32xf32> -> vector<8x32xf32>
    %c0_133 = arith.constant 0 : index
    %c0_134 = arith.constant 0 : index
    %581 = vector.load %arg11[%c0_133, %c0_134] : memref<1x32xf32, #tpu.memory_space<vmem>>, vector<1x32xf32>
    %582 = vector.broadcast %581 : vector<1x32xf32> to vector<8x32xf32>
    %583 = arith.addf %580, %582 : vector<8x32xf32>
    %cst_135 = arith.constant 2.500000e-01 : f32
    %584 = vector.broadcast %cst_135 : f32 to vector<8x8xf32>
    %585 = arith.mulf %576, %584 : vector<8x8xf32>
    %c0_136 = arith.constant 0 : index
    %c0_137 = arith.constant 0 : index
    %c0_138 = arith.constant 0 : index
    %586 = vector.load %arg22[%c0_136, %c0_137, %c0_138] : memref<2x8x8xf32, #tpu.memory_space<vmem>>, vector<1x8x8xf32>
    %587 = vector.shape_cast %586 : vector<1x8x8xf32> to vector<8x8xf32>
    %588 = vector.shape_cast %585 : vector<8x8xf32> to vector<1x8x8xf32>
    tpu.vector_store %arg22[%c0_136, %c0_137, %c0_138], %588 {strides = array<i32>} : memref<2x8x8xf32, #tpu.memory_space<vmem>>, vector<1x8x8xf32>,
    %589 = vector.extract_strided_slice %583 {offsets = [7, 0], sizes = [1, 32], strides = [1, 1]} : vector<8x32xf32> to vector<1x32xf32>
    %c1_139 = arith.constant 1 : index
    %c0_140 = arith.constant 0 : index
    %c0_141 = arith.constant 0 : index
    %590 = vector.load %arg0[%c1_139, %c0_140, %c0_141] : memref<2x8x32xf32, #tpu.memory_space<vmem>>, vector<1x8x32xf32>
    %591 = vector.shape_cast %590 : vector<1x8x32xf32> to vector<8x32xf32>
    %592 = vector.extract_strided_slice %591 {offsets = [7, 0], sizes = [1, 32], strides = [1, 1]} : vector<8x32xf32> to vector<1x32xf32>
    %c0_142 = arith.constant 0 : index
    %c0_143 = arith.constant 0 : index
    %593 = vector.load %arg1[%c0_142, %c0_143] : memref<32x32xf32, #tpu.memory_space<vmem>>, vector<32x32xf32>
    %cst_144 = arith.constant dense<0.000000e+00> : vector<8x32xf32>
    %594 = tpu.matmul %591, %593, %cst_144 {dimension_numbers = #tpu.dot_dimension_numbers<[1], [0], [0], [1], [0, 0, 1, 1], [], []>} : vector<8x32xf32>, vector<32x32xf32>, vector<8x32xf32> -> vector<8x32xf32>
    %c0_145 = arith.constant 0 : index
    %c0_146 = arith.constant 0 : index
    %595 = vector.load %arg2[%c0_145, %c0_146] : memref<1x32xf32, #tpu.memory_space<vmem>>, vector<1x32xf32>
    %596 = vector.broadcast %595 : vector<1x32xf32> to vector<8x32xf32>
    %597 = arith.addf %594, %596 : vector<8x32xf32>
    %cst_147 = arith.constant 0.000000e+00 : f32
    %598 = vector.broadcast %cst_147 : f32 to vector<8x32xf32>
    %599 = arith.maximumf %597, %598 : vector<8x32xf32>
    %c0_148 = arith.constant 0 : index
    %c0_149 = arith.constant 0 : index
    %600 = vector.load %arg3[%c0_148, %c0_149] : memref<32x32xf32, #tpu.memory_space<vmem>>, vector<32x32xf32>
    %cst_150 = arith.constant dense<0.000000e+00> : vector<8x32xf32>
    %601 = tpu.matmul %599, %600, %cst_150 {dimension_numbers = #tpu.dot_dimension_numbers<[1], [0], [0], [1], [0, 0, 1, 1], [], []>} : vector<8x32xf32>, vector<32x32xf32>, vector<8x32xf32> -> vector<8x32xf32>
    %c0_151 = arith.constant 0 : index
    %c0_152 = arith.constant 0 : index
    %602 = vector.load %arg4[%c0_151, %c0_152] : memref<1x32xf32, #tpu.memory_space<vmem>>, vector<1x32xf32>
    %603 = vector.broadcast %602 : vector<1x32xf32> to vector<8x32xf32>
    %604 = arith.addf %601, %603 : vector<8x32xf32>
    %cst_153 = arith.constant 0.000000e+00 : f32
    %605 = vector.broadcast %cst_153 : f32 to vector<8x32xf32>
    %606 = arith.maximumf %604, %605 : vector<8x32xf32>
    %c0_154 = arith.constant 0 : index
    %c0_155 = arith.constant 0 : index
    %c0_156 = arith.constant 0 : index
    %607 = vector.load %arg5[%c0_154, %c0_155, %c0_156] : memref<2x32x128xf32, #tpu.memory_space<vmem>>, vector<1x32x128xf32>
    %608 = vector.shape_cast %607 : vector<1x32x128xf32> to vector<32x128xf32>
    %cst_157 = arith.constant dense<0.000000e+00> : vector<8x128xf32>
    %609 = tpu.matmul %606, %608, %cst_157 {dimension_numbers = #tpu.dot_dimension_numbers<[1], [0], [0], [1], [0, 0, 1, 1], [], []>} : vector<8x32xf32>, vector<32x128xf32>, vector<8x128xf32> -> vector<8x128xf32>
    %c0_158 = arith.constant 0 : index
    %c0_159 = arith.constant 0 : index
    %c0_160 = arith.constant 0 : index
    %610 = vector.load %arg7[%c0_158, %c0_159, %c0_160] : memref<2x1x128xf32, #tpu.memory_space<vmem>>, vector<1x1x128xf32>
    %611 = vector.shape_cast %610 : vector<1x1x128xf32> to vector<1x128xf32>
    %612 = vector.broadcast %611 : vector<1x128xf32> to vector<8x128xf32>
    %613 = arith.addf %609, %612 : vector<8x128xf32>
    %c0_161 = arith.constant 0 : index
    %c0_162 = arith.constant 0 : index
    %c0_163 = arith.constant 0 : index
    %614 = vector.load %arg6[%c0_161, %c0_162, %c0_163] : memref<2x32x128xf32, #tpu.memory_space<vmem>>, vector<1x32x128xf32>
    %615 = vector.shape_cast %614 : vector<1x32x128xf32> to vector<32x128xf32>
    %cst_164 = arith.constant 0.000000e+00 : f32
    %616 = vector.broadcast %cst_164 : f32 to vector<1x32xf32>
    %cst_165 = arith.constant 0.000000e+00 : f32
    %617 = vector.broadcast %cst_165 : f32 to vector<1x32xf32>
    %618 = vector.extract_strided_slice %613 {offsets = [0, 0], sizes = [1, 128], strides = [1, 1]} : vector<8x128xf32> to vector<1x128xf32>
    %cst_166 = arith.constant dense<0.000000e+00> : vector<1x128xf32>
    %619 = tpu.matmul %616, %615, %cst_166 {dimension_numbers = #tpu.dot_dimension_numbers<[1], [0], [0], [1], [0, 0, 1, 1], [], []>} : vector<1x32xf32>, vector<32x128xf32>, vector<1x128xf32> -> vector<1x128xf32>
    %620 = arith.addf %618, %619 : vector<1x128xf32>
    %621 = vector.extract_strided_slice %620 {offsets = [0, 0], sizes = [1, 32], strides = [1, 1]} : vector<1x128xf32> to vector<1x32xf32>
    %622 = arith.negf %621 : vector<1x32xf32>
    %623 = math.exp %622 : vector<1x32xf32>
    %cst_167 = arith.constant 1.000000e+00 : f32
    %624 = vector.broadcast %cst_167 : f32 to vector<1x32xf32>
    %625 = arith.addf %624, %623 : vector<1x32xf32>
    %626 = arith.divf %624, %625 : vector<1x32xf32>
    %627 = vector.extract_strided_slice %620 {offsets = [0, 32], sizes = [1, 32], strides = [1, 1]} : vector<1x128xf32> to vector<1x32xf32>
    %628 = arith.negf %627 : vector<1x32xf32>
    %629 = math.exp %628 : vector<1x32xf32>
    %cst_168 = arith.constant 1.000000e+00 : f32
    %630 = vector.broadcast %cst_168 : f32 to vector<1x32xf32>
    %631 = arith.addf %630, %629 : vector<1x32xf32>
    %632 = arith.divf %630, %631 : vector<1x32xf32>
    %633 = vector.extract_strided_slice %620 {offsets = [0, 64], sizes = [1, 32], strides = [1, 1]} : vector<1x128xf32> to vector<1x32xf32>
    %634 = math.tanh %633 : vector<1x32xf32>
    %635 = vector.extract_strided_slice %620 {offsets = [0, 96], sizes = [1, 32], strides = [1, 1]} : vector<1x128xf32> to vector<1x32xf32>
    %636 = arith.negf %635 : vector<1x32xf32>
    %637 = math.exp %636 : vector<1x32xf32>
    %cst_169 = arith.constant 1.000000e+00 : f32
    %638 = vector.broadcast %cst_169 : f32 to vector<1x32xf32>
    %639 = arith.addf %638, %637 : vector<1x32xf32>
    %640 = arith.divf %638, %639 : vector<1x32xf32>
    %641 = arith.mulf %632, %617 : vector<1x32xf32>
    %642 = arith.mulf %626, %634 : vector<1x32xf32>
    %643 = arith.addf %641, %642 : vector<1x32xf32>
    %644 = math.tanh %643 : vector<1x32xf32>
    %645 = arith.mulf %640, %644 : vector<1x32xf32>
    %646 = vector.extract_strided_slice %613 {offsets = [1, 0], sizes = [1, 128], strides = [1, 1]} : vector<8x128xf32> to vector<1x128xf32>
    %cst_170 = arith.constant dense<0.000000e+00> : vector<1x128xf32>
    %647 = tpu.matmul %645, %615, %cst_170 {dimension_numbers = #tpu.dot_dimension_numbers<[1], [0], [0], [1], [0, 0, 1, 1], [], []>} : vector<1x32xf32>, vector<32x128xf32>, vector<1x128xf32> -> vector<1x128xf32>
    %648 = arith.addf %646, %647 : vector<1x128xf32>
    %649 = vector.extract_strided_slice %648 {offsets = [0, 0], sizes = [1, 32], strides = [1, 1]} : vector<1x128xf32> to vector<1x32xf32>
    %650 = arith.negf %649 : vector<1x32xf32>
    %651 = math.exp %650 : vector<1x32xf32>
    %cst_171 = arith.constant 1.000000e+00 : f32
    %652 = vector.broadcast %cst_171 : f32 to vector<1x32xf32>
    %653 = arith.addf %652, %651 : vector<1x32xf32>
    %654 = arith.divf %652, %653 : vector<1x32xf32>
    %655 = vector.extract_strided_slice %648 {offsets = [0, 32], sizes = [1, 32], strides = [1, 1]} : vector<1x128xf32> to vector<1x32xf32>
    %656 = arith.negf %655 : vector<1x32xf32>
    %657 = math.exp %656 : vector<1x32xf32>
    %cst_172 = arith.constant 1.000000e+00 : f32
    %658 = vector.broadcast %cst_172 : f32 to vector<1x32xf32>
    %659 = arith.addf %658, %657 : vector<1x32xf32>
    %660 = arith.divf %658, %659 : vector<1x32xf32>
    %661 = vector.extract_strided_slice %648 {offsets = [0, 64], sizes = [1, 32], strides = [1, 1]} : vector<1x128xf32> to vector<1x32xf32>
    %662 = math.tanh %661 : vector<1x32xf32>
    %663 = vector.extract_strided_slice %648 {offsets = [0, 96], sizes = [1, 32], strides = [1, 1]} : vector<1x128xf32> to vector<1x32xf32>
    %664 = arith.negf %663 : vector<1x32xf32>
    %665 = math.exp %664 : vector<1x32xf32>
    %cst_173 = arith.constant 1.000000e+00 : f32
    %666 = vector.broadcast %cst_173 : f32 to vector<1x32xf32>
    %667 = arith.addf %666, %665 : vector<1x32xf32>
    %668 = arith.divf %666, %667 : vector<1x32xf32>
    %669 = arith.mulf %660, %643 : vector<1x32xf32>
    %670 = arith.mulf %654, %662 : vector<1x32xf32>
    %671 = arith.addf %669, %670 : vector<1x32xf32>
    %672 = math.tanh %671 : vector<1x32xf32>
    %673 = arith.mulf %668, %672 : vector<1x32xf32>
    %674 = vector.extract_strided_slice %613 {offsets = [2, 0], sizes = [1, 128], strides = [1, 1]} : vector<8x128xf32> to vector<1x128xf32>
    %cst_174 = arith.constant dense<0.000000e+00> : vector<1x128xf32>
    %675 = tpu.matmul %673, %615, %cst_174 {dimension_numbers = #tpu.dot_dimension_numbers<[1], [0], [0], [1], [0, 0, 1, 1], [], []>} : vector<1x32xf32>, vector<32x128xf32>, vector<1x128xf32> -> vector<1x128xf32>
    %676 = arith.addf %674, %675 : vector<1x128xf32>
    %677 = vector.extract_strided_slice %676 {offsets = [0, 0], sizes = [1, 32], strides = [1, 1]} : vector<1x128xf32> to vector<1x32xf32>
    %678 = arith.negf %677 : vector<1x32xf32>
    %679 = math.exp %678 : vector<1x32xf32>
    %cst_175 = arith.constant 1.000000e+00 : f32
    %680 = vector.broadcast %cst_175 : f32 to vector<1x32xf32>
    %681 = arith.addf %680, %679 : vector<1x32xf32>
    %682 = arith.divf %680, %681 : vector<1x32xf32>
    %683 = vector.extract_strided_slice %676 {offsets = [0, 32], sizes = [1, 32], strides = [1, 1]} : vector<1x128xf32> to vector<1x32xf32>
    %684 = arith.negf %683 : vector<1x32xf32>
    %685 = math.exp %684 : vector<1x32xf32>
    %cst_176 = arith.constant 1.000000e+00 : f32
    %686 = vector.broadcast %cst_176 : f32 to vector<1x32xf32>
    %687 = arith.addf %686, %685 : vector<1x32xf32>
    %688 = arith.divf %686, %687 : vector<1x32xf32>
    %689 = vector.extract_strided_slice %676 {offsets = [0, 64], sizes = [1, 32], strides = [1, 1]} : vector<1x128xf32> to vector<1x32xf32>
    %690 = math.tanh %689 : vector<1x32xf32>
    %691 = vector.extract_strided_slice %676 {offsets = [0, 96], sizes = [1, 32], strides = [1, 1]} : vector<1x128xf32> to vector<1x32xf32>
    %692 = arith.negf %691 : vector<1x32xf32>
    %693 = math.exp %692 : vector<1x32xf32>
    %cst_177 = arith.constant 1.000000e+00 : f32
    %694 = vector.broadcast %cst_177 : f32 to vector<1x32xf32>
    %695 = arith.addf %694, %693 : vector<1x32xf32>
    %696 = arith.divf %694, %695 : vector<1x32xf32>
    %697 = arith.mulf %688, %671 : vector<1x32xf32>
    %698 = arith.mulf %682, %690 : vector<1x32xf32>
    %699 = arith.addf %697, %698 : vector<1x32xf32>
    %700 = math.tanh %699 : vector<1x32xf32>
    %701 = arith.mulf %696, %700 : vector<1x32xf32>
    %702 = vector.extract_strided_slice %613 {offsets = [3, 0], sizes = [1, 128], strides = [1, 1]} : vector<8x128xf32> to vector<1x128xf32>
    %cst_178 = arith.constant dense<0.000000e+00> : vector<1x128xf32>
    %703 = tpu.matmul %701, %615, %cst_178 {dimension_numbers = #tpu.dot_dimension_numbers<[1], [0], [0], [1], [0, 0, 1, 1], [], []>} : vector<1x32xf32>, vector<32x128xf32>, vector<1x128xf32> -> vector<1x128xf32>
    %704 = arith.addf %702, %703 : vector<1x128xf32>
    %705 = vector.extract_strided_slice %704 {offsets = [0, 0], sizes = [1, 32], strides = [1, 1]} : vector<1x128xf32> to vector<1x32xf32>
    %706 = arith.negf %705 : vector<1x32xf32>
    %707 = math.exp %706 : vector<1x32xf32>
    %cst_179 = arith.constant 1.000000e+00 : f32
    %708 = vector.broadcast %cst_179 : f32 to vector<1x32xf32>
    %709 = arith.addf %708, %707 : vector<1x32xf32>
    %710 = arith.divf %708, %709 : vector<1x32xf32>
    %711 = vector.extract_strided_slice %704 {offsets = [0, 32], sizes = [1, 32], strides = [1, 1]} : vector<1x128xf32> to vector<1x32xf32>
    %712 = arith.negf %711 : vector<1x32xf32>
    %713 = math.exp %712 : vector<1x32xf32>
    %cst_180 = arith.constant 1.000000e+00 : f32
    %714 = vector.broadcast %cst_180 : f32 to vector<1x32xf32>
    %715 = arith.addf %714, %713 : vector<1x32xf32>
    %716 = arith.divf %714, %715 : vector<1x32xf32>
    %717 = vector.extract_strided_slice %704 {offsets = [0, 64], sizes = [1, 32], strides = [1, 1]} : vector<1x128xf32> to vector<1x32xf32>
    %718 = math.tanh %717 : vector<1x32xf32>
    %719 = vector.extract_strided_slice %704 {offsets = [0, 96], sizes = [1, 32], strides = [1, 1]} : vector<1x128xf32> to vector<1x32xf32>
    %720 = arith.negf %719 : vector<1x32xf32>
    %721 = math.exp %720 : vector<1x32xf32>
    %cst_181 = arith.constant 1.000000e+00 : f32
    %722 = vector.broadcast %cst_181 : f32 to vector<1x32xf32>
    %723 = arith.addf %722, %721 : vector<1x32xf32>
    %724 = arith.divf %722, %723 : vector<1x32xf32>
    %725 = arith.mulf %716, %699 : vector<1x32xf32>
    %726 = arith.mulf %710, %718 : vector<1x32xf32>
    %727 = arith.addf %725, %726 : vector<1x32xf32>
    %728 = math.tanh %727 : vector<1x32xf32>
    %729 = arith.mulf %724, %728 : vector<1x32xf32>
    %730 = vector.extract_strided_slice %613 {offsets = [4, 0], sizes = [1, 128], strides = [1, 1]} : vector<8x128xf32> to vector<1x128xf32>
    %cst_182 = arith.constant dense<0.000000e+00> : vector<1x128xf32>
    %731 = tpu.matmul %729, %615, %cst_182 {dimension_numbers = #tpu.dot_dimension_numbers<[1], [0], [0], [1], [0, 0, 1, 1], [], []>} : vector<1x32xf32>, vector<32x128xf32>, vector<1x128xf32> -> vector<1x128xf32>
    %732 = arith.addf %730, %731 : vector<1x128xf32>
    %733 = vector.extract_strided_slice %732 {offsets = [0, 0], sizes = [1, 32], strides = [1, 1]} : vector<1x128xf32> to vector<1x32xf32>
    %734 = arith.negf %733 : vector<1x32xf32>
    %735 = math.exp %734 : vector<1x32xf32>
    %cst_183 = arith.constant 1.000000e+00 : f32
    %736 = vector.broadcast %cst_183 : f32 to vector<1x32xf32>
    %737 = arith.addf %736, %735 : vector<1x32xf32>
    %738 = arith.divf %736, %737 : vector<1x32xf32>
    %739 = vector.extract_strided_slice %732 {offsets = [0, 32], sizes = [1, 32], strides = [1, 1]} : vector<1x128xf32> to vector<1x32xf32>
    %740 = arith.negf %739 : vector<1x32xf32>
    %741 = math.exp %740 : vector<1x32xf32>
    %cst_184 = arith.constant 1.000000e+00 : f32
    %742 = vector.broadcast %cst_184 : f32 to vector<1x32xf32>
    %743 = arith.addf %742, %741 : vector<1x32xf32>
    %744 = arith.divf %742, %743 : vector<1x32xf32>
    %745 = vector.extract_strided_slice %732 {offsets = [0, 64], sizes = [1, 32], strides = [1, 1]} : vector<1x128xf32> to vector<1x32xf32>
    %746 = math.tanh %745 : vector<1x32xf32>
    %747 = vector.extract_strided_slice %732 {offsets = [0, 96], sizes = [1, 32], strides = [1, 1]} : vector<1x128xf32> to vector<1x32xf32>
    %748 = arith.negf %747 : vector<1x32xf32>
    %749 = math.exp %748 : vector<1x32xf32>
    %cst_185 = arith.constant 1.000000e+00 : f32
    %750 = vector.broadcast %cst_185 : f32 to vector<1x32xf32>
    %751 = arith.addf %750, %749 : vector<1x32xf32>
    %752 = arith.divf %750, %751 : vector<1x32xf32>
    %753 = arith.mulf %744, %727 : vector<1x32xf32>
    %754 = arith.mulf %738, %746 : vector<1x32xf32>
    %755 = arith.addf %753, %754 : vector<1x32xf32>
    %756 = math.tanh %755 : vector<1x32xf32>
    %757 = arith.mulf %752, %756 : vector<1x32xf32>
    %758 = vector.extract_strided_slice %613 {offsets = [5, 0], sizes = [1, 128], strides = [1, 1]} : vector<8x128xf32> to vector<1x128xf32>
    %cst_186 = arith.constant dense<0.000000e+00> : vector<1x128xf32>
    %759 = tpu.matmul %757, %615, %cst_186 {dimension_numbers = #tpu.dot_dimension_numbers<[1], [0], [0], [1], [0, 0, 1, 1], [], []>} : vector<1x32xf32>, vector<32x128xf32>, vector<1x128xf32> -> vector<1x128xf32>
    %760 = arith.addf %758, %759 : vector<1x128xf32>
    %761 = vector.extract_strided_slice %760 {offsets = [0, 0], sizes = [1, 32], strides = [1, 1]} : vector<1x128xf32> to vector<1x32xf32>
    %762 = arith.negf %761 : vector<1x32xf32>
    %763 = math.exp %762 : vector<1x32xf32>
    %cst_187 = arith.constant 1.000000e+00 : f32
    %764 = vector.broadcast %cst_187 : f32 to vector<1x32xf32>
    %765 = arith.addf %764, %763 : vector<1x32xf32>
    %766 = arith.divf %764, %765 : vector<1x32xf32>
    %767 = vector.extract_strided_slice %760 {offsets = [0, 32], sizes = [1, 32], strides = [1, 1]} : vector<1x128xf32> to vector<1x32xf32>
    %768 = arith.negf %767 : vector<1x32xf32>
    %769 = math.exp %768 : vector<1x32xf32>
    %cst_188 = arith.constant 1.000000e+00 : f32
    %770 = vector.broadcast %cst_188 : f32 to vector<1x32xf32>
    %771 = arith.addf %770, %769 : vector<1x32xf32>
    %772 = arith.divf %770, %771 : vector<1x32xf32>
    %773 = vector.extract_strided_slice %760 {offsets = [0, 64], sizes = [1, 32], strides = [1, 1]} : vector<1x128xf32> to vector<1x32xf32>
    %774 = math.tanh %773 : vector<1x32xf32>
    %775 = vector.extract_strided_slice %760 {offsets = [0, 96], sizes = [1, 32], strides = [1, 1]} : vector<1x128xf32> to vector<1x32xf32>
    %776 = arith.negf %775 : vector<1x32xf32>
    %777 = math.exp %776 : vector<1x32xf32>
    %cst_189 = arith.constant 1.000000e+00 : f32
    %778 = vector.broadcast %cst_189 : f32 to vector<1x32xf32>
    %779 = arith.addf %778, %777 : vector<1x32xf32>
    %780 = arith.divf %778, %779 : vector<1x32xf32>
    %781 = arith.mulf %772, %755 : vector<1x32xf32>
    %782 = arith.mulf %766, %774 : vector<1x32xf32>
    %783 = arith.addf %781, %782 : vector<1x32xf32>
    %784 = math.tanh %783 : vector<1x32xf32>
    %785 = arith.mulf %780, %784 : vector<1x32xf32>
    %786 = vector.extract_strided_slice %613 {offsets = [6, 0], sizes = [1, 128], strides = [1, 1]} : vector<8x128xf32> to vector<1x128xf32>
    %cst_190 = arith.constant dense<0.000000e+00> : vector<1x128xf32>
    %787 = tpu.matmul %785, %615, %cst_190 {dimension_numbers = #tpu.dot_dimension_numbers<[1], [0], [0], [1], [0, 0, 1, 1], [], []>} : vector<1x32xf32>, vector<32x128xf32>, vector<1x128xf32> -> vector<1x128xf32>
    %788 = arith.addf %786, %787 : vector<1x128xf32>
    %789 = vector.extract_strided_slice %788 {offsets = [0, 0], sizes = [1, 32], strides = [1, 1]} : vector<1x128xf32> to vector<1x32xf32>
    %790 = arith.negf %789 : vector<1x32xf32>
    %791 = math.exp %790 : vector<1x32xf32>
    %cst_191 = arith.constant 1.000000e+00 : f32
    %792 = vector.broadcast %cst_191 : f32 to vector<1x32xf32>
    %793 = arith.addf %792, %791 : vector<1x32xf32>
    %794 = arith.divf %792, %793 : vector<1x32xf32>
    %795 = vector.extract_strided_slice %788 {offsets = [0, 32], sizes = [1, 32], strides = [1, 1]} : vector<1x128xf32> to vector<1x32xf32>
    %796 = arith.negf %795 : vector<1x32xf32>
    %797 = math.exp %796 : vector<1x32xf32>
    %cst_192 = arith.constant 1.000000e+00 : f32
    %798 = vector.broadcast %cst_192 : f32 to vector<1x32xf32>
    %799 = arith.addf %798, %797 : vector<1x32xf32>
    %800 = arith.divf %798, %799 : vector<1x32xf32>
    %801 = vector.extract_strided_slice %788 {offsets = [0, 64], sizes = [1, 32], strides = [1, 1]} : vector<1x128xf32> to vector<1x32xf32>
    %802 = math.tanh %801 : vector<1x32xf32>
    %803 = vector.extract_strided_slice %788 {offsets = [0, 96], sizes = [1, 32], strides = [1, 1]} : vector<1x128xf32> to vector<1x32xf32>
    %804 = arith.negf %803 : vector<1x32xf32>
    %805 = math.exp %804 : vector<1x32xf32>
    %cst_193 = arith.constant 1.000000e+00 : f32
    %806 = vector.broadcast %cst_193 : f32 to vector<1x32xf32>
    %807 = arith.addf %806, %805 : vector<1x32xf32>
    %808 = arith.divf %806, %807 : vector<1x32xf32>
    %809 = arith.mulf %800, %783 : vector<1x32xf32>
    %810 = arith.mulf %794, %802 : vector<1x32xf32>
    %811 = arith.addf %809, %810 : vector<1x32xf32>
    %812 = math.tanh %811 : vector<1x32xf32>
    %813 = arith.mulf %808, %812 : vector<1x32xf32>
    %814 = vector.extract_strided_slice %613 {offsets = [7, 0], sizes = [1, 128], strides = [1, 1]} : vector<8x128xf32> to vector<1x128xf32>
    %cst_194 = arith.constant dense<0.000000e+00> : vector<1x128xf32>
    %815 = tpu.matmul %813, %615, %cst_194 {dimension_numbers = #tpu.dot_dimension_numbers<[1], [0], [0], [1], [0, 0, 1, 1], [], []>} : vector<1x32xf32>, vector<32x128xf32>, vector<1x128xf32> -> vector<1x128xf32>
    %816 = arith.addf %814, %815 : vector<1x128xf32>
    %817 = vector.extract_strided_slice %816 {offsets = [0, 0], sizes = [1, 32], strides = [1, 1]} : vector<1x128xf32> to vector<1x32xf32>
    %818 = arith.negf %817 : vector<1x32xf32>
    %819 = math.exp %818 : vector<1x32xf32>
    %cst_195 = arith.constant 1.000000e+00 : f32
    %820 = vector.broadcast %cst_195 : f32 to vector<1x32xf32>
    %821 = arith.addf %820, %819 : vector<1x32xf32>
    %822 = arith.divf %820, %821 : vector<1x32xf32>
    %823 = vector.extract_strided_slice %816 {offsets = [0, 32], sizes = [1, 32], strides = [1, 1]} : vector<1x128xf32> to vector<1x32xf32>
    %824 = arith.negf %823 : vector<1x32xf32>
    %825 = math.exp %824 : vector<1x32xf32>
    %cst_196 = arith.constant 1.000000e+00 : f32
    %826 = vector.broadcast %cst_196 : f32 to vector<1x32xf32>
    %827 = arith.addf %826, %825 : vector<1x32xf32>
    %828 = arith.divf %826, %827 : vector<1x32xf32>
    %829 = vector.extract_strided_slice %816 {offsets = [0, 64], sizes = [1, 32], strides = [1, 1]} : vector<1x128xf32> to vector<1x32xf32>
    %830 = math.tanh %829 : vector<1x32xf32>
    %831 = vector.extract_strided_slice %816 {offsets = [0, 96], sizes = [1, 32], strides = [1, 1]} : vector<1x128xf32> to vector<1x32xf32>
    %832 = arith.negf %831 : vector<1x32xf32>
    %833 = math.exp %832 : vector<1x32xf32>
    %cst_197 = arith.constant 1.000000e+00 : f32
    %834 = vector.broadcast %cst_197 : f32 to vector<1x32xf32>
    %835 = arith.addf %834, %833 : vector<1x32xf32>
    %836 = arith.divf %834, %835 : vector<1x32xf32>
    %837 = arith.mulf %828, %811 : vector<1x32xf32>
    %838 = arith.mulf %822, %830 : vector<1x32xf32>
    %839 = arith.addf %837, %838 : vector<1x32xf32>
    %840 = math.tanh %839 : vector<1x32xf32>
    %841 = arith.mulf %836, %840 : vector<1x32xf32>
    %842 = tpu.concatenate %645, %673, %701, %729, %757, %785, %813, %841 in 0 : vector<1x32xf32>, vector<1x32xf32>, vector<1x32xf32>, vector<1x32xf32>, vector<1x32xf32>, vector<1x32xf32>, vector<1x32xf32>, vector<1x32xf32> -> vector<8x32xf32>
    %c1_198 = arith.constant 1 : index
    %c0_199 = arith.constant 0 : index
    %c0_200 = arith.constant 0 : index
    %843 = vector.load %arg5[%c1_198, %c0_199, %c0_200] : memref<2x32x128xf32, #tpu.memory_space<vmem>>, vector<1x32x128xf32>
    %844 = vector.shape_cast %843 : vector<1x32x128xf32> to vector<32x128xf32>
    %cst_201 = arith.constant dense<0.000000e+00> : vector<8x128xf32>
    %845 = tpu.matmul %842, %844, %cst_201 {dimension_numbers = #tpu.dot_dimension_numbers<[1], [0], [0], [1], [0, 0, 1, 1], [], []>} : vector<8x32xf32>, vector<32x128xf32>, vector<8x128xf32> -> vector<8x128xf32>
    %c1_202 = arith.constant 1 : index
    %c0_203 = arith.constant 0 : index
    %c0_204 = arith.constant 0 : index
    %846 = vector.load %arg7[%c1_202, %c0_203, %c0_204] : memref<2x1x128xf32, #tpu.memory_space<vmem>>, vector<1x1x128xf32>
    %847 = vector.shape_cast %846 : vector<1x1x128xf32> to vector<1x128xf32>
    %848 = vector.broadcast %847 : vector<1x128xf32> to vector<8x128xf32>
    %849 = arith.addf %845, %848 : vector<8x128xf32>
    %c1_205 = arith.constant 1 : index
    %c0_206 = arith.constant 0 : index
    %c0_207 = arith.constant 0 : index
    %850 = vector.load %arg6[%c1_205, %c0_206, %c0_207] : memref<2x32x128xf32, #tpu.memory_space<vmem>>, vector<1x32x128xf32>
    %851 = vector.shape_cast %850 : vector<1x32x128xf32> to vector<32x128xf32>
    %cst_208 = arith.constant 0.000000e+00 : f32
    %852 = vector.broadcast %cst_208 : f32 to vector<1x32xf32>
    %cst_209 = arith.constant 0.000000e+00 : f32
    %853 = vector.broadcast %cst_209 : f32 to vector<1x32xf32>
    %854 = vector.extract_strided_slice %849 {offsets = [0, 0], sizes = [1, 128], strides = [1, 1]} : vector<8x128xf32> to vector<1x128xf32>
    %cst_210 = arith.constant dense<0.000000e+00> : vector<1x128xf32>
    %855 = tpu.matmul %852, %851, %cst_210 {dimension_numbers = #tpu.dot_dimension_numbers<[1], [0], [0], [1], [0, 0, 1, 1], [], []>} : vector<1x32xf32>, vector<32x128xf32>, vector<1x128xf32> -> vector<1x128xf32>
    %856 = arith.addf %854, %855 : vector<1x128xf32>
    %857 = vector.extract_strided_slice %856 {offsets = [0, 0], sizes = [1, 32], strides = [1, 1]} : vector<1x128xf32> to vector<1x32xf32>
    %858 = arith.negf %857 : vector<1x32xf32>
    %859 = math.exp %858 : vector<1x32xf32>
    %cst_211 = arith.constant 1.000000e+00 : f32
    %860 = vector.broadcast %cst_211 : f32 to vector<1x32xf32>
    %861 = arith.addf %860, %859 : vector<1x32xf32>
    %862 = arith.divf %860, %861 : vector<1x32xf32>
    %863 = vector.extract_strided_slice %856 {offsets = [0, 32], sizes = [1, 32], strides = [1, 1]} : vector<1x128xf32> to vector<1x32xf32>
    %864 = arith.negf %863 : vector<1x32xf32>
    %865 = math.exp %864 : vector<1x32xf32>
    %cst_212 = arith.constant 1.000000e+00 : f32
    %866 = vector.broadcast %cst_212 : f32 to vector<1x32xf32>
    %867 = arith.addf %866, %865 : vector<1x32xf32>
    %868 = arith.divf %866, %867 : vector<1x32xf32>
    %869 = vector.extract_strided_slice %856 {offsets = [0, 64], sizes = [1, 32], strides = [1, 1]} : vector<1x128xf32> to vector<1x32xf32>
    %870 = math.tanh %869 : vector<1x32xf32>
    %871 = vector.extract_strided_slice %856 {offsets = [0, 96], sizes = [1, 32], strides = [1, 1]} : vector<1x128xf32> to vector<1x32xf32>
    %872 = arith.negf %871 : vector<1x32xf32>
    %873 = math.exp %872 : vector<1x32xf32>
    %cst_213 = arith.constant 1.000000e+00 : f32
    %874 = vector.broadcast %cst_213 : f32 to vector<1x32xf32>
    %875 = arith.addf %874, %873 : vector<1x32xf32>
    %876 = arith.divf %874, %875 : vector<1x32xf32>
    %877 = arith.mulf %868, %853 : vector<1x32xf32>
    %878 = arith.mulf %862, %870 : vector<1x32xf32>
    %879 = arith.addf %877, %878 : vector<1x32xf32>
    %880 = math.tanh %879 : vector<1x32xf32>
    %881 = arith.mulf %876, %880 : vector<1x32xf32>
    %882 = vector.extract_strided_slice %849 {offsets = [1, 0], sizes = [1, 128], strides = [1, 1]} : vector<8x128xf32> to vector<1x128xf32>
    %cst_214 = arith.constant dense<0.000000e+00> : vector<1x128xf32>
    %883 = tpu.matmul %881, %851, %cst_214 {dimension_numbers = #tpu.dot_dimension_numbers<[1], [0], [0], [1], [0, 0, 1, 1], [], []>} : vector<1x32xf32>, vector<32x128xf32>, vector<1x128xf32> -> vector<1x128xf32>
    %884 = arith.addf %882, %883 : vector<1x128xf32>
    %885 = vector.extract_strided_slice %884 {offsets = [0, 0], sizes = [1, 32], strides = [1, 1]} : vector<1x128xf32> to vector<1x32xf32>
    %886 = arith.negf %885 : vector<1x32xf32>
    %887 = math.exp %886 : vector<1x32xf32>
    %cst_215 = arith.constant 1.000000e+00 : f32
    %888 = vector.broadcast %cst_215 : f32 to vector<1x32xf32>
    %889 = arith.addf %888, %887 : vector<1x32xf32>
    %890 = arith.divf %888, %889 : vector<1x32xf32>
    %891 = vector.extract_strided_slice %884 {offsets = [0, 32], sizes = [1, 32], strides = [1, 1]} : vector<1x128xf32> to vector<1x32xf32>
    %892 = arith.negf %891 : vector<1x32xf32>
    %893 = math.exp %892 : vector<1x32xf32>
    %cst_216 = arith.constant 1.000000e+00 : f32
    %894 = vector.broadcast %cst_216 : f32 to vector<1x32xf32>
    %895 = arith.addf %894, %893 : vector<1x32xf32>
    %896 = arith.divf %894, %895 : vector<1x32xf32>
    %897 = vector.extract_strided_slice %884 {offsets = [0, 64], sizes = [1, 32], strides = [1, 1]} : vector<1x128xf32> to vector<1x32xf32>
    %898 = math.tanh %897 : vector<1x32xf32>
    %899 = vector.extract_strided_slice %884 {offsets = [0, 96], sizes = [1, 32], strides = [1, 1]} : vector<1x128xf32> to vector<1x32xf32>
    %900 = arith.negf %899 : vector<1x32xf32>
    %901 = math.exp %900 : vector<1x32xf32>
    %cst_217 = arith.constant 1.000000e+00 : f32
    %902 = vector.broadcast %cst_217 : f32 to vector<1x32xf32>
    %903 = arith.addf %902, %901 : vector<1x32xf32>
    %904 = arith.divf %902, %903 : vector<1x32xf32>
    %905 = arith.mulf %896, %879 : vector<1x32xf32>
    %906 = arith.mulf %890, %898 : vector<1x32xf32>
    %907 = arith.addf %905, %906 : vector<1x32xf32>
    %908 = math.tanh %907 : vector<1x32xf32>
    %909 = arith.mulf %904, %908 : vector<1x32xf32>
    %910 = vector.extract_strided_slice %849 {offsets = [2, 0], sizes = [1, 128], strides = [1, 1]} : vector<8x128xf32> to vector<1x128xf32>
    %cst_218 = arith.constant dense<0.000000e+00> : vector<1x128xf32>
    %911 = tpu.matmul %909, %851, %cst_218 {dimension_numbers = #tpu.dot_dimension_numbers<[1], [0], [0], [1], [0, 0, 1, 1], [], []>} : vector<1x32xf32>, vector<32x128xf32>, vector<1x128xf32> -> vector<1x128xf32>
    %912 = arith.addf %910, %911 : vector<1x128xf32>
    %913 = vector.extract_strided_slice %912 {offsets = [0, 0], sizes = [1, 32], strides = [1, 1]} : vector<1x128xf32> to vector<1x32xf32>
    %914 = arith.negf %913 : vector<1x32xf32>
    %915 = math.exp %914 : vector<1x32xf32>
    %cst_219 = arith.constant 1.000000e+00 : f32
    %916 = vector.broadcast %cst_219 : f32 to vector<1x32xf32>
    %917 = arith.addf %916, %915 : vector<1x32xf32>
    %918 = arith.divf %916, %917 : vector<1x32xf32>
    %919 = vector.extract_strided_slice %912 {offsets = [0, 32], sizes = [1, 32], strides = [1, 1]} : vector<1x128xf32> to vector<1x32xf32>
    %920 = arith.negf %919 : vector<1x32xf32>
    %921 = math.exp %920 : vector<1x32xf32>
    %cst_220 = arith.constant 1.000000e+00 : f32
    %922 = vector.broadcast %cst_220 : f32 to vector<1x32xf32>
    %923 = arith.addf %922, %921 : vector<1x32xf32>
    %924 = arith.divf %922, %923 : vector<1x32xf32>
    %925 = vector.extract_strided_slice %912 {offsets = [0, 64], sizes = [1, 32], strides = [1, 1]} : vector<1x128xf32> to vector<1x32xf32>
    %926 = math.tanh %925 : vector<1x32xf32>
    %927 = vector.extract_strided_slice %912 {offsets = [0, 96], sizes = [1, 32], strides = [1, 1]} : vector<1x128xf32> to vector<1x32xf32>
    %928 = arith.negf %927 : vector<1x32xf32>
    %929 = math.exp %928 : vector<1x32xf32>
    %cst_221 = arith.constant 1.000000e+00 : f32
    %930 = vector.broadcast %cst_221 : f32 to vector<1x32xf32>
    %931 = arith.addf %930, %929 : vector<1x32xf32>
    %932 = arith.divf %930, %931 : vector<1x32xf32>
    %933 = arith.mulf %924, %907 : vector<1x32xf32>
    %934 = arith.mulf %918, %926 : vector<1x32xf32>
    %935 = arith.addf %933, %934 : vector<1x32xf32>
    %936 = math.tanh %935 : vector<1x32xf32>
    %937 = arith.mulf %932, %936 : vector<1x32xf32>
    %938 = vector.extract_strided_slice %849 {offsets = [3, 0], sizes = [1, 128], strides = [1, 1]} : vector<8x128xf32> to vector<1x128xf32>
    %cst_222 = arith.constant dense<0.000000e+00> : vector<1x128xf32>
    %939 = tpu.matmul %937, %851, %cst_222 {dimension_numbers = #tpu.dot_dimension_numbers<[1], [0], [0], [1], [0, 0, 1, 1], [], []>} : vector<1x32xf32>, vector<32x128xf32>, vector<1x128xf32> -> vector<1x128xf32>
    %940 = arith.addf %938, %939 : vector<1x128xf32>
    %941 = vector.extract_strided_slice %940 {offsets = [0, 0], sizes = [1, 32], strides = [1, 1]} : vector<1x128xf32> to vector<1x32xf32>
    %942 = arith.negf %941 : vector<1x32xf32>
    %943 = math.exp %942 : vector<1x32xf32>
    %cst_223 = arith.constant 1.000000e+00 : f32
    %944 = vector.broadcast %cst_223 : f32 to vector<1x32xf32>
    %945 = arith.addf %944, %943 : vector<1x32xf32>
    %946 = arith.divf %944, %945 : vector<1x32xf32>
    %947 = vector.extract_strided_slice %940 {offsets = [0, 32], sizes = [1, 32], strides = [1, 1]} : vector<1x128xf32> to vector<1x32xf32>
    %948 = arith.negf %947 : vector<1x32xf32>
    %949 = math.exp %948 : vector<1x32xf32>
    %cst_224 = arith.constant 1.000000e+00 : f32
    %950 = vector.broadcast %cst_224 : f32 to vector<1x32xf32>
    %951 = arith.addf %950, %949 : vector<1x32xf32>
    %952 = arith.divf %950, %951 : vector<1x32xf32>
    %953 = vector.extract_strided_slice %940 {offsets = [0, 64], sizes = [1, 32], strides = [1, 1]} : vector<1x128xf32> to vector<1x32xf32>
    %954 = math.tanh %953 : vector<1x32xf32>
    %955 = vector.extract_strided_slice %940 {offsets = [0, 96], sizes = [1, 32], strides = [1, 1]} : vector<1x128xf32> to vector<1x32xf32>
    %956 = arith.negf %955 : vector<1x32xf32>
    %957 = math.exp %956 : vector<1x32xf32>
    %cst_225 = arith.constant 1.000000e+00 : f32
    %958 = vector.broadcast %cst_225 : f32 to vector<1x32xf32>
    %959 = arith.addf %958, %957 : vector<1x32xf32>
    %960 = arith.divf %958, %959 : vector<1x32xf32>
    %961 = arith.mulf %952, %935 : vector<1x32xf32>
    %962 = arith.mulf %946, %954 : vector<1x32xf32>
    %963 = arith.addf %961, %962 : vector<1x32xf32>
    %964 = math.tanh %963 : vector<1x32xf32>
    %965 = arith.mulf %960, %964 : vector<1x32xf32>
    %966 = vector.extract_strided_slice %849 {offsets = [4, 0], sizes = [1, 128], strides = [1, 1]} : vector<8x128xf32> to vector<1x128xf32>
    %cst_226 = arith.constant dense<0.000000e+00> : vector<1x128xf32>
    %967 = tpu.matmul %965, %851, %cst_226 {dimension_numbers = #tpu.dot_dimension_numbers<[1], [0], [0], [1], [0, 0, 1, 1], [], []>} : vector<1x32xf32>, vector<32x128xf32>, vector<1x128xf32> -> vector<1x128xf32>
    %968 = arith.addf %966, %967 : vector<1x128xf32>
    %969 = vector.extract_strided_slice %968 {offsets = [0, 0], sizes = [1, 32], strides = [1, 1]} : vector<1x128xf32> to vector<1x32xf32>
    %970 = arith.negf %969 : vector<1x32xf32>
    %971 = math.exp %970 : vector<1x32xf32>
    %cst_227 = arith.constant 1.000000e+00 : f32
    %972 = vector.broadcast %cst_227 : f32 to vector<1x32xf32>
    %973 = arith.addf %972, %971 : vector<1x32xf32>
    %974 = arith.divf %972, %973 : vector<1x32xf32>
    %975 = vector.extract_strided_slice %968 {offsets = [0, 32], sizes = [1, 32], strides = [1, 1]} : vector<1x128xf32> to vector<1x32xf32>
    %976 = arith.negf %975 : vector<1x32xf32>
    %977 = math.exp %976 : vector<1x32xf32>
    %cst_228 = arith.constant 1.000000e+00 : f32
    %978 = vector.broadcast %cst_228 : f32 to vector<1x32xf32>
    %979 = arith.addf %978, %977 : vector<1x32xf32>
    %980 = arith.divf %978, %979 : vector<1x32xf32>
    %981 = vector.extract_strided_slice %968 {offsets = [0, 64], sizes = [1, 32], strides = [1, 1]} : vector<1x128xf32> to vector<1x32xf32>
    %982 = math.tanh %981 : vector<1x32xf32>
    %983 = vector.extract_strided_slice %968 {offsets = [0, 96], sizes = [1, 32], strides = [1, 1]} : vector<1x128xf32> to vector<1x32xf32>
    %984 = arith.negf %983 : vector<1x32xf32>
    %985 = math.exp %984 : vector<1x32xf32>
    %cst_229 = arith.constant 1.000000e+00 : f32
    %986 = vector.broadcast %cst_229 : f32 to vector<1x32xf32>
    %987 = arith.addf %986, %985 : vector<1x32xf32>
    %988 = arith.divf %986, %987 : vector<1x32xf32>
    %989 = arith.mulf %980, %963 : vector<1x32xf32>
    %990 = arith.mulf %974, %982 : vector<1x32xf32>
    %991 = arith.addf %989, %990 : vector<1x32xf32>
    %992 = math.tanh %991 : vector<1x32xf32>
    %993 = arith.mulf %988, %992 : vector<1x32xf32>
    %994 = vector.extract_strided_slice %849 {offsets = [5, 0], sizes = [1, 128], strides = [1, 1]} : vector<8x128xf32> to vector<1x128xf32>
    %cst_230 = arith.constant dense<0.000000e+00> : vector<1x128xf32>
    %995 = tpu.matmul %993, %851, %cst_230 {dimension_numbers = #tpu.dot_dimension_numbers<[1], [0], [0], [1], [0, 0, 1, 1], [], []>} : vector<1x32xf32>, vector<32x128xf32>, vector<1x128xf32> -> vector<1x128xf32>
    %996 = arith.addf %994, %995 : vector<1x128xf32>
    %997 = vector.extract_strided_slice %996 {offsets = [0, 0], sizes = [1, 32], strides = [1, 1]} : vector<1x128xf32> to vector<1x32xf32>
    %998 = arith.negf %997 : vector<1x32xf32>
    %999 = math.exp %998 : vector<1x32xf32>
    %cst_231 = arith.constant 1.000000e+00 : f32
    %1000 = vector.broadcast %cst_231 : f32 to vector<1x32xf32>
    %1001 = arith.addf %1000, %999 : vector<1x32xf32>
    %1002 = arith.divf %1000, %1001 : vector<1x32xf32>
    %1003 = vector.extract_strided_slice %996 {offsets = [0, 32], sizes = [1, 32], strides = [1, 1]} : vector<1x128xf32> to vector<1x32xf32>
    %1004 = arith.negf %1003 : vector<1x32xf32>
    %1005 = math.exp %1004 : vector<1x32xf32>
    %cst_232 = arith.constant 1.000000e+00 : f32
    %1006 = vector.broadcast %cst_232 : f32 to vector<1x32xf32>
    %1007 = arith.addf %1006, %1005 : vector<1x32xf32>
    %1008 = arith.divf %1006, %1007 : vector<1x32xf32>
    %1009 = vector.extract_strided_slice %996 {offsets = [0, 64], sizes = [1, 32], strides = [1, 1]} : vector<1x128xf32> to vector<1x32xf32>
    %1010 = math.tanh %1009 : vector<1x32xf32>
    %1011 = vector.extract_strided_slice %996 {offsets = [0, 96], sizes = [1, 32], strides = [1, 1]} : vector<1x128xf32> to vector<1x32xf32>
    %1012 = arith.negf %1011 : vector<1x32xf32>
    %1013 = math.exp %1012 : vector<1x32xf32>
    %cst_233 = arith.constant 1.000000e+00 : f32
    %1014 = vector.broadcast %cst_233 : f32 to vector<1x32xf32>
    %1015 = arith.addf %1014, %1013 : vector<1x32xf32>
    %1016 = arith.divf %1014, %1015 : vector<1x32xf32>
    %1017 = arith.mulf %1008, %991 : vector<1x32xf32>
    %1018 = arith.mulf %1002, %1010 : vector<1x32xf32>
    %1019 = arith.addf %1017, %1018 : vector<1x32xf32>
    %1020 = math.tanh %1019 : vector<1x32xf32>
    %1021 = arith.mulf %1016, %1020 : vector<1x32xf32>
    %1022 = vector.extract_strided_slice %849 {offsets = [6, 0], sizes = [1, 128], strides = [1, 1]} : vector<8x128xf32> to vector<1x128xf32>
    %cst_234 = arith.constant dense<0.000000e+00> : vector<1x128xf32>
    %1023 = tpu.matmul %1021, %851, %cst_234 {dimension_numbers = #tpu.dot_dimension_numbers<[1], [0], [0], [1], [0, 0, 1, 1], [], []>} : vector<1x32xf32>, vector<32x128xf32>, vector<1x128xf32> -> vector<1x128xf32>
    %1024 = arith.addf %1022, %1023 : vector<1x128xf32>
    %1025 = vector.extract_strided_slice %1024 {offsets = [0, 0], sizes = [1, 32], strides = [1, 1]} : vector<1x128xf32> to vector<1x32xf32>
    %1026 = arith.negf %1025 : vector<1x32xf32>
    %1027 = math.exp %1026 : vector<1x32xf32>
    %cst_235 = arith.constant 1.000000e+00 : f32
    %1028 = vector.broadcast %cst_235 : f32 to vector<1x32xf32>
    %1029 = arith.addf %1028, %1027 : vector<1x32xf32>
    %1030 = arith.divf %1028, %1029 : vector<1x32xf32>
    %1031 = vector.extract_strided_slice %1024 {offsets = [0, 32], sizes = [1, 32], strides = [1, 1]} : vector<1x128xf32> to vector<1x32xf32>
    %1032 = arith.negf %1031 : vector<1x32xf32>
    %1033 = math.exp %1032 : vector<1x32xf32>
    %cst_236 = arith.constant 1.000000e+00 : f32
    %1034 = vector.broadcast %cst_236 : f32 to vector<1x32xf32>
    %1035 = arith.addf %1034, %1033 : vector<1x32xf32>
    %1036 = arith.divf %1034, %1035 : vector<1x32xf32>
    %1037 = vector.extract_strided_slice %1024 {offsets = [0, 64], sizes = [1, 32], strides = [1, 1]} : vector<1x128xf32> to vector<1x32xf32>
    %1038 = math.tanh %1037 : vector<1x32xf32>
    %1039 = vector.extract_strided_slice %1024 {offsets = [0, 96], sizes = [1, 32], strides = [1, 1]} : vector<1x128xf32> to vector<1x32xf32>
    %1040 = arith.negf %1039 : vector<1x32xf32>
    %1041 = math.exp %1040 : vector<1x32xf32>
    %cst_237 = arith.constant 1.000000e+00 : f32
    %1042 = vector.broadcast %cst_237 : f32 to vector<1x32xf32>
    %1043 = arith.addf %1042, %1041 : vector<1x32xf32>
    %1044 = arith.divf %1042, %1043 : vector<1x32xf32>
    %1045 = arith.mulf %1036, %1019 : vector<1x32xf32>
    %1046 = arith.mulf %1030, %1038 : vector<1x32xf32>
    %1047 = arith.addf %1045, %1046 : vector<1x32xf32>
    %1048 = math.tanh %1047 : vector<1x32xf32>
    %1049 = arith.mulf %1044, %1048 : vector<1x32xf32>
    %1050 = vector.extract_strided_slice %849 {offsets = [7, 0], sizes = [1, 128], strides = [1, 1]} : vector<8x128xf32> to vector<1x128xf32>
    %cst_238 = arith.constant dense<0.000000e+00> : vector<1x128xf32>
    %1051 = tpu.matmul %1049, %851, %cst_238 {dimension_numbers = #tpu.dot_dimension_numbers<[1], [0], [0], [1], [0, 0, 1, 1], [], []>} : vector<1x32xf32>, vector<32x128xf32>, vector<1x128xf32> -> vector<1x128xf32>
    %1052 = arith.addf %1050, %1051 : vector<1x128xf32>
    %1053 = vector.extract_strided_slice %1052 {offsets = [0, 0], sizes = [1, 32], strides = [1, 1]} : vector<1x128xf32> to vector<1x32xf32>
    %1054 = arith.negf %1053 : vector<1x32xf32>
    %1055 = math.exp %1054 : vector<1x32xf32>
    %cst_239 = arith.constant 1.000000e+00 : f32
    %1056 = vector.broadcast %cst_239 : f32 to vector<1x32xf32>
    %1057 = arith.addf %1056, %1055 : vector<1x32xf32>
    %1058 = arith.divf %1056, %1057 : vector<1x32xf32>
    %1059 = vector.extract_strided_slice %1052 {offsets = [0, 32], sizes = [1, 32], strides = [1, 1]} : vector<1x128xf32> to vector<1x32xf32>
    %1060 = arith.negf %1059 : vector<1x32xf32>
    %1061 = math.exp %1060 : vector<1x32xf32>
    %cst_240 = arith.constant 1.000000e+00 : f32
    %1062 = vector.broadcast %cst_240 : f32 to vector<1x32xf32>
    %1063 = arith.addf %1062, %1061 : vector<1x32xf32>
    %1064 = arith.divf %1062, %1063 : vector<1x32xf32>
    %1065 = vector.extract_strided_slice %1052 {offsets = [0, 64], sizes = [1, 32], strides = [1, 1]} : vector<1x128xf32> to vector<1x32xf32>
    %1066 = math.tanh %1065 : vector<1x32xf32>
    %1067 = vector.extract_strided_slice %1052 {offsets = [0, 96], sizes = [1, 32], strides = [1, 1]} : vector<1x128xf32> to vector<1x32xf32>
    %1068 = arith.negf %1067 : vector<1x32xf32>
    %1069 = math.exp %1068 : vector<1x32xf32>
    %cst_241 = arith.constant 1.000000e+00 : f32
    %1070 = vector.broadcast %cst_241 : f32 to vector<1x32xf32>
    %1071 = arith.addf %1070, %1069 : vector<1x32xf32>
    %1072 = arith.divf %1070, %1071 : vector<1x32xf32>
    %1073 = arith.mulf %1064, %1047 : vector<1x32xf32>
    %1074 = arith.mulf %1058, %1066 : vector<1x32xf32>
    %1075 = arith.addf %1073, %1074 : vector<1x32xf32>
    %1076 = math.tanh %1075 : vector<1x32xf32>
    %1077 = arith.mulf %1072, %1076 : vector<1x32xf32>
    %1078 = tpu.concatenate %881, %909, %937, %965, %993, %1021, %1049, %1077 in 0 : vector<1x32xf32>, vector<1x32xf32>, vector<1x32xf32>, vector<1x32xf32>, vector<1x32xf32>, vector<1x32xf32>, vector<1x32xf32>, vector<1x32xf32> -> vector<8x32xf32>
    %c0_242 = arith.constant 0 : index
    %c0_243 = arith.constant 0 : index
    %1079 = vector.load %arg8[%c0_242, %c0_243] : memref<32x96xf32, #tpu.memory_space<vmem>>, vector<32x96xf32>
    %cst_244 = arith.constant dense<0.000000e+00> : vector<8x96xf32>
    %1080 = tpu.matmul %1078, %1079, %cst_244 {dimension_numbers = #tpu.dot_dimension_numbers<[1], [0], [0], [1], [0, 0, 1, 1], [], []>} : vector<8x32xf32>, vector<32x96xf32>, vector<8x96xf32> -> vector<8x96xf32>
    %c0_245 = arith.constant 0 : index
    %c0_246 = arith.constant 0 : index
    %1081 = vector.load %arg9[%c0_245, %c0_246] : memref<1x96xf32, #tpu.memory_space<vmem>>, vector<1x96xf32>
    %1082 = vector.broadcast %1081 : vector<1x96xf32> to vector<8x96xf32>
    %1083 = arith.addf %1080, %1082 : vector<8x96xf32>
    %1084 = vector.extract_strided_slice %1083 {offsets = [0, 0], sizes = [8, 32], strides = [1, 1]} : vector<8x96xf32> to vector<8x32xf32>
    %1085 = vector.extract_strided_slice %1083 {offsets = [0, 32], sizes = [8, 32], strides = [1, 1]} : vector<8x96xf32> to vector<8x32xf32>
    %1086 = vector.extract_strided_slice %1083 {offsets = [0, 64], sizes = [8, 32], strides = [1, 1]} : vector<8x96xf32> to vector<8x32xf32>
    %cst_247 = arith.constant 0.000000e+00 : f32
    %1087 = vector.broadcast %cst_247 : f32 to vector<8x8xf32>
    %1088 = vector.extract_strided_slice %1084 {offsets = [0, 0], sizes = [8, 8], strides = [1, 1]} : vector<8x32xf32> to vector<8x8xf32>
    %cst_248 = arith.constant 0.353553385 : f32
    %1089 = vector.broadcast %cst_248 : f32 to vector<8x8xf32>
    %1090 = arith.mulf %1088, %1089 : vector<8x8xf32>
    %1091 = vector.extract_strided_slice %1085 {offsets = [0, 0], sizes = [8, 8], strides = [1, 1]} : vector<8x32xf32> to vector<8x8xf32>
    %1092 = vector.extract_strided_slice %1086 {offsets = [0, 0], sizes = [8, 8], strides = [1, 1]} : vector<8x32xf32> to vector<8x8xf32>
    %1093 = tpu.transpose %1091, [1, 0] : vector<8x8xf32> -> vector<8x8xf32>
    %cst_249 = arith.constant dense<0.000000e+00> : vector<8x8xf32>
    %1094 = tpu.matmul %1090, %1093, %cst_249 {dimension_numbers = #tpu.dot_dimension_numbers<[1], [0], [0], [1], [0, 0, 1, 1], [], []>} : vector<8x8xf32>, vector<8x8xf32>, vector<8x8xf32> -> vector<8x8xf32>
    %cst_250 = arith.constant dense<0xFF800000> : vector<8xf32>
    %1095 = vector.multi_reduction <maximumf>, %1094, %cst_250 [1] : vector<8x8xf32> to vector<8xf32>
    %cst_251 = arith.constant 0xFF800000 : f32
    %1096 = vector.broadcast %cst_251 : f32 to vector<8xf32>
    %1097 = arith.maximumf %1096, %1095 : vector<8xf32>
    %1098 = vector.shape_cast %1097 : vector<8xf32> to vector<8x1xf32>
    %1099 = vector.broadcast %1098 : vector<8x1xf32> to vector<8x8xf32>
    %1100 = arith.subf %1094, %1099 : vector<8x8xf32>
    %1101 = math.exp %1100 : vector<8x8xf32>
    %cst_252 = arith.constant dense<0.000000e+00> : vector<8xf32>
    %1102 = vector.multi_reduction <add>, %1101, %cst_252 [1] : vector<8x8xf32> to vector<8xf32>
    %1103 = vector.shape_cast %1102 : vector<8xf32> to vector<8x1xf32>
    %1104 = vector.broadcast %1103 : vector<8x1xf32> to vector<8x8xf32>
    %1105 = arith.divf %1101, %1104 : vector<8x8xf32>
    %1106 = arith.addf %1087, %1105 : vector<8x8xf32>
    %cst_253 = arith.constant dense<0.000000e+00> : vector<8x8xf32>
    %1107 = tpu.matmul %1105, %1092, %cst_253 {dimension_numbers = #tpu.dot_dimension_numbers<[1], [0], [0], [1], [0, 0, 1, 1], [], []>} : vector<8x8xf32>, vector<8x8xf32>, vector<8x8xf32> -> vector<8x8xf32>
    %1108 = vector.extract_strided_slice %1084 {offsets = [0, 8], sizes = [8, 8], strides = [1, 1]} : vector<8x32xf32> to vector<8x8xf32>
    %cst_254 = arith.constant 0.353553385 : f32
    %1109 = vector.broadcast %cst_254 : f32 to vector<8x8xf32>
    %1110 = arith.mulf %1108, %1109 : vector<8x8xf32>
    %1111 = vector.extract_strided_slice %1085 {offsets = [0, 8], sizes = [8, 8], strides = [1, 1]} : vector<8x32xf32> to vector<8x8xf32>
    %1112 = vector.extract_strided_slice %1086 {offsets = [0, 8], sizes = [8, 8], strides = [1, 1]} : vector<8x32xf32> to vector<8x8xf32>
    %1113 = tpu.transpose %1111, [1, 0] : vector<8x8xf32> -> vector<8x8xf32>
    %cst_255 = arith.constant dense<0.000000e+00> : vector<8x8xf32>
    %1114 = tpu.matmul %1110, %1113, %cst_255 {dimension_numbers = #tpu.dot_dimension_numbers<[1], [0], [0], [1], [0, 0, 1, 1], [], []>} : vector<8x8xf32>, vector<8x8xf32>, vector<8x8xf32> -> vector<8x8xf32>
    %cst_256 = arith.constant dense<0xFF800000> : vector<8xf32>
    %1115 = vector.multi_reduction <maximumf>, %1114, %cst_256 [1] : vector<8x8xf32> to vector<8xf32>
    %cst_257 = arith.constant 0xFF800000 : f32
    %1116 = vector.broadcast %cst_257 : f32 to vector<8xf32>
    %1117 = arith.maximumf %1116, %1115 : vector<8xf32>
    %1118 = vector.shape_cast %1117 : vector<8xf32> to vector<8x1xf32>
    %1119 = vector.broadcast %1118 : vector<8x1xf32> to vector<8x8xf32>
    %1120 = arith.subf %1114, %1119 : vector<8x8xf32>
    %1121 = math.exp %1120 : vector<8x8xf32>
    %cst_258 = arith.constant dense<0.000000e+00> : vector<8xf32>
    %1122 = vector.multi_reduction <add>, %1121, %cst_258 [1] : vector<8x8xf32> to vector<8xf32>
    %1123 = vector.shape_cast %1122 : vector<8xf32> to vector<8x1xf32>
    %1124 = vector.broadcast %1123 : vector<8x1xf32> to vector<8x8xf32>
    %1125 = arith.divf %1121, %1124 : vector<8x8xf32>
    %1126 = arith.addf %1106, %1125 : vector<8x8xf32>
    %cst_259 = arith.constant dense<0.000000e+00> : vector<8x8xf32>
    %1127 = tpu.matmul %1125, %1112, %cst_259 {dimension_numbers = #tpu.dot_dimension_numbers<[1], [0], [0], [1], [0, 0, 1, 1], [], []>} : vector<8x8xf32>, vector<8x8xf32>, vector<8x8xf32> -> vector<8x8xf32>
    %1128 = vector.extract_strided_slice %1084 {offsets = [0, 16], sizes = [8, 8], strides = [1, 1]} : vector<8x32xf32> to vector<8x8xf32>
    %cst_260 = arith.constant 0.353553385 : f32
    %1129 = vector.broadcast %cst_260 : f32 to vector<8x8xf32>
    %1130 = arith.mulf %1128, %1129 : vector<8x8xf32>
    %1131 = vector.extract_strided_slice %1085 {offsets = [0, 16], sizes = [8, 8], strides = [1, 1]} : vector<8x32xf32> to vector<8x8xf32>
    %1132 = vector.extract_strided_slice %1086 {offsets = [0, 16], sizes = [8, 8], strides = [1, 1]} : vector<8x32xf32> to vector<8x8xf32>
    %1133 = tpu.transpose %1131, [1, 0] : vector<8x8xf32> -> vector<8x8xf32>
    %cst_261 = arith.constant dense<0.000000e+00> : vector<8x8xf32>
    %1134 = tpu.matmul %1130, %1133, %cst_261 {dimension_numbers = #tpu.dot_dimension_numbers<[1], [0], [0], [1], [0, 0, 1, 1], [], []>} : vector<8x8xf32>, vector<8x8xf32>, vector<8x8xf32> -> vector<8x8xf32>
    %cst_262 = arith.constant dense<0xFF800000> : vector<8xf32>
    %1135 = vector.multi_reduction <maximumf>, %1134, %cst_262 [1] : vector<8x8xf32> to vector<8xf32>
    %cst_263 = arith.constant 0xFF800000 : f32
    %1136 = vector.broadcast %cst_263 : f32 to vector<8xf32>
    %1137 = arith.maximumf %1136, %1135 : vector<8xf32>
    %1138 = vector.shape_cast %1137 : vector<8xf32> to vector<8x1xf32>
    %1139 = vector.broadcast %1138 : vector<8x1xf32> to vector<8x8xf32>
    %1140 = arith.subf %1134, %1139 : vector<8x8xf32>
    %1141 = math.exp %1140 : vector<8x8xf32>
    %cst_264 = arith.constant dense<0.000000e+00> : vector<8xf32>
    %1142 = vector.multi_reduction <add>, %1141, %cst_264 [1] : vector<8x8xf32> to vector<8xf32>
    %1143 = vector.shape_cast %1142 : vector<8xf32> to vector<8x1xf32>
    %1144 = vector.broadcast %1143 : vector<8x1xf32> to vector<8x8xf32>
    %1145 = arith.divf %1141, %1144 : vector<8x8xf32>
    %1146 = arith.addf %1126, %1145 : vector<8x8xf32>
    %cst_265 = arith.constant dense<0.000000e+00> : vector<8x8xf32>
    %1147 = tpu.matmul %1145, %1132, %cst_265 {dimension_numbers = #tpu.dot_dimension_numbers<[1], [0], [0], [1], [0, 0, 1, 1], [], []>} : vector<8x8xf32>, vector<8x8xf32>, vector<8x8xf32> -> vector<8x8xf32>
    %1148 = vector.extract_strided_slice %1084 {offsets = [0, 24], sizes = [8, 8], strides = [1, 1]} : vector<8x32xf32> to vector<8x8xf32>
    %cst_266 = arith.constant 0.353553385 : f32
    %1149 = vector.broadcast %cst_266 : f32 to vector<8x8xf32>
    %1150 = arith.mulf %1148, %1149 : vector<8x8xf32>
    %1151 = vector.extract_strided_slice %1085 {offsets = [0, 24], sizes = [8, 8], strides = [1, 1]} : vector<8x32xf32> to vector<8x8xf32>
    %1152 = vector.extract_strided_slice %1086 {offsets = [0, 24], sizes = [8, 8], strides = [1, 1]} : vector<8x32xf32> to vector<8x8xf32>
    %1153 = tpu.transpose %1151, [1, 0] : vector<8x8xf32> -> vector<8x8xf32>
    %cst_267 = arith.constant dense<0.000000e+00> : vector<8x8xf32>
    %1154 = tpu.matmul %1150, %1153, %cst_267 {dimension_numbers = #tpu.dot_dimension_numbers<[1], [0], [0], [1], [0, 0, 1, 1], [], []>} : vector<8x8xf32>, vector<8x8xf32>, vector<8x8xf32> -> vector<8x8xf32>
    %cst_268 = arith.constant dense<0xFF800000> : vector<8xf32>
    %1155 = vector.multi_reduction <maximumf>, %1154, %cst_268 [1] : vector<8x8xf32> to vector<8xf32>
    %cst_269 = arith.constant 0xFF800000 : f32
    %1156 = vector.broadcast %cst_269 : f32 to vector<8xf32>
    %1157 = arith.maximumf %1156, %1155 : vector<8xf32>
    %1158 = vector.shape_cast %1157 : vector<8xf32> to vector<8x1xf32>
    %1159 = vector.broadcast %1158 : vector<8x1xf32> to vector<8x8xf32>
    %1160 = arith.subf %1154, %1159 : vector<8x8xf32>
    %1161 = math.exp %1160 : vector<8x8xf32>
    %cst_270 = arith.constant dense<0.000000e+00> : vector<8xf32>
    %1162 = vector.multi_reduction <add>, %1161, %cst_270 [1] : vector<8x8xf32> to vector<8xf32>
    %1163 = vector.shape_cast %1162 : vector<8xf32> to vector<8x1xf32>
    %1164 = vector.broadcast %1163 : vector<8x1xf32> to vector<8x8xf32>
    %1165 = arith.divf %1161, %1164 : vector<8x8xf32>
    %1166 = arith.addf %1146, %1165 : vector<8x8xf32>
    %cst_271 = arith.constant dense<0.000000e+00> : vector<8x8xf32>
    %1167 = tpu.matmul %1165, %1152, %cst_271 {dimension_numbers = #tpu.dot_dimension_numbers<[1], [0], [0], [1], [0, 0, 1, 1], [], []>} : vector<8x8xf32>, vector<8x8xf32>, vector<8x8xf32> -> vector<8x8xf32>
    %1168 = tpu.concatenate %1107, %1127, %1147, %1167 in 1 : vector<8x8xf32>, vector<8x8xf32>, vector<8x8xf32>, vector<8x8xf32> -> vector<8x32xf32>
    %c0_272 = arith.constant 0 : index
    %c0_273 = arith.constant 0 : index
    %1169 = vector.load %arg10[%c0_272, %c0_273] : memref<32x32xf32, #tpu.memory_space<vmem>>, vector<32x32xf32>
    %cst_274 = arith.constant dense<0.000000e+00> : vector<8x32xf32>
    %1170 = tpu.matmul %1168, %1169, %cst_274 {dimension_numbers = #tpu.dot_dimension_numbers<[1], [0], [0], [1], [0, 0, 1, 1], [], []>} : vector<8x32xf32>, vector<32x32xf32>, vector<8x32xf32> -> vector<8x32xf32>
    %c0_275 = arith.constant 0 : index
    %c0_276 = arith.constant 0 : index
    %1171 = vector.load %arg11[%c0_275, %c0_276] : memref<1x32xf32, #tpu.memory_space<vmem>>, vector<1x32xf32>
    %1172 = vector.broadcast %1171 : vector<1x32xf32> to vector<8x32xf32>
    %1173 = arith.addf %1170, %1172 : vector<8x32xf32>
    %cst_277 = arith.constant 2.500000e-01 : f32
    %1174 = vector.broadcast %cst_277 : f32 to vector<8x8xf32>
    %1175 = arith.mulf %1166, %1174 : vector<8x8xf32>
    %c1_278 = arith.constant 1 : index
    %c0_279 = arith.constant 0 : index
    %c0_280 = arith.constant 0 : index
    %1176 = vector.load %arg22[%c1_278, %c0_279, %c0_280] : memref<2x8x8xf32, #tpu.memory_space<vmem>>, vector<1x8x8xf32>
    %1177 = vector.shape_cast %1176 : vector<1x8x8xf32> to vector<8x8xf32>
    %1178 = vector.shape_cast %1175 : vector<8x8xf32> to vector<1x8x8xf32>
    tpu.vector_store %arg22[%c1_278, %c0_279, %c0_280], %1178 {strides = array<i32>} : memref<2x8x8xf32, #tpu.memory_space<vmem>>, vector<1x8x8xf32>,
    %1179 = vector.extract_strided_slice %1173 {offsets = [7, 0], sizes = [1, 32], strides = [1, 1]} : vector<8x32xf32> to vector<1x32xf32>
    %1180 = tpu.concatenate %589, %1179 in 0 : vector<1x32xf32>, vector<1x32xf32> -> vector<2x32xf32>
    %1181 = tpu.concatenate %2, %592 in 0 : vector<1x32xf32>, vector<1x32xf32> -> vector<2x32xf32>
    %c0_281 = arith.constant 0 : index
    %c0_282 = arith.constant 0 : index
    %1182 = vector.load %arg12[%c0_281, %c0_282] : memref<32x16xf32, #tpu.memory_space<vmem>>, vector<32x16xf32>
    %cst_283 = arith.constant dense<0.000000e+00> : vector<2x16xf32>
    %1183 = tpu.matmul %1180, %1182, %cst_283 {dimension_numbers = #tpu.dot_dimension_numbers<[1], [0], [0], [1], [0, 0, 1, 1], [], []>} : vector<2x32xf32>, vector<32x16xf32>, vector<2x16xf32> -> vector<2x16xf32>
    %c0_284 = arith.constant 0 : index
    %c0_285 = arith.constant 0 : index
    %1184 = vector.load %arg13[%c0_284, %c0_285] : memref<1x16xf32, #tpu.memory_space<vmem>>, vector<1x16xf32>
    %1185 = vector.broadcast %1184 : vector<1x16xf32> to vector<2x16xf32>
    %1186 = arith.addf %1183, %1185 : vector<2x16xf32>
    %cst_286 = arith.constant 0.000000e+00 : f32
    %1187 = vector.broadcast %cst_286 : f32 to vector<2x16xf32>
    %1188 = arith.maximumf %1186, %1187 : vector<2x16xf32>
    %c0_287 = arith.constant 0 : index
    %c0_288 = arith.constant 0 : index
    %1189 = vector.load %arg14[%c0_287, %c0_288] : memref<16x1xf32, #tpu.memory_space<vmem>>, vector<16x1xf32>
    %cst_289 = arith.constant dense<0.000000e+00> : vector<2x1xf32>
    %1190 = tpu.matmul %1188, %1189, %cst_289 {dimension_numbers = #tpu.dot_dimension_numbers<[1], [0], [0], [1], [0, 0, 1, 1], [], []>} : vector<2x16xf32>, vector<16x1xf32>, vector<2x1xf32> -> vector<2x1xf32>
    %c0_290 = arith.constant 0 : index
    %c0_291 = arith.constant 0 : index
    %1191 = vector.load %arg15[%c0_290, %c0_291] : memref<1x1xf32, #tpu.memory_space<vmem>>, vector<1x1xf32>
    %1192 = vector.broadcast %1191 : vector<1x1xf32> to vector<2x1xf32>
    %1193 = arith.addf %1190, %1192 : vector<2x1xf32>
    %c0_292 = arith.constant 0 : index
    %c0_293 = arith.constant 0 : index
    %1194 = vector.load %arg20[%c0_292, %c0_293] : memref<2x1xf32, #tpu.memory_space<vmem>>, vector<2x1xf32>
    tpu.vector_store %arg20[%c0_292, %c0_293], %1193 {strides = array<i32>} : memref<2x1xf32, #tpu.memory_space<vmem>>, vector<2x1xf32>,
    %c0_294 = arith.constant 0 : index
    %c0_295 = arith.constant 0 : index
    %1195 = vector.load %arg16[%c0_294, %c0_295] : memref<32x16xf32, #tpu.memory_space<vmem>>, vector<32x16xf32>
    %cst_296 = arith.constant dense<0.000000e+00> : vector<2x16xf32>
    %1196 = tpu.matmul %1181, %1195, %cst_296 {dimension_numbers = #tpu.dot_dimension_numbers<[1], [0], [0], [1], [0, 0, 1, 1], [], []>} : vector<2x32xf32>, vector<32x16xf32>, vector<2x16xf32> -> vector<2x16xf32>
    %c0_297 = arith.constant 0 : index
    %c0_298 = arith.constant 0 : index
    %1197 = vector.load %arg17[%c0_297, %c0_298] : memref<1x16xf32, #tpu.memory_space<vmem>>, vector<1x16xf32>
    %1198 = vector.broadcast %1197 : vector<1x16xf32> to vector<2x16xf32>
    %1199 = arith.addf %1196, %1198 : vector<2x16xf32>
    %cst_299 = arith.constant 0.000000e+00 : f32
    %1200 = vector.broadcast %cst_299 : f32 to vector<2x16xf32>
    %1201 = arith.maximumf %1199, %1200 : vector<2x16xf32>
    %c0_300 = arith.constant 0 : index
    %c0_301 = arith.constant 0 : index
    %1202 = vector.load %arg18[%c0_300, %c0_301] : memref<16x1xf32, #tpu.memory_space<vmem>>, vector<16x1xf32>
    %cst_302 = arith.constant dense<0.000000e+00> : vector<2x1xf32>
    %1203 = tpu.matmul %1201, %1202, %cst_302 {dimension_numbers = #tpu.dot_dimension_numbers<[1], [0], [0], [1], [0, 0, 1, 1], [], []>} : vector<2x16xf32>, vector<16x1xf32>, vector<2x1xf32> -> vector<2x1xf32>
    %c0_303 = arith.constant 0 : index
    %c0_304 = arith.constant 0 : index
    %1204 = vector.load %arg19[%c0_303, %c0_304] : memref<1x1xf32, #tpu.memory_space<vmem>>, vector<1x1xf32>
    %1205 = vector.broadcast %1204 : vector<1x1xf32> to vector<2x1xf32>
    %1206 = arith.addf %1203, %1205 : vector<2x1xf32>
    %cst_305 = arith.constant 2.000000e+01 : f32
    %1207 = vector.broadcast %cst_305 : f32 to vector<2x1xf32>
    %1208 = arith.cmpf ogt, %1206, %1207 : vector<2x1xf32>
    %cst_306 = arith.constant 2.000000e+01 : f32
    %1209 = vector.broadcast %cst_306 : f32 to vector<2x1xf32>
    %1210 = arith.minimumf %1206, %1209 : vector<2x1xf32>
    %1211 = math.exp %1210 : vector<2x1xf32>
    %1212 = math.log1p %1211 : vector<2x1xf32>
    %1213 = arith.select %1208, %1206, %1212 : vector<2x1xi1>, vector<2x1xf32>
    %c0_307 = arith.constant 0 : index
    %c0_308 = arith.constant 0 : index
    %1214 = vector.load %arg21[%c0_307, %c0_308] : memref<2x1xf32, #tpu.memory_space<vmem>>, vector<2x1xf32>
    tpu.vector_store %arg21[%c0_307, %c0_308], %1213 {strides = array<i32>} : memref<2x1xf32, #tpu.memory_space<vmem>>, vector<2x1xf32>,
    return
  }
}

</mosaic_0001>

<llo_original>
// kernel: uncertainty_net_forward.1
$region0: #{uncertainty_net_forward.1}
  #allocation0 [shape = 'u32[]', space=smem, size = 0x4, offset = 0x4, fixed_abs, tag = 'smem constant byte address 0x4 - core index']
  #allocation1 [shape = 'u32[144,128]{1,0:T(1,128)}', space=vmem, size = 0x12000, scoped, tag = 'internal scratch']
  #allocation2 [shape = 'f32[1,1]{1,0:T(1,128)S(1)}', space=vmem, size = 0x200, scoped, tag = 'scoped memory for uncertainty_net_forward.1']
  #allocation3 [shape = 'f32[1,1]{1,0:T(1,128)S(1)}', space=vmem, size = 0x200, scoped, tag = 'scoped memory for uncertainty_net_forward.1']
  %s0 = inlined_call_operand.hbm [shape: f32[2,8,32], index: 0, kind: input, shape index: {}]
  %s1 = inlined_call_operand.vmem [shape: f32[32,32], index: 1, kind: input, shape index: {}]
  %s2 = inlined_call_operand.hbm [shape: f32[1,32], index: 2, kind: input, shape index: {}]
  %s3 = inlined_call_operand.hbm [shape: f32[32,32], index: 3, kind: input, shape index: {}]
  %s4 = inlined_call_operand.hbm [shape: f32[1,32], index: 4, kind: input, shape index: {}]
  %s5 = inlined_call_operand.vmem [shape: f32[2,32,128], index: 5, kind: input, shape index: {}]
  %s6 = inlined_call_operand.vmem [shape: f32[2,32,128], index: 6, kind: input, shape index: {}]
  %s7 = inlined_call_operand.vmem [shape: f32[2,1,128], index: 7, kind: input, shape index: {}]
  %s8 = inlined_call_operand.hbm [shape: f32[32,96], index: 8, kind: input, shape index: {}]
  %s9 = inlined_call_operand.hbm [shape: f32[1,96], index: 9, kind: input, shape index: {}]
  %s10 = inlined_call_operand.hbm [shape: f32[32,32], index: 10, kind: input, shape index: {}]
  %s11 = inlined_call_operand.hbm [shape: f32[1,32], index: 11, kind: input, shape index: {}]
  %s12 = inlined_call_operand.vmem [shape: f32[32,16], index: 12, kind: input, shape index: {}]
  %s13 = inlined_call_operand.hbm [shape: f32[1,16], index: 13, kind: input, shape index: {}]
  %s14 = inlined_call_operand.vmem [shape: f32[16,1], index: 14, kind: input, shape index: {}]
  %s15 = inlined_call_operand.<no memory space> [shape: f32[1,1], index: 15, kind: input, shape index: {}]
  %s16 = inlined_call_operand.vmem [shape: f32[32,16], index: 16, kind: input, shape index: {}]
  %s17 = inlined_call_operand.hbm [shape: f32[1,16], index: 17, kind: input, shape index: {}]
  %s18 = inlined_call_operand.vmem [shape: f32[16,1], index: 18, kind: input, shape index: {}]
  %s19 = inlined_call_operand.<no memory space> [shape: f32[1,1], index: 19, kind: input, shape index: {}]
  %s20 = inlined_call_operand.vmem [shape: f32[2,1], index: 20, kind: output, shape index: {0}]
  %s21 = inlined_call_operand.vmem [shape: f32[2,1], index: 21, kind: output, shape index: {1}]
  %s22 = inlined_call_operand.hbm [shape: f32[2,8,8], index: 22, kind: output, shape index: {2}]
  %23 = xla_tuple %s20, %s21, %s22
  %s24 = sld [smem:[#allocation0]]
  $region146: #{uncertainty_net_forward.1} parent=0
    _
  %s26 = ssub.s32 1, %s24
  %s27 = scalar_select 0, %s26, %s24
  %v28 = vstv %s15
  %29 = vst [vmem:[#allocation2] sm:$0x1] %v28
  %v30 = vstv %s19
  %31 = vst [vmem:[#allocation3] sm:$0x1] %v30
  $region1: #{uncertainty_net_forward.1} parent=0
    #allocation4 [shape = 'u8[8192]{0}', space=vmem, size = 0x2000, scoped, tag = 'input window, operand 0, single buffered']
    #allocation5 [shape = 's32[1]{0}', space=sflag, size = 0x4, scoped, tag = 'scoped memory for uncertainty_net_forward.1']
    #allocation6 [shape = 's32[1]{0}', space=sflag, size = 0x4, scoped, tag = 'scoped memory for uncertainty_net_forward.1']
    #allocation7 [shape = 'u8[512]{0}', space=vmem, size = 0x400, scoped, tag = 'input window, operand 2, single buffered']
    #allocation8 [shape = 's32[1]{0}', space=sflag, size = 0x4, scoped, tag = 'scoped memory for uncertainty_net_forward.1']
    #allocation9 [shape = 'u8[16384]{0}', space=vmem, size = 0x4000, scoped, tag = 'input window, operand 3, single buffered']
    #allocation10 [shape = 'u8[512]{0}', space=vmem, size = 0x400, scoped, tag = 'input window, operand 4, single buffered']
    #allocation11 [shape = 's32[1]{0}', space=sflag, size = 0x4, scoped, tag = 'scoped memory for uncertainty_net_forward.1']
    #allocation12 [shape = 'u8[16384]{0}', space=vmem, size = 0x4000, scoped, tag = 'input window, operand 8, single buffered']
    #allocation13 [shape = 'u8[512]{0}', space=vmem, size = 0x400, scoped, tag = 'input window, operand 9, single buffered']
    #allocation14 [shape = 's32[1]{0}', space=sflag, size = 0x4, scoped, tag = 'scoped memory for uncertainty_net_forward.1']
    #allocation15 [shape = 'u8[16384]{0}', space=vmem, size = 0x4000, scoped, tag = 'input window, operand 10, single buffered']
    #allocation16 [shape = 'u8[512]{0}', space=vmem, size = 0x400, scoped, tag = 'input window, operand 11, single buffered']
    #allocation17 [shape = 's32[1]{0}', space=sflag, size = 0x4, scoped, tag = 'scoped memory for uncertainty_net_forward.1']
    #allocation18 [shape = 'u8[512]{0}', space=vmem, size = 0x400, scoped, tag = 'input window, operand 13, single buffered']
    #allocation19 [shape = 'u8[512]{0}', space=vmem, size = 0x400, scoped, tag = 'input window, operand 17, single buffered']
    #allocation20 [shape = 's32[1]{0}', space=sflag, size = 0x4, scoped, tag = 'scoped memory for uncertainty_net_forward.1']
    #allocation21 [shape = 'u8[8192]{0}', space=vmem, size = 0x2000, scoped, tag = 'output window, operand 2, single buffered']
    %32 = vsyncpa [#allocation5], 0
    %33 = vsyncpa [#allocation8], 0
    %34 = vsyncpa [#allocation11], 0
    %35 = vsyncpa [#allocation14], 0
    %36 = vsyncpa [#allocation17], 0
    %37 = vsyncpa [#allocation20], 0
    %38 = vsyncpa [#allocation6], 0
    // Predicated region
    $region2: #{uncertainty_net_forward.1} parent=1 // pred_check
      _
    $region3: #{uncertainty_net_forward.1} parent=1 // pred_check_branch
      %40 = sbr.rel (0) target = $region5
    $region4: #{uncertainty_net_forward.1} parent=1 // pred_region
      %s42 = ssub.s32 256, 256
      %43 = vsyncadd [#allocation5], %s42
      %s44 = sshll.u32 [#allocation4], 4
      %s45 = int_to_ptr.vmem [resolvable:$true] %s44
      %50 = dma.hbm_to_vmem [thread:$0]  %s0, 256, %s45, [#allocation5], 128, 128, 8
    $region5: #{uncertainty_net_forward.1} parent=1 // pred_fallthru
      _
    // Predicated region
    $region6: #{uncertainty_net_forward.1} parent=1 // pred_check
      _
    $region7: #{uncertainty_net_forward.1} parent=1 // pred_check_branch
      %52 = sbr.rel (0) target = $region9
    $region8: #{uncertainty_net_forward.1} parent=1 // pred_region
      _
    $region9: #{uncertainty_net_forward.1} parent=1 // pred_fallthru
      _
    // Predicated region
    $region10: #{uncertainty_net_forward.1} parent=1 // pred_check
      _
    $region11: #{uncertainty_net_forward.1} parent=1 // pred_check_branch
      %54 = sbr.rel (0) target = $region13
    $region12: #{uncertainty_net_forward.1} parent=1 // pred_region
      %s56 = ssub.s32 16, 16
      %57 = vsyncadd [#allocation8], %s56
      %s59 = sshll.u32 [#allocation7], 4
      %s60 = int_to_ptr.vmem [resolvable:$true] %s59
      %62 = dma.hbm_to_vmem [thread:$0]  %s2, 16, %s60, [#allocation8]
    $region13: #{uncertainty_net_forward.1} parent=1 // pred_fallthru
      _
    // Predicated region
    $region14: #{uncertainty_net_forward.1} parent=1 // pred_check
      _
    $region15: #{uncertainty_net_forward.1} parent=1 // pred_check_branch
      %64 = sbr.rel (0) target = $region17
    $region16: #{uncertainty_net_forward.1} parent=1 // pred_region
      %s66 = ssub.s32 512, 512
      %67 = vsyncadd [#allocation8], %s66
      %s68 = sshll.u32 [#allocation9], 4
      %s69 = int_to_ptr.vmem [resolvable:$true] %s68
      %74 = dma.hbm_to_vmem [thread:$0]  %s3, 512, %s69, [#allocation8], 128, 128, 8
    $region17: #{uncertainty_net_forward.1} parent=1 // pred_fallthru
      _
    // Predicated region
    $region18: #{uncertainty_net_forward.1} parent=1 // pred_check
      _
    $region19: #{uncertainty_net_forward.1} parent=1 // pred_check_branch
      %76 = sbr.rel (0) target = $region21
    $region20: #{uncertainty_net_forward.1} parent=1 // pred_region
      %s78 = ssub.s32 16, 16
      %79 = vsyncadd [#allocation11], %s78
      %s81 = sshll.u32 [#allocation10], 4
      %s82 = int_to_ptr.vmem [resolvable:$true] %s81
      %84 = dma.hbm_to_vmem [thread:$0]  %s4, 16, %s82, [#allocation11]
    $region21: #{uncertainty_net_forward.1} parent=1 // pred_fallthru
      _
    // Predicated region
    $region22: #{uncertainty_net_forward.1} parent=1 // pred_check
      _
    $region23: #{uncertainty_net_forward.1} parent=1 // pred_check_branch
      %86 = sbr.rel (0) target = $region25
    $region24: #{uncertainty_net_forward.1} parent=1 // pred_region
      _
    $region25: #{uncertainty_net_forward.1} parent=1 // pred_fallthru
      _
    // Predicated region
    $region26: #{uncertainty_net_forward.1} parent=1 // pred_check
      _
    $region27: #{uncertainty_net_forward.1} parent=1 // pred_check_branch
      %88 = sbr.rel (0) target = $region29
    $region28: #{uncertainty_net_forward.1} parent=1 // pred_region
      _
    $region29: #{uncertainty_net_forward.1} parent=1 // pred_fallthru
      _
    // Predicated region
    $region30: #{uncertainty_net_forward.1} parent=1 // pred_check
      _
    $region31: #{uncertainty_net_forward.1} parent=1 // pred_check_branch
      %90 = sbr.rel (0) target = $region33
    $region32: #{uncertainty_net_forward.1} parent=1 // pred_region
      _
    $region33: #{uncertainty_net_forward.1} parent=1 // pred_fallthru
      _
    // Predicated region
    $region34: #{uncertainty_net_forward.1} parent=1 // pred_check
      _
    $region35: #{uncertainty_net_forward.1} parent=1 // pred_check_branch
      %92 = sbr.rel (0) target = $region37
    $region36: #{uncertainty_net_forward.1} parent=1 // pred_region
      %s94 = ssub.s32 512, 512
      %95 = vsyncadd [#allocation11], %s94
      %s96 = sshll.u32 [#allocation12], 4
      %s97 = int_to_ptr.vmem [resolvable:$true] %s96
      %102 = dma.hbm_to_vmem [thread:$0]  %s8, 512, %s97, [#allocation11], 128, 128, 8
    $region37: #{uncertainty_net_forward.1} parent=1 // pred_fallthru
      _
    // Predicated region
    $region38: #{uncertainty_net_forward.1} parent=1 // pred_check
      _
    $region39: #{uncertainty_net_forward.1} parent=1 // pred_check_branch
      %104 = sbr.rel (0) target = $region41
    $region40: #{uncertainty_net_forward.1} parent=1 // pred_region
      %s106 = ssub.s32 16, 16
      %107 = vsyncadd [#allocation14], %s106
      %s109 = sshll.u32 [#allocation13], 4
      %s110 = int_to_ptr.vmem [resolvable:$true] %s109
      %112 = dma.hbm_to_vmem [thread:$0]  %s9, 16, %s110, [#allocation14]
    $region41: #{uncertainty_net_forward.1} parent=1 // pred_fallthru
      _
    // Predicated region
    $region42: #{uncertainty_net_forward.1} parent=1 // pred_check
      _
    $region43: #{uncertainty_net_forward.1} parent=1 // pred_check_branch
      %114 = sbr.rel (0) target = $region45
    $region44: #{uncertainty_net_forward.1} parent=1 // pred_region
      %s116 = ssub.s32 512, 512
      %117 = vsyncadd [#allocation14], %s116
      %s118 = sshll.u32 [#allocation15], 4
      %s119 = int_to_ptr.vmem [resolvable:$true] %s118
      %124 = dma.hbm_to_vmem [thread:$0]  %s10, 512, %s119, [#allocation14], 128, 128, 8
    $region45: #{uncertainty_net_forward.1} parent=1 // pred_fallthru
      _
    // Predicated region
    $region46: #{uncertainty_net_forward.1} parent=1 // pred_check
      _
    $region47: #{uncertainty_net_forward.1} parent=1 // pred_check_branch
      %126 = sbr.rel (0) target = $region49
    $region48: #{uncertainty_net_forward.1} parent=1 // pred_region
      %s128 = ssub.s32 16, 16
      %129 = vsyncadd [#allocation17], %s128
      %s131 = sshll.u32 [#allocation16], 4
      %s132 = int_to_ptr.vmem [resolvable:$true] %s131
      %134 = dma.hbm_to_vmem [thread:$0]  %s11, 16, %s132, [#allocation17]
    $region49: #{uncertainty_net_forward.1} parent=1 // pred_fallthru
      _
    // Predicated region
    $region50: #{uncertainty_net_forward.1} parent=1 // pred_check
      _
    $region51: #{uncertainty_net_forward.1} parent=1 // pred_check_branch
      %136 = sbr.rel (0) target = $region53
    $region52: #{uncertainty_net_forward.1} parent=1 // pred_region
      _
    $region53: #{uncertainty_net_forward.1} parent=1 // pred_fallthru
      _
    // Predicated region
    $region54: #{uncertainty_net_forward.1} parent=1 // pred_check
      _
    $region55: #{uncertainty_net_forward.1} parent=1 // pred_check_branch
      %138 = sbr.rel (0) target = $region57
    $region56: #{uncertainty_net_forward.1} parent=1 // pred_region
      %s140 = ssub.s32 16, 16
      %141 = vsyncadd [#allocation17], %s140
      %s143 = sshll.u32 [#allocation18], 4
      %s144 = int_to_ptr.vmem [resolvable:$true] %s143
      %146 = dma.hbm_to_vmem [thread:$0]  %s13, 16, %s144, [#allocation17]
    $region57: #{uncertainty_net_forward.1} parent=1 // pred_fallthru
      _
    // Predicated region
    $region58: #{uncertainty_net_forward.1} parent=1 // pred_check
      _
    $region59: #{uncertainty_net_forward.1} parent=1 // pred_check_branch
      %148 = sbr.rel (0) target = $region61
    $region60: #{uncertainty_net_forward.1} parent=1 // pred_region
      _
    $region61: #{uncertainty_net_forward.1} parent=1 // pred_fallthru
      _
    // Predicated region
    $region62: #{uncertainty_net_forward.1} parent=1 // pred_check
      _
    $region63: #{uncertainty_net_forward.1} parent=1 // pred_check_branch
      %150 = sbr.rel (0) target = $region65
    $region64: #{uncertainty_net_forward.1} parent=1 // pred_region
      _
    $region65: #{uncertainty_net_forward.1} parent=1 // pred_fallthru
      _
    // Predicated region
    $region66: #{uncertainty_net_forward.1} parent=1 // pred_check
      _
    $region67: #{uncertainty_net_forward.1} parent=1 // pred_check_branch
      %152 = sbr.rel (0) target = $region69
    $region68: #{uncertainty_net_forward.1} parent=1 // pred_region
      _
    $region69: #{uncertainty_net_forward.1} parent=1 // pred_fallthru
      _
    // Predicated region
    $region70: #{uncertainty_net_forward.1} parent=1 // pred_check
      _
    $region71: #{uncertainty_net_forward.1} parent=1 // pred_check_branch
      %154 = sbr.rel (0) target = $region73
    $region72: #{uncertainty_net_forward.1} parent=1 // pred_region
      %s156 = ssub.s32 16, 16
      %157 = vsyncadd [#allocation20], %s156
      %s159 = sshll.u32 [#allocation19], 4
      %s160 = int_to_ptr.vmem [resolvable:$true] %s159
      %162 = dma.hbm_to_vmem [thread:$0]  %s17, 16, %s160, [#allocation20]
    $region73: #{uncertainty_net_forward.1} parent=1 // pred_fallthru
      _
    // Predicated region
    $region74: #{uncertainty_net_forward.1} parent=1 // pred_check
      _
    $region75: #{uncertainty_net_forward.1} parent=1 // pred_check_branch
      %164 = sbr.rel (0) target = $region77
    $region76: #{uncertainty_net_forward.1} parent=1 // pred_region
      _
    $region77: #{uncertainty_net_forward.1} parent=1 // pred_fallthru
      _
    // Predicated region
    $region78: #{uncertainty_net_forward.1} parent=1 // pred_check
      _
    $region79: #{uncertainty_net_forward.1} parent=1 // pred_check_branch
      %166 = sbr.rel (0) target = $region81
    $region80: #{uncertainty_net_forward.1} parent=1 // pred_region
      _
    $region81: #{uncertainty_net_forward.1} parent=1 // pred_fallthru
      _
    // Predicated region
    $region82: #{uncertainty_net_forward.1} parent=1 // pred_check
      _
    $region83: #{uncertainty_net_forward.1} parent=1 // pred_check_branch
      %168 = sbr.rel (0) target = $region85
    $region84: #{uncertainty_net_forward.1} parent=1 // pred_region
      %169 = dma.done [#allocation5], 256
    $region85: #{uncertainty_net_forward.1} parent=1 // pred_fallthru
      _
    // Predicated region
    $region86: #{uncertainty_net_forward.1} parent=1 // pred_check
      _
    $region87: #{uncertainty_net_forward.1} parent=1 // pred_check_branch
      %171 = sbr.rel (0) target = $region89
    $region88: #{uncertainty_net_forward.1} parent=1 // pred_region
      %172 = dma.done [#allocation8], 16
    $region89: #{uncertainty_net_forward.1} parent=1 // pred_fallthru
      _
    // Predicated region
    $region90: #{uncertainty_net_forward.1} parent=1 // pred_check
      _
    $region91: #{uncertainty_net_forward.1} parent=1 // pred_check_branch
      %174 = sbr.rel (0) target = $region93
    $region92: #{uncertainty_net_forward.1} parent=1 // pred_region
      %175 = dma.done [#allocation8], 512
    $region93: #{uncertainty_net_forward.1} parent=1 // pred_fallthru
      _
    // Predicated region
    $region94: #{uncertainty_net_forward.1} parent=1 // pred_check
      _
    $region95: #{uncertainty_net_forward.1} parent=1 // pred_check_branch
      %177 = sbr.rel (0) target = $region97
    $region96: #{uncertainty_net_forward.1} parent=1 // pred_region
      %178 = dma.done [#allocation11], 16
    $region97: #{uncertainty_net_forward.1} parent=1 // pred_fallthru
      _
    // Predicated region
    $region98: #{uncertainty_net_forward.1} parent=1 // pred_check
      _
    $region99: #{uncertainty_net_forward.1} parent=1 // pred_check_branch
      %180 = sbr.rel (0) target = $region101
    $region100: #{uncertainty_net_forward.1} parent=1 // pred_region
      %181 = dma.done [#allocation11], 512
    $region101: #{uncertainty_net_forward.1} parent=1 // pred_fallthru
      _
    // Predicated region
    $region102: #{uncertainty_net_forward.1} parent=1 // pred_check
      _
    $region103: #{uncertainty_net_forward.1} parent=1 // pred_check_branch
      %183 = sbr.rel (0) target = $region105
    $region104: #{uncertainty_net_forward.1} parent=1 // pred_region
      %184 = dma.done [#allocation14], 16
    $region105: #{uncertainty_net_forward.1} parent=1 // pred_fallthru
      _
    // Predicated region
    $region106: #{uncertainty_net_forward.1} parent=1 // pred_check
      _
    $region107: #{uncertainty_net_forward.1} parent=1 // pred_check_branch
      %186 = sbr.rel (0) target = $region109
    $region108: #{uncertainty_net_forward.1} parent=1 // pred_region
      %187 = dma.done [#allocation14], 512
    $region109: #{uncertainty_net_forward.1} parent=1 // pred_fallthru
      _
    // Predicated region
    $region110: #{uncertainty_net_forward.1} parent=1 // pred_check
      _
    $region111: #{uncertainty_net_forward.1} parent=1 // pred_check_branch
      %189 = sbr.rel (0) target = $region113
    $region112: #{uncertainty_net_forward.1} parent=1 // pred_region
      %190 = dma.done [#allocation17], 16
    $region113: #{uncertainty_net_forward.1} parent=1 // pred_fallthru
      _
    // Predicated region
    $region114: #{uncertainty_net_forward.1} parent=1 // pred_check
      _
    $region115: #{uncertainty_net_forward.1} parent=1 // pred_check_branch
      %192 = sbr.rel (0) target = $region117
    $region116: #{uncertainty_net_forward.1} parent=1 // pred_region
      %193 = dma.done [#allocation17], 16
    $region117: #{uncertainty_net_forward.1} parent=1 // pred_fallthru
      _
    // Predicated region
    $region118: #{uncertainty_net_forward.1} parent=1 // pred_check
      _
    $region119: #{uncertainty_net_forward.1} parent=1 // pred_check_branch
      %195 = sbr.rel (0) target = $region121
    $region120: #{uncertainty_net_forward.1} parent=1 // pred_region
      %196 = dma.done [#allocation20], 16
    $region121: #{uncertainty_net_forward.1} parent=1 // pred_fallthru
      _
    %v197 = vld [vmem:[#allocation4] sm:$0xff]
    %v198 = vld [vmem:[%s1] sm:$0xff]
    %v199 = vld [vmem:[%s1 + $0x8] sm:$0xff]
    %v200 = vld [vmem:[%s1 + $0x10] sm:$0xff]
    %v201 = vld [vmem:[%s1 + $0x18] sm:$0xff]
    %v202 = vld [vmem:[#allocation7] sm:$0x1]
    %v204 = vlaneseq
    %v205 = vshrl.u32 %v204, 7
    %v206 = vsub.s32 0, %v205
    %v207 = vrot.slane %v202, %v206
    %vm209 = vcmask 261120
    %v211 = vsel %vm209, %v197, 0
    %213 = vmatprep.subr.mxu0 0.0
    %214 = vmatpush1.msra.mxu0 %v198
    %215 = vmatprep.subr.mxu0 0.0
    %216 = vmatpush1.msra.mxu0 %v199
    %217 = vmatprep.subr.mxu0 0.0
    %218 = vmatpush1.msra.mxu0 %v200
    %219 = vmatprep.subr.mxu0 0.0
    %220 = vmatpush1.msra.mxu0 %v201
    %221 = vmatprep.subr.mxu0 0.0
    %222 = vmatpush1.msra.mxu0 0.0
    %223 = vmatprep.subr.mxu0 0.0
    %224 = vmatpush1.msra.mxu0 0.0
    %225 = vmatprep.subr.mxu0 0.0
    %226 = vmatpush1.msra.mxu0 0.0
    %227 = vmatprep.subr.mxu0 0.0
    %228 = vmatpush1.msra.mxu0 0.0
    %229 = vmatprep.subr.mxu0 0.0
    %230 = vmatpush1.msra.mxu0 0.0
    %231 = vmatprep.subr.mxu0 0.0
    %232 = vmatpush1.msra.mxu0 0.0
    %233 = vmatprep.subr.mxu0 0.0
    %234 = vmatpush1.msra.mxu0 0.0
    %235 = vmatprep.subr.mxu0 0.0
    %236 = vmatpush1.msra.mxu0 0.0
    %237 = vmatprep.subr.mxu0 0.0
    %238 = vmatpush1.msra.mxu0 0.0
    %239 = vmatprep.subr.mxu0 0.0
    %240 = vmatpush1.msra.mxu0 0.0
    %241 = vmatprep.subr.mxu0 0.0
    %242 = vmatpush1.msra.mxu0 0.0
    %243 = vmatprep.subr.mxu0 0.0
    %244 = vmatpush1.msra.mxu0 0.0
    %245 = vmatprep.subr.mxu0 0.0
    %246 = vmatpush1.msra.mxu0 0.0
    %247 = vmatprep.subr.mxu0 0.0
    %248 = vmatpush1.msra.mxu0 0.0
    %249 = vmatprep.subr.mxu0 0.0
    %250 = vmatpush1.msra.mxu0 0.0
    %251 = vmatprep.subr.mxu0 0.0
    %252 = vmatpush1.msra.mxu0 0.0
    %253 = vmatprep.subr.mxu0 0.0
    %254 = vmatpush1.msra.mxu0 0.0
    %255 = vmatprep.subr.mxu0 0.0
    %256 = vmatpush1.msra.mxu0 0.0
    %257 = vmatprep.subr.mxu0 0.0
    %258 = vmatpush1.msra.mxu0 0.0
    %259 = vmatprep.subr.mxu0 0.0
    %260 = vmatpush1.msra.mxu0 0.0
    %261 = vmatprep.subr.mxu0 0.0
    %262 = vmatpush1.msra.mxu0 0.0
    %263 = vmatprep.subr.mxu0 0.0
    %264 = vmatpush1.msra.mxu0 0.0
    %265 = vmatprep.subr.mxu0 0.0
    %266 = vmatpush1.msra.mxu0 0.0
    %267 = vmatprep.subr.mxu0 0.0
    %268 = vmatpush1.msra.mxu0 0.0
    %269 = vmatprep.subr.mxu0 0.0
    %270 = vmatpush1.msra.mxu0 0.0
    %271 = vmatprep.subr.mxu0 0.0
    %272 = vmatpush1.msra.mxu0 0.0
    %273 = vmatprep.subr.mxu0 0.0
    %274 = vmatpush1.msra.mxu0 0.0
    %275 = vmatprep.subr.mxu0 0.0
    %276 = vmatpush1.msra.mxu0 0.0
    %277 = vmatprep.mubr.f32.mxu0 0.0
    %278 = vmatmul.mubr.f32.gmra.mrb[0].mxu0 %v211
    %v279 = vpop.f32.mrb[0].mxu0
    %v280 = vadd.f32 %v207, %v279
    %v281 = vpop.f32.mrb[0].mxu0
    %282 = vdwg.mxu0
    %v283 = vmax.f32 %v280, 0.0
    %v284 = vld [vmem:[#allocation9] sm:$0xff]
    %v285 = vld [vmem:[#allocation9 + $0x8] sm:$0xff]
    %v286 = vld [vmem:[#allocation9 + $0x10] sm:$0xff]
    %v287 = vld [vmem:[#allocation9 + $0x18] sm:$0xff]
    %v288 = vld [vmem:[#allocation10] sm:$0x1]
    %v290 = vlaneseq
    %v291 = vshrl.u32 %v290, 7
    %v292 = vsub.s32 0, %v291
    %v293 = vrot.slane %v288, %v292
    %v296 = vsel %vm209, %v283, 0
    %298 = vmatprep.subr.mxu0 0.0
    %299 = vmatpush1.msra.mxu0 %v284
    %300 = vmatprep.subr.mxu0 0.0
    %301 = vmatpush1.msra.mxu0 %v285
    %302 = vmatprep.subr.mxu0 0.0
    %303 = vmatpush1.msra.mxu0 %v286
    %304 = vmatprep.subr.mxu0 0.0
    %305 = vmatpush1.msra.mxu0 %v287
    %306 = vmatprep.subr.mxu0 0.0
    %307 = vmatpush1.msra.mxu0 0.0
    %308 = vmatprep.subr.mxu0 0.0
    %309 = vmatpush1.msra.mxu0 0.0
    %310 = vmatprep.subr.mxu0 0.0
    %311 = vmatpush1.msra.mxu0 0.0
    %312 = vmatprep.subr.mxu0 0.0
    %313 = vmatpush1.msra.mxu0 0.0
    %314 = vmatprep.subr.mxu0 0.0
    %315 = vmatpush1.msra.mxu0 0.0
    %316 = vmatprep.subr.mxu0 0.0
    %317 = vmatpush1.msra.mxu0 0.0
    %318 = vmatprep.subr.mxu0 0.0
    %319 = vmatpush1.msra.mxu0 0.0
    %320 = vmatprep.subr.mxu0 0.0
    %321 = vmatpush1.msra.mxu0 0.0
    %322 = vmatprep.subr.mxu0 0.0
    %323 = vmatpush1.msra.mxu0 0.0
    %324 = vmatprep.subr.mxu0 0.0
    %325 = vmatpush1.msra.mxu0 0.0
    %326 = vmatprep.subr.mxu0 0.0
    %327 = vmatpush1.msra.mxu0 0.0
    %328 = vmatprep.subr.mxu0 0.0
    %329 = vmatpush1.msra.mxu0 0.0
    %330 = vmatprep.subr.mxu0 0.0
    %331 = vmatpush1.msra.mxu0 0.0
    %332 = vmatprep.subr.mxu0 0.0
    %333 = vmatpush1.msra.mxu0 0.0
    %334 = vmatprep.subr.mxu0 0.0
    %335 = vmatpush1.msra.mxu0 0.0
    %336 = vmatprep.subr.mxu0 0.0
    %337 = vmatpush1.msra.mxu0 0.0
    %338 = vmatprep.subr.mxu0 0.0
    %339 = vmatpush1.msra.mxu0 0.0
    %340 = vmatprep.subr.mxu0 0.0
    %341 = vmatpush1.msra.mxu0 0.0
    %342 = vmatprep.subr.mxu0 0.0
    %343 = vmatpush1.msra.mxu0 0.0
    %344 = vmatprep.subr.mxu0 0.0
    %345 = vmatpush1.msra.mxu0 0.0
    %346 = vmatprep.subr.mxu0 0.0
    %347 = vmatpush1.msra.mxu0 0.0
    %348 = vmatprep.subr.mxu0 0.0
    %349 = vmatpush1.msra.mxu0 0.0
    %350 = vmatprep.subr.mxu0 0.0
    %351 = vmatpush1.msra.mxu0 0.0
    %352 = vmatprep.subr.mxu0 0.0
    %353 = vmatpush1.msra.mxu0 0.0
    %354 = vmatprep.subr.mxu0 0.0
    %355 = vmatpush1.msra.mxu0 0.0
    %356 = vmatprep.subr.mxu0 0.0
    %357 = vmatpush1.msra.mxu0 0.0
    %358 = vmatprep.subr.mxu0 0.0
    %359 = vmatpush1.msra.mxu0 0.0
    %360 = vmatprep.subr.mxu0 0.0
    %361 = vmatpush1.msra.mxu0 0.0
    %362 = vmatprep.mubr.f32.mxu0 0.0
    %363 = vmatmul.mubr.f32.gmra.mrb[0].mxu0 %v296
    %v364 = vpop.f32.mrb[0].mxu0
    %v365 = vadd.f32 %v293, %v364
    %v366 = vpop.f32.mrb[0].mxu0
    %367 = vdwg.mxu0
    %v368 = vmax.f32 %v365, 0.0
    %v369 = vld [vmem:[%s5] sm:$0xff]
    %v370 = vld [vmem:[%s5 + $0x8] sm:$0xff]
    %v371 = vld [vmem:[%s5 + $0x10] sm:$0xff]
    %v372 = vld [vmem:[%s5 + $0x18] sm:$0xff]
    %v373 = vld [vmem:[%s7] sm:$0x1]
    %v375 = vlaneseq
    %v376 = vshrl.u32 %v375, 7
    %v377 = vsub.s32 0, %v376
    %v378 = vrot.slane %v373, %v377
    %v381 = vsel %vm209, %v368, 0
    %383 = vmatprep.subr.mxu0 0.0
    %384 = vmatpush1.msra.mxu0 %v369
    %385 = vmatprep.subr.mxu0 0.0
    %386 = vmatpush1.msra.mxu0 %v370
    %387 = vmatprep.subr.mxu0 0.0
    %388 = vmatpush1.msra.mxu0 %v371
    %389 = vmatprep.subr.mxu0 0.0
    %390 = vmatpush1.msra.mxu0 %v372
    %391 = vmatprep.subr.mxu0 0.0
    %392 = vmatpush1.msra.mxu0 0.0
    %393 = vmatprep.subr.mxu0 0.0
    %394 = vmatpush1.msra.mxu0 0.0
    %395 = vmatprep.subr.mxu0 0.0
    %396 = vmatpush1.msra.mxu0 0.0
    %397 = vmatprep.subr.mxu0 0.0
    %398 = vmatpush1.msra.mxu0 0.0
    %399 = vmatprep.subr.mxu0 0.0
    %400 = vmatpush1.msra.mxu0 0.0
    %401 = vmatprep.subr.mxu0 0.0
    %402 = vmatpush1.msra.mxu0 0.0
    %403 = vmatprep.subr.mxu0 0.0
    %404 = vmatpush1.msra.mxu0 0.0
    %405 = vmatprep.subr.mxu0 0.0
    %406 = vmatpush1.msra.mxu0 0.0
    %407 = vmatprep.subr.mxu0 0.0
    %408 = vmatpush1.msra.mxu0 0.0
    %409 = vmatprep.subr.mxu0 0.0
    %410 = vmatpush1.msra.mxu0 0.0
    %411 = vmatprep.subr.mxu0 0.0
    %412 = vmatpush1.msra.mxu0 0.0
    %413 = vmatprep.subr.mxu0 0.0
    %414 = vmatpush1.msra.mxu0 0.0
    %415 = vmatprep.subr.mxu0 0.0
    %416 = vmatpush1.msra.mxu0 0.0
    %417 = vmatprep.subr.mxu0 0.0
    %418 = vmatpush1.msra.mxu0 0.0
    %419 = vmatprep.subr.mxu0 0.0
    %420 = vmatpush1.msra.mxu0 0.0
    %421 = vmatprep.subr.mxu0 0.0
    %422 = vmatpush1.msra.mxu0 0.0
    %423 = vmatprep.subr.mxu0 0.0
    %424 = vmatpush1.msra.mxu0 0.0
    %425 = vmatprep.subr.mxu0 0.0
    %426 = vmatpush1.msra.mxu0 0.0
    %427 = vmatprep.subr.mxu0 0.0
    %428 = vmatpush1.msra.mxu0 0.0
    %429 = vmatprep.subr.mxu0 0.0
    %430 = vmatpush1.msra.mxu0 0.0
    %431 = vmatprep.subr.mxu0 0.0
    %432 = vmatpush1.msra.mxu0 0.0
    %433 = vmatprep.subr.mxu0 0.0
    %434 = vmatpush1.msra.mxu0 0.0
    %435 = vmatprep.subr.mxu0 0.0
    %436 = vmatpush1.msra.mxu0 0.0
    %437 = vmatprep.subr.mxu0 0.0
    %438 = vmatpush1.msra.mxu0 0.0
    %439 = vmatprep.subr.mxu0 0.0
    %440 = vmatpush1.msra.mxu0 0.0
    %441 = vmatprep.subr.mxu0 0.0
    %442 = vmatpush1.msra.mxu0 0.0
    %443 = vmatprep.subr.mxu0 0.0
    %444 = vmatpush1.msra.mxu0 0.0
    %445 = vmatprep.subr.mxu0 0.0
    %446 = vmatpush1.msra.mxu0 0.0
    %447 = vmatprep.mubr.f32.mxu0 0.0
    %448 = vmatmul.mubr.f32.gmra.mrb[0].mxu0 %v381
    %v449 = vpop.f32.mrb[0].mxu0
    %v450 = vadd.f32 %v378, %v449
    %v451 = vpop.f32.mrb[0].mxu0
    %452 = vdwg.mxu0
    %v453 = vld [vmem:[%s6] sm:$0xff]
    %v454 = vld [vmem:[%s6 + $0x8] sm:$0xff]
    %v455 = vld [vmem:[%s6 + $0x10] sm:$0xff]
    %v456 = vld [vmem:[%s6 + $0x18] sm:$0xff]
    %v458 = vsel %vm209, 0.0, 0
    %460 = vmatprep.subr.mxu0 0.0
    %461 = vmatpush1.msra.mxu0 %v453
    %462 = vmatprep.subr.mxu0 0.0
    %463 = vmatpush1.msra.mxu0 %v454
    %464 = vmatprep.subr.mxu0 0.0
    %465 = vmatpush1.msra.mxu0 %v455
    %466 = vmatprep.subr.mxu0 0.0
    %467 = vmatpush1.msra.mxu0 %v456
    %468 = vmatprep.subr.mxu0 0.0
    %469 = vmatpush1.msra.mxu0 0.0
    %470 = vmatprep.subr.mxu0 0.0
    %471 = vmatpush1.msra.mxu0 0.0
    %472 = vmatprep.subr.mxu0 0.0
    %473 = vmatpush1.msra.mxu0 0.0
    %474 = vmatprep.subr.mxu0 0.0
    %475 = vmatpush1.msra.mxu0 0.0
    %476 = vmatprep.subr.mxu0 0.0
    %477 = vmatpush1.msra.mxu0 0.0
    %478 = vmatprep.subr.mxu0 0.0
    %479 = vmatpush1.msra.mxu0 0.0
    %480 = vmatprep.subr.mxu0 0.0
    %481 = vmatpush1.msra.mxu0 0.0
    %482 = vmatprep.subr.mxu0 0.0
    %483 = vmatpush1.msra.mxu0 0.0
    %484 = vmatprep.subr.mxu0 0.0
    %485 = vmatpush1.msra.mxu0 0.0
    %486 = vmatprep.subr.mxu0 0.0
    %487 = vmatpush1.msra.mxu0 0.0
    %488 = vmatprep.subr.mxu0 0.0
    %489 = vmatpush1.msra.mxu0 0.0
    %490 = vmatprep.subr.mxu0 0.0
    %491 = vmatpush1.msra.mxu0 0.0
    %492 = vmatprep.subr.mxu0 0.0
    %493 = vmatpush1.msra.mxu0 0.0
    %494 = vmatprep.subr.mxu0 0.0
    %495 = vmatpush1.msra.mxu0 0.0
    %496 = vmatprep.subr.mxu0 0.0
    %497 = vmatpush1.msra.mxu0 0.0
    %498 = vmatprep.subr.mxu0 0.0
    %499 = vmatpush1.msra.mxu0 0.0
    %500 = vmatprep.subr.mxu0 0.0
    %501 = vmatpush1.msra.mxu0 0.0
    %502 = vmatprep.subr.mxu0 0.0
    %503 = vmatpush1.msra.mxu0 0.0
    %504 = vmatprep.subr.mxu0 0.0
    %505 = vmatpush1.msra.mxu0 0.0
    %506 = vmatprep.subr.mxu0 0.0
    %507 = vmatpush1.msra.mxu0 0.0
    %508 = vmatprep.subr.mxu0 0.0
    %509 = vmatpush1.msra.mxu0 0.0
    %510 = vmatprep.subr.mxu0 0.0
    %511 = vmatpush1.msra.mxu0 0.0
    %512 = vmatprep.subr.mxu0 0.0
    %513 = vmatpush1.msra.mxu0 0.0
    %514 = vmatprep.subr.mxu0 0.0
    %515 = vmatpush1.msra.mxu0 0.0
    %516 = vmatprep.subr.mxu0 0.0
    %517 = vmatpush1.msra.mxu0 0.0
    %518 = vmatprep.subr.mxu0 0.0
    %519 = vmatpush1.msra.mxu0 0.0
    %520 = vmatprep.subr.mxu0 0.0
    %521 = vmatpush1.msra.mxu0 0.0
    %522 = vmatprep.subr.mxu0 0.0
    %523 = vmatpush1.msra.mxu0 0.0
    %524 = vmatprep.mubr.f32.mxu0 0.0
    %525 = vmatmul.mubr.f32.gmra.mrb[0].mxu0 %v458
    %v526 = vpop.f32.mrb[0].mxu0
    %v527 = vadd.f32 0.0, %v526
    %v528 = vpop.f32.mrb[0].mxu0
    %529 = vdwg.mxu0
    %v530 = vadd.f32 %v450, %v527
    %v531 = vxor.u32 %v530, 2147483648
    %v532 = vmul.f32 %v531, 1.442695
    %v533 = vpow.pop %v532
    %v534 = vadd.f32 %v533, 1.0
    %v535 = vrcp.pop %v534
    %v536 = vmul.f32 1.0, %v535
    %v537 = vtanh.pop %v530
    %v538 = vmul.f32 %v536, 0.0
    %540 = vrot.lane.b32.xlu0 %v537, 64
    %v541 = vpop.permute.xlu0 %540
    %v543 = vmul.f32 %v536, %v541
    %545 = vrot.lane.b32.xlu0 %v543, 32
    %v546 = vpop.permute.xlu0 %545
    %v548 = vadd.f32 %v538, %v546
    %v549 = vtanh.pop %v548
    %551 = vrot.lane.b32.xlu0 %v549, 64
    %v552 = vpop.permute.xlu0 %551
    %v554 = vmul.f32 %v536, %v552
    %556 = vrot.lane.b32.xlu0 %v554, 32
    %v557 = vpop.permute.xlu0 %556
    %v558 = vsel %vm209, %v557, 0
    %560 = vmatprep.subr.mxu0 0.0
    %561 = vmatpush1.msra.mxu0 %v453
    %562 = vmatprep.subr.mxu0 0.0
    %563 = vmatpush1.msra.mxu0 %v454
    %564 = vmatprep.subr.mxu0 0.0
    %565 = vmatpush1.msra.mxu0 %v455
    %566 = vmatprep.subr.mxu0 0.0
    %567 = vmatpush1.msra.mxu0 %v456
    %568 = vmatprep.subr.mxu0 0.0
    %569 = vmatpush1.msra.mxu0 0.0
    %570 = vmatprep.subr.mxu0 0.0
    %571 = vmatpush1.msra.mxu0 0.0
    %572 = vmatprep.subr.mxu0 0.0
    %573 = vmatpush1.msra.mxu0 0.0
    %574 = vmatprep.subr.mxu0 0.0
    %575 = vmatpush1.msra.mxu0 0.0
    %576 = vmatprep.subr.mxu0 0.0
    %577 = vmatpush1.msra.mxu0 0.0
    %578 = vmatprep.subr.mxu0 0.0
    %579 = vmatpush1.msra.mxu0 0.0
    %580 = vmatprep.subr.mxu0 0.0
    %581 = vmatpush1.msra.mxu0 0.0
    %582 = vmatprep.subr.mxu0 0.0
    %583 = vmatpush1.msra.mxu0 0.0
    %584 = vmatprep.subr.mxu0 0.0
    %585 = vmatpush1.msra.mxu0 0.0
    %586 = vmatprep.subr.mxu0 0.0
    %587 = vmatpush1.msra.mxu0 0.0
    %588 = vmatprep.subr.mxu0 0.0
    %589 = vmatpush1.msra.mxu0 0.0
    %590 = vmatprep.subr.mxu0 0.0
    %591 = vmatpush1.msra.mxu0 0.0
    %592 = vmatprep.subr.mxu0 0.0
    %593 = vmatpush1.msra.mxu0 0.0
    %594 = vmatprep.subr.mxu0 0.0
    %595 = vmatpush1.msra.mxu0 0.0
    %596 = vmatprep.subr.mxu0 0.0
    %597 = vmatpush1.msra.mxu0 0.0
    %598 = vmatprep.subr.mxu0 0.0
    %599 = vmatpush1.msra.mxu0 0.0
    %600 = vmatprep.subr.mxu0 0.0
    %601 = vmatpush1.msra.mxu0 0.0
    %602 = vmatprep.subr.mxu0 0.0
    %603 = vmatpush1.msra.mxu0 0.0
    %604 = vmatprep.subr.mxu0 0.0
    %605 = vmatpush1.msra.mxu0 0.0
    %606 = vmatprep.subr.mxu0 0.0
    %607 = vmatpush1.msra.mxu0 0.0
    %608 = vmatprep.subr.mxu0 0.0
    %609 = vmatpush1.msra.mxu0 0.0
    %610 = vmatprep.subr.mxu0 0.0
    %611 = vmatpush1.msra.mxu0 0.0
    %612 = vmatprep.subr.mxu0 0.0
    %613 = vmatpush1.msra.mxu0 0.0
    %614 = vmatprep.subr.mxu0 0.0
    %615 = vmatpush1.msra.mxu0 0.0
    %616 = vmatprep.subr.mxu0 0.0
    %617 = vmatpush1.msra.mxu0 0.0
    %618 = vmatprep.subr.mxu0 0.0
    %619 = vmatpush1.msra.mxu0 0.0
    %620 = vmatprep.subr.mxu0 0.0
    %621 = vmatpush1.msra.mxu0 0.0
    %622 = vmatprep.subr.mxu0 0.0
    %623 = vmatpush1.msra.mxu0 0.0
    %624 = vmatprep.mubr.f32.mxu0 0.0
    %625 = vmatmul.mubr.f32.gmra.mrb[0].mxu0 %v558
    %v626 = vpop.f32.mrb[0].mxu0
    %v627 = vadd.f32 0.0, %v626
    %v628 = vpop.f32.mrb[0].mxu0
    %629 = vdwg.mxu0
    %v631 = vrot.slane %v627, 7
    %v633 = vadd.f32 %v450, %v631
    %v634 = vxor.u32 %v633, 2147483648
    %v635 = vmul.f32 %v634, 1.442695
    %v636 = vpow.pop %v635
    %v637 = vadd.f32 %v636, 1.0
    %v638 = vrcp.pop %v637
    %v639 = vmul.f32 1.0, %v638
    %v640 = vtanh.pop %v633
    %v642 = vrot.slane %v548, 7
    %v644 = vmul.f32 %v639, %v642
    %646 = vrot.lane.b32.xlu0 %v640, 64
    %v647 = vpop.permute.xlu0 %646
    %v649 = vmul.f32 %v639, %v647
    %651 = vrot.lane.b32.xlu0 %v649, 32
    %v652 = vpop.permute.xlu0 %651
    %v654 = vadd.f32 %v644, %v652
    %v655 = vtanh.pop %v654
    %657 = vrot.lane.b32.xlu0 %v655, 64
    %v658 = vpop.permute.xlu0 %657
    %v660 = vmul.f32 %v639, %v658
    %v662 = vrot.slane %v660, 1
    %663 = vrot.lane.b32.xlu0 %v662, 32
    %v664 = vpop.permute.xlu0 %663
    %v665 = vsel %vm209, %v664, 0
    %667 = vmatprep.subr.mxu0 0.0
    %668 = vmatpush1.msra.mxu0 %v453
    %669 = vmatprep.subr.mxu0 0.0
    %670 = vmatpush1.msra.mxu0 %v454
    %671 = vmatprep.subr.mxu0 0.0
    %672 = vmatpush1.msra.mxu0 %v455
    %673 = vmatprep.subr.mxu0 0.0
    %674 = vmatpush1.msra.mxu0 %v456
    %675 = vmatprep.subr.mxu0 0.0
    %676 = vmatpush1.msra.mxu0 0.0
    %677 = vmatprep.subr.mxu0 0.0
    %678 = vmatpush1.msra.mxu0 0.0
    %679 = vmatprep.subr.mxu0 0.0
    %680 = vmatpush1.msra.mxu0 0.0
    %681 = vmatprep.subr.mxu0 0.0
    %682 = vmatpush1.msra.mxu0 0.0
    %683 = vmatprep.subr.mxu0 0.0
    %684 = vmatpush1.msra.mxu0 0.0
    %685 = vmatprep.subr.mxu0 0.0
    %686 = vmatpush1.msra.mxu0 0.0
    %687 = vmatprep.subr.mxu0 0.0
    %688 = vmatpush1.msra.mxu0 0.0
    %689 = vmatprep.subr.mxu0 0.0
    %690 = vmatpush1.msra.mxu0 0.0
    %691 = vmatprep.subr.mxu0 0.0
    %692 = vmatpush1.msra.mxu0 0.0
    %693 = vmatprep.subr.mxu0 0.0
    %694 = vmatpush1.msra.mxu0 0.0
    %695 = vmatprep.subr.mxu0 0.0
    %696 = vmatpush1.msra.mxu0 0.0
    %697 = vmatprep.subr.mxu0 0.0
    %698 = vmatpush1.msra.mxu0 0.0
    %699 = vmatprep.subr.mxu0 0.0
    %700 = vmatpush1.msra.mxu0 0.0
    %701 = vmatprep.subr.mxu0 0.0
    %702 = vmatpush1.msra.mxu0 0.0
    %703 = vmatprep.subr.mxu0 0.0
    %704 = vmatpush1.msra.mxu0 0.0
    %705 = vmatprep.subr.mxu0 0.0
    %706 = vmatpush1.msra.mxu0 0.0
    %707 = vmatprep.subr.mxu0 0.0
    %708 = vmatpush1.msra.mxu0 0.0
    %709 = vmatprep.subr.mxu0 0.0
    %710 = vmatpush1.msra.mxu0 0.0
    %711 = vmatprep.subr.mxu0 0.0
    %712 = vmatpush1.msra.mxu0 0.0
    %713 = vmatprep.subr.mxu0 0.0
    %714 = vmatpush1.msra.mxu0 0.0
    %715 = vmatprep.subr.mxu0 0.0
    %716 = vmatpush1.msra.mxu0 0.0
    %717 = vmatprep.subr.mxu0 0.0
    %718 = vmatpush1.msra.mxu0 0.0
    %719 = vmatprep.subr.mxu0 0.0
    %720 = vmatpush1.msra.mxu0 0.0
    %721 = vmatprep.subr.mxu0 0.0
    %722 = vmatpush1.msra.mxu0 0.0
    %723 = vmatprep.subr.mxu0 0.0
    %724 = vmatpush1.msra.mxu0 0.0
    %725 = vmatprep.subr.mxu0 0.0
    %726 = vmatpush1.msra.mxu0 0.0
    %727 = vmatprep.subr.mxu0 0.0
    %728 = vmatpush1.msra.mxu0 0.0
    %729 = vmatprep.subr.mxu0 0.0
    %730 = vmatpush1.msra.mxu0 0.0
    %731 = vmatprep.mubr.f32.mxu0 0.0
    %732 = vmatmul.mubr.f32.gmra.mrb[0].mxu0 %v665
    %v733 = vpop.f32.mrb[0].mxu0
    %v734 = vadd.f32 0.0, %v733
    %v735 = vpop.f32.mrb[0].mxu0
    %736 = vdwg.mxu0
    %v738 = vrot.slane %v734, 6
    %v740 = vadd.f32 %v450, %v738
    %v741 = vxor.u32 %v740, 2147483648
    %v742 = vmul.f32 %v741, 1.442695
    %v743 = vpow.pop %v742
    %v744 = vadd.f32 %v743, 1.0
    %v745 = vrcp.pop %v744
    %v746 = vmul.f32 1.0, %v745
    %v747 = vtanh.pop %v740
    %v749 = vrot.slane %v654, 7
    %v751 = vmul.f32 %v746, %v749
    %753 = vrot.lane.b32.xlu0 %v747, 64
    %v754 = vpop.permute.xlu0 %753
    %v756 = vmul.f32 %v746, %v754
    %758 = vrot.lane.b32.xlu0 %v756, 32
    %v759 = vpop.permute.xlu0 %758
    %v761 = vadd.f32 %v751, %v759
    %v762 = vtanh.pop %v761
    %764 = vrot.lane.b32.xlu0 %v762, 64
    %v765 = vpop.permute.xlu0 %764
    %v767 = vmul.f32 %v746, %v765
    %v769 = vrot.slane %v767, 2
    %770 = vrot.lane.b32.xlu0 %v769, 32
    %v771 = vpop.permute.xlu0 %770
    %v772 = vsel %vm209, %v771, 0
    %774 = vmatprep.subr.mxu0 0.0
    %775 = vmatpush1.msra.mxu0 %v453
    %776 = vmatprep.subr.mxu0 0.0
    %777 = vmatpush1.msra.mxu0 %v454
    %778 = vmatprep.subr.mxu0 0.0
    %779 = vmatpush1.msra.mxu0 %v455
    %780 = vmatprep.subr.mxu0 0.0
    %781 = vmatpush1.msra.mxu0 %v456
    %782 = vmatprep.subr.mxu0 0.0
    %783 = vmatpush1.msra.mxu0 0.0
    %784 = vmatprep.subr.mxu0 0.0
    %785 = vmatpush1.msra.mxu0 0.0
    %786 = vmatprep.subr.mxu0 0.0
    %787 = vmatpush1.msra.mxu0 0.0
    %788 = vmatprep.subr.mxu0 0.0
    %789 = vmatpush1.msra.mxu0 0.0
    %790 = vmatprep.subr.mxu0 0.0
    %791 = vmatpush1.msra.mxu0 0.0
    %792 = vmatprep.subr.mxu0 0.0
    %793 = vmatpush1.msra.mxu0 0.0
    %794 = vmatprep.subr.mxu0 0.0
    %795 = vmatpush1.msra.mxu0 0.0
    %796 = vmatprep.subr.mxu0 0.0
    %797 = vmatpush1.msra.mxu0 0.0
    %798 = vmatprep.subr.mxu0 0.0
    %799 = vmatpush1.msra.mxu0 0.0
    %800 = vmatprep.subr.mxu0 0.0
    %801 = vmatpush1.msra.mxu0 0.0
    %802 = vmatprep.subr.mxu0 0.0
    %803 = vmatpush1.msra.mxu0 0.0
    %804 = vmatprep.subr.mxu0 0.0
    %805 = vmatpush1.msra.mxu0 0.0
    %806 = vmatprep.subr.mxu0 0.0
    %807 = vmatpush1.msra.mxu0 0.0
    %808 = vmatprep.subr.mxu0 0.0
    %809 = vmatpush1.msra.mxu0 0.0
    %810 = vmatprep.subr.mxu0 0.0
    %811 = vmatpush1.msra.mxu0 0.0
    %812 = vmatprep.subr.mxu0 0.0
    %813 = vmatpush1.msra.mxu0 0.0
    %814 = vmatprep.subr.mxu0 0.0
    %815 = vmatpush1.msra.mxu0 0.0
    %816 = vmatprep.subr.mxu0 0.0
    %817 = vmatpush1.msra.mxu0 0.0
    %818 = vmatprep.subr.mxu0 0.0
    %819 = vmatpush1.msra.mxu0 0.0
    %820 = vmatprep.subr.mxu0 0.0
    %821 = vmatpush1.msra.mxu0 0.0
    %822 = vmatprep.subr.mxu0 0.0
    %823 = vmatpush1.msra.mxu0 0.0
    %824 = vmatprep.subr.mxu0 0.0
    %825 = vmatpush1.msra.mxu0 0.0
    %826 = vmatprep.subr.mxu0 0.0
    %827 = vmatpush1.msra.mxu0 0.0
    %828 = vmatprep.subr.mxu0 0.0
    %829 = vmatpush1.msra.mxu0 0.0
    %830 = vmatprep.subr.mxu0 0.0
    %831 = vmatpush1.msra.mxu0 0.0
    %832 = vmatprep.subr.mxu0 0.0
    %833 = vmatpush1.msra.mxu0 0.0
    %834 = vmatprep.subr.mxu0 0.0
    %835 = vmatpush1.msra.mxu0 0.0
    %836 = vmatprep.subr.mxu0 0.0
    %837 = vmatpush1.msra.mxu0 0.0
    %838 = vmatprep.mubr.f32.mxu0 0.0
    %839 = vmatmul.mubr.f32.gmra.mrb[0].mxu0 %v772
    %v840 = vpop.f32.mrb[0].mxu0
    %v841 = vadd.f32 0.0, %v840
    %v842 = vpop.f32.mrb[0].mxu0
    %843 = vdwg.mxu0
    %v845 = vrot.slane %v841, 5
    %v847 = vadd.f32 %v450, %v845
    %v848 = vxor.u32 %v847, 2147483648
    %v849 = vmul.f32 %v848, 1.442695
    %v850 = vpow.pop %v849
    %v851 = vadd.f32 %v850, 1.0
    %v852 = vrcp.pop %v851
    %v853 = vmul.f32 1.0, %v852
    %v854 = vtanh.pop %v847
    %v856 = vrot.slane %v761, 7
    %v858 = vmul.f32 %v853, %v856
    %860 = vrot.lane.b32.xlu0 %v854, 64
    %v861 = vpop.permute.xlu0 %860
    %v863 = vmul.f32 %v853, %v861
    %865 = vrot.lane.b32.xlu0 %v863, 32
    %v866 = vpop.permute.xlu0 %865
    %v868 = vadd.f32 %v858, %v866
    %v869 = vtanh.pop %v868
    %871 = vrot.lane.b32.xlu0 %v869, 64
    %v872 = vpop.permute.xlu0 %871
    %v874 = vmul.f32 %v853, %v872
    %v876 = vrot.slane %v874, 3
    %877 = vrot.lane.b32.xlu0 %v876, 32
    %v878 = vpop.permute.xlu0 %877
    %v879 = vsel %vm209, %v878, 0
    %881 = vmatprep.subr.mxu0 0.0
    %882 = vmatpush1.msra.mxu0 %v453
    %883 = vmatprep.subr.mxu0 0.0
    %884 = vmatpush1.msra.mxu0 %v454
    %885 = vmatprep.subr.mxu0 0.0
    %886 = vmatpush1.msra.mxu0 %v455
    %887 = vmatprep.subr.mxu0 0.0
    %888 = vmatpush1.msra.mxu0 %v456
    %889 = vmatprep.subr.mxu0 0.0
    %890 = vmatpush1.msra.mxu0 0.0
    %891 = vmatprep.subr.mxu0 0.0
    %892 = vmatpush1.msra.mxu0 0.0
    %893 = vmatprep.subr.mxu0 0.0
    %894 = vmatpush1.msra.mxu0 0.0
    %895 = vmatprep.subr.mxu0 0.0
    %896 = vmatpush1.msra.mxu0 0.0
    %897 = vmatprep.subr.mxu0 0.0
    %898 = vmatpush1.msra.mxu0 0.0
    %899 = vmatprep.subr.mxu0 0.0
    %900 = vmatpush1.msra.mxu0 0.0
    %901 = vmatprep.subr.mxu0 0.0
    %902 = vmatpush1.msra.mxu0 0.0
    %903 = vmatprep.subr.mxu0 0.0
    %904 = vmatpush1.msra.mxu0 0.0
    %905 = vmatprep.subr.mxu0 0.0
    %906 = vmatpush1.msra.mxu0 0.0
    %907 = vmatprep.subr.mxu0 0.0
    %908 = vmatpush1.msra.mxu0 0.0
    %909 = vmatprep.subr.mxu0 0.0
    %910 = vmatpush1.msra.mxu0 0.0
    %911 = vmatprep.subr.mxu0 0.0
    %912 = vmatpush1.msra.mxu0 0.0
    %913 = vmatprep.subr.mxu0 0.0
    %914 = vmatpush1.msra.mxu0 0.0
    %915 = vmatprep.subr.mxu0 0.0
    %916 = vmatpush1.msra.mxu0 0.0
    %917 = vmatprep.subr.mxu0 0.0
    %918 = vmatpush1.msra.mxu0 0.0
    %919 = vmatprep.subr.mxu0 0.0
    %920 = vmatpush1.msra.mxu0 0.0
    %921 = vmatprep.subr.mxu0 0.0
    %922 = vmatpush1.msra.mxu0 0.0
    %923 = vmatprep.subr.mxu0 0.0
    %924 = vmatpush1.msra.mxu0 0.0
    %925 = vmatprep.subr.mxu0 0.0
    %926 = vmatpush1.msra.mxu0 0.0
    %927 = vmatprep.subr.mxu0 0.0
    %928 = vmatpush1.msra.mxu0 0.0
    %929 = vmatprep.subr.mxu0 0.0
    %930 = vmatpush1.msra.mxu0 0.0
    %931 = vmatprep.subr.mxu0 0.0
    %932 = vmatpush1.msra.mxu0 0.0
    %933 = vmatprep.subr.mxu0 0.0
    %934 = vmatpush1.msra.mxu0 0.0
    %935 = vmatprep.subr.mxu0 0.0
    %936 = vmatpush1.msra.mxu0 0.0
    %937 = vmatprep.subr.mxu0 0.0
    %938 = vmatpush1.msra.mxu0 0.0
    %939 = vmatprep.subr.mxu0 0.0
    %940 = vmatpush1.msra.mxu0 0.0
    %941 = vmatprep.subr.mxu0 0.0
    %942 = vmatpush1.msra.mxu0 0.0
    %943 = vmatprep.subr.mxu0 0.0
    %944 = vmatpush1.msra.mxu0 0.0
    %945 = vmatprep.mubr.f32.mxu0 0.0
    %946 = vmatmul.mubr.f32.gmra.mrb[0].mxu0 %v879
    %v947 = vpop.f32.mrb[0].mxu0
    %v948 = vadd.f32 0.0, %v947
    %v949 = vpop.f32.mrb[0].mxu0
    %950 = vdwg.mxu0
    %v952 = vrot.slane %v948, 4
    %v954 = vadd.f32 %v450, %v952
    %v955 = vxor.u32 %v954, 2147483648
    %v956 = vmul.f32 %v955, 1.442695
    %v957 = vpow.pop %v956
    %v958 = vadd.f32 %v957, 1.0
    %v959 = vrcp.pop %v958
    %v960 = vmul.f32 1.0, %v959
    %v961 = vtanh.pop %v954
    %v963 = vrot.slane %v868, 7
    %v965 = vmul.f32 %v960, %v963
    %967 = vrot.lane.b32.xlu0 %v961, 64
    %v968 = vpop.permute.xlu0 %967
    %v970 = vmul.f32 %v960, %v968
    %972 = vrot.lane.b32.xlu0 %v970, 32
    %v973 = vpop.permute.xlu0 %972
    %v975 = vadd.f32 %v965, %v973
    %v976 = vtanh.pop %v975
    %978 = vrot.lane.b32.xlu0 %v976, 64
    %v979 = vpop.permute.xlu0 %978
    %v981 = vmul.f32 %v960, %v979
    %v983 = vrot.slane %v981, 4
    %984 = vrot.lane.b32.xlu0 %v983, 32
    %v985 = vpop.permute.xlu0 %984
    %v986 = vsel %vm209, %v985, 0
    %988 = vmatprep.subr.mxu0 0.0
    %989 = vmatpush1.msra.mxu0 %v453
    %990 = vmatprep.subr.mxu0 0.0
    %991 = vmatpush1.msra.mxu0 %v454
    %992 = vmatprep.subr.mxu0 0.0
    %993 = vmatpush1.msra.mxu0 %v455
    %994 = vmatprep.subr.mxu0 0.0
    %995 = vmatpush1.msra.mxu0 %v456
    %996 = vmatprep.subr.mxu0 0.0
    %997 = vmatpush1.msra.mxu0 0.0
    %998 = vmatprep.subr.mxu0 0.0
    %999 = vmatpush1.msra.mxu0 0.0
    %1000 = vmatprep.subr.mxu0 0.0
    %1001 = vmatpush1.msra.mxu0 0.0
    %1002 = vmatprep.subr.mxu0 0.0
    %1003 = vmatpush1.msra.mxu0 0.0
    %1004 = vmatprep.subr.mxu0 0.0
    %1005 = vmatpush1.msra.mxu0 0.0
    %1006 = vmatprep.subr.mxu0 0.0
    %1007 = vmatpush1.msra.mxu0 0.0
    %1008 = vmatprep.subr.mxu0 0.0
    %1009 = vmatpush1.msra.mxu0 0.0
    %1010 = vmatprep.subr.mxu0 0.0
    %1011 = vmatpush1.msra.mxu0 0.0
    %1012 = vmatprep.subr.mxu0 0.0
    %1013 = vmatpush1.msra.mxu0 0.0
    %1014 = vmatprep.subr.mxu0 0.0
    %1015 = vmatpush1.msra.mxu0 0.0
    %1016 = vmatprep.subr.mxu0 0.0
    %1017 = vmatpush1.msra.mxu0 0.0
    %1018 = vmatprep.subr.mxu0 0.0
    %1019 = vmatpush1.msra.mxu0 0.0
    %1020 = vmatprep.subr.mxu0 0.0
    %1021 = vmatpush1.msra.mxu0 0.0
    %1022 = vmatprep.subr.mxu0 0.0
    %1023 = vmatpush1.msra.mxu0 0.0
    %1024 = vmatprep.subr.mxu0 0.0
    %1025 = vmatpush1.msra.mxu0 0.0
    %1026 = vmatprep.subr.mxu0 0.0
    %1027 = vmatpush1.msra.mxu0 0.0
    %1028 = vmatprep.subr.mxu0 0.0
    %1029 = vmatpush1.msra.mxu0 0.0
    %1030 = vmatprep.subr.mxu0 0.0
    %1031 = vmatpush1.msra.mxu0 0.0
    %1032 = vmatprep.subr.mxu0 0.0
    %1033 = vmatpush1.msra.mxu0 0.0
    %1034 = vmatprep.subr.mxu0 0.0
    %1035 = vmatpush1.msra.mxu0 0.0
    %1036 = vmatprep.subr.mxu0 0.0
    %1037 = vmatpush1.msra.mxu0 0.0
    %1038 = vmatprep.subr.mxu0 0.0
    %1039 = vmatpush1.msra.mxu0 0.0
    %1040 = vmatprep.subr.mxu0 0.0
    %1041 = vmatpush1.msra.mxu0 0.0
    %1042 = vmatprep.subr.mxu0 0.0
    %1043 = vmatpush1.msra.mxu0 0.0
    %1044 = vmatprep.subr.mxu0 0.0
    %1045 = vmatpush1.msra.mxu0 0.0
    %1046 = vmatprep.subr.mxu0 0.0
    %1047 = vmatpush1.msra.mxu0 0.0
    %1048 = vmatprep.subr.mxu0 0.0
    %1049 = vmatpush1.msra.mxu0 0.0
    %1050 = vmatprep.subr.mxu0 0.0
    %1051 = vmatpush1.msra.mxu0 0.0
    %1052 = vmatprep.mubr.f32.mxu0 0.0
    %1053 = vmatmul.mubr.f32.gmra.mrb[0].mxu0 %v986
    %v1054 = vpop.f32.mrb[0].mxu0
    %v1055 = vadd.f32 0.0, %v1054
    %v1056 = vpop.f32.mrb[0].mxu0
    %1057 = vdwg.mxu0
    %v1059 = vrot.slane %v1055, 3
    %v1061 = vadd.f32 %v450, %v1059
    %v1062 = vxor.u32 %v1061, 2147483648
    %v1063 = vmul.f32 %v1062, 1.442695
    %v1064 = vpow.pop %v1063
    %v1065 = vadd.f32 %v1064, 1.0
    %v1066 = vrcp.pop %v1065
    %v1067 = vmul.f32 1.0, %v1066
    %v1068 = vtanh.pop %v1061
    %v1070 = vrot.slane %v975, 7
    %v1072 = vmul.f32 %v1067, %v1070
    %1074 = vrot.lane.b32.xlu0 %v1068, 64
    %v1075 = vpop.permute.xlu0 %1074
    %v1077 = vmul.f32 %v1067, %v1075
    %1079 = vrot.lane.b32.xlu0 %v1077, 32
    %v1080 = vpop.permute.xlu0 %1079
    %v1082 = vadd.f32 %v1072, %v1080
    %v1083 = vtanh.pop %v1082
    %1085 = vrot.lane.b32.xlu0 %v1083, 64
    %v1086 = vpop.permute.xlu0 %1085
    %v1088 = vmul.f32 %v1067, %v1086
    %v1090 = vrot.slane %v1088, 5
    %1091 = vrot.lane.b32.xlu0 %v1090, 32
    %v1092 = vpop.permute.xlu0 %1091
    %v1093 = vsel %vm209, %v1092, 0
    %1095 = vmatprep.subr.mxu0 0.0
    %1096 = vmatpush1.msra.mxu0 %v453
    %1097 = vmatprep.subr.mxu0 0.0
    %1098 = vmatpush1.msra.mxu0 %v454
    %1099 = vmatprep.subr.mxu0 0.0
    %1100 = vmatpush1.msra.mxu0 %v455
    %1101 = vmatprep.subr.mxu0 0.0
    %1102 = vmatpush1.msra.mxu0 %v456
    %1103 = vmatprep.subr.mxu0 0.0
    %1104 = vmatpush1.msra.mxu0 0.0
    %1105 = vmatprep.subr.mxu0 0.0
    %1106 = vmatpush1.msra.mxu0 0.0
    %1107 = vmatprep.subr.mxu0 0.0
    %1108 = vmatpush1.msra.mxu0 0.0
    %1109 = vmatprep.subr.mxu0 0.0
    %1110 = vmatpush1.msra.mxu0 0.0
    %1111 = vmatprep.subr.mxu0 0.0
    %1112 = vmatpush1.msra.mxu0 0.0
    %1113 = vmatprep.subr.mxu0 0.0
    %1114 = vmatpush1.msra.mxu0 0.0
    %1115 = vmatprep.subr.mxu0 0.0
    %1116 = vmatpush1.msra.mxu0 0.0
    %1117 = vmatprep.subr.mxu0 0.0
    %1118 = vmatpush1.msra.mxu0 0.0
    %1119 = vmatprep.subr.mxu0 0.0
    %1120 = vmatpush1.msra.mxu0 0.0
    %1121 = vmatprep.subr.mxu0 0.0
    %1122 = vmatpush1.msra.mxu0 0.0
    %1123 = vmatprep.subr.mxu0 0.0
    %1124 = vmatpush1.msra.mxu0 0.0
    %1125 = vmatprep.subr.mxu0 0.0
    %1126 = vmatpush1.msra.mxu0 0.0
    %1127 = vmatprep.subr.mxu0 0.0
    %1128 = vmatpush1.msra.mxu0 0.0
    %1129 = vmatprep.subr.mxu0 0.0
    %1130 = vmatpush1.msra.mxu0 0.0
    %1131 = vmatprep.subr.mxu0 0.0
    %1132 = vmatpush1.msra.mxu0 0.0
    %1133 = vmatprep.subr.mxu0 0.0
    %1134 = vmatpush1.msra.mxu0 0.0
    %1135 = vmatprep.subr.mxu0 0.0
    %1136 = vmatpush1.msra.mxu0 0.0
    %1137 = vmatprep.subr.mxu0 0.0
    %1138 = vmatpush1.msra.mxu0 0.0
    %1139 = vmatprep.subr.mxu0 0.0
    %1140 = vmatpush1.msra.mxu0 0.0
    %1141 = vmatprep.subr.mxu0 0.0
    %1142 = vmatpush1.msra.mxu0 0.0
    %1143 = vmatprep.subr.mxu0 0.0
    %1144 = vmatpush1.msra.mxu0 0.0
    %1145 = vmatprep.subr.mxu0 0.0
    %1146 = vmatpush1.msra.mxu0 0.0
    %1147 = vmatprep.subr.mxu0 0.0
    %1148 = vmatpush1.msra.mxu0 0.0
    %1149 = vmatprep.subr.mxu0 0.0
    %1150 = vmatpush1.msra.mxu0 0.0
    %1151 = vmatprep.subr.mxu0 0.0
    %1152 = vmatpush1.msra.mxu0 0.0
    %1153 = vmatprep.subr.mxu0 0.0
    %1154 = vmatpush1.msra.mxu0 0.0
    %1155 = vmatprep.subr.mxu0 0.0
    %1156 = vmatpush1.msra.mxu0 0.0
    %1157 = vmatprep.subr.mxu0 0.0
    %1158 = vmatpush1.msra.mxu0 0.0
    %1159 = vmatprep.mubr.f32.mxu0 0.0
    %1160 = vmatmul.mubr.f32.gmra.mrb[0].mxu0 %v1093
    %v1161 = vpop.f32.mrb[0].mxu0
    %v1162 = vadd.f32 0.0, %v1161
    %v1163 = vpop.f32.mrb[0].mxu0
    %1164 = vdwg.mxu0
    %v1166 = vrot.slane %v1162, 2
    %v1168 = vadd.f32 %v450, %v1166
    %v1169 = vxor.u32 %v1168, 2147483648
    %v1170 = vmul.f32 %v1169, 1.442695
    %v1171 = vpow.pop %v1170
    %v1172 = vadd.f32 %v1171, 1.0
    %v1173 = vrcp.pop %v1172
    %v1174 = vmul.f32 1.0, %v1173
    %v1175 = vtanh.pop %v1168
    %v1177 = vrot.slane %v1082, 7
    %v1179 = vmul.f32 %v1174, %v1177
    %1181 = vrot.lane.b32.xlu0 %v1175, 64
    %v1182 = vpop.permute.xlu0 %1181
    %v1184 = vmul.f32 %v1174, %v1182
    %1186 = vrot.lane.b32.xlu0 %v1184, 32
    %v1187 = vpop.permute.xlu0 %1186
    %v1189 = vadd.f32 %v1179, %v1187
    %v1190 = vtanh.pop %v1189
    %1192 = vrot.lane.b32.xlu0 %v1190, 64
    %v1193 = vpop.permute.xlu0 %1192
    %v1195 = vmul.f32 %v1174, %v1193
    %v1197 = vrot.slane %v1195, 6
    %1198 = vrot.lane.b32.xlu0 %v1197, 32
    %v1199 = vpop.permute.xlu0 %1198
    %v1200 = vsel %vm209, %v1199, 0
    %1202 = vmatprep.subr.mxu0 0.0
    %1203 = vmatpush1.msra.mxu0 %v453
    %1204 = vmatprep.subr.mxu0 0.0
    %1205 = vmatpush1.msra.mxu0 %v454
    %1206 = vmatprep.subr.mxu0 0.0
    %1207 = vmatpush1.msra.mxu0 %v455
    %1208 = vmatprep.subr.mxu0 0.0
    %1209 = vmatpush1.msra.mxu0 %v456
    %1210 = vmatprep.subr.mxu0 0.0
    %1211 = vmatpush1.msra.mxu0 0.0
    %1212 = vmatprep.subr.mxu0 0.0
    %1213 = vmatpush1.msra.mxu0 0.0
    %1214 = vmatprep.subr.mxu0 0.0
    %1215 = vmatpush1.msra.mxu0 0.0
    %1216 = vmatprep.subr.mxu0 0.0
    %1217 = vmatpush1.msra.mxu0 0.0
    %1218 = vmatprep.subr.mxu0 0.0
    %1219 = vmatpush1.msra.mxu0 0.0
    %1220 = vmatprep.subr.mxu0 0.0
    %1221 = vmatpush1.msra.mxu0 0.0
    %1222 = vmatprep.subr.mxu0 0.0
    %1223 = vmatpush1.msra.mxu0 0.0
    %1224 = vmatprep.subr.mxu0 0.0
    %1225 = vmatpush1.msra.mxu0 0.0
    %1226 = vmatprep.subr.mxu0 0.0
    %1227 = vmatpush1.msra.mxu0 0.0
    %1228 = vmatprep.subr.mxu0 0.0
    %1229 = vmatpush1.msra.mxu0 0.0
    %1230 = vmatprep.subr.mxu0 0.0
    %1231 = vmatpush1.msra.mxu0 0.0
    %1232 = vmatprep.subr.mxu0 0.0
    %1233 = vmatpush1.msra.mxu0 0.0
    %1234 = vmatprep.subr.mxu0 0.0
    %1235 = vmatpush1.msra.mxu0 0.0
    %1236 = vmatprep.subr.mxu0 0.0
    %1237 = vmatpush1.msra.mxu0 0.0
    %1238 = vmatprep.subr.mxu0 0.0
    %1239 = vmatpush1.msra.mxu0 0.0
    %1240 = vmatprep.subr.mxu0 0.0
    %1241 = vmatpush1.msra.mxu0 0.0
    %1242 = vmatprep.subr.mxu0 0.0
    %1243 = vmatpush1.msra.mxu0 0.0
    %1244 = vmatprep.subr.mxu0 0.0
    %1245 = vmatpush1.msra.mxu0 0.0
    %1246 = vmatprep.subr.mxu0 0.0
    %1247 = vmatpush1.msra.mxu0 0.0
    %1248 = vmatprep.subr.mxu0 0.0
    %1249 = vmatpush1.msra.mxu0 0.0
    %1250 = vmatprep.subr.mxu0 0.0
    %1251 = vmatpush1.msra.mxu0 0.0
    %1252 = vmatprep.subr.mxu0 0.0
    %1253 = vmatpush1.msra.mxu0 0.0
    %1254 = vmatprep.subr.mxu0 0.0
    %1255 = vmatpush1.msra.mxu0 0.0
    %1256 = vmatprep.subr.mxu0 0.0
    %1257 = vmatpush1.msra.mxu0 0.0
    %1258 = vmatprep.subr.mxu0 0.0
    %1259 = vmatpush1.msra.mxu0 0.0
    %1260 = vmatprep.subr.mxu0 0.0
    %1261 = vmatpush1.msra.mxu0 0.0
    %1262 = vmatprep.subr.mxu0 0.0
    %1263 = vmatpush1.msra.mxu0 0.0
    %1264 = vmatprep.subr.mxu0 0.0
    %1265 = vmatpush1.msra.mxu0 0.0
    %1266 = vmatprep.mubr.f32.mxu0 0.0
    %1267 = vmatmul.mubr.f32.gmra.mrb[0].mxu0 %v1200
    %v1268 = vpop.f32.mrb[0].mxu0
    %v1269 = vadd.f32 0.0, %v1268
    %v1270 = vpop.f32.mrb[0].mxu0
    %1271 = vdwg.mxu0
    %v1273 = vrot.slane %v1269, 1
    %v1275 = vadd.f32 %v450, %v1273
    %v1276 = vxor.u32 %v1275, 2147483648
    %v1277 = vmul.f32 %v1276, 1.442695
    %v1278 = vpow.pop %v1277
    %v1279 = vadd.f32 %v1278, 1.0
    %v1280 = vrcp.pop %v1279
    %v1281 = vmul.f32 1.0, %v1280
    %v1282 = vtanh.pop %v1275
    %v1284 = vrot.slane %v1189, 7
    %v1286 = vmul.f32 %v1281, %v1284
    %1288 = vrot.lane.b32.xlu0 %v1282, 64
    %v1289 = vpop.permute.xlu0 %1288
    %v1291 = vmul.f32 %v1281, %v1289
    %1293 = vrot.lane.b32.xlu0 %v1291, 32
    %v1294 = vpop.permute.xlu0 %1293
    %v1296 = vadd.f32 %v1286, %v1294
    %v1297 = vtanh.pop %v1296
    %1299 = vrot.lane.b32.xlu0 %v1297, 64
    %v1300 = vpop.permute.xlu0 %1299
    %v1302 = vmul.f32 %v1281, %v1300
    %vm1303 = vcmask 1040384
    %v1304 = vsel %vm1303, %v554, %v660
    %vm1305 = vcmask 1041408
    %v1306 = vsel %vm1305, %v1304, %v767
    %vm1307 = vcmask 1042432
    %v1308 = vsel %vm1307, %v1306, %v874
    %vm1309 = vcmask 1043456
    %v1310 = vsel %vm1309, %v1308, %v981
    %vm1311 = vcmask 1044480
    %v1312 = vsel %vm1311, %v1310, %v1088
    %vm1313 = vcmask 1045504
    %v1314 = vsel %vm1313, %v1312, %v1195
    %vm1315 = vcmask 1046528
    %v1316 = vsel %vm1315, %v1314, %v1302
    %s1317 = scalar_lea.vmem %s5, 32
    %v1318 = vld [vmem:[%s1317] sm:$0xff]
    %v1319 = vld [vmem:[%s1317 + $0x8] sm:$0xff]
    %v1320 = vld [vmem:[%s1317 + $0x10] sm:$0xff]
    %v1321 = vld [vmem:[%s1317 + $0x18] sm:$0xff]
    %s1322 = scalar_lea.vmem %s7, 1
    %v1323 = vld [vmem:[%s1322] sm:$0x1]
    %v1325 = vlaneseq
    %v1326 = vshrl.u32 %v1325, 7
    %v1327 = vsub.s32 0, %v1326
    %v1328 = vrot.slane %v1323, %v1327
    %1331 = vrot.lane.b32.xlu0 %v1316, 32
    %v1332 = vpop.permute.xlu0 %1331
    %v1333 = vsel %vm209, %v1332, 0
    %1335 = vmatprep.subr.mxu0 0.0
    %1336 = vmatpush1.msra.mxu0 %v1318
    %1337 = vmatprep.subr.mxu0 0.0
    %1338 = vmatpush1.msra.mxu0 %v1319
    %1339 = vmatprep.subr.mxu0 0.0
    %1340 = vmatpush1.msra.mxu0 %v1320
    %1341 = vmatprep.subr.mxu0 0.0
    %1342 = vmatpush1.msra.mxu0 %v1321
    %1343 = vmatprep.subr.mxu0 0.0
    %1344 = vmatpush1.msra.mxu0 0.0
    %1345 = vmatprep.subr.mxu0 0.0
    %1346 = vmatpush1.msra.mxu0 0.0
    %1347 = vmatprep.subr.mxu0 0.0
    %1348 = vmatpush1.msra.mxu0 0.0
    %1349 = vmatprep.subr.mxu0 0.0
    %1350 = vmatpush1.msra.mxu0 0.0
    %1351 = vmatprep.subr.mxu0 0.0
    %1352 = vmatpush1.msra.mxu0 0.0
    %1353 = vmatprep.subr.mxu0 0.0
    %1354 = vmatpush1.msra.mxu0 0.0
    %1355 = vmatprep.subr.mxu0 0.0
    %1356 = vmatpush1.msra.mxu0 0.0
    %1357 = vmatprep.subr.mxu0 0.0
    %1358 = vmatpush1.msra.mxu0 0.0
    %1359 = vmatprep.subr.mxu0 0.0
    %1360 = vmatpush1.msra.mxu0 0.0
    %1361 = vmatprep.subr.mxu0 0.0
    %1362 = vmatpush1.msra.mxu0 0.0
    %1363 = vmatprep.subr.mxu0 0.0
    %1364 = vmatpush1.msra.mxu0 0.0
    %1365 = vmatprep.subr.mxu0 0.0
    %1366 = vmatpush1.msra.mxu0 0.0
    %1367 = vmatprep.subr.mxu0 0.0
    %1368 = vmatpush1.msra.mxu0 0.0
    %1369 = vmatprep.subr.mxu0 0.0
    %1370 = vmatpush1.msra.mxu0 0.0
    %1371 = vmatprep.subr.mxu0 0.0
    %1372 = vmatpush1.msra.mxu0 0.0
    %1373 = vmatprep.subr.mxu0 0.0
    %1374 = vmatpush1.msra.mxu0 0.0
    %1375 = vmatprep.subr.mxu0 0.0
    %1376 = vmatpush1.msra.mxu0 0.0
    %1377 = vmatprep.subr.mxu0 0.0
    %1378 = vmatpush1.msra.mxu0 0.0
    %1379 = vmatprep.subr.mxu0 0.0
    %1380 = vmatpush1.msra.mxu0 0.0
    %1381 = vmatprep.subr.mxu0 0.0
    %1382 = vmatpush1.msra.mxu0 0.0
    %1383 = vmatprep.subr.mxu0 0.0
    %1384 = vmatpush1.msra.mxu0 0.0
    %1385 = vmatprep.subr.mxu0 0.0
    %1386 = vmatpush1.msra.mxu0 0.0
    %1387 = vmatprep.subr.mxu0 0.0
    %1388 = vmatpush1.msra.mxu0 0.0
    %1389 = vmatprep.subr.mxu0 0.0
    %1390 = vmatpush1.msra.mxu0 0.0
    %1391 = vmatprep.subr.mxu0 0.0
    %1392 = vmatpush1.msra.mxu0 0.0
    %1393 = vmatprep.subr.mxu0 0.0
    %1394 = vmatpush1.msra.mxu0 0.0
    %1395 = vmatprep.subr.mxu0 0.0
    %1396 = vmatpush1.msra.mxu0 0.0
    %1397 = vmatprep.subr.mxu0 0.0
    %1398 = vmatpush1.msra.mxu0 0.0
    %1399 = vmatprep.mubr.f32.mxu0 0.0
    %1400 = vmatmul.mubr.f32.gmra.mrb[0].mxu0 %v1333
    %v1401 = vpop.f32.mrb[0].mxu0
    %v1402 = vadd.f32 %v1328, %v1401
    %v1403 = vpop.f32.mrb[0].mxu0
    %1404 = vdwg.mxu0
    %s1405 = scalar_lea.vmem %s6, 32
    %v1406 = vld [vmem:[%s1405] sm:$0xff]
    %v1407 = vld [vmem:[%s1405 + $0x8] sm:$0xff]
    %v1408 = vld [vmem:[%s1405 + $0x10] sm:$0xff]
    %v1409 = vld [vmem:[%s1405 + $0x18] sm:$0xff]
    %1410 = vmatprep.subr.mxu0 0.0
    %1411 = vmatpush1.msra.mxu0 %v1406
    %1412 = vmatprep.subr.mxu0 0.0
    %1413 = vmatpush1.msra.mxu0 %v1407
    %1414 = vmatprep.subr.mxu0 0.0
    %1415 = vmatpush1.msra.mxu0 %v1408
    %1416 = vmatprep.subr.mxu0 0.0
    %1417 = vmatpush1.msra.mxu0 %v1409
    %1418 = vmatprep.subr.mxu0 0.0
    %1419 = vmatpush1.msra.mxu0 0.0
    %1420 = vmatprep.subr.mxu0 0.0
    %1421 = vmatpush1.msra.mxu0 0.0
    %1422 = vmatprep.subr.mxu0 0.0
    %1423 = vmatpush1.msra.mxu0 0.0
    %1424 = vmatprep.subr.mxu0 0.0
    %1425 = vmatpush1.msra.mxu0 0.0
    %1426 = vmatprep.subr.mxu0 0.0
    %1427 = vmatpush1.msra.mxu0 0.0
    %1428 = vmatprep.subr.mxu0 0.0
    %1429 = vmatpush1.msra.mxu0 0.0
    %1430 = vmatprep.subr.mxu0 0.0
    %1431 = vmatpush1.msra.mxu0 0.0
    %1432 = vmatprep.subr.mxu0 0.0
    %1433 = vmatpush1.msra.mxu0 0.0
    %1434 = vmatprep.subr.mxu0 0.0
    %1435 = vmatpush1.msra.mxu0 0.0
    %1436 = vmatprep.subr.mxu0 0.0
    %1437 = vmatpush1.msra.mxu0 0.0
    %1438 = vmatprep.subr.mxu0 0.0
    %1439 = vmatpush1.msra.mxu0 0.0
    %1440 = vmatprep.subr.mxu0 0.0
    %1441 = vmatpush1.msra.mxu0 0.0
    %1442 = vmatprep.subr.mxu0 0.0
    %1443 = vmatpush1.msra.mxu0 0.0
    %1444 = vmatprep.subr.mxu0 0.0
    %1445 = vmatpush1.msra.mxu0 0.0
    %1446 = vmatprep.subr.mxu0 0.0
    %1447 = vmatpush1.msra.mxu0 0.0
    %1448 = vmatprep.subr.mxu0 0.0
    %1449 = vmatpush1.msra.mxu0 0.0
    %1450 = vmatprep.subr.mxu0 0.0
    %1451 = vmatpush1.msra.mxu0 0.0
    %1452 = vmatprep.subr.mxu0 0.0
    %1453 = vmatpush1.msra.mxu0 0.0
    %1454 = vmatprep.subr.mxu0 0.0
    %1455 = vmatpush1.msra.mxu0 0.0
    %1456 = vmatprep.subr.mxu0 0.0
    %1457 = vmatpush1.msra.mxu0 0.0
    %1458 = vmatprep.subr.mxu0 0.0
    %1459 = vmatpush1.msra.mxu0 0.0
    %1460 = vmatprep.subr.mxu0 0.0
    %1461 = vmatpush1.msra.mxu0 0.0
    %1462 = vmatprep.subr.mxu0 0.0
    %1463 = vmatpush1.msra.mxu0 0.0
    %1464 = vmatprep.subr.mxu0 0.0
    %1465 = vmatpush1.msra.mxu0 0.0
    %1466 = vmatprep.subr.mxu0 0.0
    %1467 = vmatpush1.msra.mxu0 0.0
    %1468 = vmatprep.subr.mxu0 0.0
    %1469 = vmatpush1.msra.mxu0 0.0
    %1470 = vmatprep.subr.mxu0 0.0
    %1471 = vmatpush1.msra.mxu0 0.0
    %1472 = vmatprep.subr.mxu0 0.0
    %1473 = vmatpush1.msra.mxu0 0.0
    %1474 = vmatprep.mubr.f32.mxu0 0.0
    %1475 = vmatmul.mubr.f32.gmra.mrb[0].mxu0 %v458
    %v1476 = vpop.f32.mrb[0].mxu0
    %v1477 = vadd.f32 0.0, %v1476
    %v1478 = vpop.f32.mrb[0].mxu0
    %1479 = vdwg.mxu0
    %v1480 = vadd.f32 %v1402, %v1477
    %v1481 = vxor.u32 %v1480, 2147483648
    %v1482 = vmul.f32 %v1481, 1.442695
    %v1483 = vpow.pop %v1482
    %v1484 = vadd.f32 %v1483, 1.0
    %v1485 = vrcp.pop %v1484
    %v1486 = vmul.f32 1.0, %v1485
    %v1487 = vtanh.pop %v1480
    %v1488 = vmul.f32 %v1486, 0.0
    %1490 = vrot.lane.b32.xlu0 %v1487, 64
    %v1491 = vpop.permute.xlu0 %1490
    %v1493 = vmul.f32 %v1486, %v1491
    %1495 = vrot.lane.b32.xlu0 %v1493, 32
    %v1496 = vpop.permute.xlu0 %1495
    %v1498 = vadd.f32 %v1488, %v1496
    %v1499 = vtanh.pop %v1498
    %1501 = vrot.lane.b32.xlu0 %v1499, 64
    %v1502 = vpop.permute.xlu0 %1501
    %v1504 = vmul.f32 %v1486, %v1502
    %1506 = vrot.lane.b32.xlu0 %v1504, 32
    %v1507 = vpop.permute.xlu0 %1506
    %v1508 = vsel %vm209, %v1507, 0
    %1510 = vmatprep.subr.mxu0 0.0
    %1511 = vmatpush1.msra.mxu0 %v1406
    %1512 = vmatprep.subr.mxu0 0.0
    %1513 = vmatpush1.msra.mxu0 %v1407
    %1514 = vmatprep.subr.mxu0 0.0
    %1515 = vmatpush1.msra.mxu0 %v1408
    %1516 = vmatprep.subr.mxu0 0.0
    %1517 = vmatpush1.msra.mxu0 %v1409
    %1518 = vmatprep.subr.mxu0 0.0
    %1519 = vmatpush1.msra.mxu0 0.0
    %1520 = vmatprep.subr.mxu0 0.0
    %1521 = vmatpush1.msra.mxu0 0.0
    %1522 = vmatprep.subr.mxu0 0.0
    %1523 = vmatpush1.msra.mxu0 0.0
    %1524 = vmatprep.subr.mxu0 0.0
    %1525 = vmatpush1.msra.mxu0 0.0
    %1526 = vmatprep.subr.mxu0 0.0
    %1527 = vmatpush1.msra.mxu0 0.0
    %1528 = vmatprep.subr.mxu0 0.0
    %1529 = vmatpush1.msra.mxu0 0.0
    %1530 = vmatprep.subr.mxu0 0.0
    %1531 = vmatpush1.msra.mxu0 0.0
    %1532 = vmatprep.subr.mxu0 0.0
    %1533 = vmatpush1.msra.mxu0 0.0
    %1534 = vmatprep.subr.mxu0 0.0
    %1535 = vmatpush1.msra.mxu0 0.0
    %1536 = vmatprep.subr.mxu0 0.0
    %1537 = vmatpush1.msra.mxu0 0.0
    %1538 = vmatprep.subr.mxu0 0.0
    %1539 = vmatpush1.msra.mxu0 0.0
    %1540 = vmatprep.subr.mxu0 0.0
    %1541 = vmatpush1.msra.mxu0 0.0
    %1542 = vmatprep.subr.mxu0 0.0
    %1543 = vmatpush1.msra.mxu0 0.0
    %1544 = vmatprep.subr.mxu0 0.0
    %1545 = vmatpush1.msra.mxu0 0.0
    %1546 = vmatprep.subr.mxu0 0.0
    %1547 = vmatpush1.msra.mxu0 0.0
    %1548 = vmatprep.subr.mxu0 0.0
    %1549 = vmatpush1.msra.mxu0 0.0
    %1550 = vmatprep.subr.mxu0 0.0
    %1551 = vmatpush1.msra.mxu0 0.0
    %1552 = vmatprep.subr.mxu0 0.0
    %1553 = vmatpush1.msra.mxu0 0.0
    %1554 = vmatprep.subr.mxu0 0.0
    %1555 = vmatpush1.msra.mxu0 0.0
    %1556 = vmatprep.subr.mxu0 0.0
    %1557 = vmatpush1.msra.mxu0 0.0
    %1558 = vmatprep.subr.mxu0 0.0
    %1559 = vmatpush1.msra.mxu0 0.0
    %1560 = vmatprep.subr.mxu0 0.0
    %1561 = vmatpush1.msra.mxu0 0.0
    %1562 = vmatprep.subr.mxu0 0.0
    %1563 = vmatpush1.msra.mxu0 0.0
    %1564 = vmatprep.subr.mxu0 0.0
    %1565 = vmatpush1.msra.mxu0 0.0
    %1566 = vmatprep.subr.mxu0 0.0
    %1567 = vmatpush1.msra.mxu0 0.0
    %1568 = vmatprep.subr.mxu0 0.0
    %1569 = vmatpush1.msra.mxu0 0.0
    %1570 = vmatprep.subr.mxu0 0.0
    %1571 = vmatpush1.msra.mxu0 0.0
    %1572 = vmatprep.subr.mxu0 0.0
    %1573 = vmatpush1.msra.mxu0 0.0
    %1574 = vmatprep.mubr.f32.mxu0 0.0
    %1575 = vmatmul.mubr.f32.gmra.mrb[0].mxu0 %v1508
    %v1576 = vpop.f32.mrb[0].mxu0
    %v1577 = vadd.f32 0.0, %v1576
    %v1578 = vpop.f32.mrb[0].mxu0
    %1579 = vdwg.mxu0
    %v1581 = vrot.slane %v1577, 7
    %v1583 = vadd.f32 %v1402, %v1581
    %v1584 = vxor.u32 %v1583, 2147483648
    %v1585 = vmul.f32 %v1584, 1.442695
    %v1586 = vpow.pop %v1585
    %v1587 = vadd.f32 %v1586, 1.0
    %v1588 = vrcp.pop %v1587
    %v1589 = vmul.f32 1.0, %v1588
    %v1590 = vtanh.pop %v1583
    %v1592 = vrot.slane %v1498, 7
    %v1594 = vmul.f32 %v1589, %v1592
    %1596 = vrot.lane.b32.xlu0 %v1590, 64
    %v1597 = vpop.permute.xlu0 %1596
    %v1599 = vmul.f32 %v1589, %v1597
    %1601 = vrot.lane.b32.xlu0 %v1599, 32
    %v1602 = vpop.permute.xlu0 %1601
    %v1604 = vadd.f32 %v1594, %v1602
    %v1605 = vtanh.pop %v1604
    %1607 = vrot.lane.b32.xlu0 %v1605, 64
    %v1608 = vpop.permute.xlu0 %1607
    %v1610 = vmul.f32 %v1589, %v1608
    %v1612 = vrot.slane %v1610, 1
    %1613 = vrot.lane.b32.xlu0 %v1612, 32
    %v1614 = vpop.permute.xlu0 %1613
    %v1615 = vsel %vm209, %v1614, 0
    %1617 = vmatprep.subr.mxu0 0.0
    %1618 = vmatpush1.msra.mxu0 %v1406
    %1619 = vmatprep.subr.mxu0 0.0
    %1620 = vmatpush1.msra.mxu0 %v1407
    %1621 = vmatprep.subr.mxu0 0.0
    %1622 = vmatpush1.msra.mxu0 %v1408
    %1623 = vmatprep.subr.mxu0 0.0
    %1624 = vmatpush1.msra.mxu0 %v1409
    %1625 = vmatprep.subr.mxu0 0.0
    %1626 = vmatpush1.msra.mxu0 0.0
    %1627 = vmatprep.subr.mxu0 0.0
    %1628 = vmatpush1.msra.mxu0 0.0
    %1629 = vmatprep.subr.mxu0 0.0
    %1630 = vmatpush1.msra.mxu0 0.0
    %1631 = vmatprep.subr.mxu0 0.0
    %1632 = vmatpush1.msra.mxu0 0.0
    %1633 = vmatprep.subr.mxu0 0.0
    %1634 = vmatpush1.msra.mxu0 0.0
    %1635 = vmatprep.subr.mxu0 0.0
    %1636 = vmatpush1.msra.mxu0 0.0
    %1637 = vmatprep.subr.mxu0 0.0
    %1638 = vmatpush1.msra.mxu0 0.0
    %1639 = vmatprep.subr.mxu0 0.0
    %1640 = vmatpush1.msra.mxu0 0.0
    %1641 = vmatprep.subr.mxu0 0.0
    %1642 = vmatpush1.msra.mxu0 0.0
    %1643 = vmatprep.subr.mxu0 0.0
    %1644 = vmatpush1.msra.mxu0 0.0
    %1645 = vmatprep.subr.mxu0 0.0
    %1646 = vmatpush1.msra.mxu0 0.0
    %1647 = vmatprep.subr.mxu0 0.0
    %1648 = vmatpush1.msra.mxu0 0.0
    %1649 = vmatprep.subr.mxu0 0.0
    %1650 = vmatpush1.msra.mxu0 0.0
    %1651 = vmatprep.subr.mxu0 0.0
    %1652 = vmatpush1.msra.mxu0 0.0
    %1653 = vmatprep.subr.mxu0 0.0
    %1654 = vmatpush1.msra.mxu0 0.0
    %1655 = vmatprep.subr.mxu0 0.0
    %1656 = vmatpush1.msra.mxu0 0.0
    %1657 = vmatprep.subr.mxu0 0.0
    %1658 = vmatpush1.msra.mxu0 0.0
    %1659 = vmatprep.subr.mxu0 0.0
    %1660 = vmatpush1.msra.mxu0 0.0
    %1661 = vmatprep.subr.mxu0 0.0
    %1662 = vmatpush1.msra.mxu0 0.0
    %1663 = vmatprep.subr.mxu0 0.0
    %1664 = vmatpush1.msra.mxu0 0.0
    %1665 = vmatprep.subr.mxu0 0.0
    %1666 = vmatpush1.msra.mxu0 0.0
    %1667 = vmatprep.subr.mxu0 0.0
    %1668 = vmatpush1.msra.mxu0 0.0
    %1669 = vmatprep.subr.mxu0 0.0
    %1670 = vmatpush1.msra.mxu0 0.0
    %1671 = vmatprep.subr.mxu0 0.0
    %1672 = vmatpush1.msra.mxu0 0.0
    %1673 = vmatprep.subr.mxu0 0.0
    %1674 = vmatpush1.msra.mxu0 0.0
    %1675 = vmatprep.subr.mxu0 0.0
    %1676 = vmatpush1.msra.mxu0 0.0
    %1677 = vmatprep.subr.mxu0 0.0
    %1678 = vmatpush1.msra.mxu0 0.0
    %1679 = vmatprep.subr.mxu0 0.0
    %1680 = vmatpush1.msra.mxu0 0.0
    %1681 = vmatprep.mubr.f32.mxu0 0.0
    %1682 = vmatmul.mubr.f32.gmra.mrb[0].mxu0 %v1615
    %v1683 = vpop.f32.mrb[0].mxu0
    %v1684 = vadd.f32 0.0, %v1683
    %v1685 = vpop.f32.mrb[0].mxu0
    %1686 = vdwg.mxu0
    %v1688 = vrot.slane %v1684, 6
    %v1690 = vadd.f32 %v1402, %v1688
    %v1691 = vxor.u32 %v1690, 2147483648
    %v1692 = vmul.f32 %v1691, 1.442695
    %v1693 = vpow.pop %v1692
    %v1694 = vadd.f32 %v1693, 1.0
    %v1695 = vrcp.pop %v1694
    %v1696 = vmul.f32 1.0, %v1695
    %v1697 = vtanh.pop %v1690
    %v1699 = vrot.slane %v1604, 7
    %v1701 = vmul.f32 %v1696, %v1699
    %1703 = vrot.lane.b32.xlu0 %v1697, 64
    %v1704 = vpop.permute.xlu0 %1703
    %v1706 = vmul.f32 %v1696, %v1704
    %1708 = vrot.lane.b32.xlu0 %v1706, 32
    %v1709 = vpop.permute.xlu0 %1708
    %v1711 = vadd.f32 %v1701, %v1709
    %v1712 = vtanh.pop %v1711
    %1714 = vrot.lane.b32.xlu0 %v1712, 64
    %v1715 = vpop.permute.xlu0 %1714
    %v1717 = vmul.f32 %v1696, %v1715
    %v1719 = vrot.slane %v1717, 2
    %1720 = vrot.lane.b32.xlu0 %v1719, 32
    %v1721 = vpop.permute.xlu0 %1720
    %v1722 = vsel %vm209, %v1721, 0
    %1724 = vmatprep.subr.mxu0 0.0
    %1725 = vmatpush1.msra.mxu0 %v1406
    %1726 = vmatprep.subr.mxu0 0.0
    %1727 = vmatpush1.msra.mxu0 %v1407
    %1728 = vmatprep.subr.mxu0 0.0
    %1729 = vmatpush1.msra.mxu0 %v1408
    %1730 = vmatprep.subr.mxu0 0.0
    %1731 = vmatpush1.msra.mxu0 %v1409
    %1732 = vmatprep.subr.mxu0 0.0
    %1733 = vmatpush1.msra.mxu0 0.0
    %1734 = vmatprep.subr.mxu0 0.0
    %1735 = vmatpush1.msra.mxu0 0.0
    %1736 = vmatprep.subr.mxu0 0.0
    %1737 = vmatpush1.msra.mxu0 0.0
    %1738 = vmatprep.subr.mxu0 0.0
    %1739 = vmatpush1.msra.mxu0 0.0
    %1740 = vmatprep.subr.mxu0 0.0
    %1741 = vmatpush1.msra.mxu0 0.0
    %1742 = vmatprep.subr.mxu0 0.0
    %1743 = vmatpush1.msra.mxu0 0.0
    %1744 = vmatprep.subr.mxu0 0.0
    %1745 = vmatpush1.msra.mxu0 0.0
    %1746 = vmatprep.subr.mxu0 0.0
    %1747 = vmatpush1.msra.mxu0 0.0
    %1748 = vmatprep.subr.mxu0 0.0
    %1749 = vmatpush1.msra.mxu0 0.0
    %1750 = vmatprep.subr.mxu0 0.0
    %1751 = vmatpush1.msra.mxu0 0.0
    %1752 = vmatprep.subr.mxu0 0.0
    %1753 = vmatpush1.msra.mxu0 0.0
    %1754 = vmatprep.subr.mxu0 0.0
    %1755 = vmatpush1.msra.mxu0 0.0
    %1756 = vmatprep.subr.mxu0 0.0
    %1757 = vmatpush1.msra.mxu0 0.0
    %1758 = vmatprep.subr.mxu0 0.0
    %1759 = vmatpush1.msra.mxu0 0.0
    %1760 = vmatprep.subr.mxu0 0.0
    %1761 = vmatpush1.msra.mxu0 0.0
    %1762 = vmatprep.subr.mxu0 0.0
    %1763 = vmatpush1.msra.mxu0 0.0
    %1764 = vmatprep.subr.mxu0 0.0
    %1765 = vmatpush1.msra.mxu0 0.0
    %1766 = vmatprep.subr.mxu0 0.0
    %1767 = vmatpush1.msra.mxu0 0.0
    %1768 = vmatprep.subr.mxu0 0.0
    %1769 = vmatpush1.msra.mxu0 0.0
    %1770 = vmatprep.subr.mxu0 0.0
    %1771 = vmatpush1.msra.mxu0 0.0
    %1772 = vmatprep.subr.mxu0 0.0
    %1773 = vmatpush1.msra.mxu0 0.0
    %1774 = vmatprep.subr.mxu0 0.0
    %1775 = vmatpush1.msra.mxu0 0.0
    %1776 = vmatprep.subr.mxu0 0.0
    %1777 = vmatpush1.msra.mxu0 0.0
    %1778 = vmatprep.subr.mxu0 0.0
    %1779 = vmatpush1.msra.mxu0 0.0
    %1780 = vmatprep.subr.mxu0 0.0
    %1781 = vmatpush1.msra.mxu0 0.0
    %1782 = vmatprep.subr.mxu0 0.0
    %1783 = vmatpush1.msra.mxu0 0.0
    %1784 = vmatprep.subr.mxu0 0.0
    %1785 = vmatpush1.msra.mxu0 0.0
    %1786 = vmatprep.subr.mxu0 0.0
    %1787 = vmatpush1.msra.mxu0 0.0
    %1788 = vmatprep.mubr.f32.mxu0 0.0
    %1789 = vmatmul.mubr.f32.gmra.mrb[0].mxu0 %v1722
    %v1790 = vpop.f32.mrb[0].mxu0
    %v1791 = vadd.f32 0.0, %v1790
    %v1792 = vpop.f32.mrb[0].mxu0
    %1793 = vdwg.mxu0
    %v1795 = vrot.slane %v1791, 5
    %v1797 = vadd.f32 %v1402, %v1795
    %v1798 = vxor.u32 %v1797, 2147483648
    %v1799 = vmul.f32 %v1798, 1.442695
    %v1800 = vpow.pop %v1799
    %v1801 = vadd.f32 %v1800, 1.0
    %v1802 = vrcp.pop %v1801
    %v1803 = vmul.f32 1.0, %v1802
    %v1804 = vtanh.pop %v1797
    %v1806 = vrot.slane %v1711, 7
    %v1808 = vmul.f32 %v1803, %v1806
    %1810 = vrot.lane.b32.xlu0 %v1804, 64
    %v1811 = vpop.permute.xlu0 %1810
    %v1813 = vmul.f32 %v1803, %v1811
    %1815 = vrot.lane.b32.xlu0 %v1813, 32
    %v1816 = vpop.permute.xlu0 %1815
    %v1818 = vadd.f32 %v1808, %v1816
    %v1819 = vtanh.pop %v1818
    %1821 = vrot.lane.b32.xlu0 %v1819, 64
    %v1822 = vpop.permute.xlu0 %1821
    %v1824 = vmul.f32 %v1803, %v1822
    %v1826 = vrot.slane %v1824, 3
    %1827 = vrot.lane.b32.xlu0 %v1826, 32
    %v1828 = vpop.permute.xlu0 %1827
    %v1829 = vsel %vm209, %v1828, 0
    %1831 = vmatprep.subr.mxu0 0.0
    %1832 = vmatpush1.msra.mxu0 %v1406
    %1833 = vmatprep.subr.mxu0 0.0
    %1834 = vmatpush1.msra.mxu0 %v1407
    %1835 = vmatprep.subr.mxu0 0.0
    %1836 = vmatpush1.msra.mxu0 %v1408
    %1837 = vmatprep.subr.mxu0 0.0
    %1838 = vmatpush1.msra.mxu0 %v1409
    %1839 = vmatprep.subr.mxu0 0.0
    %1840 = vmatpush1.msra.mxu0 0.0
    %1841 = vmatprep.subr.mxu0 0.0
    %1842 = vmatpush1.msra.mxu0 0.0
    %1843 = vmatprep.subr.mxu0 0.0
    %1844 = vmatpush1.msra.mxu0 0.0
    %1845 = vmatprep.subr.mxu0 0.0
    %1846 = vmatpush1.msra.mxu0 0.0
    %1847 = vmatprep.subr.mxu0 0.0
    %1848 = vmatpush1.msra.mxu0 0.0
    %1849 = vmatprep.subr.mxu0 0.0
    %1850 = vmatpush1.msra.mxu0 0.0
    %1851 = vmatprep.subr.mxu0 0.0
    %1852 = vmatpush1.msra.mxu0 0.0
    %1853 = vmatprep.subr.mxu0 0.0
    %1854 = vmatpush1.msra.mxu0 0.0
    %1855 = vmatprep.subr.mxu0 0.0
    %1856 = vmatpush1.msra.mxu0 0.0
    %1857 = vmatprep.subr.mxu0 0.0
    %1858 = vmatpush1.msra.mxu0 0.0
    %1859 = vmatprep.subr.mxu0 0.0
    %1860 = vmatpush1.msra.mxu0 0.0
    %1861 = vmatprep.subr.mxu0 0.0
    %1862 = vmatpush1.msra.mxu0 0.0
    %1863 = vmatprep.subr.mxu0 0.0
    %1864 = vmatpush1.msra.mxu0 0.0
    %1865 = vmatprep.subr.mxu0 0.0
    %1866 = vmatpush1.msra.mxu0 0.0
    %1867 = vmatprep.subr.mxu0 0.0
    %1868 = vmatpush1.msra.mxu0 0.0
    %1869 = vmatprep.subr.mxu0 0.0
    %1870 = vmatpush1.msra.mxu0 0.0
    %1871 = vmatprep.subr.mxu0 0.0
    %1872 = vmatpush1.msra.mxu0 0.0
    %1873 = vmatprep.subr.mxu0 0.0
    %1874 = vmatpush1.msra.mxu0 0.0
    %1875 = vmatprep.subr.mxu0 0.0
    %1876 = vmatpush1.msra.mxu0 0.0
    %1877 = vmatprep.subr.mxu0 0.0
    %1878 = vmatpush1.msra.mxu0 0.0
    %1879 = vmatprep.subr.mxu0 0.0
    %1880 = vmatpush1.msra.mxu0 0.0
    %1881 = vmatprep.subr.mxu0 0.0
    %1882 = vmatpush1.msra.mxu0 0.0
    %1883 = vmatprep.subr.mxu0 0.0
    %1884 = vmatpush1.msra.mxu0 0.0
    %1885 = vmatprep.subr.mxu0 0.0
    %1886 = vmatpush1.msra.mxu0 0.0
    %1887 = vmatprep.subr.mxu0 0.0
    %1888 = vmatpush1.msra.mxu0 0.0
    %1889 = vmatprep.subr.mxu0 0.0
    %1890 = vmatpush1.msra.mxu0 0.0
    %1891 = vmatprep.subr.mxu0 0.0
    %1892 = vmatpush1.msra.mxu0 0.0
    %1893 = vmatprep.subr.mxu0 0.0
    %1894 = vmatpush1.msra.mxu0 0.0
    %1895 = vmatprep.mubr.f32.mxu0 0.0
    %1896 = vmatmul.mubr.f32.gmra.mrb[0].mxu0 %v1829
    %v1897 = vpop.f32.mrb[0].mxu0
    %v1898 = vadd.f32 0.0, %v1897
    %v1899 = vpop.f32.mrb[0].mxu0
    %1900 = vdwg.mxu0
    %v1902 = vrot.slane %v1898, 4
    %v1904 = vadd.f32 %v1402, %v1902
    %v1905 = vxor.u32 %v1904, 2147483648
    %v1906 = vmul.f32 %v1905, 1.442695
    %v1907 = vpow.pop %v1906
    %v1908 = vadd.f32 %v1907, 1.0
    %v1909 = vrcp.pop %v1908
    %v1910 = vmul.f32 1.0, %v1909
    %v1911 = vtanh.pop %v1904
    %v1913 = vrot.slane %v1818, 7
    %v1915 = vmul.f32 %v1910, %v1913
    %1917 = vrot.lane.b32.xlu0 %v1911, 64
    %v1918 = vpop.permute.xlu0 %1917
    %v1920 = vmul.f32 %v1910, %v1918
    %1922 = vrot.lane.b32.xlu0 %v1920, 32
    %v1923 = vpop.permute.xlu0 %1922
    %v1925 = vadd.f32 %v1915, %v1923
    %v1926 = vtanh.pop %v1925
    %1928 = vrot.lane.b32.xlu0 %v1926, 64
    %v1929 = vpop.permute.xlu0 %1928
    %v1931 = vmul.f32 %v1910, %v1929
    %v1933 = vrot.slane %v1931, 4
    %1934 = vrot.lane.b32.xlu0 %v1933, 32
    %v1935 = vpop.permute.xlu0 %1934
    %v1936 = vsel %vm209, %v1935, 0
    %1938 = vmatprep.subr.mxu0 0.0
    %1939 = vmatpush1.msra.mxu0 %v1406
    %1940 = vmatprep.subr.mxu0 0.0
    %1941 = vmatpush1.msra.mxu0 %v1407
    %1942 = vmatprep.subr.mxu0 0.0
    %1943 = vmatpush1.msra.mxu0 %v1408
    %1944 = vmatprep.subr.mxu0 0.0
    %1945 = vmatpush1.msra.mxu0 %v1409
    %1946 = vmatprep.subr.mxu0 0.0
    %1947 = vmatpush1.msra.mxu0 0.0
    %1948 = vmatprep.subr.mxu0 0.0
    %1949 = vmatpush1.msra.mxu0 0.0
    %1950 = vmatprep.subr.mxu0 0.0
    %1951 = vmatpush1.msra.mxu0 0.0
    %1952 = vmatprep.subr.mxu0 0.0
    %1953 = vmatpush1.msra.mxu0 0.0
    %1954 = vmatprep.subr.mxu0 0.0
    %1955 = vmatpush1.msra.mxu0 0.0
    %1956 = vmatprep.subr.mxu0 0.0
    %1957 = vmatpush1.msra.mxu0 0.0
    %1958 = vmatprep.subr.mxu0 0.0
    %1959 = vmatpush1.msra.mxu0 0.0
    %1960 = vmatprep.subr.mxu0 0.0
    %1961 = vmatpush1.msra.mxu0 0.0
    %1962 = vmatprep.subr.mxu0 0.0
    %1963 = vmatpush1.msra.mxu0 0.0
    %1964 = vmatprep.subr.mxu0 0.0
    %1965 = vmatpush1.msra.mxu0 0.0
    %1966 = vmatprep.subr.mxu0 0.0
    %1967 = vmatpush1.msra.mxu0 0.0
    %1968 = vmatprep.subr.mxu0 0.0
    %1969 = vmatpush1.msra.mxu0 0.0
    %1970 = vmatprep.subr.mxu0 0.0
    %1971 = vmatpush1.msra.mxu0 0.0
    %1972 = vmatprep.subr.mxu0 0.0
    %1973 = vmatpush1.msra.mxu0 0.0
    %1974 = vmatprep.subr.mxu0 0.0
    %1975 = vmatpush1.msra.mxu0 0.0
    %1976 = vmatprep.subr.mxu0 0.0
    %1977 = vmatpush1.msra.mxu0 0.0
    %1978 = vmatprep.subr.mxu0 0.0
    %1979 = vmatpush1.msra.mxu0 0.0
    %1980 = vmatprep.subr.mxu0 0.0
    %1981 = vmatpush1.msra.mxu0 0.0
    %1982 = vmatprep.subr.mxu0 0.0
    %1983 = vmatpush1.msra.mxu0 0.0
    %1984 = vmatprep.subr.mxu0 0.0
    %1985 = vmatpush1.msra.mxu0 0.0
    %1986 = vmatprep.subr.mxu0 0.0
    %1987 = vmatpush1.msra.mxu0 0.0
    %1988 = vmatprep.subr.mxu0 0.0
    %1989 = vmatpush1.msra.mxu0 0.0
    %1990 = vmatprep.subr.mxu0 0.0
    %1991 = vmatpush1.msra.mxu0 0.0
    %1992 = vmatprep.subr.mxu0 0.0
    %1993 = vmatpush1.msra.mxu0 0.0
    %1994 = vmatprep.subr.mxu0 0.0
    %1995 = vmatpush1.msra.mxu0 0.0
    %1996 = vmatprep.subr.mxu0 0.0
    %1997 = vmatpush1.msra.mxu0 0.0
    %1998 = vmatprep.subr.mxu0 0.0
    %1999 = vmatpush1.msra.mxu0 0.0
    %2000 = vmatprep.subr.mxu0 0.0
    %2001 = vmatpush1.msra.mxu0 0.0
    %2002 = vmatprep.mubr.f32.mxu0 0.0
    %2003 = vmatmul.mubr.f32.gmra.mrb[0].mxu0 %v1936
    %v2004 = vpop.f32.mrb[0].mxu0
    %v2005 = vadd.f32 0.0, %v2004
    %v2006 = vpop.f32.mrb[0].mxu0
    %2007 = vdwg.mxu0
    %v2009 = vrot.slane %v2005, 3
    %v2011 = vadd.f32 %v1402, %v2009
    %v2012 = vxor.u32 %v2011, 2147483648
    %v2013 = vmul.f32 %v2012, 1.442695
    %v2014 = vpow.pop %v2013
    %v2015 = vadd.f32 %v2014, 1.0
    %v2016 = vrcp.pop %v2015
    %v2017 = vmul.f32 1.0, %v2016
    %v2018 = vtanh.pop %v2011
    %v2020 = vrot.slane %v1925, 7
    %v2022 = vmul.f32 %v2017, %v2020
    %2024 = vrot.lane.b32.xlu0 %v2018, 64
    %v2025 = vpop.permute.xlu0 %2024
    %v2027 = vmul.f32 %v2017, %v2025
    %2029 = vrot.lane.b32.xlu0 %v2027, 32
    %v2030 = vpop.permute.xlu0 %2029
    %v2032 = vadd.f32 %v2022, %v2030
    %v2033 = vtanh.pop %v2032
    %2035 = vrot.lane.b32.xlu0 %v2033, 64
    %v2036 = vpop.permute.xlu0 %2035
    %v2038 = vmul.f32 %v2017, %v2036
    %v2040 = vrot.slane %v2038, 5
    %2041 = vrot.lane.b32.xlu0 %v2040, 32
    %v2042 = vpop.permute.xlu0 %2041
    %v2043 = vsel %vm209, %v2042, 0
    %2045 = vmatprep.subr.mxu0 0.0
    %2046 = vmatpush1.msra.mxu0 %v1406
    %2047 = vmatprep.subr.mxu0 0.0
    %2048 = vmatpush1.msra.mxu0 %v1407
    %2049 = vmatprep.subr.mxu0 0.0
    %2050 = vmatpush1.msra.mxu0 %v1408
    %2051 = vmatprep.subr.mxu0 0.0
    %2052 = vmatpush1.msra.mxu0 %v1409
    %2053 = vmatprep.subr.mxu0 0.0
    %2054 = vmatpush1.msra.mxu0 0.0
    %2055 = vmatprep.subr.mxu0 0.0
    %2056 = vmatpush1.msra.mxu0 0.0
    %2057 = vmatprep.subr.mxu0 0.0
    %2058 = vmatpush1.msra.mxu0 0.0
    %2059 = vmatprep.subr.mxu0 0.0
    %2060 = vmatpush1.msra.mxu0 0.0
    %2061 = vmatprep.subr.mxu0 0.0
    %2062 = vmatpush1.msra.mxu0 0.0
    %2063 = vmatprep.subr.mxu0 0.0
    %2064 = vmatpush1.msra.mxu0 0.0
    %2065 = vmatprep.subr.mxu0 0.0
    %2066 = vmatpush1.msra.mxu0 0.0
    %2067 = vmatprep.subr.mxu0 0.0
    %2068 = vmatpush1.msra.mxu0 0.0
    %2069 = vmatprep.subr.mxu0 0.0
    %2070 = vmatpush1.msra.mxu0 0.0
    %2071 = vmatprep.subr.mxu0 0.0
    %2072 = vmatpush1.msra.mxu0 0.0
    %2073 = vmatprep.subr.mxu0 0.0
    %2074 = vmatpush1.msra.mxu0 0.0
    %2075 = vmatprep.subr.mxu0 0.0
    %2076 = vmatpush1.msra.mxu0 0.0
    %2077 = vmatprep.subr.mxu0 0.0
    %2078 = vmatpush1.msra.mxu0 0.0
    %2079 = vmatprep.subr.mxu0 0.0
    %2080 = vmatpush1.msra.mxu0 0.0
    %2081 = vmatprep.subr.mxu0 0.0
    %2082 = vmatpush1.msra.mxu0 0.0
    %2083 = vmatprep.subr.mxu0 0.0
    %2084 = vmatpush1.msra.mxu0 0.0
    %2085 = vmatprep.subr.mxu0 0.0
    %2086 = vmatpush1.msra.mxu0 0.0
    %2087 = vmatprep.subr.mxu0 0.0
    %2088 = vmatpush1.msra.mxu0 0.0
    %2089 = vmatprep.subr.mxu0 0.0
    %2090 = vmatpush1.msra.mxu0 0.0
    %2091 = vmatprep.subr.mxu0 0.0
    %2092 = vmatpush1.msra.mxu0 0.0
    %2093 = vmatprep.subr.mxu0 0.0
    %2094 = vmatpush1.msra.mxu0 0.0
    %2095 = vmatprep.subr.mxu0 0.0
    %2096 = vmatpush1.msra.mxu0 0.0
    %2097 = vmatprep.subr.mxu0 0.0
    %2098 = vmatpush1.msra.mxu0 0.0
    %2099 = vmatprep.subr.mxu0 0.0
    %2100 = vmatpush1.msra.mxu0 0.0
    %2101 = vmatprep.subr.mxu0 0.0
    %2102 = vmatpush1.msra.mxu0 0.0
    %2103 = vmatprep.subr.mxu0 0.0
    %2104 = vmatpush1.msra.mxu0 0.0
    %2105 = vmatprep.subr.mxu0 0.0
    %2106 = vmatpush1.msra.mxu0 0.0
    %2107 = vmatprep.subr.mxu0 0.0
    %2108 = vmatpush1.msra.mxu0 0.0
    %2109 = vmatprep.mubr.f32.mxu0 0.0
    %2110 = vmatmul.mubr.f32.gmra.mrb[0].mxu0 %v2043
    %v2111 = vpop.f32.mrb[0].mxu0
    %v2112 = vadd.f32 0.0, %v2111
    %v2113 = vpop.f32.mrb[0].mxu0
    %2114 = vdwg.mxu0
    %v2116 = vrot.slane %v2112, 2
    %v2118 = vadd.f32 %v1402, %v2116
    %v2119 = vxor.u32 %v2118, 2147483648
    %v2120 = vmul.f32 %v2119, 1.442695
    %v2121 = vpow.pop %v2120
    %v2122 = vadd.f32 %v2121, 1.0
    %v2123 = vrcp.pop %v2122
    %v2124 = vmul.f32 1.0, %v2123
    %v2125 = vtanh.pop %v2118
    %v2127 = vrot.slane %v2032, 7
    %v2129 = vmul.f32 %v2124, %v2127
    %2131 = vrot.lane.b32.xlu0 %v2125, 64
    %v2132 = vpop.permute.xlu0 %2131
    %v2134 = vmul.f32 %v2124, %v2132
    %2136 = vrot.lane.b32.xlu0 %v2134, 32
    %v2137 = vpop.permute.xlu0 %2136
    %v2139 = vadd.f32 %v2129, %v2137
    %v2140 = vtanh.pop %v2139
    %2142 = vrot.lane.b32.xlu0 %v2140, 64
    %v2143 = vpop.permute.xlu0 %2142
    %v2145 = vmul.f32 %v2124, %v2143
    %v2147 = vrot.slane %v2145, 6
    %2148 = vrot.lane.b32.xlu0 %v2147, 32
    %v2149 = vpop.permute.xlu0 %2148
    %v2150 = vsel %vm209, %v2149, 0
    %2152 = vmatprep.subr.mxu0 0.0
    %2153 = vmatpush1.msra.mxu0 %v1406
    %2154 = vmatprep.subr.mxu0 0.0
    %2155 = vmatpush1.msra.mxu0 %v1407
    %2156 = vmatprep.subr.mxu0 0.0
    %2157 = vmatpush1.msra.mxu0 %v1408
    %2158 = vmatprep.subr.mxu0 0.0
    %2159 = vmatpush1.msra.mxu0 %v1409
    %2160 = vmatprep.subr.mxu0 0.0
    %2161 = vmatpush1.msra.mxu0 0.0
    %2162 = vmatprep.subr.mxu0 0.0
    %2163 = vmatpush1.msra.mxu0 0.0
    %2164 = vmatprep.subr.mxu0 0.0
    %2165 = vmatpush1.msra.mxu0 0.0
    %2166 = vmatprep.subr.mxu0 0.0
    %2167 = vmatpush1.msra.mxu0 0.0
    %2168 = vmatprep.subr.mxu0 0.0
    %2169 = vmatpush1.msra.mxu0 0.0
    %2170 = vmatprep.subr.mxu0 0.0
    %2171 = vmatpush1.msra.mxu0 0.0
    %2172 = vmatprep.subr.mxu0 0.0
    %2173 = vmatpush1.msra.mxu0 0.0
    %2174 = vmatprep.subr.mxu0 0.0
    %2175 = vmatpush1.msra.mxu0 0.0
    %2176 = vmatprep.subr.mxu0 0.0
    %2177 = vmatpush1.msra.mxu0 0.0
    %2178 = vmatprep.subr.mxu0 0.0
    %2179 = vmatpush1.msra.mxu0 0.0
    %2180 = vmatprep.subr.mxu0 0.0
    %2181 = vmatpush1.msra.mxu0 0.0
    %2182 = vmatprep.subr.mxu0 0.0
    %2183 = vmatpush1.msra.mxu0 0.0
    %2184 = vmatprep.subr.mxu0 0.0
    %2185 = vmatpush1.msra.mxu0 0.0
    %2186 = vmatprep.subr.mxu0 0.0
    %2187 = vmatpush1.msra.mxu0 0.0
    %2188 = vmatprep.subr.mxu0 0.0
    %2189 = vmatpush1.msra.mxu0 0.0
    %2190 = vmatprep.subr.mxu0 0.0
    %2191 = vmatpush1.msra.mxu0 0.0
    %2192 = vmatprep.subr.mxu0 0.0
    %2193 = vmatpush1.msra.mxu0 0.0
    %2194 = vmatprep.subr.mxu0 0.0
    %2195 = vmatpush1.msra.mxu0 0.0
    %2196 = vmatprep.subr.mxu0 0.0
    %2197 = vmatpush1.msra.mxu0 0.0
    %2198 = vmatprep.subr.mxu0 0.0
    %2199 = vmatpush1.msra.mxu0 0.0
    %2200 = vmatprep.subr.mxu0 0.0
    %2201 = vmatpush1.msra.mxu0 0.0
    %2202 = vmatprep.subr.mxu0 0.0
    %2203 = vmatpush1.msra.mxu0 0.0
    %2204 = vmatprep.subr.mxu0 0.0
    %2205 = vmatpush1.msra.mxu0 0.0
    %2206 = vmatprep.subr.mxu0 0.0
    %2207 = vmatpush1.msra.mxu0 0.0
    %2208 = vmatprep.subr.mxu0 0.0
    %2209 = vmatpush1.msra.mxu0 0.0
    %2210 = vmatprep.subr.mxu0 0.0
    %2211 = vmatpush1.msra.mxu0 0.0
    %2212 = vmatprep.subr.mxu0 0.0
    %2213 = vmatpush1.msra.mxu0 0.0
    %2214 = vmatprep.subr.mxu0 0.0
    %2215 = vmatpush1.msra.mxu0 0.0
    %2216 = vmatprep.mubr.f32.mxu0 0.0
    %2217 = vmatmul.mubr.f32.gmra.mrb[0].mxu0 %v2150
    %v2218 = vpop.f32.mrb[0].mxu0
    %v2219 = vadd.f32 0.0, %v2218
    %v2220 = vpop.f32.mrb[0].mxu0
    %2221 = vdwg.mxu0
    %v2223 = vrot.slane %v2219, 1
    %v2225 = vadd.f32 %v1402, %v2223
    %v2226 = vxor.u32 %v2225, 2147483648
    %v2227 = vmul.f32 %v2226, 1.442695
    %v2228 = vpow.pop %v2227
    %v2229 = vadd.f32 %v2228, 1.0
    %v2230 = vrcp.pop %v2229
    %v2231 = vmul.f32 1.0, %v2230
    %v2232 = vtanh.pop %v2225
    %v2234 = vrot.slane %v2139, 7
    %v2236 = vmul.f32 %v2231, %v2234
    %2238 = vrot.lane.b32.xlu0 %v2232, 64
    %v2239 = vpop.permute.xlu0 %2238
    %v2241 = vmul.f32 %v2231, %v2239
    %2243 = vrot.lane.b32.xlu0 %v2241, 32
    %v2244 = vpop.permute.xlu0 %2243
    %v2246 = vadd.f32 %v2236, %v2244
    %v2247 = vtanh.pop %v2246
    %2249 = vrot.lane.b32.xlu0 %v2247, 64
    %v2250 = vpop.permute.xlu0 %2249
    %v2252 = vmul.f32 %v2231, %v2250
    %v2253 = vsel %vm1303, %v1504, %v1610
    %v2254 = vsel %vm1305, %v2253, %v1717
    %v2255 = vsel %vm1307, %v2254, %v1824
    %v2256 = vsel %vm1309, %v2255, %v1931
    %v2257 = vsel %vm1311, %v2256, %v2038
    %v2258 = vsel %vm1313, %v2257, %v2145
    %v2259 = vsel %vm1315, %v2258, %v2252
    %v2260 = vld [vmem:[#allocation12] sm:$0xff]
    %v2261 = vld [vmem:[#allocation12 + $0x8] sm:$0xff]
    %v2262 = vld [vmem:[#allocation12 + $0x10] sm:$0xff]
    %v2263 = vld [vmem:[#allocation12 + $0x18] sm:$0xff]
    %v2264 = vld [vmem:[#allocation13] sm:$0x1]
    %v2266 = vlaneseq
    %v2267 = vshrl.u32 %v2266, 7
    %v2268 = vsub.s32 0, %v2267
    %v2269 = vrot.slane %v2264, %v2268
    %2272 = vrot.lane.b32.xlu0 %v2259, 32
    %v2273 = vpop.permute.xlu0 %2272
    %v2274 = vsel %vm209, %v2273, 0
    %2276 = vmatprep.subr.mxu0 0.0
    %2277 = vmatpush1.msra.mxu0 %v2260
    %2278 = vmatprep.subr.mxu0 0.0
    %2279 = vmatpush1.msra.mxu0 %v2261
    %2280 = vmatprep.subr.mxu0 0.0
    %2281 = vmatpush1.msra.mxu0 %v2262
    %2282 = vmatprep.subr.mxu0 0.0
    %2283 = vmatpush1.msra.mxu0 %v2263
    %2284 = vmatprep.subr.mxu0 0.0
    %2285 = vmatpush1.msra.mxu0 0.0
    %2286 = vmatprep.subr.mxu0 0.0
    %2287 = vmatpush1.msra.mxu0 0.0
    %2288 = vmatprep.subr.mxu0 0.0
    %2289 = vmatpush1.msra.mxu0 0.0
    %2290 = vmatprep.subr.mxu0 0.0
    %2291 = vmatpush1.msra.mxu0 0.0
    %2292 = vmatprep.subr.mxu0 0.0
    %2293 = vmatpush1.msra.mxu0 0.0
    %2294 = vmatprep.subr.mxu0 0.0
    %2295 = vmatpush1.msra.mxu0 0.0
    %2296 = vmatprep.subr.mxu0 0.0
    %2297 = vmatpush1.msra.mxu0 0.0
    %2298 = vmatprep.subr.mxu0 0.0
    %2299 = vmatpush1.msra.mxu0 0.0
    %2300 = vmatprep.subr.mxu0 0.0
    %2301 = vmatpush1.msra.mxu0 0.0
    %2302 = vmatprep.subr.mxu0 0.0
    %2303 = vmatpush1.msra.mxu0 0.0
    %2304 = vmatprep.subr.mxu0 0.0
    %2305 = vmatpush1.msra.mxu0 0.0
    %2306 = vmatprep.subr.mxu0 0.0
    %2307 = vmatpush1.msra.mxu0 0.0
    %2308 = vmatprep.subr.mxu0 0.0
    %2309 = vmatpush1.msra.mxu0 0.0
    %2310 = vmatprep.subr.mxu0 0.0
    %2311 = vmatpush1.msra.mxu0 0.0
    %2312 = vmatprep.subr.mxu0 0.0
    %2313 = vmatpush1.msra.mxu0 0.0
    %2314 = vmatprep.subr.mxu0 0.0
    %2315 = vmatpush1.msra.mxu0 0.0
    %2316 = vmatprep.subr.mxu0 0.0
    %2317 = vmatpush1.msra.mxu0 0.0
    %2318 = vmatprep.subr.mxu0 0.0
    %2319 = vmatpush1.msra.mxu0 0.0
    %2320 = vmatprep.subr.mxu0 0.0
    %2321 = vmatpush1.msra.mxu0 0.0
    %2322 = vmatprep.subr.mxu0 0.0
    %2323 = vmatpush1.msra.mxu0 0.0
    %2324 = vmatprep.subr.mxu0 0.0
    %2325 = vmatpush1.msra.mxu0 0.0
    %2326 = vmatprep.subr.mxu0 0.0
    %2327 = vmatpush1.msra.mxu0 0.0
    %2328 = vmatprep.subr.mxu0 0.0
    %2329 = vmatpush1.msra.mxu0 0.0
    %2330 = vmatprep.subr.mxu0 0.0
    %2331 = vmatpush1.msra.mxu0 0.0
    %2332 = vmatprep.subr.mxu0 0.0
    %2333 = vmatpush1.msra.mxu0 0.0
    %2334 = vmatprep.subr.mxu0 0.0
    %2335 = vmatpush1.msra.mxu0 0.0
    %2336 = vmatprep.subr.mxu0 0.0
    %2337 = vmatpush1.msra.mxu0 0.0
    %2338 = vmatprep.subr.mxu0 0.0
    %2339 = vmatpush1.msra.mxu0 0.0
    %2340 = vmatprep.mubr.f32.mxu0 0.0
    %2341 = vmatmul.mubr.f32.gmra.mrb[0].mxu0 %v2274
    %v2342 = vpop.f32.mrb[0].mxu0
    %v2343 = vadd.f32 %v2269, %v2342
    %v2344 = vpop.f32.mrb[0].mxu0
    %2345 = vdwg.mxu0
    %v2346 = vmul.f32 %v2343, 0.35355338
    %2348 = vrot.lane.b32.xlu0 %v2343, 96
    %v2349 = vpop.permute.xlu0 %2348
    %vm2350 = vcmask 64512
    %v2352 = vsel %vm2350, %v2346, 0
    %v2354 = vsel %vm2350, %v2349, 0
    %2356 = vmatprep.subr.mxu0 0.0
    %2357 = vmatpush1.xpose.msra.mxu0 %v2354
    %2358 = vmatprep.subr.mxu0 0.0
    %2359 = vmatpush1.xpose.msra.mxu0 0.0
    %2360 = vmatprep.subr.mxu0 0.0
    %2361 = vmatpush1.xpose.msra.mxu0 0.0
    %2362 = vmatprep.subr.mxu0 0.0
    %2363 = vmatpush1.xpose.msra.mxu0 0.0
    %2364 = vmatprep.subr.mxu0 0.0
    %2365 = vmatpush1.xpose.msra.mxu0 0.0
    %2366 = vmatprep.subr.mxu0 0.0
    %2367 = vmatpush1.xpose.msra.mxu0 0.0
    %2368 = vmatprep.subr.mxu0 0.0
    %2369 = vmatpush1.xpose.msra.mxu0 0.0
    %2370 = vmatprep.subr.mxu0 0.0
    %2371 = vmatpush1.xpose.msra.mxu0 0.0
    %2372 = vmatprep.subr.mxu0 0.0
    %2373 = vmatpush1.xpose.msra.mxu0 0.0
    %2374 = vmatprep.subr.mxu0 0.0
    %2375 = vmatpush1.xpose.msra.mxu0 0.0
    %2376 = vmatprep.subr.mxu0 0.0
    %2377 = vmatpush1.xpose.msra.mxu0 0.0
    %2378 = vmatprep.subr.mxu0 0.0
    %2379 = vmatpush1.xpose.msra.mxu0 0.0
    %2380 = vmatprep.subr.mxu0 0.0
    %2381 = vmatpush1.xpose.msra.mxu0 0.0
    %2382 = vmatprep.subr.mxu0 0.0
    %2383 = vmatpush1.xpose.msra.mxu0 0.0
    %2384 = vmatprep.subr.mxu0 0.0
    %2385 = vmatpush1.xpose.msra.mxu0 0.0
    %2386 = vmatprep.subr.mxu0 0.0
    %2387 = vmatpush1.xpose.msra.mxu0 0.0
    %2388 = vmatprep.subr.mxu0 0.0
    %2389 = vmatpush1.xpose.msra.mxu0 0.0
    %2390 = vmatprep.subr.mxu0 0.0
    %2391 = vmatpush1.xpose.msra.mxu0 0.0
    %2392 = vmatprep.subr.mxu0 0.0
    %2393 = vmatpush1.xpose.msra.mxu0 0.0
    %2394 = vmatprep.subr.mxu0 0.0
    %2395 = vmatpush1.xpose.msra.mxu0 0.0
    %2396 = vmatprep.subr.mxu0 0.0
    %2397 = vmatpush1.xpose.msra.mxu0 0.0
    %2398 = vmatprep.subr.mxu0 0.0
    %2399 = vmatpush1.xpose.msra.mxu0 0.0
    %2400 = vmatprep.subr.mxu0 0.0
    %2401 = vmatpush1.xpose.msra.mxu0 0.0
    %2402 = vmatprep.subr.mxu0 0.0
    %2403 = vmatpush1.xpose.msra.mxu0 0.0
    %2404 = vmatprep.subr.mxu0 0.0
    %2405 = vmatpush1.xpose.msra.mxu0 0.0
    %2406 = vmatprep.subr.mxu0 0.0
    %2407 = vmatpush1.xpose.msra.mxu0 0.0
    %2408 = vmatprep.subr.mxu0 0.0
    %2409 = vmatpush1.xpose.msra.mxu0 0.0
    %2410 = vmatprep.subr.mxu0 0.0
    %2411 = vmatpush1.xpose.msra.mxu0 0.0
    %2412 = vmatprep.subr.mxu0 0.0
    %2413 = vmatpush1.xpose.msra.mxu0 0.0
    %2414 = vmatprep.subr.mxu0 0.0
    %2415 = vmatpush1.xpose.msra.mxu0 0.0
    %2416 = vmatprep.subr.mxu0 0.0
    %2417 = vmatpush1.xpose.msra.mxu0 0.0
    %2418 = vmatprep.subr.mxu0 0.0
    %2419 = vmatpush1.xpose.msra.mxu0 0.0
    %2420 = vmatprep.mubr.f32.mxu0 0.0
    %2421 = vmatmul.mubr.f32.gmra.mrb[0].mxu0 %v2352
    %v2422 = vpop.f32.mrb[0].mxu0
    %v2423 = vadd.f32 0.0, %v2422
    %v2424 = vpop.f32.mrb[0].mxu0
    %2425 = vdwg.mxu0
    %v2426 = vsel %vm2350, %v2423, -inf
    %2427 = vmax.xlane.f32.xlu0 %v2426
    %v2428 = vpop.xlane.xlu0 %2427
    %v2429 = vsub.f32 %v2423, %v2428
    %v2430 = vmul.f32 %v2429, 1.442695
    %v2431 = vpow.pop %v2430
    %v2432 = vsel %vm2350, %v2431, 0.0
    %2433 = vadd.xlane.f32.xlu0 %v2432
    %v2434 = vpop.xlane.xlu0 %2433
    %v2435 = vrcp.pop %v2434
    %v2436 = vmul.f32 %v2431, %v2435
    %v2437 = vadd.f32 %v2436, 0.0
    %2438 = vrot.lane.b32.xlu0 %v2343, 64
    %v2439 = vpop.permute.xlu0 %2438
    %v2442 = vsel %vm2350, %v2436, 0
    %2444 = vmatprep.subr.mxu0 0.0
    %2445 = vmatpush1.msra.mxu0 %v2439
    %2446 = vmatprep.subr.mxu0 0.0
    %2447 = vmatpush1.msra.mxu0 0.0
    %2448 = vmatprep.subr.mxu0 0.0
    %2449 = vmatpush1.msra.mxu0 0.0
    %2450 = vmatprep.subr.mxu0 0.0
    %2451 = vmatpush1.msra.mxu0 0.0
    %2452 = vmatprep.subr.mxu0 0.0
    %2453 = vmatpush1.msra.mxu0 0.0
    %2454 = vmatprep.subr.mxu0 0.0
    %2455 = vmatpush1.msra.mxu0 0.0
    %2456 = vmatprep.subr.mxu0 0.0
    %2457 = vmatpush1.msra.mxu0 0.0
    %2458 = vmatprep.subr.mxu0 0.0
    %2459 = vmatpush1.msra.mxu0 0.0
    %2460 = vmatprep.subr.mxu0 0.0
    %2461 = vmatpush1.msra.mxu0 0.0
    %2462 = vmatprep.subr.mxu0 0.0
    %2463 = vmatpush1.msra.mxu0 0.0
    %2464 = vmatprep.subr.mxu0 0.0
    %2465 = vmatpush1.msra.mxu0 0.0
    %2466 = vmatprep.subr.mxu0 0.0
    %2467 = vmatpush1.msra.mxu0 0.0
    %2468 = vmatprep.subr.mxu0 0.0
    %2469 = vmatpush1.msra.mxu0 0.0
    %2470 = vmatprep.subr.mxu0 0.0
    %2471 = vmatpush1.msra.mxu0 0.0
    %2472 = vmatprep.subr.mxu0 0.0
    %2473 = vmatpush1.msra.mxu0 0.0
    %2474 = vmatprep.subr.mxu0 0.0
    %2475 = vmatpush1.msra.mxu0 0.0
    %2476 = vmatprep.subr.mxu0 0.0
    %2477 = vmatpush1.msra.mxu0 0.0
    %2478 = vmatprep.subr.mxu0 0.0
    %2479 = vmatpush1.msra.mxu0 0.0
    %2480 = vmatprep.subr.mxu0 0.0
    %2481 = vmatpush1.msra.mxu0 0.0
    %2482 = vmatprep.subr.mxu0 0.0
    %2483 = vmatpush1.msra.mxu0 0.0
    %2484 = vmatprep.subr.mxu0 0.0
    %2485 = vmatpush1.msra.mxu0 0.0
    %2486 = vmatprep.subr.mxu0 0.0
    %2487 = vmatpush1.msra.mxu0 0.0
    %2488 = vmatprep.subr.mxu0 0.0
    %2489 = vmatpush1.msra.mxu0 0.0
    %2490 = vmatprep.subr.mxu0 0.0
    %2491 = vmatpush1.msra.mxu0 0.0
    %2492 = vmatprep.subr.mxu0 0.0
    %2493 = vmatpush1.msra.mxu0 0.0
    %2494 = vmatprep.subr.mxu0 0.0
    %2495 = vmatpush1.msra.mxu0 0.0
    %2496 = vmatprep.subr.mxu0 0.0
    %2497 = vmatpush1.msra.mxu0 0.0
    %2498 = vmatprep.subr.mxu0 0.0
    %2499 = vmatpush1.msra.mxu0 0.0
    %2500 = vmatprep.subr.mxu0 0.0
    %2501 = vmatpush1.msra.mxu0 0.0
    %2502 = vmatprep.subr.mxu0 0.0
    %2503 = vmatpush1.msra.mxu0 0.0
    %2504 = vmatprep.subr.mxu0 0.0
    %2505 = vmatpush1.msra.mxu0 0.0
    %2506 = vmatprep.subr.mxu0 0.0
    %2507 = vmatpush1.msra.mxu0 0.0
    %2508 = vmatprep.mubr.f32.mxu0 0.0
    %2509 = vmatmul.mubr.f32.gmra.mrb[0].mxu0 %v2442
    %v2510 = vpop.f32.mrb[0].mxu0
    %v2511 = vadd.f32 0.0, %v2510
    %v2512 = vpop.f32.mrb[0].mxu0
    %2513 = vdwg.mxu0
    %2514 = vrot.lane.b32.xlu0 %v2346, 120
    %v2515 = vpop.permute.xlu0 %2514
    %2516 = vrot.lane.b32.xlu0 %v2343, 88
    %v2517 = vpop.permute.xlu0 %2516
    %v2518 = vsel %vm2350, %v2515, 0
    %v2520 = vsel %vm2350, %v2517, 0
    %2522 = vmatprep.subr.mxu0 0.0
    %2523 = vmatpush1.xpose.msra.mxu0 %v2520
    %2524 = vmatprep.subr.mxu0 0.0
    %2525 = vmatpush1.xpose.msra.mxu0 0.0
    %2526 = vmatprep.subr.mxu0 0.0
    %2527 = vmatpush1.xpose.msra.mxu0 0.0
    %2528 = vmatprep.subr.mxu0 0.0
    %2529 = vmatpush1.xpose.msra.mxu0 0.0
    %2530 = vmatprep.subr.mxu0 0.0
    %2531 = vmatpush1.xpose.msra.mxu0 0.0
    %2532 = vmatprep.subr.mxu0 0.0
    %2533 = vmatpush1.xpose.msra.mxu0 0.0
    %2534 = vmatprep.subr.mxu0 0.0
    %2535 = vmatpush1.xpose.msra.mxu0 0.0
    %2536 = vmatprep.subr.mxu0 0.0
    %2537 = vmatpush1.xpose.msra.mxu0 0.0
    %2538 = vmatprep.subr.mxu0 0.0
    %2539 = vmatpush1.xpose.msra.mxu0 0.0
    %2540 = vmatprep.subr.mxu0 0.0
    %2541 = vmatpush1.xpose.msra.mxu0 0.0
    %2542 = vmatprep.subr.mxu0 0.0
    %2543 = vmatpush1.xpose.msra.mxu0 0.0
    %2544 = vmatprep.subr.mxu0 0.0
    %2545 = vmatpush1.xpose.msra.mxu0 0.0
    %2546 = vmatprep.subr.mxu0 0.0
    %2547 = vmatpush1.xpose.msra.mxu0 0.0
    %2548 = vmatprep.subr.mxu0 0.0
    %2549 = vmatpush1.xpose.msra.mxu0 0.0
    %2550 = vmatprep.subr.mxu0 0.0
    %2551 = vmatpush1.xpose.msra.mxu0 0.0
    %2552 = vmatprep.subr.mxu0 0.0
    %2553 = vmatpush1.xpose.msra.mxu0 0.0
    %2554 = vmatprep.subr.mxu0 0.0
    %2555 = vmatpush1.xpose.msra.mxu0 0.0
    %2556 = vmatprep.subr.mxu0 0.0
    %2557 = vmatpush1.xpose.msra.mxu0 0.0
    %2558 = vmatprep.subr.mxu0 0.0
    %2559 = vmatpush1.xpose.msra.mxu0 0.0
    %2560 = vmatprep.subr.mxu0 0.0
    %2561 = vmatpush1.xpose.msra.mxu0 0.0
    %2562 = vmatprep.subr.mxu0 0.0
    %2563 = vmatpush1.xpose.msra.mxu0 0.0
    %2564 = vmatprep.subr.mxu0 0.0
    %2565 = vmatpush1.xpose.msra.mxu0 0.0
    %2566 = vmatprep.subr.mxu0 0.0
    %2567 = vmatpush1.xpose.msra.mxu0 0.0
    %2568 = vmatprep.subr.mxu0 0.0
    %2569 = vmatpush1.xpose.msra.mxu0 0.0
    %2570 = vmatprep.subr.mxu0 0.0
    %2571 = vmatpush1.xpose.msra.mxu0 0.0
    %2572 = vmatprep.subr.mxu0 0.0
    %2573 = vmatpush1.xpose.msra.mxu0 0.0
    %2574 = vmatprep.subr.mxu0 0.0
    %2575 = vmatpush1.xpose.msra.mxu0 0.0
    %2576 = vmatprep.subr.mxu0 0.0
    %2577 = vmatpush1.xpose.msra.mxu0 0.0
    %2578 = vmatprep.subr.mxu0 0.0
    %2579 = vmatpush1.xpose.msra.mxu0 0.0
    %2580 = vmatprep.subr.mxu0 0.0
    %2581 = vmatpush1.xpose.msra.mxu0 0.0
    %2582 = vmatprep.subr.mxu0 0.0
    %2583 = vmatpush1.xpose.msra.mxu0 0.0
    %2584 = vmatprep.subr.mxu0 0.0
    %2585 = vmatpush1.xpose.msra.mxu0 0.0
    %2586 = vmatprep.mubr.f32.mxu0 0.0
    %2587 = vmatmul.mubr.f32.gmra.mrb[0].mxu0 %v2518
    %v2588 = vpop.f32.mrb[0].mxu0
    %v2589 = vadd.f32 0.0, %v2588
    %v2590 = vpop.f32.mrb[0].mxu0
    %2591 = vdwg.mxu0
    %v2592 = vsel %vm2350, %v2589, -inf
    %2593 = vmax.xlane.f32.xlu0 %v2592
    %v2594 = vpop.xlane.xlu0 %2593
    %v2595 = vsub.f32 %v2589, %v2594
    %v2596 = vmul.f32 %v2595, 1.442695
    %v2597 = vpow.pop %v2596
    %v2598 = vsel %vm2350, %v2597, 0.0
    %2599 = vadd.xlane.f32.xlu0 %v2598
    %v2600 = vpop.xlane.xlu0 %2599
    %v2601 = vrcp.pop %v2600
    %v2602 = vmul.f32 %v2597, %v2601
    %v2603 = vadd.f32 %v2437, %v2602
    %2604 = vrot.lane.b32.xlu0 %v2343, 56
    %v2605 = vpop.permute.xlu0 %2604
    %v2608 = vsel %vm2350, %v2602, 0
    %2610 = vmatprep.subr.mxu0 0.0
    %2611 = vmatpush1.msra.mxu0 %v2605
    %2612 = vmatprep.subr.mxu0 0.0
    %2613 = vmatpush1.msra.mxu0 0.0
    %2614 = vmatprep.subr.mxu0 0.0
    %2615 = vmatpush1.msra.mxu0 0.0
    %2616 = vmatprep.subr.mxu0 0.0
    %2617 = vmatpush1.msra.mxu0 0.0
    %2618 = vmatprep.subr.mxu0 0.0
    %2619 = vmatpush1.msra.mxu0 0.0
    %2620 = vmatprep.subr.mxu0 0.0
    %2621 = vmatpush1.msra.mxu0 0.0
    %2622 = vmatprep.subr.mxu0 0.0
    %2623 = vmatpush1.msra.mxu0 0.0
    %2624 = vmatprep.subr.mxu0 0.0
    %2625 = vmatpush1.msra.mxu0 0.0
    %2626 = vmatprep.subr.mxu0 0.0
    %2627 = vmatpush1.msra.mxu0 0.0
    %2628 = vmatprep.subr.mxu0 0.0
    %2629 = vmatpush1.msra.mxu0 0.0
    %2630 = vmatprep.subr.mxu0 0.0
    %2631 = vmatpush1.msra.mxu0 0.0
    %2632 = vmatprep.subr.mxu0 0.0
    %2633 = vmatpush1.msra.mxu0 0.0
    %2634 = vmatprep.subr.mxu0 0.0
    %2635 = vmatpush1.msra.mxu0 0.0
    %2636 = vmatprep.subr.mxu0 0.0
    %2637 = vmatpush1.msra.mxu0 0.0
    %2638 = vmatprep.subr.mxu0 0.0
    %2639 = vmatpush1.msra.mxu0 0.0
    %2640 = vmatprep.subr.mxu0 0.0
    %2641 = vmatpush1.msra.mxu0 0.0
    %2642 = vmatprep.subr.mxu0 0.0
    %2643 = vmatpush1.msra.mxu0 0.0
    %2644 = vmatprep.subr.mxu0 0.0
    %2645 = vmatpush1.msra.mxu0 0.0
    %2646 = vmatprep.subr.mxu0 0.0
    %2647 = vmatpush1.msra.mxu0 0.0
    %2648 = vmatprep.subr.mxu0 0.0
    %2649 = vmatpush1.msra.mxu0 0.0
    %2650 = vmatprep.subr.mxu0 0.0
    %2651 = vmatpush1.msra.mxu0 0.0
    %2652 = vmatprep.subr.mxu0 0.0
    %2653 = vmatpush1.msra.mxu0 0.0
    %2654 = vmatprep.subr.mxu0 0.0
    %2655 = vmatpush1.msra.mxu0 0.0
    %2656 = vmatprep.subr.mxu0 0.0
    %2657 = vmatpush1.msra.mxu0 0.0
    %2658 = vmatprep.subr.mxu0 0.0
    %2659 = vmatpush1.msra.mxu0 0.0
    %2660 = vmatprep.subr.mxu0 0.0
    %2661 = vmatpush1.msra.mxu0 0.0
    %2662 = vmatprep.subr.mxu0 0.0
    %2663 = vmatpush1.msra.mxu0 0.0
    %2664 = vmatprep.subr.mxu0 0.0
    %2665 = vmatpush1.msra.mxu0 0.0
    %2666 = vmatprep.subr.mxu0 0.0
    %2667 = vmatpush1.msra.mxu0 0.0
    %2668 = vmatprep.subr.mxu0 0.0
    %2669 = vmatpush1.msra.mxu0 0.0
    %2670 = vmatprep.subr.mxu0 0.0
    %2671 = vmatpush1.msra.mxu0 0.0
    %2672 = vmatprep.subr.mxu0 0.0
    %2673 = vmatpush1.msra.mxu0 0.0
    %2674 = vmatprep.mubr.f32.mxu0 0.0
    %2675 = vmatmul.mubr.f32.gmra.mrb[0].mxu0 %v2608
    %v2676 = vpop.f32.mrb[0].mxu0
    %v2677 = vadd.f32 0.0, %v2676
    %v2678 = vpop.f32.mrb[0].mxu0
    %2679 = vdwg.mxu0
    %2680 = vrot.lane.b32.xlu0 %v2346, 112
    %v2681 = vpop.permute.xlu0 %2680
    %2682 = vrot.lane.b32.xlu0 %v2343, 80
    %v2683 = vpop.permute.xlu0 %2682
    %v2684 = vsel %vm2350, %v2681, 0
    %v2686 = vsel %vm2350, %v2683, 0
    %2688 = vmatprep.subr.mxu0 0.0
    %2689 = vmatpush1.xpose.msra.mxu0 %v2686
    %2690 = vmatprep.subr.mxu0 0.0
    %2691 = vmatpush1.xpose.msra.mxu0 0.0
    %2692 = vmatprep.subr.mxu0 0.0
    %2693 = vmatpush1.xpose.msra.mxu0 0.0
    %2694 = vmatprep.subr.mxu0 0.0
    %2695 = vmatpush1.xpose.msra.mxu0 0.0
    %2696 = vmatprep.subr.mxu0 0.0
    %2697 = vmatpush1.xpose.msra.mxu0 0.0
    %2698 = vmatprep.subr.mxu0 0.0
    %2699 = vmatpush1.xpose.msra.mxu0 0.0
    %2700 = vmatprep.subr.mxu0 0.0
    %2701 = vmatpush1.xpose.msra.mxu0 0.0
    %2702 = vmatprep.subr.mxu0 0.0
    %2703 = vmatpush1.xpose.msra.mxu0 0.0
    %2704 = vmatprep.subr.mxu0 0.0
    %2705 = vmatpush1.xpose.msra.mxu0 0.0
    %2706 = vmatprep.subr.mxu0 0.0
    %2707 = vmatpush1.xpose.msra.mxu0 0.0
    %2708 = vmatprep.subr.mxu0 0.0
    %2709 = vmatpush1.xpose.msra.mxu0 0.0
    %2710 = vmatprep.subr.mxu0 0.0
    %2711 = vmatpush1.xpose.msra.mxu0 0.0
    %2712 = vmatprep.subr.mxu0 0.0
    %2713 = vmatpush1.xpose.msra.mxu0 0.0
    %2714 = vmatprep.subr.mxu0 0.0
    %2715 = vmatpush1.xpose.msra.mxu0 0.0
    %2716 = vmatprep.subr.mxu0 0.0
    %2717 = vmatpush1.xpose.msra.mxu0 0.0
    %2718 = vmatprep.subr.mxu0 0.0
    %2719 = vmatpush1.xpose.msra.mxu0 0.0
    %2720 = vmatprep.subr.mxu0 0.0
    %2721 = vmatpush1.xpose.msra.mxu0 0.0
    %2722 = vmatprep.subr.mxu0 0.0
    %2723 = vmatpush1.xpose.msra.mxu0 0.0
    %2724 = vmatprep.subr.mxu0 0.0
    %2725 = vmatpush1.xpose.msra.mxu0 0.0
    %2726 = vmatprep.subr.mxu0 0.0
    %2727 = vmatpush1.xpose.msra.mxu0 0.0
    %2728 = vmatprep.subr.mxu0 0.0
    %2729 = vmatpush1.xpose.msra.mxu0 0.0
    %2730 = vmatprep.subr.mxu0 0.0
    %2731 = vmatpush1.xpose.msra.mxu0 0.0
    %2732 = vmatprep.subr.mxu0 0.0
    %2733 = vmatpush1.xpose.msra.mxu0 0.0
    %2734 = vmatprep.subr.mxu0 0.0
    %2735 = vmatpush1.xpose.msra.mxu0 0.0
    %2736 = vmatprep.subr.mxu0 0.0
    %2737 = vmatpush1.xpose.msra.mxu0 0.0
    %2738 = vmatprep.subr.mxu0 0.0
    %2739 = vmatpush1.xpose.msra.mxu0 0.0
    %2740 = vmatprep.subr.mxu0 0.0
    %2741 = vmatpush1.xpose.msra.mxu0 0.0
    %2742 = vmatprep.subr.mxu0 0.0
    %2743 = vmatpush1.xpose.msra.mxu0 0.0
    %2744 = vmatprep.subr.mxu0 0.0
    %2745 = vmatpush1.xpose.msra.mxu0 0.0
    %2746 = vmatprep.subr.mxu0 0.0
    %2747 = vmatpush1.xpose.msra.mxu0 0.0
    %2748 = vmatprep.subr.mxu0 0.0
    %2749 = vmatpush1.xpose.msra.mxu0 0.0
    %2750 = vmatprep.subr.mxu0 0.0
    %2751 = vmatpush1.xpose.msra.mxu0 0.0
    %2752 = vmatprep.mubr.f32.mxu0 0.0
    %2753 = vmatmul.mubr.f32.gmra.mrb[0].mxu0 %v2684
    %v2754 = vpop.f32.mrb[0].mxu0
    %v2755 = vadd.f32 0.0, %v2754
    %v2756 = vpop.f32.mrb[0].mxu0
    %2757 = vdwg.mxu0
    %v2758 = vsel %vm2350, %v2755, -inf
    %2759 = vmax.xlane.f32.xlu0 %v2758
    %v2760 = vpop.xlane.xlu0 %2759
    %v2761 = vsub.f32 %v2755, %v2760
    %v2762 = vmul.f32 %v2761, 1.442695
    %v2763 = vpow.pop %v2762
    %v2764 = vsel %vm2350, %v2763, 0.0
    %2765 = vadd.xlane.f32.xlu0 %v2764
    %v2766 = vpop.xlane.xlu0 %2765
    %v2767 = vrcp.pop %v2766
    %v2768 = vmul.f32 %v2763, %v2767
    %v2769 = vadd.f32 %v2603, %v2768
    %2770 = vrot.lane.b32.xlu0 %v2343, 48
    %v2771 = vpop.permute.xlu0 %2770
    %v2774 = vsel %vm2350, %v2768, 0
    %2776 = vmatprep.subr.mxu0 0.0
    %2777 = vmatpush1.msra.mxu0 %v2771
    %2778 = vmatprep.subr.mxu0 0.0
    %2779 = vmatpush1.msra.mxu0 0.0
    %2780 = vmatprep.subr.mxu0 0.0
    %2781 = vmatpush1.msra.mxu0 0.0
    %2782 = vmatprep.subr.mxu0 0.0
    %2783 = vmatpush1.msra.mxu0 0.0
    %2784 = vmatprep.subr.mxu0 0.0
    %2785 = vmatpush1.msra.mxu0 0.0
    %2786 = vmatprep.subr.mxu0 0.0
    %2787 = vmatpush1.msra.mxu0 0.0
    %2788 = vmatprep.subr.mxu0 0.0
    %2789 = vmatpush1.msra.mxu0 0.0
    %2790 = vmatprep.subr.mxu0 0.0
    %2791 = vmatpush1.msra.mxu0 0.0
    %2792 = vmatprep.subr.mxu0 0.0
    %2793 = vmatpush1.msra.mxu0 0.0
    %2794 = vmatprep.subr.mxu0 0.0
    %2795 = vmatpush1.msra.mxu0 0.0
    %2796 = vmatprep.subr.mxu0 0.0
    %2797 = vmatpush1.msra.mxu0 0.0
    %2798 = vmatprep.subr.mxu0 0.0
    %2799 = vmatpush1.msra.mxu0 0.0
    %2800 = vmatprep.subr.mxu0 0.0
    %2801 = vmatpush1.msra.mxu0 0.0
    %2802 = vmatprep.subr.mxu0 0.0
    %2803 = vmatpush1.msra.mxu0 0.0
    %2804 = vmatprep.subr.mxu0 0.0
    %2805 = vmatpush1.msra.mxu0 0.0
    %2806 = vmatprep.subr.mxu0 0.0
    %2807 = vmatpush1.msra.mxu0 0.0
    %2808 = vmatprep.subr.mxu0 0.0
    %2809 = vmatpush1.msra.mxu0 0.0
    %2810 = vmatprep.subr.mxu0 0.0
    %2811 = vmatpush1.msra.mxu0 0.0
    %2812 = vmatprep.subr.mxu0 0.0
    %2813 = vmatpush1.msra.mxu0 0.0
    %2814 = vmatprep.subr.mxu0 0.0
    %2815 = vmatpush1.msra.mxu0 0.0
    %2816 = vmatprep.subr.mxu0 0.0
    %2817 = vmatpush1.msra.mxu0 0.0
    %2818 = vmatprep.subr.mxu0 0.0
    %2819 = vmatpush1.msra.mxu0 0.0
    %2820 = vmatprep.subr.mxu0 0.0
    %2821 = vmatpush1.msra.mxu0 0.0
    %2822 = vmatprep.subr.mxu0 0.0
    %2823 = vmatpush1.msra.mxu0 0.0
    %2824 = vmatprep.subr.mxu0 0.0
    %2825 = vmatpush1.msra.mxu0 0.0
    %2826 = vmatprep.subr.mxu0 0.0
    %2827 = vmatpush1.msra.mxu0 0.0
    %2828 = vmatprep.subr.mxu0 0.0
    %2829 = vmatpush1.msra.mxu0 0.0
    %2830 = vmatprep.subr.mxu0 0.0
    %2831 = vmatpush1.msra.mxu0 0.0
    %2832 = vmatprep.subr.mxu0 0.0
    %2833 = vmatpush1.msra.mxu0 0.0
    %2834 = vmatprep.subr.mxu0 0.0
    %2835 = vmatpush1.msra.mxu0 0.0
    %2836 = vmatprep.subr.mxu0 0.0
    %2837 = vmatpush1.msra.mxu0 0.0
    %2838 = vmatprep.subr.mxu0 0.0
    %2839 = vmatpush1.msra.mxu0 0.0
    %2840 = vmatprep.mubr.f32.mxu0 0.0
    %2841 = vmatmul.mubr.f32.gmra.mrb[0].mxu0 %v2774
    %v2842 = vpop.f32.mrb[0].mxu0
    %v2843 = vadd.f32 0.0, %v2842
    %v2844 = vpop.f32.mrb[0].mxu0
    %2845 = vdwg.mxu0
    %2846 = vrot.lane.b32.xlu0 %v2346, 104
    %v2847 = vpop.permute.xlu0 %2846
    %2848 = vrot.lane.b32.xlu0 %v2343, 72
    %v2849 = vpop.permute.xlu0 %2848
    %v2850 = vsel %vm2350, %v2847, 0
    %v2852 = vsel %vm2350, %v2849, 0
    %2854 = vmatprep.subr.mxu0 0.0
    %2855 = vmatpush1.xpose.msra.mxu0 %v2852
    %2856 = vmatprep.subr.mxu0 0.0
    %2857 = vmatpush1.xpose.msra.mxu0 0.0
    %2858 = vmatprep.subr.mxu0 0.0
    %2859 = vmatpush1.xpose.msra.mxu0 0.0
    %2860 = vmatprep.subr.mxu0 0.0
    %2861 = vmatpush1.xpose.msra.mxu0 0.0
    %2862 = vmatprep.subr.mxu0 0.0
    %2863 = vmatpush1.xpose.msra.mxu0 0.0
    %2864 = vmatprep.subr.mxu0 0.0
    %2865 = vmatpush1.xpose.msra.mxu0 0.0
    %2866 = vmatprep.subr.mxu0 0.0
    %2867 = vmatpush1.xpose.msra.mxu0 0.0
    %2868 = vmatprep.subr.mxu0 0.0
    %2869 = vmatpush1.xpose.msra.mxu0 0.0
    %2870 = vmatprep.subr.mxu0 0.0
    %2871 = vmatpush1.xpose.msra.mxu0 0.0
    %2872 = vmatprep.subr.mxu0 0.0
    %2873 = vmatpush1.xpose.msra.mxu0 0.0
    %2874 = vmatprep.subr.mxu0 0.0
    %2875 = vmatpush1.xpose.msra.mxu0 0.0
    %2876 = vmatprep.subr.mxu0 0.0
    %2877 = vmatpush1.xpose.msra.mxu0 0.0
    %2878 = vmatprep.subr.mxu0 0.0
    %2879 = vmatpush1.xpose.msra.mxu0 0.0
    %2880 = vmatprep.subr.mxu0 0.0
    %2881 = vmatpush1.xpose.msra.mxu0 0.0
    %2882 = vmatprep.subr.mxu0 0.0
    %2883 = vmatpush1.xpose.msra.mxu0 0.0
    %2884 = vmatprep.subr.mxu0 0.0
    %2885 = vmatpush1.xpose.msra.mxu0 0.0
    %2886 = vmatprep.subr.mxu0 0.0
    %2887 = vmatpush1.xpose.msra.mxu0 0.0
    %2888 = vmatprep.subr.mxu0 0.0
    %2889 = vmatpush1.xpose.msra.mxu0 0.0
    %2890 = vmatprep.subr.mxu0 0.0
    %2891 = vmatpush1.xpose.msra.mxu0 0.0
    %2892 = vmatprep.subr.mxu0 0.0
    %2893 = vmatpush1.xpose.msra.mxu0 0.0
    %2894 = vmatprep.subr.mxu0 0.0
    %2895 = vmatpush1.xpose.msra.mxu0 0.0
    %2896 = vmatprep.subr.mxu0 0.0
    %2897 = vmatpush1.xpose.msra.mxu0 0.0
    %2898 = vmatprep.subr.mxu0 0.0
    %2899 = vmatpush1.xpose.msra.mxu0 0.0
    %2900 = vmatprep.subr.mxu0 0.0
    %2901 = vmatpush1.xpose.msra.mxu0 0.0
    %2902 = vmatprep.subr.mxu0 0.0
    %2903 = vmatpush1.xpose.msra.mxu0 0.0
    %2904 = vmatprep.subr.mxu0 0.0
    %2905 = vmatpush1.xpose.msra.mxu0 0.0
    %2906 = vmatprep.subr.mxu0 0.0
    %2907 = vmatpush1.xpose.msra.mxu0 0.0
    %2908 = vmatprep.subr.mxu0 0.0
    %2909 = vmatpush1.xpose.msra.mxu0 0.0
    %2910 = vmatprep.subr.mxu0 0.0
    %2911 = vmatpush1.xpose.msra.mxu0 0.0
    %2912 = vmatprep.subr.mxu0 0.0
    %2913 = vmatpush1.xpose.msra.mxu0 0.0
    %2914 = vmatprep.subr.mxu0 0.0
    %2915 = vmatpush1.xpose.msra.mxu0 0.0
    %2916 = vmatprep.subr.mxu0 0.0
    %2917 = vmatpush1.xpose.msra.mxu0 0.0
    %2918 = vmatprep.mubr.f32.mxu0 0.0
    %2919 = vmatmul.mubr.f32.gmra.mrb[0].mxu0 %v2850
    %v2920 = vpop.f32.mrb[0].mxu0
    %v2921 = vadd.f32 0.0, %v2920
    %v2922 = vpop.f32.mrb[0].mxu0
    %2923 = vdwg.mxu0
    %v2924 = vsel %vm2350, %v2921, -inf
    %2925 = vmax.xlane.f32.xlu0 %v2924
    %v2926 = vpop.xlane.xlu0 %2925
    %v2927 = vsub.f32 %v2921, %v2926
    %v2928 = vmul.f32 %v2927, 1.442695
    %v2929 = vpow.pop %v2928
    %v2930 = vsel %vm2350, %v2929, 0.0
    %2931 = vadd.xlane.f32.xlu0 %v2930
    %v2932 = vpop.xlane.xlu0 %2931
    %v2933 = vrcp.pop %v2932
    %v2934 = vmul.f32 %v2929, %v2933
    %v2935 = vadd.f32 %v2769, %v2934
    %2936 = vrot.lane.b32.xlu0 %v2343, 40
    %v2937 = vpop.permute.xlu0 %2936
    %v2940 = vsel %vm2350, %v2934, 0
    %2942 = vmatprep.subr.mxu0 0.0
    %2943 = vmatpush1.msra.mxu0 %v2937
    %2944 = vmatprep.subr.mxu0 0.0
    %2945 = vmatpush1.msra.mxu0 0.0
    %2946 = vmatprep.subr.mxu0 0.0
    %2947 = vmatpush1.msra.mxu0 0.0
    %2948 = vmatprep.subr.mxu0 0.0
    %2949 = vmatpush1.msra.mxu0 0.0
    %2950 = vmatprep.subr.mxu0 0.0
    %2951 = vmatpush1.msra.mxu0 0.0
    %2952 = vmatprep.subr.mxu0 0.0
    %2953 = vmatpush1.msra.mxu0 0.0
    %2954 = vmatprep.subr.mxu0 0.0
    %2955 = vmatpush1.msra.mxu0 0.0
    %2956 = vmatprep.subr.mxu0 0.0
    %2957 = vmatpush1.msra.mxu0 0.0
    %2958 = vmatprep.subr.mxu0 0.0
    %2959 = vmatpush1.msra.mxu0 0.0
    %2960 = vmatprep.subr.mxu0 0.0
    %2961 = vmatpush1.msra.mxu0 0.0
    %2962 = vmatprep.subr.mxu0 0.0
    %2963 = vmatpush1.msra.mxu0 0.0
    %2964 = vmatprep.subr.mxu0 0.0
    %2965 = vmatpush1.msra.mxu0 0.0
    %2966 = vmatprep.subr.mxu0 0.0
    %2967 = vmatpush1.msra.mxu0 0.0
    %2968 = vmatprep.subr.mxu0 0.0
    %2969 = vmatpush1.msra.mxu0 0.0
    %2970 = vmatprep.subr.mxu0 0.0
    %2971 = vmatpush1.msra.mxu0 0.0
    %2972 = vmatprep.subr.mxu0 0.0
    %2973 = vmatpush1.msra.mxu0 0.0
    %2974 = vmatprep.subr.mxu0 0.0
    %2975 = vmatpush1.msra.mxu0 0.0
    %2976 = vmatprep.subr.mxu0 0.0
    %2977 = vmatpush1.msra.mxu0 0.0
    %2978 = vmatprep.subr.mxu0 0.0
    %2979 = vmatpush1.msra.mxu0 0.0
    %2980 = vmatprep.subr.mxu0 0.0
    %2981 = vmatpush1.msra.mxu0 0.0
    %2982 = vmatprep.subr.mxu0 0.0
    %2983 = vmatpush1.msra.mxu0 0.0
    %2984 = vmatprep.subr.mxu0 0.0
    %2985 = vmatpush1.msra.mxu0 0.0
    %2986 = vmatprep.subr.mxu0 0.0
    %2987 = vmatpush1.msra.mxu0 0.0
    %2988 = vmatprep.subr.mxu0 0.0
    %2989 = vmatpush1.msra.mxu0 0.0
    %2990 = vmatprep.subr.mxu0 0.0
    %2991 = vmatpush1.msra.mxu0 0.0
    %2992 = vmatprep.subr.mxu0 0.0
    %2993 = vmatpush1.msra.mxu0 0.0
    %2994 = vmatprep.subr.mxu0 0.0
    %2995 = vmatpush1.msra.mxu0 0.0
    %2996 = vmatprep.subr.mxu0 0.0
    %2997 = vmatpush1.msra.mxu0 0.0
    %2998 = vmatprep.subr.mxu0 0.0
    %2999 = vmatpush1.msra.mxu0 0.0
    %3000 = vmatprep.subr.mxu0 0.0
    %3001 = vmatpush1.msra.mxu0 0.0
    %3002 = vmatprep.subr.mxu0 0.0
    %3003 = vmatpush1.msra.mxu0 0.0
    %3004 = vmatprep.subr.mxu0 0.0
    %3005 = vmatpush1.msra.mxu0 0.0
    %3006 = vmatprep.mubr.f32.mxu0 0.0
    %3007 = vmatmul.mubr.f32.gmra.mrb[0].mxu0 %v2940
    %v3008 = vpop.f32.mrb[0].mxu0
    %v3009 = vadd.f32 0.0, %v3008
    %v3010 = vpop.f32.mrb[0].mxu0
    %3011 = vdwg.mxu0
    %3013 = vrot.lane.b32.xlu0 %v2677, 8
    %v3014 = vpop.permute.xlu0 %3013
    %3017 = vrot.lane.b32.xlu0 %v2843, 16
    %v3018 = vpop.permute.xlu0 %3017
    %3021 = vrot.lane.b32.xlu0 %v3009, 24
    %v3022 = vpop.permute.xlu0 %3021
    %v3024 = vsel %vm2350, %v2511, %v3014
    %vm3025 = vcmask 130048
    %v3026 = vsel %vm3025, %v3024, %v3018
    %vm3027 = vcmask 195584
    %v3028 = vsel %vm3027, %v3026, %v3022
    %v3029 = vld [vmem:[#allocation15] sm:$0xff]
    %v3030 = vld [vmem:[#allocation15 + $0x8] sm:$0xff]
    %v3031 = vld [vmem:[#allocation15 + $0x10] sm:$0xff]
    %v3032 = vld [vmem:[#allocation15 + $0x18] sm:$0xff]
    %v3033 = vld [vmem:[#allocation16] sm:$0x1]
    %v3035 = vlaneseq
    %v3036 = vshrl.u32 %v3035, 7
    %v3037 = vsub.s32 0, %v3036
    %v3038 = vrot.slane %v3033, %v3037
    %v3041 = vsel %vm209, %v3028, 0
    %3043 = vmatprep.subr.mxu0 0.0
    %3044 = vmatpush1.msra.mxu0 %v3029
    %3045 = vmatprep.subr.mxu0 0.0
    %3046 = vmatpush1.msra.mxu0 %v3030
    %3047 = vmatprep.subr.mxu0 0.0
    %3048 = vmatpush1.msra.mxu0 %v3031
    %3049 = vmatprep.subr.mxu0 0.0
    %3050 = vmatpush1.msra.mxu0 %v3032
    %3051 = vmatprep.subr.mxu0 0.0
    %3052 = vmatpush1.msra.mxu0 0.0
    %3053 = vmatprep.subr.mxu0 0.0
    %3054 = vmatpush1.msra.mxu0 0.0
    %3055 = vmatprep.subr.mxu0 0.0
    %3056 = vmatpush1.msra.mxu0 0.0
    %3057 = vmatprep.subr.mxu0 0.0
    %3058 = vmatpush1.msra.mxu0 0.0
    %3059 = vmatprep.subr.mxu0 0.0
    %3060 = vmatpush1.msra.mxu0 0.0
    %3061 = vmatprep.subr.mxu0 0.0
    %3062 = vmatpush1.msra.mxu0 0.0
    %3063 = vmatprep.subr.mxu0 0.0
    %3064 = vmatpush1.msra.mxu0 0.0
    %3065 = vmatprep.subr.mxu0 0.0
    %3066 = vmatpush1.msra.mxu0 0.0
    %3067 = vmatprep.subr.mxu0 0.0
    %3068 = vmatpush1.msra.mxu0 0.0
    %3069 = vmatprep.subr.mxu0 0.0
    %3070 = vmatpush1.msra.mxu0 0.0
    %3071 = vmatprep.subr.mxu0 0.0
    %3072 = vmatpush1.msra.mxu0 0.0
    %3073 = vmatprep.subr.mxu0 0.0
    %3074 = vmatpush1.msra.mxu0 0.0
    %3075 = vmatprep.subr.mxu0 0.0
    %3076 = vmatpush1.msra.mxu0 0.0
    %3077 = vmatprep.subr.mxu0 0.0
    %3078 = vmatpush1.msra.mxu0 0.0
    %3079 = vmatprep.subr.mxu0 0.0
    %3080 = vmatpush1.msra.mxu0 0.0
    %3081 = vmatprep.subr.mxu0 0.0
    %3082 = vmatpush1.msra.mxu0 0.0
    %3083 = vmatprep.subr.mxu0 0.0
    %3084 = vmatpush1.msra.mxu0 0.0
    %3085 = vmatprep.subr.mxu0 0.0
    %3086 = vmatpush1.msra.mxu0 0.0
    %3087 = vmatprep.subr.mxu0 0.0
    %3088 = vmatpush1.msra.mxu0 0.0
    %3089 = vmatprep.subr.mxu0 0.0
    %3090 = vmatpush1.msra.mxu0 0.0
    %3091 = vmatprep.subr.mxu0 0.0
    %3092 = vmatpush1.msra.mxu0 0.0
    %3093 = vmatprep.subr.mxu0 0.0
    %3094 = vmatpush1.msra.mxu0 0.0
    %3095 = vmatprep.subr.mxu0 0.0
    %3096 = vmatpush1.msra.mxu0 0.0
    %3097 = vmatprep.subr.mxu0 0.0
    %3098 = vmatpush1.msra.mxu0 0.0
    %3099 = vmatprep.subr.mxu0 0.0
    %3100 = vmatpush1.msra.mxu0 0.0
    %3101 = vmatprep.subr.mxu0 0.0
    %3102 = vmatpush1.msra.mxu0 0.0
    %3103 = vmatprep.subr.mxu0 0.0
    %3104 = vmatpush1.msra.mxu0 0.0
    %3105 = vmatprep.subr.mxu0 0.0
    %3106 = vmatpush1.msra.mxu0 0.0
    %3107 = vmatprep.mubr.f32.mxu0 0.0
    %3108 = vmatmul.mubr.f32.gmra.mrb[0].mxu0 %v3041
    %v3109 = vpop.f32.mrb[0].mxu0
    %v3110 = vadd.f32 %v3038, %v3109
    %v3111 = vpop.f32.mrb[0].mxu0
    %3112 = vdwg.mxu0
    %v3113 = vmul.f32 %v2935, 0.25
    %3114 = vst.msk [vmem:[#allocation21] sm:$0xff] %vm2350, %v3113
    %s3115 = scalar_lea.vmem [#allocation4], 8
    %v3116 = vld [vmem:[%s3115] sm:$0xff]
    %v3117 = vld [vmem:[%s1] sm:$0xff]
    %v3118 = vld [vmem:[%s1 + $0x8] sm:$0xff]
    %v3119 = vld [vmem:[%s1 + $0x10] sm:$0xff]
    %v3120 = vld [vmem:[%s1 + $0x18] sm:$0xff]
    %v3121 = vld [vmem:[#allocation7] sm:$0x1]
    %v3123 = vlaneseq
    %v3124 = vshrl.u32 %v3123, 7
    %v3125 = vsub.s32 0, %v3124
    %v3126 = vrot.slane %v3121, %v3125
    %v3129 = vsel %vm209, %v3116, 0
    %3131 = vmatprep.subr.mxu0 0.0
    %3132 = vmatpush1.msra.mxu0 %v3117
    %3133 = vmatprep.subr.mxu0 0.0
    %3134 = vmatpush1.msra.mxu0 %v3118
    %3135 = vmatprep.subr.mxu0 0.0
    %3136 = vmatpush1.msra.mxu0 %v3119
    %3137 = vmatprep.subr.mxu0 0.0
    %3138 = vmatpush1.msra.mxu0 %v3120
    %3139 = vmatprep.subr.mxu0 0.0
    %3140 = vmatpush1.msra.mxu0 0.0
    %3141 = vmatprep.subr.mxu0 0.0
    %3142 = vmatpush1.msra.mxu0 0.0
    %3143 = vmatprep.subr.mxu0 0.0
    %3144 = vmatpush1.msra.mxu0 0.0
    %3145 = vmatprep.subr.mxu0 0.0
    %3146 = vmatpush1.msra.mxu0 0.0
    %3147 = vmatprep.subr.mxu0 0.0
    %3148 = vmatpush1.msra.mxu0 0.0
    %3149 = vmatprep.subr.mxu0 0.0
    %3150 = vmatpush1.msra.mxu0 0.0
    %3151 = vmatprep.subr.mxu0 0.0
    %3152 = vmatpush1.msra.mxu0 0.0
    %3153 = vmatprep.subr.mxu0 0.0
    %3154 = vmatpush1.msra.mxu0 0.0
    %3155 = vmatprep.subr.mxu0 0.0
    %3156 = vmatpush1.msra.mxu0 0.0
    %3157 = vmatprep.subr.mxu0 0.0
    %3158 = vmatpush1.msra.mxu0 0.0
    %3159 = vmatprep.subr.mxu0 0.0
    %3160 = vmatpush1.msra.mxu0 0.0
    %3161 = vmatprep.subr.mxu0 0.0
    %3162 = vmatpush1.msra.mxu0 0.0
    %3163 = vmatprep.subr.mxu0 0.0
    %3164 = vmatpush1.msra.mxu0 0.0
    %3165 = vmatprep.subr.mxu0 0.0
    %3166 = vmatpush1.msra.mxu0 0.0
    %3167 = vmatprep.subr.mxu0 0.0
    %3168 = vmatpush1.msra.mxu0 0.0
    %3169 = vmatprep.subr.mxu0 0.0
    %3170 = vmatpush1.msra.mxu0 0.0
    %3171 = vmatprep.subr.mxu0 0.0
    %3172 = vmatpush1.msra.mxu0 0.0
    %3173 = vmatprep.subr.mxu0 0.0
    %3174 = vmatpush1.msra.mxu0 0.0
    %3175 = vmatprep.subr.mxu0 0.0
    %3176 = vmatpush1.msra.mxu0 0.0
    %3177 = vmatprep.subr.mxu0 0.0
    %3178 = vmatpush1.msra.mxu0 0.0
    %3179 = vmatprep.subr.mxu0 0.0
    %3180 = vmatpush1.msra.mxu0 0.0
    %3181 = vmatprep.subr.mxu0 0.0
    %3182 = vmatpush1.msra.mxu0 0.0
    %3183 = vmatprep.subr.mxu0 0.0
    %3184 = vmatpush1.msra.mxu0 0.0
    %3185 = vmatprep.subr.mxu0 0.0
    %3186 = vmatpush1.msra.mxu0 0.0
    %3187 = vmatprep.subr.mxu0 0.0
    %3188 = vmatpush1.msra.mxu0 0.0
    %3189 = vmatprep.subr.mxu0 0.0
    %3190 = vmatpush1.msra.mxu0 0.0
    %3191 = vmatprep.subr.mxu0 0.0
    %3192 = vmatpush1.msra.mxu0 0.0
    %3193 = vmatprep.subr.mxu0 0.0
    %3194 = vmatpush1.msra.mxu0 0.0
    %3195 = vmatprep.mubr.f32.mxu0 0.0
    %3196 = vmatmul.mubr.f32.gmra.mrb[0].mxu0 %v3129
    %v3197 = vpop.f32.mrb[0].mxu0
    %v3198 = vadd.f32 %v3126, %v3197
    %v3199 = vpop.f32.mrb[0].mxu0
    %3200 = vdwg.mxu0
    %v3201 = vmax.f32 %v3198, 0.0
    %v3202 = vld [vmem:[#allocation9] sm:$0xff]
    %v3203 = vld [vmem:[#allocation9 + $0x8] sm:$0xff]
    %v3204 = vld [vmem:[#allocation9 + $0x10] sm:$0xff]
    %v3205 = vld [vmem:[#allocation9 + $0x18] sm:$0xff]
    %v3206 = vld [vmem:[#allocation10] sm:$0x1]
    %v3208 = vlaneseq
    %v3209 = vshrl.u32 %v3208, 7
    %v3210 = vsub.s32 0, %v3209
    %v3211 = vrot.slane %v3206, %v3210
    %v3214 = vsel %vm209, %v3201, 0
    %3216 = vmatprep.subr.mxu0 0.0
    %3217 = vmatpush1.msra.mxu0 %v3202
    %3218 = vmatprep.subr.mxu0 0.0
    %3219 = vmatpush1.msra.mxu0 %v3203
    %3220 = vmatprep.subr.mxu0 0.0
    %3221 = vmatpush1.msra.mxu0 %v3204
    %3222 = vmatprep.subr.mxu0 0.0
    %3223 = vmatpush1.msra.mxu0 %v3205
    %3224 = vmatprep.subr.mxu0 0.0
    %3225 = vmatpush1.msra.mxu0 0.0
    %3226 = vmatprep.subr.mxu0 0.0
    %3227 = vmatpush1.msra.mxu0 0.0
    %3228 = vmatprep.subr.mxu0 0.0
    %3229 = vmatpush1.msra.mxu0 0.0
    %3230 = vmatprep.subr.mxu0 0.0
    %3231 = vmatpush1.msra.mxu0 0.0
    %3232 = vmatprep.subr.mxu0 0.0
    %3233 = vmatpush1.msra.mxu0 0.0
    %3234 = vmatprep.subr.mxu0 0.0
    %3235 = vmatpush1.msra.mxu0 0.0
    %3236 = vmatprep.subr.mxu0 0.0
    %3237 = vmatpush1.msra.mxu0 0.0
    %3238 = vmatprep.subr.mxu0 0.0
    %3239 = vmatpush1.msra.mxu0 0.0
    %3240 = vmatprep.subr.mxu0 0.0
    %3241 = vmatpush1.msra.mxu0 0.0
    %3242 = vmatprep.subr.mxu0 0.0
    %3243 = vmatpush1.msra.mxu0 0.0
    %3244 = vmatprep.subr.mxu0 0.0
    %3245 = vmatpush1.msra.mxu0 0.0
    %3246 = vmatprep.subr.mxu0 0.0
    %3247 = vmatpush1.msra.mxu0 0.0
    %3248 = vmatprep.subr.mxu0 0.0
    %3249 = vmatpush1.msra.mxu0 0.0
    %3250 = vmatprep.subr.mxu0 0.0
    %3251 = vmatpush1.msra.mxu0 0.0
    %3252 = vmatprep.subr.mxu0 0.0
    %3253 = vmatpush1.msra.mxu0 0.0
    %3254 = vmatprep.subr.mxu0 0.0
    %3255 = vmatpush1.msra.mxu0 0.0
    %3256 = vmatprep.subr.mxu0 0.0
    %3257 = vmatpush1.msra.mxu0 0.0
    %3258 = vmatprep.subr.mxu0 0.0
    %3259 = vmatpush1.msra.mxu0 0.0
    %3260 = vmatprep.subr.mxu0 0.0
    %3261 = vmatpush1.msra.mxu0 0.0
    %3262 = vmatprep.subr.mxu0 0.0
    %3263 = vmatpush1.msra.mxu0 0.0
    %3264 = vmatprep.subr.mxu0 0.0
    %3265 = vmatpush1.msra.mxu0 0.0
    %3266 = vmatprep.subr.mxu0 0.0
    %3267 = vmatpush1.msra.mxu0 0.0
    %3268 = vmatprep.subr.mxu0 0.0
    %3269 = vmatpush1.msra.mxu0 0.0
    %3270 = vmatprep.subr.mxu0 0.0
    %3271 = vmatpush1.msra.mxu0 0.0
    %3272 = vmatprep.subr.mxu0 0.0
    %3273 = vmatpush1.msra.mxu0 0.0
    %3274 = vmatprep.subr.mxu0 0.0
    %3275 = vmatpush1.msra.mxu0 0.0
    %3276 = vmatprep.subr.mxu0 0.0
    %3277 = vmatpush1.msra.mxu0 0.0
    %3278 = vmatprep.subr.mxu0 0.0
    %3279 = vmatpush1.msra.mxu0 0.0
    %3280 = vmatprep.mubr.f32.mxu0 0.0
    %3281 = vmatmul.mubr.f32.gmra.mrb[0].mxu0 %v3214
    %v3282 = vpop.f32.mrb[0].mxu0
    %v3283 = vadd.f32 %v3211, %v3282
    %v3284 = vpop.f32.mrb[0].mxu0
    %3285 = vdwg.mxu0
    %v3286 = vmax.f32 %v3283, 0.0
    %v3287 = vld [vmem:[%s5] sm:$0xff]
    %v3288 = vld [vmem:[%s5 + $0x8] sm:$0xff]
    %v3289 = vld [vmem:[%s5 + $0x10] sm:$0xff]
    %v3290 = vld [vmem:[%s5 + $0x18] sm:$0xff]
    %v3291 = vld [vmem:[%s7] sm:$0x1]
    %v3293 = vlaneseq
    %v3294 = vshrl.u32 %v3293, 7
    %v3295 = vsub.s32 0, %v3294
    %v3296 = vrot.slane %v3291, %v3295
    %v3299 = vsel %vm209, %v3286, 0
    %3301 = vmatprep.subr.mxu0 0.0
    %3302 = vmatpush1.msra.mxu0 %v3287
    %3303 = vmatprep.subr.mxu0 0.0
    %3304 = vmatpush1.msra.mxu0 %v3288
    %3305 = vmatprep.subr.mxu0 0.0
    %3306 = vmatpush1.msra.mxu0 %v3289
    %3307 = vmatprep.subr.mxu0 0.0
    %3308 = vmatpush1.msra.mxu0 %v3290
    %3309 = vmatprep.subr.mxu0 0.0
    %3310 = vmatpush1.msra.mxu0 0.0
    %3311 = vmatprep.subr.mxu0 0.0
    %3312 = vmatpush1.msra.mxu0 0.0
    %3313 = vmatprep.subr.mxu0 0.0
    %3314 = vmatpush1.msra.mxu0 0.0
    %3315 = vmatprep.subr.mxu0 0.0
    %3316 = vmatpush1.msra.mxu0 0.0
    %3317 = vmatprep.subr.mxu0 0.0
    %3318 = vmatpush1.msra.mxu0 0.0
    %3319 = vmatprep.subr.mxu0 0.0
    %3320 = vmatpush1.msra.mxu0 0.0
    %3321 = vmatprep.subr.mxu0 0.0
    %3322 = vmatpush1.msra.mxu0 0.0
    %3323 = vmatprep.subr.mxu0 0.0
    %3324 = vmatpush1.msra.mxu0 0.0
    %3325 = vmatprep.subr.mxu0 0.0
    %3326 = vmatpush1.msra.mxu0 0.0
    %3327 = vmatprep.subr.mxu0 0.0
    %3328 = vmatpush1.msra.mxu0 0.0
    %3329 = vmatprep.subr.mxu0 0.0
    %3330 = vmatpush1.msra.mxu0 0.0
    %3331 = vmatprep.subr.mxu0 0.0
    %3332 = vmatpush1.msra.mxu0 0.0
    %3333 = vmatprep.subr.mxu0 0.0
    %3334 = vmatpush1.msra.mxu0 0.0
    %3335 = vmatprep.subr.mxu0 0.0
    %3336 = vmatpush1.msra.mxu0 0.0
    %3337 = vmatprep.subr.mxu0 0.0
    %3338 = vmatpush1.msra.mxu0 0.0
    %3339 = vmatprep.subr.mxu0 0.0
    %3340 = vmatpush1.msra.mxu0 0.0
    %3341 = vmatprep.subr.mxu0 0.0
    %3342 = vmatpush1.msra.mxu0 0.0
    %3343 = vmatprep.subr.mxu0 0.0
    %3344 = vmatpush1.msra.mxu0 0.0
    %3345 = vmatprep.subr.mxu0 0.0
    %3346 = vmatpush1.msra.mxu0 0.0
    %3347 = vmatprep.subr.mxu0 0.0
    %3348 = vmatpush1.msra.mxu0 0.0
    %3349 = vmatprep.subr.mxu0 0.0
    %3350 = vmatpush1.msra.mxu0 0.0
    %3351 = vmatprep.subr.mxu0 0.0
    %3352 = vmatpush1.msra.mxu0 0.0
    %3353 = vmatprep.subr.mxu0 0.0
    %3354 = vmatpush1.msra.mxu0 0.0
    %3355 = vmatprep.subr.mxu0 0.0
    %3356 = vmatpush1.msra.mxu0 0.0
    %3357 = vmatprep.subr.mxu0 0.0
    %3358 = vmatpush1.msra.mxu0 0.0
    %3359 = vmatprep.subr.mxu0 0.0
    %3360 = vmatpush1.msra.mxu0 0.0
    %3361 = vmatprep.subr.mxu0 0.0
    %3362 = vmatpush1.msra.mxu0 0.0
    %3363 = vmatprep.subr.mxu0 0.0
    %3364 = vmatpush1.msra.mxu0 0.0
    %3365 = vmatprep.mubr.f32.mxu0 0.0
    %3366 = vmatmul.mubr.f32.gmra.mrb[0].mxu0 %v3299
    %v3367 = vpop.f32.mrb[0].mxu0
    %v3368 = vadd.f32 %v3296, %v3367
    %v3369 = vpop.f32.mrb[0].mxu0
    %3370 = vdwg.mxu0
    %v3371 = vld [vmem:[%s6] sm:$0xff]
    %v3372 = vld [vmem:[%s6 + $0x8] sm:$0xff]
    %v3373 = vld [vmem:[%s6 + $0x10] sm:$0xff]
    %v3374 = vld [vmem:[%s6 + $0x18] sm:$0xff]
    %3375 = vmatprep.subr.mxu0 0.0
    %3376 = vmatpush1.msra.mxu0 %v3371
    %3377 = vmatprep.subr.mxu0 0.0
    %3378 = vmatpush1.msra.mxu0 %v3372
    %3379 = vmatprep.subr.mxu0 0.0
    %3380 = vmatpush1.msra.mxu0 %v3373
    %3381 = vmatprep.subr.mxu0 0.0
    %3382 = vmatpush1.msra.mxu0 %v3374
    %3383 = vmatprep.subr.mxu0 0.0
    %3384 = vmatpush1.msra.mxu0 0.0
    %3385 = vmatprep.subr.mxu0 0.0
    %3386 = vmatpush1.msra.mxu0 0.0
    %3387 = vmatprep.subr.mxu0 0.0
    %3388 = vmatpush1.msra.mxu0 0.0
    %3389 = vmatprep.subr.mxu0 0.0
    %3390 = vmatpush1.msra.mxu0 0.0
    %3391 = vmatprep.subr.mxu0 0.0
    %3392 = vmatpush1.msra.mxu0 0.0
    %3393 = vmatprep.subr.mxu0 0.0
    %3394 = vmatpush1.msra.mxu0 0.0
    %3395 = vmatprep.subr.mxu0 0.0
    %3396 = vmatpush1.msra.mxu0 0.0
    %3397 = vmatprep.subr.mxu0 0.0
    %3398 = vmatpush1.msra.mxu0 0.0
    %3399 = vmatprep.subr.mxu0 0.0
    %3400 = vmatpush1.msra.mxu0 0.0
    %3401 = vmatprep.subr.mxu0 0.0
    %3402 = vmatpush1.msra.mxu0 0.0
    %3403 = vmatprep.subr.mxu0 0.0
    %3404 = vmatpush1.msra.mxu0 0.0
    %3405 = vmatprep.subr.mxu0 0.0
    %3406 = vmatpush1.msra.mxu0 0.0
    %3407 = vmatprep.subr.mxu0 0.0
    %3408 = vmatpush1.msra.mxu0 0.0
    %3409 = vmatprep.subr.mxu0 0.0
    %3410 = vmatpush1.msra.mxu0 0.0
    %3411 = vmatprep.subr.mxu0 0.0
    %3412 = vmatpush1.msra.mxu0 0.0
    %3413 = vmatprep.subr.mxu0 0.0
    %3414 = vmatpush1.msra.mxu0 0.0
    %3415 = vmatprep.subr.mxu0 0.0
    %3416 = vmatpush1.msra.mxu0 0.0
    %3417 = vmatprep.subr.mxu0 0.0
    %3418 = vmatpush1.msra.mxu0 0.0
    %3419 = vmatprep.subr.mxu0 0.0
    %3420 = vmatpush1.msra.mxu0 0.0
    %3421 = vmatprep.subr.mxu0 0.0
    %3422 = vmatpush1.msra.mxu0 0.0
    %3423 = vmatprep.subr.mxu0 0.0
    %3424 = vmatpush1.msra.mxu0 0.0
    %3425 = vmatprep.subr.mxu0 0.0
    %3426 = vmatpush1.msra.mxu0 0.0
    %3427 = vmatprep.subr.mxu0 0.0
    %3428 = vmatpush1.msra.mxu0 0.0
    %3429 = vmatprep.subr.mxu0 0.0
    %3430 = vmatpush1.msra.mxu0 0.0
    %3431 = vmatprep.subr.mxu0 0.0
    %3432 = vmatpush1.msra.mxu0 0.0
    %3433 = vmatprep.subr.mxu0 0.0
    %3434 = vmatpush1.msra.mxu0 0.0
    %3435 = vmatprep.subr.mxu0 0.0
    %3436 = vmatpush1.msra.mxu0 0.0
    %3437 = vmatprep.subr.mxu0 0.0
    %3438 = vmatpush1.msra.mxu0 0.0
    %3439 = vmatprep.mubr.f32.mxu0 0.0
    %3440 = vmatmul.mubr.f32.gmra.mrb[0].mxu0 %v458
    %v3441 = vpop.f32.mrb[0].mxu0
    %v3442 = vadd.f32 0.0, %v3441
    %v3443 = vpop.f32.mrb[0].mxu0
    %3444 = vdwg.mxu0
    %v3445 = vadd.f32 %v3368, %v3442
    %v3446 = vxor.u32 %v3445, 2147483648
    %v3447 = vmul.f32 %v3446, 1.442695
    %v3448 = vpow.pop %v3447
    %v3449 = vadd.f32 %v3448, 1.0
    %v3450 = vrcp.pop %v3449
    %v3451 = vmul.f32 1.0, %v3450
    %v3452 = vtanh.pop %v3445
    %v3453 = vmul.f32 %v3451, 0.0
    %3455 = vrot.lane.b32.xlu0 %v3452, 64
    %v3456 = vpop.permute.xlu0 %3455
    %v3458 = vmul.f32 %v3451, %v3456
    %3460 = vrot.lane.b32.xlu0 %v3458, 32
    %v3461 = vpop.permute.xlu0 %3460
    %v3463 = vadd.f32 %v3453, %v3461
    %v3464 = vtanh.pop %v3463
    %3466 = vrot.lane.b32.xlu0 %v3464, 64
    %v3467 = vpop.permute.xlu0 %3466
    %v3469 = vmul.f32 %v3451, %v3467
    %3471 = vrot.lane.b32.xlu0 %v3469, 32
    %v3472 = vpop.permute.xlu0 %3471
    %v3473 = vsel %vm209, %v3472, 0
    %3475 = vmatprep.subr.mxu0 0.0
    %3476 = vmatpush1.msra.mxu0 %v3371
    %3477 = vmatprep.subr.mxu0 0.0
    %3478 = vmatpush1.msra.mxu0 %v3372
    %3479 = vmatprep.subr.mxu0 0.0
    %3480 = vmatpush1.msra.mxu0 %v3373
    %3481 = vmatprep.subr.mxu0 0.0
    %3482 = vmatpush1.msra.mxu0 %v3374
    %3483 = vmatprep.subr.mxu0 0.0
    %3484 = vmatpush1.msra.mxu0 0.0
    %3485 = vmatprep.subr.mxu0 0.0
    %3486 = vmatpush1.msra.mxu0 0.0
    %3487 = vmatprep.subr.mxu0 0.0
    %3488 = vmatpush1.msra.mxu0 0.0
    %3489 = vmatprep.subr.mxu0 0.0
    %3490 = vmatpush1.msra.mxu0 0.0
    %3491 = vmatprep.subr.mxu0 0.0
    %3492 = vmatpush1.msra.mxu0 0.0
    %3493 = vmatprep.subr.mxu0 0.0
    %3494 = vmatpush1.msra.mxu0 0.0
    %3495 = vmatprep.subr.mxu0 0.0
    %3496 = vmatpush1.msra.mxu0 0.0
    %3497 = vmatprep.subr.mxu0 0.0
    %3498 = vmatpush1.msra.mxu0 0.0
    %3499 = vmatprep.subr.mxu0 0.0
    %3500 = vmatpush1.msra.mxu0 0.0
    %3501 = vmatprep.subr.mxu0 0.0
    %3502 = vmatpush1.msra.mxu0 0.0
    %3503 = vmatprep.subr.mxu0 0.0
    %3504 = vmatpush1.msra.mxu0 0.0
    %3505 = vmatprep.subr.mxu0 0.0
    %3506 = vmatpush1.msra.mxu0 0.0
    %3507 = vmatprep.subr.mxu0 0.0
    %3508 = vmatpush1.msra.mxu0 0.0
    %3509 = vmatprep.subr.mxu0 0.0
    %3510 = vmatpush1.msra.mxu0 0.0
    %3511 = vmatprep.subr.mxu0 0.0
    %3512 = vmatpush1.msra.mxu0 0.0
    %3513 = vmatprep.subr.mxu0 0.0
    %3514 = vmatpush1.msra.mxu0 0.0
    %3515 = vmatprep.subr.mxu0 0.0
    %3516 = vmatpush1.msra.mxu0 0.0
    %3517 = vmatprep.subr.mxu0 0.0
    %3518 = vmatpush1.msra.mxu0 0.0
    %3519 = vmatprep.subr.mxu0 0.0
    %3520 = vmatpush1.msra.mxu0 0.0
    %3521 = vmatprep.subr.mxu0 0.0
    %3522 = vmatpush1.msra.mxu0 0.0
    %3523 = vmatprep.subr.mxu0 0.0
    %3524 = vmatpush1.msra.mxu0 0.0
    %3525 = vmatprep.subr.mxu0 0.0
    %3526 = vmatpush1.msra.mxu0 0.0
    %3527 = vmatprep.subr.mxu0 0.0
    %3528 = vmatpush1.msra.mxu0 0.0
    %3529 = vmatprep.subr.mxu0 0.0
    %3530 = vmatpush1.msra.mxu0 0.0
    %3531 = vmatprep.subr.mxu0 0.0
    %3532 = vmatpush1.msra.mxu0 0.0
    %3533 = vmatprep.subr.mxu0 0.0
    %3534 = vmatpush1.msra.mxu0 0.0
    %3535 = vmatprep.subr.mxu0 0.0
    %3536 = vmatpush1.msra.mxu0 0.0
    %3537 = vmatprep.subr.mxu0 0.0
    %3538 = vmatpush1.msra.mxu0 0.0
    %3539 = vmatprep.mubr.f32.mxu0 0.0
    %3540 = vmatmul.mubr.f32.gmra.mrb[0].mxu0 %v3473
    %v3541 = vpop.f32.mrb[0].mxu0
    %v3542 = vadd.f32 0.0, %v3541
    %v3543 = vpop.f32.mrb[0].mxu0
    %3544 = vdwg.mxu0
    %v3546 = vrot.slane %v3542, 7
    %v3548 = vadd.f32 %v3368, %v3546
    %v3549 = vxor.u32 %v3548, 2147483648
    %v3550 = vmul.f32 %v3549, 1.442695
    %v3551 = vpow.pop %v3550
    %v3552 = vadd.f32 %v3551, 1.0
    %v3553 = vrcp.pop %v3552
    %v3554 = vmul.f32 1.0, %v3553
    %v3555 = vtanh.pop %v3548
    %v3557 = vrot.slane %v3463, 7
    %v3559 = vmul.f32 %v3554, %v3557
    %3561 = vrot.lane.b32.xlu0 %v3555, 64
    %v3562 = vpop.permute.xlu0 %3561
    %v3564 = vmul.f32 %v3554, %v3562
    %3566 = vrot.lane.b32.xlu0 %v3564, 32
    %v3567 = vpop.permute.xlu0 %3566
    %v3569 = vadd.f32 %v3559, %v3567
    %v3570 = vtanh.pop %v3569
    %3572 = vrot.lane.b32.xlu0 %v3570, 64
    %v3573 = vpop.permute.xlu0 %3572
    %v3575 = vmul.f32 %v3554, %v3573
    %v3577 = vrot.slane %v3575, 1
    %3578 = vrot.lane.b32.xlu0 %v3577, 32
    %v3579 = vpop.permute.xlu0 %3578
    %v3580 = vsel %vm209, %v3579, 0
    %3582 = vmatprep.subr.mxu0 0.0
    %3583 = vmatpush1.msra.mxu0 %v3371
    %3584 = vmatprep.subr.mxu0 0.0
    %3585 = vmatpush1.msra.mxu0 %v3372
    %3586 = vmatprep.subr.mxu0 0.0
    %3587 = vmatpush1.msra.mxu0 %v3373
    %3588 = vmatprep.subr.mxu0 0.0
    %3589 = vmatpush1.msra.mxu0 %v3374
    %3590 = vmatprep.subr.mxu0 0.0
    %3591 = vmatpush1.msra.mxu0 0.0
    %3592 = vmatprep.subr.mxu0 0.0
    %3593 = vmatpush1.msra.mxu0 0.0
    %3594 = vmatprep.subr.mxu0 0.0
    %3595 = vmatpush1.msra.mxu0 0.0
    %3596 = vmatprep.subr.mxu0 0.0
    %3597 = vmatpush1.msra.mxu0 0.0
    %3598 = vmatprep.subr.mxu0 0.0
    %3599 = vmatpush1.msra.mxu0 0.0
    %3600 = vmatprep.subr.mxu0 0.0
    %3601 = vmatpush1.msra.mxu0 0.0
    %3602 = vmatprep.subr.mxu0 0.0
    %3603 = vmatpush1.msra.mxu0 0.0
    %3604 = vmatprep.subr.mxu0 0.0
    %3605 = vmatpush1.msra.mxu0 0.0
    %3606 = vmatprep.subr.mxu0 0.0
    %3607 = vmatpush1.msra.mxu0 0.0
    %3608 = vmatprep.subr.mxu0 0.0
    %3609 = vmatpush1.msra.mxu0 0.0
    %3610 = vmatprep.subr.mxu0 0.0
    %3611 = vmatpush1.msra.mxu0 0.0
    %3612 = vmatprep.subr.mxu0 0.0
    %3613 = vmatpush1.msra.mxu0 0.0
    %3614 = vmatprep.subr.mxu0 0.0
    %3615 = vmatpush1.msra.mxu0 0.0
    %3616 = vmatprep.subr.mxu0 0.0
    %3617 = vmatpush1.msra.mxu0 0.0
    %3618 = vmatprep.subr.mxu0 0.0
    %3619 = vmatpush1.msra.mxu0 0.0
    %3620 = vmatprep.subr.mxu0 0.0
    %3621 = vmatpush1.msra.mxu0 0.0
    %3622 = vmatprep.subr.mxu0 0.0
    %3623 = vmatpush1.msra.mxu0 0.0
    %3624 = vmatprep.subr.mxu0 0.0
    %3625 = vmatpush1.msra.mxu0 0.0
    %3626 = vmatprep.subr.mxu0 0.0
    %3627 = vmatpush1.msra.mxu0 0.0
    %3628 = vmatprep.subr.mxu0 0.0
    %3629 = vmatpush1.msra.mxu0 0.0
    %3630 = vmatprep.subr.mxu0 0.0
    %3631 = vmatpush1.msra.mxu0 0.0
    %3632 = vmatprep.subr.mxu0 0.0
    %3633 = vmatpush1.msra.mxu0 0.0
    %3634 = vmatprep.subr.mxu0 0.0
    %3635 = vmatpush1.msra.mxu0 0.0
    %3636 = vmatprep.subr.mxu0 0.0
    %3637 = vmatpush1.msra.mxu0 0.0
    %3638 = vmatprep.subr.mxu0 0.0
    %3639 = vmatpush1.msra.mxu0 0.0
    %3640 = vmatprep.subr.mxu0 0.0
    %3641 = vmatpush1.msra.mxu0 0.0
    %3642 = vmatprep.subr.mxu0 0.0
    %3643 = vmatpush1.msra.mxu0 0.0
    %3644 = vmatprep.subr.mxu0 0.0
    %3645 = vmatpush1.msra.mxu0 0.0
    %3646 = vmatprep.mubr.f32.mxu0 0.0
    %3647 = vmatmul.mubr.f32.gmra.mrb[0].mxu0 %v3580
    %v3648 = vpop.f32.mrb[0].mxu0
    %v3649 = vadd.f32 0.0, %v3648
    %v3650 = vpop.f32.mrb[0].mxu0
    %3651 = vdwg.mxu0
    %v3653 = vrot.slane %v3649, 6
    %v3655 = vadd.f32 %v3368, %v3653
    %v3656 = vxor.u32 %v3655, 2147483648
    %v3657 = vmul.f32 %v3656, 1.442695
    %v3658 = vpow.pop %v3657
    %v3659 = vadd.f32 %v3658, 1.0
    %v3660 = vrcp.pop %v3659
    %v3661 = vmul.f32 1.0, %v3660
    %v3662 = vtanh.pop %v3655
    %v3664 = vrot.slane %v3569, 7
    %v3666 = vmul.f32 %v3661, %v3664
    %3668 = vrot.lane.b32.xlu0 %v3662, 64
    %v3669 = vpop.permute.xlu0 %3668
    %v3671 = vmul.f32 %v3661, %v3669
    %3673 = vrot.lane.b32.xlu0 %v3671, 32
    %v3674 = vpop.permute.xlu0 %3673
    %v3676 = vadd.f32 %v3666, %v3674
    %v3677 = vtanh.pop %v3676
    %3679 = vrot.lane.b32.xlu0 %v3677, 64
    %v3680 = vpop.permute.xlu0 %3679
    %v3682 = vmul.f32 %v3661, %v3680
    %v3684 = vrot.slane %v3682, 2
    %3685 = vrot.lane.b32.xlu0 %v3684, 32
    %v3686 = vpop.permute.xlu0 %3685
    %v3687 = vsel %vm209, %v3686, 0
    %3689 = vmatprep.subr.mxu0 0.0
    %3690 = vmatpush1.msra.mxu0 %v3371
    %3691 = vmatprep.subr.mxu0 0.0
    %3692 = vmatpush1.msra.mxu0 %v3372
    %3693 = vmatprep.subr.mxu0 0.0
    %3694 = vmatpush1.msra.mxu0 %v3373
    %3695 = vmatprep.subr.mxu0 0.0
    %3696 = vmatpush1.msra.mxu0 %v3374
    %3697 = vmatprep.subr.mxu0 0.0
    %3698 = vmatpush1.msra.mxu0 0.0
    %3699 = vmatprep.subr.mxu0 0.0
    %3700 = vmatpush1.msra.mxu0 0.0
    %3701 = vmatprep.subr.mxu0 0.0
    %3702 = vmatpush1.msra.mxu0 0.0
    %3703 = vmatprep.subr.mxu0 0.0
    %3704 = vmatpush1.msra.mxu0 0.0
    %3705 = vmatprep.subr.mxu0 0.0
    %3706 = vmatpush1.msra.mxu0 0.0
    %3707 = vmatprep.subr.mxu0 0.0
    %3708 = vmatpush1.msra.mxu0 0.0
    %3709 = vmatprep.subr.mxu0 0.0
    %3710 = vmatpush1.msra.mxu0 0.0
    %3711 = vmatprep.subr.mxu0 0.0
    %3712 = vmatpush1.msra.mxu0 0.0
    %3713 = vmatprep.subr.mxu0 0.0
    %3714 = vmatpush1.msra.mxu0 0.0
    %3715 = vmatprep.subr.mxu0 0.0
    %3716 = vmatpush1.msra.mxu0 0.0
    %3717 = vmatprep.subr.mxu0 0.0
    %3718 = vmatpush1.msra.mxu0 0.0
    %3719 = vmatprep.subr.mxu0 0.0
    %3720 = vmatpush1.msra.mxu0 0.0
    %3721 = vmatprep.subr.mxu0 0.0
    %3722 = vmatpush1.msra.mxu0 0.0
    %3723 = vmatprep.subr.mxu0 0.0
    %3724 = vmatpush1.msra.mxu0 0.0
    %3725 = vmatprep.subr.mxu0 0.0
    %3726 = vmatpush1.msra.mxu0 0.0
    %3727 = vmatprep.subr.mxu0 0.0
    %3728 = vmatpush1.msra.mxu0 0.0
    %3729 = vmatprep.subr.mxu0 0.0
    %3730 = vmatpush1.msra.mxu0 0.0
    %3731 = vmatprep.subr.mxu0 0.0
    %3732 = vmatpush1.msra.mxu0 0.0
    %3733 = vmatprep.subr.mxu0 0.0
    %3734 = vmatpush1.msra.mxu0 0.0
    %3735 = vmatprep.subr.mxu0 0.0
    %3736 = vmatpush1.msra.mxu0 0.0
    %3737 = vmatprep.subr.mxu0 0.0
    %3738 = vmatpush1.msra.mxu0 0.0
    %3739 = vmatprep.subr.mxu0 0.0
    %3740 = vmatpush1.msra.mxu0 0.0
    %3741 = vmatprep.subr.mxu0 0.0
    %3742 = vmatpush1.msra.mxu0 0.0
    %3743 = vmatprep.subr.mxu0 0.0
    %3744 = vmatpush1.msra.mxu0 0.0
    %3745 = vmatprep.subr.mxu0 0.0
    %3746 = vmatpush1.msra.mxu0 0.0
    %3747 = vmatprep.subr.mxu0 0.0
    %3748 = vmatpush1.msra.mxu0 0.0
    %3749 = vmatprep.subr.mxu0 0.0
    %3750 = vmatpush1.msra.mxu0 0.0
    %3751 = vmatprep.subr.mxu0 0.0
    %3752 = vmatpush1.msra.mxu0 0.0
    %3753 = vmatprep.mubr.f32.mxu0 0.0
    %3754 = vmatmul.mubr.f32.gmra.mrb[0].mxu0 %v3687
    %v3755 = vpop.f32.mrb[0].mxu0
    %v3756 = vadd.f32 0.0, %v3755
    %v3757 = vpop.f32.mrb[0].mxu0
    %3758 = vdwg.mxu0
    %v3760 = vrot.slane %v3756, 5
    %v3762 = vadd.f32 %v3368, %v3760
    %v3763 = vxor.u32 %v3762, 2147483648
    %v3764 = vmul.f32 %v3763, 1.442695
    %v3765 = vpow.pop %v3764
    %v3766 = vadd.f32 %v3765, 1.0
    %v3767 = vrcp.pop %v3766
    %v3768 = vmul.f32 1.0, %v3767
    %v3769 = vtanh.pop %v3762
    %v3771 = vrot.slane %v3676, 7
    %v3773 = vmul.f32 %v3768, %v3771
    %3775 = vrot.lane.b32.xlu0 %v3769, 64
    %v3776 = vpop.permute.xlu0 %3775
    %v3778 = vmul.f32 %v3768, %v3776
    %3780 = vrot.lane.b32.xlu0 %v3778, 32
    %v3781 = vpop.permute.xlu0 %3780
    %v3783 = vadd.f32 %v3773, %v3781
    %v3784 = vtanh.pop %v3783
    %3786 = vrot.lane.b32.xlu0 %v3784, 64
    %v3787 = vpop.permute.xlu0 %3786
    %v3789 = vmul.f32 %v3768, %v3787
    %v3791 = vrot.slane %v3789, 3
    %3792 = vrot.lane.b32.xlu0 %v3791, 32
    %v3793 = vpop.permute.xlu0 %3792
    %v3794 = vsel %vm209, %v3793, 0
    %3796 = vmatprep.subr.mxu0 0.0
    %3797 = vmatpush1.msra.mxu0 %v3371
    %3798 = vmatprep.subr.mxu0 0.0
    %3799 = vmatpush1.msra.mxu0 %v3372
    %3800 = vmatprep.subr.mxu0 0.0
    %3801 = vmatpush1.msra.mxu0 %v3373
    %3802 = vmatprep.subr.mxu0 0.0
    %3803 = vmatpush1.msra.mxu0 %v3374
    %3804 = vmatprep.subr.mxu0 0.0
    %3805 = vmatpush1.msra.mxu0 0.0
    %3806 = vmatprep.subr.mxu0 0.0
    %3807 = vmatpush1.msra.mxu0 0.0
    %3808 = vmatprep.subr.mxu0 0.0
    %3809 = vmatpush1.msra.mxu0 0.0
    %3810 = vmatprep.subr.mxu0 0.0
    %3811 = vmatpush1.msra.mxu0 0.0
    %3812 = vmatprep.subr.mxu0 0.0
    %3813 = vmatpush1.msra.mxu0 0.0
    %3814 = vmatprep.subr.mxu0 0.0
    %3815 = vmatpush1.msra.mxu0 0.0
    %3816 = vmatprep.subr.mxu0 0.0
    %3817 = vmatpush1.msra.mxu0 0.0
    %3818 = vmatprep.subr.mxu0 0.0
    %3819 = vmatpush1.msra.mxu0 0.0
    %3820 = vmatprep.subr.mxu0 0.0
    %3821 = vmatpush1.msra.mxu0 0.0
    %3822 = vmatprep.subr.mxu0 0.0
    %3823 = vmatpush1.msra.mxu0 0.0
    %3824 = vmatprep.subr.mxu0 0.0
    %3825 = vmatpush1.msra.mxu0 0.0
    %3826 = vmatprep.subr.mxu0 0.0
    %3827 = vmatpush1.msra.mxu0 0.0
    %3828 = vmatprep.subr.mxu0 0.0
    %3829 = vmatpush1.msra.mxu0 0.0
    %3830 = vmatprep.subr.mxu0 0.0
    %3831 = vmatpush1.msra.mxu0 0.0
    %3832 = vmatprep.subr.mxu0 0.0
    %3833 = vmatpush1.msra.mxu0 0.0
    %3834 = vmatprep.subr.mxu0 0.0
    %3835 = vmatpush1.msra.mxu0 0.0
    %3836 = vmatprep.subr.mxu0 0.0
    %3837 = vmatpush1.msra.mxu0 0.0
    %3838 = vmatprep.subr.mxu0 0.0
    %3839 = vmatpush1.msra.mxu0 0.0
    %3840 = vmatprep.subr.mxu0 0.0
    %3841 = vmatpush1.msra.mxu0 0.0
    %3842 = vmatprep.subr.mxu0 0.0
    %3843 = vmatpush1.msra.mxu0 0.0
    %3844 = vmatprep.subr.mxu0 0.0
    %3845 = vmatpush1.msra.mxu0 0.0
    %3846 = vmatprep.subr.mxu0 0.0
    %3847 = vmatpush1.msra.mxu0 0.0
    %3848 = vmatprep.subr.mxu0 0.0
    %3849 = vmatpush1.msra.mxu0 0.0
    %3850 = vmatprep.subr.mxu0 0.0
    %3851 = vmatpush1.msra.mxu0 0.0
    %3852 = vmatprep.subr.mxu0 0.0
    %3853 = vmatpush1.msra.mxu0 0.0
    %3854 = vmatprep.subr.mxu0 0.0
    %3855 = vmatpush1.msra.mxu0 0.0
    %3856 = vmatprep.subr.mxu0 0.0
    %3857 = vmatpush1.msra.mxu0 0.0
    %3858 = vmatprep.subr.mxu0 0.0
    %3859 = vmatpush1.msra.mxu0 0.0
    %3860 = vmatprep.mubr.f32.mxu0 0.0
    %3861 = vmatmul.mubr.f32.gmra.mrb[0].mxu0 %v3794
    %v3862 = vpop.f32.mrb[0].mxu0
    %v3863 = vadd.f32 0.0, %v3862
    %v3864 = vpop.f32.mrb[0].mxu0
    %3865 = vdwg.mxu0
    %v3867 = vrot.slane %v3863, 4
    %v3869 = vadd.f32 %v3368, %v3867
    %v3870 = vxor.u32 %v3869, 2147483648
    %v3871 = vmul.f32 %v3870, 1.442695
    %v3872 = vpow.pop %v3871
    %v3873 = vadd.f32 %v3872, 1.0
    %v3874 = vrcp.pop %v3873
    %v3875 = vmul.f32 1.0, %v3874
    %v3876 = vtanh.pop %v3869
    %v3878 = vrot.slane %v3783, 7
    %v3880 = vmul.f32 %v3875, %v3878
    %3882 = vrot.lane.b32.xlu0 %v3876, 64
    %v3883 = vpop.permute.xlu0 %3882
    %v3885 = vmul.f32 %v3875, %v3883
    %3887 = vrot.lane.b32.xlu0 %v3885, 32
    %v3888 = vpop.permute.xlu0 %3887
    %v3890 = vadd.f32 %v3880, %v3888
    %v3891 = vtanh.pop %v3890
    %3893 = vrot.lane.b32.xlu0 %v3891, 64
    %v3894 = vpop.permute.xlu0 %3893
    %v3896 = vmul.f32 %v3875, %v3894
    %v3898 = vrot.slane %v3896, 4
    %3899 = vrot.lane.b32.xlu0 %v3898, 32
    %v3900 = vpop.permute.xlu0 %3899
    %v3901 = vsel %vm209, %v3900, 0
    %3903 = vmatprep.subr.mxu0 0.0
    %3904 = vmatpush1.msra.mxu0 %v3371
    %3905 = vmatprep.subr.mxu0 0.0
    %3906 = vmatpush1.msra.mxu0 %v3372
    %3907 = vmatprep.subr.mxu0 0.0
    %3908 = vmatpush1.msra.mxu0 %v3373
    %3909 = vmatprep.subr.mxu0 0.0
    %3910 = vmatpush1.msra.mxu0 %v3374
    %3911 = vmatprep.subr.mxu0 0.0
    %3912 = vmatpush1.msra.mxu0 0.0
    %3913 = vmatprep.subr.mxu0 0.0
    %3914 = vmatpush1.msra.mxu0 0.0
    %3915 = vmatprep.subr.mxu0 0.0
    %3916 = vmatpush1.msra.mxu0 0.0
    %3917 = vmatprep.subr.mxu0 0.0
    %3918 = vmatpush1.msra.mxu0 0.0
    %3919 = vmatprep.subr.mxu0 0.0
    %3920 = vmatpush1.msra.mxu0 0.0
    %3921 = vmatprep.subr.mxu0 0.0
    %3922 = vmatpush1.msra.mxu0 0.0
    %3923 = vmatprep.subr.mxu0 0.0
    %3924 = vmatpush1.msra.mxu0 0.0
    %3925 = vmatprep.subr.mxu0 0.0
    %3926 = vmatpush1.msra.mxu0 0.0
    %3927 = vmatprep.subr.mxu0 0.0
    %3928 = vmatpush1.msra.mxu0 0.0
    %3929 = vmatprep.subr.mxu0 0.0
    %3930 = vmatpush1.msra.mxu0 0.0
    %3931 = vmatprep.subr.mxu0 0.0
    %3932 = vmatpush1.msra.mxu0 0.0
    %3933 = vmatprep.subr.mxu0 0.0
    %3934 = vmatpush1.msra.mxu0 0.0
    %3935 = vmatprep.subr.mxu0 0.0
    %3936 = vmatpush1.msra.mxu0 0.0
    %3937 = vmatprep.subr.mxu0 0.0
    %3938 = vmatpush1.msra.mxu0 0.0
    %3939 = vmatprep.subr.mxu0 0.0
    %3940 = vmatpush1.msra.mxu0 0.0
    %3941 = vmatprep.subr.mxu0 0.0
    %3942 = vmatpush1.msra.mxu0 0.0
    %3943 = vmatprep.subr.mxu0 0.0
    %3944 = vmatpush1.msra.mxu0 0.0
    %3945 = vmatprep.subr.mxu0 0.0
    %3946 = vmatpush1.msra.mxu0 0.0
    %3947 = vmatprep.subr.mxu0 0.0
    %3948 = vmatpush1.msra.mxu0 0.0
    %3949 = vmatprep.subr.mxu0 0.0
    %3950 = vmatpush1.msra.mxu0 0.0
    %3951 = vmatprep.subr.mxu0 0.0
    %3952 = vmatpush1.msra.mxu0 0.0
    %3953 = vmatprep.subr.mxu0 0.0
    %3954 = vmatpush1.msra.mxu0 0.0
    %3955 = vmatprep.subr.mxu0 0.0
    %3956 = vmatpush1.msra.mxu0 0.0
    %3957 = vmatprep.subr.mxu0 0.0
    %3958 = vmatpush1.msra.mxu0 0.0
    %3959 = vmatprep.subr.mxu0 0.0
    %3960 = vmatpush1.msra.mxu0 0.0
    %3961 = vmatprep.subr.mxu0 0.0
    %3962 = vmatpush1.msra.mxu0 0.0
    %3963 = vmatprep.subr.mxu0 0.0
    %3964 = vmatpush1.msra.mxu0 0.0
    %3965 = vmatprep.subr.mxu0 0.0
    %3966 = vmatpush1.msra.mxu0 0.0
    %3967 = vmatprep.mubr.f32.mxu0 0.0
    %3968 = vmatmul.mubr.f32.gmra.mrb[0].mxu0 %v3901
    %v3969 = vpop.f32.mrb[0].mxu0
    %v3970 = vadd.f32 0.0, %v3969
    %v3971 = vpop.f32.mrb[0].mxu0
    %3972 = vdwg.mxu0
    %v3974 = vrot.slane %v3970, 3
    %v3976 = vadd.f32 %v3368, %v3974
    %v3977 = vxor.u32 %v3976, 2147483648
    %v3978 = vmul.f32 %v3977, 1.442695
    %v3979 = vpow.pop %v3978
    %v3980 = vadd.f32 %v3979, 1.0
    %v3981 = vrcp.pop %v3980
    %v3982 = vmul.f32 1.0, %v3981
    %v3983 = vtanh.pop %v3976
    %v3985 = vrot.slane %v3890, 7
    %v3987 = vmul.f32 %v3982, %v3985
    %3989 = vrot.lane.b32.xlu0 %v3983, 64
    %v3990 = vpop.permute.xlu0 %3989
    %v3992 = vmul.f32 %v3982, %v3990
    %3994 = vrot.lane.b32.xlu0 %v3992, 32
    %v3995 = vpop.permute.xlu0 %3994
    %v3997 = vadd.f32 %v3987, %v3995
    %v3998 = vtanh.pop %v3997
    %4000 = vrot.lane.b32.xlu0 %v3998, 64
    %v4001 = vpop.permute.xlu0 %4000
    %v4003 = vmul.f32 %v3982, %v4001
    %v4005 = vrot.slane %v4003, 5
    %4006 = vrot.lane.b32.xlu0 %v4005, 32
    %v4007 = vpop.permute.xlu0 %4006
    %v4008 = vsel %vm209, %v4007, 0
    %4010 = vmatprep.subr.mxu0 0.0
    %4011 = vmatpush1.msra.mxu0 %v3371
    %4012 = vmatprep.subr.mxu0 0.0
    %4013 = vmatpush1.msra.mxu0 %v3372
    %4014 = vmatprep.subr.mxu0 0.0
    %4015 = vmatpush1.msra.mxu0 %v3373
    %4016 = vmatprep.subr.mxu0 0.0
    %4017 = vmatpush1.msra.mxu0 %v3374
    %4018 = vmatprep.subr.mxu0 0.0
    %4019 = vmatpush1.msra.mxu0 0.0
    %4020 = vmatprep.subr.mxu0 0.0
    %4021 = vmatpush1.msra.mxu0 0.0
    %4022 = vmatprep.subr.mxu0 0.0
    %4023 = vmatpush1.msra.mxu0 0.0
    %4024 = vmatprep.subr.mxu0 0.0
    %4025 = vmatpush1.msra.mxu0 0.0
    %4026 = vmatprep.subr.mxu0 0.0
    %4027 = vmatpush1.msra.mxu0 0.0
    %4028 = vmatprep.subr.mxu0 0.0
    %4029 = vmatpush1.msra.mxu0 0.0
    %4030 = vmatprep.subr.mxu0 0.0
    %4031 = vmatpush1.msra.mxu0 0.0
    %4032 = vmatprep.subr.mxu0 0.0
    %4033 = vmatpush1.msra.mxu0 0.0
    %4034 = vmatprep.subr.mxu0 0.0
    %4035 = vmatpush1.msra.mxu0 0.0
    %4036 = vmatprep.subr.mxu0 0.0
    %4037 = vmatpush1.msra.mxu0 0.0
    %4038 = vmatprep.subr.mxu0 0.0
    %4039 = vmatpush1.msra.mxu0 0.0
    %4040 = vmatprep.subr.mxu0 0.0
    %4041 = vmatpush1.msra.mxu0 0.0
    %4042 = vmatprep.subr.mxu0 0.0
    %4043 = vmatpush1.msra.mxu0 0.0
    %4044 = vmatprep.subr.mxu0 0.0
    %4045 = vmatpush1.msra.mxu0 0.0
    %4046 = vmatprep.subr.mxu0 0.0
    %4047 = vmatpush1.msra.mxu0 0.0
    %4048 = vmatprep.subr.mxu0 0.0
    %4049 = vmatpush1.msra.mxu0 0.0
    %4050 = vmatprep.subr.mxu0 0.0
    %4051 = vmatpush1.msra.mxu0 0.0
    %4052 = vmatprep.subr.mxu0 0.0
    %4053 = vmatpush1.msra.mxu0 0.0
    %4054 = vmatprep.subr.mxu0 0.0
    %4055 = vmatpush1.msra.mxu0 0.0
    %4056 = vmatprep.subr.mxu0 0.0
    %4057 = vmatpush1.msra.mxu0 0.0
    %4058 = vmatprep.subr.mxu0 0.0
    %4059 = vmatpush1.msra.mxu0 0.0
    %4060 = vmatprep.subr.mxu0 0.0
    %4061 = vmatpush1.msra.mxu0 0.0
    %4062 = vmatprep.subr.mxu0 0.0
    %4063 = vmatpush1.msra.mxu0 0.0
    %4064 = vmatprep.subr.mxu0 0.0
    %4065 = vmatpush1.msra.mxu0 0.0
    %4066 = vmatprep.subr.mxu0 0.0
    %4067 = vmatpush1.msra.mxu0 0.0
    %4068 = vmatprep.subr.mxu0 0.0
    %4069 = vmatpush1.msra.mxu0 0.0
    %4070 = vmatprep.subr.mxu0 0.0
    %4071 = vmatpush1.msra.mxu0 0.0
    %4072 = vmatprep.subr.mxu0 0.0
    %4073 = vmatpush1.msra.mxu0 0.0
    %4074 = vmatprep.mubr.f32.mxu0 0.0
    %4075 = vmatmul.mubr.f32.gmra.mrb[0].mxu0 %v4008
    %v4076 = vpop.f32.mrb[0].mxu0
    %v4077 = vadd.f32 0.0, %v4076
    %v4078 = vpop.f32.mrb[0].mxu0
    %4079 = vdwg.mxu0
    %v4081 = vrot.slane %v4077, 2
    %v4083 = vadd.f32 %v3368, %v4081
    %v4084 = vxor.u32 %v4083, 2147483648
    %v4085 = vmul.f32 %v4084, 1.442695
    %v4086 = vpow.pop %v4085
    %v4087 = vadd.f32 %v4086, 1.0
    %v4088 = vrcp.pop %v4087
    %v4089 = vmul.f32 1.0, %v4088
    %v4090 = vtanh.pop %v4083
    %v4092 = vrot.slane %v3997, 7
    %v4094 = vmul.f32 %v4089, %v4092
    %4096 = vrot.lane.b32.xlu0 %v4090, 64
    %v4097 = vpop.permute.xlu0 %4096
    %v4099 = vmul.f32 %v4089, %v4097
    %4101 = vrot.lane.b32.xlu0 %v4099, 32
    %v4102 = vpop.permute.xlu0 %4101
    %v4104 = vadd.f32 %v4094, %v4102
    %v4105 = vtanh.pop %v4104
    %4107 = vrot.lane.b32.xlu0 %v4105, 64
    %v4108 = vpop.permute.xlu0 %4107
    %v4110 = vmul.f32 %v4089, %v4108
    %v4112 = vrot.slane %v4110, 6
    %4113 = vrot.lane.b32.xlu0 %v4112, 32
    %v4114 = vpop.permute.xlu0 %4113
    %v4115 = vsel %vm209, %v4114, 0
    %4117 = vmatprep.subr.mxu0 0.0
    %4118 = vmatpush1.msra.mxu0 %v3371
    %4119 = vmatprep.subr.mxu0 0.0
    %4120 = vmatpush1.msra.mxu0 %v3372
    %4121 = vmatprep.subr.mxu0 0.0
    %4122 = vmatpush1.msra.mxu0 %v3373
    %4123 = vmatprep.subr.mxu0 0.0
    %4124 = vmatpush1.msra.mxu0 %v3374
    %4125 = vmatprep.subr.mxu0 0.0
    %4126 = vmatpush1.msra.mxu0 0.0
    %4127 = vmatprep.subr.mxu0 0.0
    %4128 = vmatpush1.msra.mxu0 0.0
    %4129 = vmatprep.subr.mxu0 0.0
    %4130 = vmatpush1.msra.mxu0 0.0
    %4131 = vmatprep.subr.mxu0 0.0
    %4132 = vmatpush1.msra.mxu0 0.0
    %4133 = vmatprep.subr.mxu0 0.0
    %4134 = vmatpush1.msra.mxu0 0.0
    %4135 = vmatprep.subr.mxu0 0.0
    %4136 = vmatpush1.msra.mxu0 0.0
    %4137 = vmatprep.subr.mxu0 0.0
    %4138 = vmatpush1.msra.mxu0 0.0
    %4139 = vmatprep.subr.mxu0 0.0
    %4140 = vmatpush1.msra.mxu0 0.0
    %4141 = vmatprep.subr.mxu0 0.0
    %4142 = vmatpush1.msra.mxu0 0.0
    %4143 = vmatprep.subr.mxu0 0.0
    %4144 = vmatpush1.msra.mxu0 0.0
    %4145 = vmatprep.subr.mxu0 0.0
    %4146 = vmatpush1.msra.mxu0 0.0
    %4147 = vmatprep.subr.mxu0 0.0
    %4148 = vmatpush1.msra.mxu0 0.0
    %4149 = vmatprep.subr.mxu0 0.0
    %4150 = vmatpush1.msra.mxu0 0.0
    %4151 = vmatprep.subr.mxu0 0.0
    %4152 = vmatpush1.msra.mxu0 0.0
    %4153 = vmatprep.subr.mxu0 0.0
    %4154 = vmatpush1.msra.mxu0 0.0
    %4155 = vmatprep.subr.mxu0 0.0
    %4156 = vmatpush1.msra.mxu0 0.0
    %4157 = vmatprep.subr.mxu0 0.0
    %4158 = vmatpush1.msra.mxu0 0.0
    %4159 = vmatprep.subr.mxu0 0.0
    %4160 = vmatpush1.msra.mxu0 0.0
    %4161 = vmatprep.subr.mxu0 0.0
    %4162 = vmatpush1.msra.mxu0 0.0
    %4163 = vmatprep.subr.mxu0 0.0
    %4164 = vmatpush1.msra.mxu0 0.0
    %4165 = vmatprep.subr.mxu0 0.0
    %4166 = vmatpush1.msra.mxu0 0.0
    %4167 = vmatprep.subr.mxu0 0.0
    %4168 = vmatpush1.msra.mxu0 0.0
    %4169 = vmatprep.subr.mxu0 0.0
    %4170 = vmatpush1.msra.mxu0 0.0
    %4171 = vmatprep.subr.mxu0 0.0
    %4172 = vmatpush1.msra.mxu0 0.0
    %4173 = vmatprep.subr.mxu0 0.0
    %4174 = vmatpush1.msra.mxu0 0.0
    %4175 = vmatprep.subr.mxu0 0.0
    %4176 = vmatpush1.msra.mxu0 0.0
    %4177 = vmatprep.subr.mxu0 0.0
    %4178 = vmatpush1.msra.mxu0 0.0
    %4179 = vmatprep.subr.mxu0 0.0
    %4180 = vmatpush1.msra.mxu0 0.0
    %4181 = vmatprep.mubr.f32.mxu0 0.0
    %4182 = vmatmul.mubr.f32.gmra.mrb[0].mxu0 %v4115
    %v4183 = vpop.f32.mrb[0].mxu0
    %v4184 = vadd.f32 0.0, %v4183
    %v4185 = vpop.f32.mrb[0].mxu0
    %4186 = vdwg.mxu0
    %v4188 = vrot.slane %v4184, 1
    %v4190 = vadd.f32 %v3368, %v4188
    %v4191 = vxor.u32 %v4190, 2147483648
    %v4192 = vmul.f32 %v4191, 1.442695
    %v4193 = vpow.pop %v4192
    %v4194 = vadd.f32 %v4193, 1.0
    %v4195 = vrcp.pop %v4194
    %v4196 = vmul.f32 1.0, %v4195
    %v4197 = vtanh.pop %v4190
    %v4199 = vrot.slane %v4104, 7
    %v4201 = vmul.f32 %v4196, %v4199
    %4203 = vrot.lane.b32.xlu0 %v4197, 64
    %v4204 = vpop.permute.xlu0 %4203
    %v4206 = vmul.f32 %v4196, %v4204
    %4208 = vrot.lane.b32.xlu0 %v4206, 32
    %v4209 = vpop.permute.xlu0 %4208
    %v4211 = vadd.f32 %v4201, %v4209
    %v4212 = vtanh.pop %v4211
    %4214 = vrot.lane.b32.xlu0 %v4212, 64
    %v4215 = vpop.permute.xlu0 %4214
    %v4217 = vmul.f32 %v4196, %v4215
    %v4218 = vsel %vm1303, %v3469, %v3575
    %v4219 = vsel %vm1305, %v4218, %v3682
    %v4220 = vsel %vm1307, %v4219, %v3789
    %v4221 = vsel %vm1309, %v4220, %v3896
    %v4222 = vsel %vm1311, %v4221, %v4003
    %v4223 = vsel %vm1313, %v4222, %v4110
    %v4224 = vsel %vm1315, %v4223, %v4217
    %v4225 = vld [vmem:[%s1317] sm:$0xff]
    %v4226 = vld [vmem:[%s1317 + $0x8] sm:$0xff]
    %v4227 = vld [vmem:[%s1317 + $0x10] sm:$0xff]
    %v4228 = vld [vmem:[%s1317 + $0x18] sm:$0xff]
    %v4229 = vld [vmem:[%s1322] sm:$0x1]
    %v4231 = vlaneseq
    %v4232 = vshrl.u32 %v4231, 7
    %v4233 = vsub.s32 0, %v4232
    %v4234 = vrot.slane %v4229, %v4233
    %4237 = vrot.lane.b32.xlu0 %v4224, 32
    %v4238 = vpop.permute.xlu0 %4237
    %v4239 = vsel %vm209, %v4238, 0
    %4241 = vmatprep.subr.mxu0 0.0
    %4242 = vmatpush1.msra.mxu0 %v4225
    %4243 = vmatprep.subr.mxu0 0.0
    %4244 = vmatpush1.msra.mxu0 %v4226
    %4245 = vmatprep.subr.mxu0 0.0
    %4246 = vmatpush1.msra.mxu0 %v4227
    %4247 = vmatprep.subr.mxu0 0.0
    %4248 = vmatpush1.msra.mxu0 %v4228
    %4249 = vmatprep.subr.mxu0 0.0
    %4250 = vmatpush1.msra.mxu0 0.0
    %4251 = vmatprep.subr.mxu0 0.0
    %4252 = vmatpush1.msra.mxu0 0.0
    %4253 = vmatprep.subr.mxu0 0.0
    %4254 = vmatpush1.msra.mxu0 0.0
    %4255 = vmatprep.subr.mxu0 0.0
    %4256 = vmatpush1.msra.mxu0 0.0
    %4257 = vmatprep.subr.mxu0 0.0
    %4258 = vmatpush1.msra.mxu0 0.0
    %4259 = vmatprep.subr.mxu0 0.0
    %4260 = vmatpush1.msra.mxu0 0.0
    %4261 = vmatprep.subr.mxu0 0.0
    %4262 = vmatpush1.msra.mxu0 0.0
    %4263 = vmatprep.subr.mxu0 0.0
    %4264 = vmatpush1.msra.mxu0 0.0
    %4265 = vmatprep.subr.mxu0 0.0
    %4266 = vmatpush1.msra.mxu0 0.0
    %4267 = vmatprep.subr.mxu0 0.0
    %4268 = vmatpush1.msra.mxu0 0.0
    %4269 = vmatprep.subr.mxu0 0.0
    %4270 = vmatpush1.msra.mxu0 0.0
    %4271 = vmatprep.subr.mxu0 0.0
    %4272 = vmatpush1.msra.mxu0 0.0
    %4273 = vmatprep.subr.mxu0 0.0
    %4274 = vmatpush1.msra.mxu0 0.0
    %4275 = vmatprep.subr.mxu0 0.0
    %4276 = vmatpush1.msra.mxu0 0.0
    %4277 = vmatprep.subr.mxu0 0.0
    %4278 = vmatpush1.msra.mxu0 0.0
    %4279 = vmatprep.subr.mxu0 0.0
    %4280 = vmatpush1.msra.mxu0 0.0
    %4281 = vmatprep.subr.mxu0 0.0
    %4282 = vmatpush1.msra.mxu0 0.0
    %4283 = vmatprep.subr.mxu0 0.0
    %4284 = vmatpush1.msra.mxu0 0.0
    %4285 = vmatprep.subr.mxu0 0.0
    %4286 = vmatpush1.msra.mxu0 0.0
    %4287 = vmatprep.subr.mxu0 0.0
    %4288 = vmatpush1.msra.mxu0 0.0
    %4289 = vmatprep.subr.mxu0 0.0
    %4290 = vmatpush1.msra.mxu0 0.0
    %4291 = vmatprep.subr.mxu0 0.0
    %4292 = vmatpush1.msra.mxu0 0.0
    %4293 = vmatprep.subr.mxu0 0.0
    %4294 = vmatpush1.msra.mxu0 0.0
    %4295 = vmatprep.subr.mxu0 0.0
    %4296 = vmatpush1.msra.mxu0 0.0
    %4297 = vmatprep.subr.mxu0 0.0
    %4298 = vmatpush1.msra.mxu0 0.0
    %4299 = vmatprep.subr.mxu0 0.0
    %4300 = vmatpush1.msra.mxu0 0.0
    %4301 = vmatprep.subr.mxu0 0.0
    %4302 = vmatpush1.msra.mxu0 0.0
    %4303 = vmatprep.subr.mxu0 0.0
    %4304 = vmatpush1.msra.mxu0 0.0
    %4305 = vmatprep.mubr.f32.mxu0 0.0
    %4306 = vmatmul.mubr.f32.gmra.mrb[0].mxu0 %v4239
    %v4307 = vpop.f32.mrb[0].mxu0
    %v4308 = vadd.f32 %v4234, %v4307
    %v4309 = vpop.f32.mrb[0].mxu0
    %4310 = vdwg.mxu0
    %v4311 = vld [vmem:[%s1405] sm:$0xff]
    %v4312 = vld [vmem:[%s1405 + $0x8] sm:$0xff]
    %v4313 = vld [vmem:[%s1405 + $0x10] sm:$0xff]
    %v4314 = vld [vmem:[%s1405 + $0x18] sm:$0xff]
    %4315 = vmatprep.subr.mxu0 0.0
    %4316 = vmatpush1.msra.mxu0 %v4311
    %4317 = vmatprep.subr.mxu0 0.0
    %4318 = vmatpush1.msra.mxu0 %v4312
    %4319 = vmatprep.subr.mxu0 0.0
    %4320 = vmatpush1.msra.mxu0 %v4313
    %4321 = vmatprep.subr.mxu0 0.0
    %4322 = vmatpush1.msra.mxu0 %v4314
    %4323 = vmatprep.subr.mxu0 0.0
    %4324 = vmatpush1.msra.mxu0 0.0
    %4325 = vmatprep.subr.mxu0 0.0
    %4326 = vmatpush1.msra.mxu0 0.0
    %4327 = vmatprep.subr.mxu0 0.0
    %4328 = vmatpush1.msra.mxu0 0.0
    %4329 = vmatprep.subr.mxu0 0.0
    %4330 = vmatpush1.msra.mxu0 0.0
    %4331 = vmatprep.subr.mxu0 0.0
    %4332 = vmatpush1.msra.mxu0 0.0
    %4333 = vmatprep.subr.mxu0 0.0
    %4334 = vmatpush1.msra.mxu0 0.0
    %4335 = vmatprep.subr.mxu0 0.0
    %4336 = vmatpush1.msra.mxu0 0.0
    %4337 = vmatprep.subr.mxu0 0.0
    %4338 = vmatpush1.msra.mxu0 0.0
    %4339 = vmatprep.subr.mxu0 0.0
    %4340 = vmatpush1.msra.mxu0 0.0
    %4341 = vmatprep.subr.mxu0 0.0
    %4342 = vmatpush1.msra.mxu0 0.0
    %4343 = vmatprep.subr.mxu0 0.0
    %4344 = vmatpush1.msra.mxu0 0.0
    %4345 = vmatprep.subr.mxu0 0.0
    %4346 = vmatpush1.msra.mxu0 0.0
    %4347 = vmatprep.subr.mxu0 0.0
    %4348 = vmatpush1.msra.mxu0 0.0
    %4349 = vmatprep.subr.mxu0 0.0
    %4350 = vmatpush1.msra.mxu0 0.0
    %4351 = vmatprep.subr.mxu0 0.0
    %4352 = vmatpush1.msra.mxu0 0.0
    %4353 = vmatprep.subr.mxu0 0.0
    %4354 = vmatpush1.msra.mxu0 0.0
    %4355 = vmatprep.subr.mxu0 0.0
    %4356 = vmatpush1.msra.mxu0 0.0
    %4357 = vmatprep.subr.mxu0 0.0
    %4358 = vmatpush1.msra.mxu0 0.0
    %4359 = vmatprep.subr.mxu0 0.0
    %4360 = vmatpush1.msra.mxu0 0.0
    %4361 = vmatprep.subr.mxu0 0.0
    %4362 = vmatpush1.msra.mxu0 0.0
    %4363 = vmatprep.subr.mxu0 0.0
    %4364 = vmatpush1.msra.mxu0 0.0
    %4365 = vmatprep.subr.mxu0 0.0
    %4366 = vmatpush1.msra.mxu0 0.0
    %4367 = vmatprep.subr.mxu0 0.0
    %4368 = vmatpush1.msra.mxu0 0.0
    %4369 = vmatprep.subr.mxu0 0.0
    %4370 = vmatpush1.msra.mxu0 0.0
    %4371 = vmatprep.subr.mxu0 0.0
    %4372 = vmatpush1.msra.mxu0 0.0
    %4373 = vmatprep.subr.mxu0 0.0
    %4374 = vmatpush1.msra.mxu0 0.0
    %4375 = vmatprep.subr.mxu0 0.0
    %4376 = vmatpush1.msra.mxu0 0.0
    %4377 = vmatprep.subr.mxu0 0.0
    %4378 = vmatpush1.msra.mxu0 0.0
    %4379 = vmatprep.mubr.f32.mxu0 0.0
    %4380 = vmatmul.mubr.f32.gmra.mrb[0].mxu0 %v458
    %v4381 = vpop.f32.mrb[0].mxu0
    %v4382 = vadd.f32 0.0, %v4381
    %v4383 = vpop.f32.mrb[0].mxu0
    %4384 = vdwg.mxu0
    %v4385 = vadd.f32 %v4308, %v4382
    %v4386 = vxor.u32 %v4385, 2147483648
    %v4387 = vmul.f32 %v4386, 1.442695
    %v4388 = vpow.pop %v4387
    %v4389 = vadd.f32 %v4388, 1.0
    %v4390 = vrcp.pop %v4389
    %v4391 = vmul.f32 1.0, %v4390
    %v4392 = vtanh.pop %v4385
    %v4393 = vmul.f32 %v4391, 0.0
    %4395 = vrot.lane.b32.xlu0 %v4392, 64
    %v4396 = vpop.permute.xlu0 %4395
    %v4398 = vmul.f32 %v4391, %v4396
    %4400 = vrot.lane.b32.xlu0 %v4398, 32
    %v4401 = vpop.permute.xlu0 %4400
    %v4403 = vadd.f32 %v4393, %v4401
    %v4404 = vtanh.pop %v4403
    %4406 = vrot.lane.b32.xlu0 %v4404, 64
    %v4407 = vpop.permute.xlu0 %4406
    %v4409 = vmul.f32 %v4391, %v4407
    %4411 = vrot.lane.b32.xlu0 %v4409, 32
    %v4412 = vpop.permute.xlu0 %4411
    %v4413 = vsel %vm209, %v4412, 0
    %4415 = vmatprep.subr.mxu0 0.0
    %4416 = vmatpush1.msra.mxu0 %v4311
    %4417 = vmatprep.subr.mxu0 0.0
    %4418 = vmatpush1.msra.mxu0 %v4312
    %4419 = vmatprep.subr.mxu0 0.0
    %4420 = vmatpush1.msra.mxu0 %v4313
    %4421 = vmatprep.subr.mxu0 0.0
    %4422 = vmatpush1.msra.mxu0 %v4314
    %4423 = vmatprep.subr.mxu0 0.0
    %4424 = vmatpush1.msra.mxu0 0.0
    %4425 = vmatprep.subr.mxu0 0.0
    %4426 = vmatpush1.msra.mxu0 0.0
    %4427 = vmatprep.subr.mxu0 0.0
    %4428 = vmatpush1.msra.mxu0 0.0
    %4429 = vmatprep.subr.mxu0 0.0
    %4430 = vmatpush1.msra.mxu0 0.0
    %4431 = vmatprep.subr.mxu0 0.0
    %4432 = vmatpush1.msra.mxu0 0.0
    %4433 = vmatprep.subr.mxu0 0.0
    %4434 = vmatpush1.msra.mxu0 0.0
    %4435 = vmatprep.subr.mxu0 0.0
    %4436 = vmatpush1.msra.mxu0 0.0
    %4437 = vmatprep.subr.mxu0 0.0
    %4438 = vmatpush1.msra.mxu0 0.0
    %4439 = vmatprep.subr.mxu0 0.0
    %4440 = vmatpush1.msra.mxu0 0.0
    %4441 = vmatprep.subr.mxu0 0.0
    %4442 = vmatpush1.msra.mxu0 0.0
    %4443 = vmatprep.subr.mxu0 0.0
    %4444 = vmatpush1.msra.mxu0 0.0
    %4445 = vmatprep.subr.mxu0 0.0
    %4446 = vmatpush1.msra.mxu0 0.0
    %4447 = vmatprep.subr.mxu0 0.0
    %4448 = vmatpush1.msra.mxu0 0.0
    %4449 = vmatprep.subr.mxu0 0.0
    %4450 = vmatpush1.msra.mxu0 0.0
    %4451 = vmatprep.subr.mxu0 0.0
    %4452 = vmatpush1.msra.mxu0 0.0
    %4453 = vmatprep.subr.mxu0 0.0
    %4454 = vmatpush1.msra.mxu0 0.0
    %4455 = vmatprep.subr.mxu0 0.0
    %4456 = vmatpush1.msra.mxu0 0.0
    %4457 = vmatprep.subr.mxu0 0.0
    %4458 = vmatpush1.msra.mxu0 0.0
    %4459 = vmatprep.subr.mxu0 0.0
    %4460 = vmatpush1.msra.mxu0 0.0
    %4461 = vmatprep.subr.mxu0 0.0
    %4462 = vmatpush1.msra.mxu0 0.0
    %4463 = vmatprep.subr.mxu0 0.0
    %4464 = vmatpush1.msra.mxu0 0.0
    %4465 = vmatprep.subr.mxu0 0.0
    %4466 = vmatpush1.msra.mxu0 0.0
    %4467 = vmatprep.subr.mxu0 0.0
    %4468 = vmatpush1.msra.mxu0 0.0
    %4469 = vmatprep.subr.mxu0 0.0
    %4470 = vmatpush1.msra.mxu0 0.0
    %4471 = vmatprep.subr.mxu0 0.0
    %4472 = vmatpush1.msra.mxu0 0.0
    %4473 = vmatprep.subr.mxu0 0.0
    %4474 = vmatpush1.msra.mxu0 0.0
    %4475 = vmatprep.subr.mxu0 0.0
    %4476 = vmatpush1.msra.mxu0 0.0
    %4477 = vmatprep.subr.mxu0 0.0
    %4478 = vmatpush1.msra.mxu0 0.0
    %4479 = vmatprep.mubr.f32.mxu0 0.0
    %4480 = vmatmul.mubr.f32.gmra.mrb[0].mxu0 %v4413
    %v4481 = vpop.f32.mrb[0].mxu0
    %v4482 = vadd.f32 0.0, %v4481
    %v4483 = vpop.f32.mrb[0].mxu0
    %4484 = vdwg.mxu0
    %v4486 = vrot.slane %v4482, 7
    %v4488 = vadd.f32 %v4308, %v4486
    %v4489 = vxor.u32 %v4488, 2147483648
    %v4490 = vmul.f32 %v4489, 1.442695
    %v4491 = vpow.pop %v4490
    %v4492 = vadd.f32 %v4491, 1.0
    %v4493 = vrcp.pop %v4492
    %v4494 = vmul.f32 1.0, %v4493
    %v4495 = vtanh.pop %v4488
    %v4497 = vrot.slane %v4403, 7
    %v4499 = vmul.f32 %v4494, %v4497
    %4501 = vrot.lane.b32.xlu0 %v4495, 64
    %v4502 = vpop.permute.xlu0 %4501
    %v4504 = vmul.f32 %v4494, %v4502
    %4506 = vrot.lane.b32.xlu0 %v4504, 32
    %v4507 = vpop.permute.xlu0 %4506
    %v4509 = vadd.f32 %v4499, %v4507
    %v4510 = vtanh.pop %v4509
    %4512 = vrot.lane.b32.xlu0 %v4510, 64
    %v4513 = vpop.permute.xlu0 %4512
    %v4515 = vmul.f32 %v4494, %v4513
    %v4517 = vrot.slane %v4515, 1
    %4518 = vrot.lane.b32.xlu0 %v4517, 32
    %v4519 = vpop.permute.xlu0 %4518
    %v4520 = vsel %vm209, %v4519, 0
    %4522 = vmatprep.subr.mxu0 0.0
    %4523 = vmatpush1.msra.mxu0 %v4311
    %4524 = vmatprep.subr.mxu0 0.0
    %4525 = vmatpush1.msra.mxu0 %v4312
    %4526 = vmatprep.subr.mxu0 0.0
    %4527 = vmatpush1.msra.mxu0 %v4313
    %4528 = vmatprep.subr.mxu0 0.0
    %4529 = vmatpush1.msra.mxu0 %v4314
    %4530 = vmatprep.subr.mxu0 0.0
    %4531 = vmatpush1.msra.mxu0 0.0
    %4532 = vmatprep.subr.mxu0 0.0
    %4533 = vmatpush1.msra.mxu0 0.0
    %4534 = vmatprep.subr.mxu0 0.0
    %4535 = vmatpush1.msra.mxu0 0.0
    %4536 = vmatprep.subr.mxu0 0.0
    %4537 = vmatpush1.msra.mxu0 0.0
    %4538 = vmatprep.subr.mxu0 0.0
    %4539 = vmatpush1.msra.mxu0 0.0
    %4540 = vmatprep.subr.mxu0 0.0
    %4541 = vmatpush1.msra.mxu0 0.0
    %4542 = vmatprep.subr.mxu0 0.0
    %4543 = vmatpush1.msra.mxu0 0.0
    %4544 = vmatprep.subr.mxu0 0.0
    %4545 = vmatpush1.msra.mxu0 0.0
    %4546 = vmatprep.subr.mxu0 0.0
    %4547 = vmatpush1.msra.mxu0 0.0
    %4548 = vmatprep.subr.mxu0 0.0
    %4549 = vmatpush1.msra.mxu0 0.0
    %4550 = vmatprep.subr.mxu0 0.0
    %4551 = vmatpush1.msra.mxu0 0.0
    %4552 = vmatprep.subr.mxu0 0.0
    %4553 = vmatpush1.msra.mxu0 0.0
    %4554 = vmatprep.subr.mxu0 0.0
    %4555 = vmatpush1.msra.mxu0 0.0
    %4556 = vmatprep.subr.mxu0 0.0
    %4557 = vmatpush1.msra.mxu0 0.0
    %4558 = vmatprep.subr.mxu0 0.0
    %4559 = vmatpush1.msra.mxu0 0.0
    %4560 = vmatprep.subr.mxu0 0.0
    %4561 = vmatpush1.msra.mxu0 0.0
    %4562 = vmatprep.subr.mxu0 0.0
    %4563 = vmatpush1.msra.mxu0 0.0
    %4564 = vmatprep.subr.mxu0 0.0
    %4565 = vmatpush1.msra.mxu0 0.0
    %4566 = vmatprep.subr.mxu0 0.0
    %4567 = vmatpush1.msra.mxu0 0.0
    %4568 = vmatprep.subr.mxu0 0.0
    %4569 = vmatpush1.msra.mxu0 0.0
    %4570 = vmatprep.subr.mxu0 0.0
    %4571 = vmatpush1.msra.mxu0 0.0
    %4572 = vmatprep.subr.mxu0 0.0
    %4573 = vmatpush1.msra.mxu0 0.0
    %4574 = vmatprep.subr.mxu0 0.0
    %4575 = vmatpush1.msra.mxu0 0.0
    %4576 = vmatprep.subr.mxu0 0.0
    %4577 = vmatpush1.msra.mxu0 0.0
    %4578 = vmatprep.subr.mxu0 0.0
    %4579 = vmatpush1.msra.mxu0 0.0
    %4580 = vmatprep.subr.mxu0 0.0
    %4581 = vmatpush1.msra.mxu0 0.0
    %4582 = vmatprep.subr.mxu0 0.0
    %4583 = vmatpush1.msra.mxu0 0.0
    %4584 = vmatprep.subr.mxu0 0.0
    %4585 = vmatpush1.msra.mxu0 0.0
    %4586 = vmatprep.mubr.f32.mxu0 0.0
    %4587 = vmatmul.mubr.f32.gmra.mrb[0].mxu0 %v4520
    %v4588 = vpop.f32.mrb[0].mxu0
    %v4589 = vadd.f32 0.0, %v4588
    %v4590 = vpop.f32.mrb[0].mxu0
    %4591 = vdwg.mxu0
    %v4593 = vrot.slane %v4589, 6
    %v4595 = vadd.f32 %v4308, %v4593
    %v4596 = vxor.u32 %v4595, 2147483648
    %v4597 = vmul.f32 %v4596, 1.442695
    %v4598 = vpow.pop %v4597
    %v4599 = vadd.f32 %v4598, 1.0
    %v4600 = vrcp.pop %v4599
    %v4601 = vmul.f32 1.0, %v4600
    %v4602 = vtanh.pop %v4595
    %v4604 = vrot.slane %v4509, 7
    %v4606 = vmul.f32 %v4601, %v4604
    %4608 = vrot.lane.b32.xlu0 %v4602, 64
    %v4609 = vpop.permute.xlu0 %4608
    %v4611 = vmul.f32 %v4601, %v4609
    %4613 = vrot.lane.b32.xlu0 %v4611, 32
    %v4614 = vpop.permute.xlu0 %4613
    %v4616 = vadd.f32 %v4606, %v4614
    %v4617 = vtanh.pop %v4616
    %4619 = vrot.lane.b32.xlu0 %v4617, 64
    %v4620 = vpop.permute.xlu0 %4619
    %v4622 = vmul.f32 %v4601, %v4620
    %v4624 = vrot.slane %v4622, 2
    %4625 = vrot.lane.b32.xlu0 %v4624, 32
    %v4626 = vpop.permute.xlu0 %4625
    %v4627 = vsel %vm209, %v4626, 0
    %4629 = vmatprep.subr.mxu0 0.0
    %4630 = vmatpush1.msra.mxu0 %v4311
    %4631 = vmatprep.subr.mxu0 0.0
    %4632 = vmatpush1.msra.mxu0 %v4312
    %4633 = vmatprep.subr.mxu0 0.0
    %4634 = vmatpush1.msra.mxu0 %v4313
    %4635 = vmatprep.subr.mxu0 0.0
    %4636 = vmatpush1.msra.mxu0 %v4314
    %4637 = vmatprep.subr.mxu0 0.0
    %4638 = vmatpush1.msra.mxu0 0.0
    %4639 = vmatprep.subr.mxu0 0.0
    %4640 = vmatpush1.msra.mxu0 0.0
    %4641 = vmatprep.subr.mxu0 0.0
    %4642 = vmatpush1.msra.mxu0 0.0
    %4643 = vmatprep.subr.mxu0 0.0
    %4644 = vmatpush1.msra.mxu0 0.0
    %4645 = vmatprep.subr.mxu0 0.0
    %4646 = vmatpush1.msra.mxu0 0.0
    %4647 = vmatprep.subr.mxu0 0.0
    %4648 = vmatpush1.msra.mxu0 0.0
    %4649 = vmatprep.subr.mxu0 0.0
    %4650 = vmatpush1.msra.mxu0 0.0
    %4651 = vmatprep.subr.mxu0 0.0
    %4652 = vmatpush1.msra.mxu0 0.0
    %4653 = vmatprep.subr.mxu0 0.0
    %4654 = vmatpush1.msra.mxu0 0.0
    %4655 = vmatprep.subr.mxu0 0.0
    %4656 = vmatpush1.msra.mxu0 0.0
    %4657 = vmatprep.subr.mxu0 0.0
    %4658 = vmatpush1.msra.mxu0 0.0
    %4659 = vmatprep.subr.mxu0 0.0
    %4660 = vmatpush1.msra.mxu0 0.0
    %4661 = vmatprep.subr.mxu0 0.0
    %4662 = vmatpush1.msra.mxu0 0.0
    %4663 = vmatprep.subr.mxu0 0.0
    %4664 = vmatpush1.msra.mxu0 0.0
    %4665 = vmatprep.subr.mxu0 0.0
    %4666 = vmatpush1.msra.mxu0 0.0
    %4667 = vmatprep.subr.mxu0 0.0
    %4668 = vmatpush1.msra.mxu0 0.0
    %4669 = vmatprep.subr.mxu0 0.0
    %4670 = vmatpush1.msra.mxu0 0.0
    %4671 = vmatprep.subr.mxu0 0.0
    %4672 = vmatpush1.msra.mxu0 0.0
    %4673 = vmatprep.subr.mxu0 0.0
    %4674 = vmatpush1.msra.mxu0 0.0
    %4675 = vmatprep.subr.mxu0 0.0
    %4676 = vmatpush1.msra.mxu0 0.0
    %4677 = vmatprep.subr.mxu0 0.0
    %4678 = vmatpush1.msra.mxu0 0.0
    %4679 = vmatprep.subr.mxu0 0.0
    %4680 = vmatpush1.msra.mxu0 0.0
    %4681 = vmatprep.subr.mxu0 0.0
    %4682 = vmatpush1.msra.mxu0 0.0
    %4683 = vmatprep.subr.mxu0 0.0
    %4684 = vmatpush1.msra.mxu0 0.0
    %4685 = vmatprep.subr.mxu0 0.0
    %4686 = vmatpush1.msra.mxu0 0.0
    %4687 = vmatprep.subr.mxu0 0.0
    %4688 = vmatpush1.msra.mxu0 0.0
    %4689 = vmatprep.subr.mxu0 0.0
    %4690 = vmatpush1.msra.mxu0 0.0
    %4691 = vmatprep.subr.mxu0 0.0
    %4692 = vmatpush1.msra.mxu0 0.0
    %4693 = vmatprep.mubr.f32.mxu0 0.0
    %4694 = vmatmul.mubr.f32.gmra.mrb[0].mxu0 %v4627
    %v4695 = vpop.f32.mrb[0].mxu0
    %v4696 = vadd.f32 0.0, %v4695
    %v4697 = vpop.f32.mrb[0].mxu0
    %4698 = vdwg.mxu0
    %v4700 = vrot.slane %v4696, 5
    %v4702 = vadd.f32 %v4308, %v4700
    %v4703 = vxor.u32 %v4702, 2147483648
    %v4704 = vmul.f32 %v4703, 1.442695
    %v4705 = vpow.pop %v4704
    %v4706 = vadd.f32 %v4705, 1.0
    %v4707 = vrcp.pop %v4706
    %v4708 = vmul.f32 1.0, %v4707
    %v4709 = vtanh.pop %v4702
    %v4711 = vrot.slane %v4616, 7
    %v4713 = vmul.f32 %v4708, %v4711
    %4715 = vrot.lane.b32.xlu0 %v4709, 64
    %v4716 = vpop.permute.xlu0 %4715
    %v4718 = vmul.f32 %v4708, %v4716
    %4720 = vrot.lane.b32.xlu0 %v4718, 32
    %v4721 = vpop.permute.xlu0 %4720
    %v4723 = vadd.f32 %v4713, %v4721
    %v4724 = vtanh.pop %v4723
    %4726 = vrot.lane.b32.xlu0 %v4724, 64
    %v4727 = vpop.permute.xlu0 %4726
    %v4729 = vmul.f32 %v4708, %v4727
    %v4731 = vrot.slane %v4729, 3
    %4732 = vrot.lane.b32.xlu0 %v4731, 32
    %v4733 = vpop.permute.xlu0 %4732
    %v4734 = vsel %vm209, %v4733, 0
    %4736 = vmatprep.subr.mxu0 0.0
    %4737 = vmatpush1.msra.mxu0 %v4311
    %4738 = vmatprep.subr.mxu0 0.0
    %4739 = vmatpush1.msra.mxu0 %v4312
    %4740 = vmatprep.subr.mxu0 0.0
    %4741 = vmatpush1.msra.mxu0 %v4313
    %4742 = vmatprep.subr.mxu0 0.0
    %4743 = vmatpush1.msra.mxu0 %v4314
    %4744 = vmatprep.subr.mxu0 0.0
    %4745 = vmatpush1.msra.mxu0 0.0
    %4746 = vmatprep.subr.mxu0 0.0
    %4747 = vmatpush1.msra.mxu0 0.0
    %4748 = vmatprep.subr.mxu0 0.0
    %4749 = vmatpush1.msra.mxu0 0.0
    %4750 = vmatprep.subr.mxu0 0.0
    %4751 = vmatpush1.msra.mxu0 0.0
    %4752 = vmatprep.subr.mxu0 0.0
    %4753 = vmatpush1.msra.mxu0 0.0
    %4754 = vmatprep.subr.mxu0 0.0
    %4755 = vmatpush1.msra.mxu0 0.0
    %4756 = vmatprep.subr.mxu0 0.0
    %4757 = vmatpush1.msra.mxu0 0.0
    %4758 = vmatprep.subr.mxu0 0.0
    %4759 = vmatpush1.msra.mxu0 0.0
    %4760 = vmatprep.subr.mxu0 0.0
    %4761 = vmatpush1.msra.mxu0 0.0
    %4762 = vmatprep.subr.mxu0 0.0
    %4763 = vmatpush1.msra.mxu0 0.0
    %4764 = vmatprep.subr.mxu0 0.0
    %4765 = vmatpush1.msra.mxu0 0.0
    %4766 = vmatprep.subr.mxu0 0.0
    %4767 = vmatpush1.msra.mxu0 0.0
    %4768 = vmatprep.subr.mxu0 0.0
    %4769 = vmatpush1.msra.mxu0 0.0
    %4770 = vmatprep.subr.mxu0 0.0
    %4771 = vmatpush1.msra.mxu0 0.0
    %4772 = vmatprep.subr.mxu0 0.0
    %4773 = vmatpush1.msra.mxu0 0.0
    %4774 = vmatprep.subr.mxu0 0.0
    %4775 = vmatpush1.msra.mxu0 0.0
    %4776 = vmatprep.subr.mxu0 0.0
    %4777 = vmatpush1.msra.mxu0 0.0
    %4778 = vmatprep.subr.mxu0 0.0
    %4779 = vmatpush1.msra.mxu0 0.0
    %4780 = vmatprep.subr.mxu0 0.0
    %4781 = vmatpush1.msra.mxu0 0.0
    %4782 = vmatprep.subr.mxu0 0.0
    %4783 = vmatpush1.msra.mxu0 0.0
    %4784 = vmatprep.subr.mxu0 0.0
    %4785 = vmatpush1.msra.mxu0 0.0
    %4786 = vmatprep.subr.mxu0 0.0
    %4787 = vmatpush1.msra.mxu0 0.0
    %4788 = vmatprep.subr.mxu0 0.0
    %4789 = vmatpush1.msra.mxu0 0.0
    %4790 = vmatprep.subr.mxu0 0.0
    %4791 = vmatpush1.msra.mxu0 0.0
    %4792 = vmatprep.subr.mxu0 0.0
    %4793 = vmatpush1.msra.mxu0 0.0
    %4794 = vmatprep.subr.mxu0 0.0
    %4795 = vmatpush1.msra.mxu0 0.0
    %4796 = vmatprep.subr.mxu0 0.0
    %4797 = vmatpush1.msra.mxu0 0.0
    %4798 = vmatprep.subr.mxu0 0.0
    %4799 = vmatpush1.msra.mxu0 0.0
    %4800 = vmatprep.mubr.f32.mxu0 0.0
    %4801 = vmatmul.mubr.f32.gmra.mrb[0].mxu0 %v4734
    %v4802 = vpop.f32.mrb[0].mxu0
    %v4803 = vadd.f32 0.0, %v4802
    %v4804 = vpop.f32.mrb[0].mxu0
    %4805 = vdwg.mxu0
    %v4807 = vrot.slane %v4803, 4
    %v4809 = vadd.f32 %v4308, %v4807
    %v4810 = vxor.u32 %v4809, 2147483648
    %v4811 = vmul.f32 %v4810, 1.442695
    %v4812 = vpow.pop %v4811
    %v4813 = vadd.f32 %v4812, 1.0
    %v4814 = vrcp.pop %v4813
    %v4815 = vmul.f32 1.0, %v4814
    %v4816 = vtanh.pop %v4809
    %v4818 = vrot.slane %v4723, 7
    %v4820 = vmul.f32 %v4815, %v4818
    %4822 = vrot.lane.b32.xlu0 %v4816, 64
    %v4823 = vpop.permute.xlu0 %4822
    %v4825 = vmul.f32 %v4815, %v4823
    %4827 = vrot.lane.b32.xlu0 %v4825, 32
    %v4828 = vpop.permute.xlu0 %4827
    %v4830 = vadd.f32 %v4820, %v4828
    %v4831 = vtanh.pop %v4830
    %4833 = vrot.lane.b32.xlu0 %v4831, 64
    %v4834 = vpop.permute.xlu0 %4833
    %v4836 = vmul.f32 %v4815, %v4834
    %v4838 = vrot.slane %v4836, 4
    %4839 = vrot.lane.b32.xlu0 %v4838, 32
    %v4840 = vpop.permute.xlu0 %4839
    %v4841 = vsel %vm209, %v4840, 0
    %4843 = vmatprep.subr.mxu0 0.0
    %4844 = vmatpush1.msra.mxu0 %v4311
    %4845 = vmatprep.subr.mxu0 0.0
    %4846 = vmatpush1.msra.mxu0 %v4312
    %4847 = vmatprep.subr.mxu0 0.0
    %4848 = vmatpush1.msra.mxu0 %v4313
    %4849 = vmatprep.subr.mxu0 0.0
    %4850 = vmatpush1.msra.mxu0 %v4314
    %4851 = vmatprep.subr.mxu0 0.0
    %4852 = vmatpush1.msra.mxu0 0.0
    %4853 = vmatprep.subr.mxu0 0.0
    %4854 = vmatpush1.msra.mxu0 0.0
    %4855 = vmatprep.subr.mxu0 0.0
    %4856 = vmatpush1.msra.mxu0 0.0
    %4857 = vmatprep.subr.mxu0 0.0
    %4858 = vmatpush1.msra.mxu0 0.0
    %4859 = vmatprep.subr.mxu0 0.0
    %4860 = vmatpush1.msra.mxu0 0.0
    %4861 = vmatprep.subr.mxu0 0.0
    %4862 = vmatpush1.msra.mxu0 0.0
    %4863 = vmatprep.subr.mxu0 0.0
    %4864 = vmatpush1.msra.mxu0 0.0
    %4865 = vmatprep.subr.mxu0 0.0
    %4866 = vmatpush1.msra.mxu0 0.0
    %4867 = vmatprep.subr.mxu0 0.0
    %4868 = vmatpush1.msra.mxu0 0.0
    %4869 = vmatprep.subr.mxu0 0.0
    %4870 = vmatpush1.msra.mxu0 0.0
    %4871 = vmatprep.subr.mxu0 0.0
    %4872 = vmatpush1.msra.mxu0 0.0
    %4873 = vmatprep.subr.mxu0 0.0
    %4874 = vmatpush1.msra.mxu0 0.0
    %4875 = vmatprep.subr.mxu0 0.0
    %4876 = vmatpush1.msra.mxu0 0.0
    %4877 = vmatprep.subr.mxu0 0.0
    %4878 = vmatpush1.msra.mxu0 0.0
    %4879 = vmatprep.subr.mxu0 0.0
    %4880 = vmatpush1.msra.mxu0 0.0
    %4881 = vmatprep.subr.mxu0 0.0
    %4882 = vmatpush1.msra.mxu0 0.0
    %4883 = vmatprep.subr.mxu0 0.0
    %4884 = vmatpush1.msra.mxu0 0.0
    %4885 = vmatprep.subr.mxu0 0.0
    %4886 = vmatpush1.msra.mxu0 0.0
    %4887 = vmatprep.subr.mxu0 0.0
    %4888 = vmatpush1.msra.mxu0 0.0
    %4889 = vmatprep.subr.mxu0 0.0
    %4890 = vmatpush1.msra.mxu0 0.0
    %4891 = vmatprep.subr.mxu0 0.0
    %4892 = vmatpush1.msra.mxu0 0.0
    %4893 = vmatprep.subr.mxu0 0.0
    %4894 = vmatpush1.msra.mxu0 0.0
    %4895 = vmatprep.subr.mxu0 0.0
    %4896 = vmatpush1.msra.mxu0 0.0
    %4897 = vmatprep.subr.mxu0 0.0
    %4898 = vmatpush1.msra.mxu0 0.0
    %4899 = vmatprep.subr.mxu0 0.0
    %4900 = vmatpush1.msra.mxu0 0.0
    %4901 = vmatprep.subr.mxu0 0.0
    %4902 = vmatpush1.msra.mxu0 0.0
    %4903 = vmatprep.subr.mxu0 0.0
    %4904 = vmatpush1.msra.mxu0 0.0
    %4905 = vmatprep.subr.mxu0 0.0
    %4906 = vmatpush1.msra.mxu0 0.0
    %4907 = vmatprep.mubr.f32.mxu0 0.0
    %4908 = vmatmul.mubr.f32.gmra.mrb[0].mxu0 %v4841
    %v4909 = vpop.f32.mrb[0].mxu0
    %v4910 = vadd.f32 0.0, %v4909
    %v4911 = vpop.f32.mrb[0].mxu0
    %4912 = vdwg.mxu0
    %v4914 = vrot.slane %v4910, 3
    %v4916 = vadd.f32 %v4308, %v4914
    %v4917 = vxor.u32 %v4916, 2147483648
    %v4918 = vmul.f32 %v4917, 1.442695
    %v4919 = vpow.pop %v4918
    %v4920 = vadd.f32 %v4919, 1.0
    %v4921 = vrcp.pop %v4920
    %v4922 = vmul.f32 1.0, %v4921
    %v4923 = vtanh.pop %v4916
    %v4925 = vrot.slane %v4830, 7
    %v4927 = vmul.f32 %v4922, %v4925
    %4929 = vrot.lane.b32.xlu0 %v4923, 64
    %v4930 = vpop.permute.xlu0 %4929
    %v4932 = vmul.f32 %v4922, %v4930
    %4934 = vrot.lane.b32.xlu0 %v4932, 32
    %v4935 = vpop.permute.xlu0 %4934
    %v4937 = vadd.f32 %v4927, %v4935
    %v4938 = vtanh.pop %v4937
    %4940 = vrot.lane.b32.xlu0 %v4938, 64
    %v4941 = vpop.permute.xlu0 %4940
    %v4943 = vmul.f32 %v4922, %v4941
    %v4945 = vrot.slane %v4943, 5
    %4946 = vrot.lane.b32.xlu0 %v4945, 32
    %v4947 = vpop.permute.xlu0 %4946
    %v4948 = vsel %vm209, %v4947, 0
    %4950 = vmatprep.subr.mxu0 0.0
    %4951 = vmatpush1.msra.mxu0 %v4311
    %4952 = vmatprep.subr.mxu0 0.0
    %4953 = vmatpush1.msra.mxu0 %v4312
    %4954 = vmatprep.subr.mxu0 0.0
    %4955 = vmatpush1.msra.mxu0 %v4313
    %4956 = vmatprep.subr.mxu0 0.0
    %4957 = vmatpush1.msra.mxu0 %v4314
    %4958 = vmatprep.subr.mxu0 0.0
    %4959 = vmatpush1.msra.mxu0 0.0
    %4960 = vmatprep.subr.mxu0 0.0
    %4961 = vmatpush1.msra.mxu0 0.0
    %4962 = vmatprep.subr.mxu0 0.0
    %4963 = vmatpush1.msra.mxu0 0.0
    %4964 = vmatprep.subr.mxu0 0.0
    %4965 = vmatpush1.msra.mxu0 0.0
    %4966 = vmatprep.subr.mxu0 0.0
    %4967 = vmatpush1.msra.mxu0 0.0
    %4968 = vmatprep.subr.mxu0 0.0
    %4969 = vmatpush1.msra.mxu0 0.0
    %4970 = vmatprep.subr.mxu0 0.0
    %4971 = vmatpush1.msra.mxu0 0.0
    %4972 = vmatprep.subr.mxu0 0.0
    %4973 = vmatpush1.msra.mxu0 0.0
    %4974 = vmatprep.subr.mxu0 0.0
    %4975 = vmatpush1.msra.mxu0 0.0
    %4976 = vmatprep.subr.mxu0 0.0
    %4977 = vmatpush1.msra.mxu0 0.0
    %4978 = vmatprep.subr.mxu0 0.0
    %4979 = vmatpush1.msra.mxu0 0.0
    %4980 = vmatprep.subr.mxu0 0.0
    %4981 = vmatpush1.msra.mxu0 0.0
    %4982 = vmatprep.subr.mxu0 0.0
    %4983 = vmatpush1.msra.mxu0 0.0
    %4984 = vmatprep.subr.mxu0 0.0
    %4985 = vmatpush1.msra.mxu0 0.0
    %4986 = vmatprep.subr.mxu0 0.0
    %4987 = vmatpush1.msra.mxu0 0.0
    %4988 = vmatprep.subr.mxu0 0.0
    %4989 = vmatpush1.msra.mxu0 0.0
    %4990 = vmatprep.subr.mxu0 0.0
    %4991 = vmatpush1.msra.mxu0 0.0
    %4992 = vmatprep.subr.mxu0 0.0
    %4993 = vmatpush1.msra.mxu0 0.0
    %4994 = vmatprep.subr.mxu0 0.0
    %4995 = vmatpush1.msra.mxu0 0.0
    %4996 = vmatprep.subr.mxu0 0.0
    %4997 = vmatpush1.msra.mxu0 0.0
    %4998 = vmatprep.subr.mxu0 0.0
    %4999 = vmatpush1.msra.mxu0 0.0
    %5000 = vmatprep.subr.mxu0 0.0
    %5001 = vmatpush1.msra.mxu0 0.0
    %5002 = vmatprep.subr.mxu0 0.0
    %5003 = vmatpush1.msra.mxu0 0.0
    %5004 = vmatprep.subr.mxu0 0.0
    %5005 = vmatpush1.msra.mxu0 0.0
    %5006 = vmatprep.subr.mxu0 0.0
    %5007 = vmatpush1.msra.mxu0 0.0
    %5008 = vmatprep.subr.mxu0 0.0
    %5009 = vmatpush1.msra.mxu0 0.0
    %5010 = vmatprep.subr.mxu0 0.0
    %5011 = vmatpush1.msra.mxu0 0.0
    %5012 = vmatprep.subr.mxu0 0.0
    %5013 = vmatpush1.msra.mxu0 0.0
    %5014 = vmatprep.mubr.f32.mxu0 0.0
    %5015 = vmatmul.mubr.f32.gmra.mrb[0].mxu0 %v4948
    %v5016 = vpop.f32.mrb[0].mxu0
    %v5017 = vadd.f32 0.0, %v5016
    %v5018 = vpop.f32.mrb[0].mxu0
    %5019 = vdwg.mxu0
    %v5021 = vrot.slane %v5017, 2
    %v5023 = vadd.f32 %v4308, %v5021
    %v5024 = vxor.u32 %v5023, 2147483648
    %v5025 = vmul.f32 %v5024, 1.442695
    %v5026 = vpow.pop %v5025
    %v5027 = vadd.f32 %v5026, 1.0
    %v5028 = vrcp.pop %v5027
    %v5029 = vmul.f32 1.0, %v5028
    %v5030 = vtanh.pop %v5023
    %v5032 = vrot.slane %v4937, 7
    %v5034 = vmul.f32 %v5029, %v5032
    %5036 = vrot.lane.b32.xlu0 %v5030, 64
    %v5037 = vpop.permute.xlu0 %5036
    %v5039 = vmul.f32 %v5029, %v5037
    %5041 = vrot.lane.b32.xlu0 %v5039, 32
    %v5042 = vpop.permute.xlu0 %5041
    %v5044 = vadd.f32 %v5034, %v5042
    %v5045 = vtanh.pop %v5044
    %5047 = vrot.lane.b32.xlu0 %v5045, 64
    %v5048 = vpop.permute.xlu0 %5047
    %v5050 = vmul.f32 %v5029, %v5048
    %v5052 = vrot.slane %v5050, 6
    %5053 = vrot.lane.b32.xlu0 %v5052, 32
    %v5054 = vpop.permute.xlu0 %5053
    %v5055 = vsel %vm209, %v5054, 0
    %5057 = vmatprep.subr.mxu0 0.0
    %5058 = vmatpush1.msra.mxu0 %v4311
    %5059 = vmatprep.subr.mxu0 0.0
    %5060 = vmatpush1.msra.mxu0 %v4312
    %5061 = vmatprep.subr.mxu0 0.0
    %5062 = vmatpush1.msra.mxu0 %v4313
    %5063 = vmatprep.subr.mxu0 0.0
    %5064 = vmatpush1.msra.mxu0 %v4314
    %5065 = vmatprep.subr.mxu0 0.0
    %5066 = vmatpush1.msra.mxu0 0.0
    %5067 = vmatprep.subr.mxu0 0.0
    %5068 = vmatpush1.msra.mxu0 0.0
    %5069 = vmatprep.subr.mxu0 0.0
    %5070 = vmatpush1.msra.mxu0 0.0
    %5071 = vmatprep.subr.mxu0 0.0
    %5072 = vmatpush1.msra.mxu0 0.0
    %5073 = vmatprep.subr.mxu0 0.0
    %5074 = vmatpush1.msra.mxu0 0.0
    %5075 = vmatprep.subr.mxu0 0.0
    %5076 = vmatpush1.msra.mxu0 0.0
    %5077 = vmatprep.subr.mxu0 0.0
    %5078 = vmatpush1.msra.mxu0 0.0
    %5079 = vmatprep.subr.mxu0 0.0
    %5080 = vmatpush1.msra.mxu0 0.0
    %5081 = vmatprep.subr.mxu0 0.0
    %5082 = vmatpush1.msra.mxu0 0.0
    %5083 = vmatprep.subr.mxu0 0.0
    %5084 = vmatpush1.msra.mxu0 0.0
    %5085 = vmatprep.subr.mxu0 0.0
    %5086 = vmatpush1.msra.mxu0 0.0
    %5087 = vmatprep.subr.mxu0 0.0
    %5088 = vmatpush1.msra.mxu0 0.0
    %5089 = vmatprep.subr.mxu0 0.0
    %5090 = vmatpush1.msra.mxu0 0.0
    %5091 = vmatprep.subr.mxu0 0.0
    %5092 = vmatpush1.msra.mxu0 0.0
    %5093 = vmatprep.subr.mxu0 0.0
    %5094 = vmatpush1.msra.mxu0 0.0
    %5095 = vmatprep.subr.mxu0 0.0
    %5096 = vmatpush1.msra.mxu0 0.0
    %5097 = vmatprep.subr.mxu0 0.0
    %5098 = vmatpush1.msra.mxu0 0.0
    %5099 = vmatprep.subr.mxu0 0.0
    %5100 = vmatpush1.msra.mxu0 0.0
    %5101 = vmatprep.subr.mxu0 0.0
    %5102 = vmatpush1.msra.mxu0 0.0
    %5103 = vmatprep.subr.mxu0 0.0
    %5104 = vmatpush1.msra.mxu0 0.0
    %5105 = vmatprep.subr.mxu0 0.0
    %5106 = vmatpush1.msra.mxu0 0.0
    %5107 = vmatprep.subr.mxu0 0.0
    %5108 = vmatpush1.msra.mxu0 0.0
    %5109 = vmatprep.subr.mxu0 0.0
    %5110 = vmatpush1.msra.mxu0 0.0
    %5111 = vmatprep.subr.mxu0 0.0
    %5112 = vmatpush1.msra.mxu0 0.0
    %5113 = vmatprep.subr.mxu0 0.0
    %5114 = vmatpush1.msra.mxu0 0.0
    %5115 = vmatprep.subr.mxu0 0.0
    %5116 = vmatpush1.msra.mxu0 0.0
    %5117 = vmatprep.subr.mxu0 0.0
    %5118 = vmatpush1.msra.mxu0 0.0
    %5119 = vmatprep.subr.mxu0 0.0
    %5120 = vmatpush1.msra.mxu0 0.0
    %5121 = vmatprep.mubr.f32.mxu0 0.0
    %5122 = vmatmul.mubr.f32.gmra.mrb[0].mxu0 %v5055
    %v5123 = vpop.f32.mrb[0].mxu0
    %v5124 = vadd.f32 0.0, %v5123
    %v5125 = vpop.f32.mrb[0].mxu0
    %5126 = vdwg.mxu0
    %v5128 = vrot.slane %v5124, 1
    %v5130 = vadd.f32 %v4308, %v5128
    %v5131 = vxor.u32 %v5130, 2147483648
    %v5132 = vmul.f32 %v5131, 1.442695
    %v5133 = vpow.pop %v5132
    %v5134 = vadd.f32 %v5133, 1.0
    %v5135 = vrcp.pop %v5134
    %v5136 = vmul.f32 1.0, %v5135
    %v5137 = vtanh.pop %v5130
    %v5139 = vrot.slane %v5044, 7
    %v5141 = vmul.f32 %v5136, %v5139
    %5143 = vrot.lane.b32.xlu0 %v5137, 64
    %v5144 = vpop.permute.xlu0 %5143
    %v5146 = vmul.f32 %v5136, %v5144
    %5148 = vrot.lane.b32.xlu0 %v5146, 32
    %v5149 = vpop.permute.xlu0 %5148
    %v5151 = vadd.f32 %v5141, %v5149
    %v5152 = vtanh.pop %v5151
    %5154 = vrot.lane.b32.xlu0 %v5152, 64
    %v5155 = vpop.permute.xlu0 %5154
    %v5157 = vmul.f32 %v5136, %v5155
    %v5158 = vsel %vm1303, %v4409, %v4515
    %v5159 = vsel %vm1305, %v5158, %v4622
    %v5160 = vsel %vm1307, %v5159, %v4729
    %v5161 = vsel %vm1309, %v5160, %v4836
    %v5162 = vsel %vm1311, %v5161, %v4943
    %v5163 = vsel %vm1313, %v5162, %v5050
    %v5164 = vsel %vm1315, %v5163, %v5157
    %v5165 = vld [vmem:[#allocation12] sm:$0xff]
    %v5166 = vld [vmem:[#allocation12 + $0x8] sm:$0xff]
    %v5167 = vld [vmem:[#allocation12 + $0x10] sm:$0xff]
    %v5168 = vld [vmem:[#allocation12 + $0x18] sm:$0xff]
    %v5169 = vld [vmem:[#allocation13] sm:$0x1]
    %v5171 = vlaneseq
    %v5172 = vshrl.u32 %v5171, 7
    %v5173 = vsub.s32 0, %v5172
    %v5174 = vrot.slane %v5169, %v5173
    %5177 = vrot.lane.b32.xlu0 %v5164, 32
    %v5178 = vpop.permute.xlu0 %5177
    %v5179 = vsel %vm209, %v5178, 0
    %5181 = vmatprep.subr.mxu0 0.0
    %5182 = vmatpush1.msra.mxu0 %v5165
    %5183 = vmatprep.subr.mxu0 0.0
    %5184 = vmatpush1.msra.mxu0 %v5166
    %5185 = vmatprep.subr.mxu0 0.0
    %5186 = vmatpush1.msra.mxu0 %v5167
    %5187 = vmatprep.subr.mxu0 0.0
    %5188 = vmatpush1.msra.mxu0 %v5168
    %5189 = vmatprep.subr.mxu0 0.0
    %5190 = vmatpush1.msra.mxu0 0.0
    %5191 = vmatprep.subr.mxu0 0.0
    %5192 = vmatpush1.msra.mxu0 0.0
    %5193 = vmatprep.subr.mxu0 0.0
    %5194 = vmatpush1.msra.mxu0 0.0
    %5195 = vmatprep.subr.mxu0 0.0
    %5196 = vmatpush1.msra.mxu0 0.0
    %5197 = vmatprep.subr.mxu0 0.0
    %5198 = vmatpush1.msra.mxu0 0.0
    %5199 = vmatprep.subr.mxu0 0.0
    %5200 = vmatpush1.msra.mxu0 0.0
    %5201 = vmatprep.subr.mxu0 0.0
    %5202 = vmatpush1.msra.mxu0 0.0
    %5203 = vmatprep.subr.mxu0 0.0
    %5204 = vmatpush1.msra.mxu0 0.0
    %5205 = vmatprep.subr.mxu0 0.0
    %5206 = vmatpush1.msra.mxu0 0.0
    %5207 = vmatprep.subr.mxu0 0.0
    %5208 = vmatpush1.msra.mxu0 0.0
    %5209 = vmatprep.subr.mxu0 0.0
    %5210 = vmatpush1.msra.mxu0 0.0
    %5211 = vmatprep.subr.mxu0 0.0
    %5212 = vmatpush1.msra.mxu0 0.0
    %5213 = vmatprep.subr.mxu0 0.0
    %5214 = vmatpush1.msra.mxu0 0.0
    %5215 = vmatprep.subr.mxu0 0.0
    %5216 = vmatpush1.msra.mxu0 0.0
    %5217 = vmatprep.subr.mxu0 0.0
    %5218 = vmatpush1.msra.mxu0 0.0
    %5219 = vmatprep.subr.mxu0 0.0
    %5220 = vmatpush1.msra.mxu0 0.0
    %5221 = vmatprep.subr.mxu0 0.0
    %5222 = vmatpush1.msra.mxu0 0.0
    %5223 = vmatprep.subr.mxu0 0.0
    %5224 = vmatpush1.msra.mxu0 0.0
    %5225 = vmatprep.subr.mxu0 0.0
    %5226 = vmatpush1.msra.mxu0 0.0
    %5227 = vmatprep.subr.mxu0 0.0
    %5228 = vmatpush1.msra.mxu0 0.0
    %5229 = vmatprep.subr.mxu0 0.0
    %5230 = vmatpush1.msra.mxu0 0.0
    %5231 = vmatprep.subr.mxu0 0.0
    %5232 = vmatpush1.msra.mxu0 0.0
    %5233 = vmatprep.subr.mxu0 0.0
    %5234 = vmatpush1.msra.mxu0 0.0
    %5235 = vmatprep.subr.mxu0 0.0
    %5236 = vmatpush1.msra.mxu0 0.0
    %5237 = vmatprep.subr.mxu0 0.0
    %5238 = vmatpush1.msra.mxu0 0.0
    %5239 = vmatprep.subr.mxu0 0.0
    %5240 = vmatpush1.msra.mxu0 0.0
    %5241 = vmatprep.subr.mxu0 0.0
    %5242 = vmatpush1.msra.mxu0 0.0
    %5243 = vmatprep.subr.mxu0 0.0
    %5244 = vmatpush1.msra.mxu0 0.0
    %5245 = vmatprep.mubr.f32.mxu0 0.0
    %5246 = vmatmul.mubr.f32.gmra.mrb[0].mxu0 %v5179
    %v5247 = vpop.f32.mrb[0].mxu0
    %v5248 = vadd.f32 %v5174, %v5247
    %v5249 = vpop.f32.mrb[0].mxu0
    %5250 = vdwg.mxu0
    %v5251 = vmul.f32 %v5248, 0.35355338
    %5253 = vrot.lane.b32.xlu0 %v5248, 96
    %v5254 = vpop.permute.xlu0 %5253
    %v5256 = vsel %vm2350, %v5251, 0
    %v5258 = vsel %vm2350, %v5254, 0
    %5260 = vmatprep.subr.mxu0 0.0
    %5261 = vmatpush1.xpose.msra.mxu0 %v5258
    %5262 = vmatprep.subr.mxu0 0.0
    %5263 = vmatpush1.xpose.msra.mxu0 0.0
    %5264 = vmatprep.subr.mxu0 0.0
    %5265 = vmatpush1.xpose.msra.mxu0 0.0
    %5266 = vmatprep.subr.mxu0 0.0
    %5267 = vmatpush1.xpose.msra.mxu0 0.0
    %5268 = vmatprep.subr.mxu0 0.0
    %5269 = vmatpush1.xpose.msra.mxu0 0.0
    %5270 = vmatprep.subr.mxu0 0.0
    %5271 = vmatpush1.xpose.msra.mxu0 0.0
    %5272 = vmatprep.subr.mxu0 0.0
    %5273 = vmatpush1.xpose.msra.mxu0 0.0
    %5274 = vmatprep.subr.mxu0 0.0
    %5275 = vmatpush1.xpose.msra.mxu0 0.0
    %5276 = vmatprep.subr.mxu0 0.0
    %5277 = vmatpush1.xpose.msra.mxu0 0.0
    %5278 = vmatprep.subr.mxu0 0.0
    %5279 = vmatpush1.xpose.msra.mxu0 0.0
    %5280 = vmatprep.subr.mxu0 0.0
    %5281 = vmatpush1.xpose.msra.mxu0 0.0
    %5282 = vmatprep.subr.mxu0 0.0
    %5283 = vmatpush1.xpose.msra.mxu0 0.0
    %5284 = vmatprep.subr.mxu0 0.0
    %5285 = vmatpush1.xpose.msra.mxu0 0.0
    %5286 = vmatprep.subr.mxu0 0.0
    %5287 = vmatpush1.xpose.msra.mxu0 0.0
    %5288 = vmatprep.subr.mxu0 0.0
    %5289 = vmatpush1.xpose.msra.mxu0 0.0
    %5290 = vmatprep.subr.mxu0 0.0
    %5291 = vmatpush1.xpose.msra.mxu0 0.0
    %5292 = vmatprep.subr.mxu0 0.0
    %5293 = vmatpush1.xpose.msra.mxu0 0.0
    %5294 = vmatprep.subr.mxu0 0.0
    %5295 = vmatpush1.xpose.msra.mxu0 0.0
    %5296 = vmatprep.subr.mxu0 0.0
    %5297 = vmatpush1.xpose.msra.mxu0 0.0
    %5298 = vmatprep.subr.mxu0 0.0
    %5299 = vmatpush1.xpose.msra.mxu0 0.0
    %5300 = vmatprep.subr.mxu0 0.0
    %5301 = vmatpush1.xpose.msra.mxu0 0.0
    %5302 = vmatprep.subr.mxu0 0.0
    %5303 = vmatpush1.xpose.msra.mxu0 0.0
    %5304 = vmatprep.subr.mxu0 0.0
    %5305 = vmatpush1.xpose.msra.mxu0 0.0
    %5306 = vmatprep.subr.mxu0 0.0
    %5307 = vmatpush1.xpose.msra.mxu0 0.0
    %5308 = vmatprep.subr.mxu0 0.0
    %5309 = vmatpush1.xpose.msra.mxu0 0.0
    %5310 = vmatprep.subr.mxu0 0.0
    %5311 = vmatpush1.xpose.msra.mxu0 0.0
    %5312 = vmatprep.subr.mxu0 0.0
    %5313 = vmatpush1.xpose.msra.mxu0 0.0
    %5314 = vmatprep.subr.mxu0 0.0
    %5315 = vmatpush1.xpose.msra.mxu0 0.0
    %5316 = vmatprep.subr.mxu0 0.0
    %5317 = vmatpush1.xpose.msra.mxu0 0.0
    %5318 = vmatprep.subr.mxu0 0.0
    %5319 = vmatpush1.xpose.msra.mxu0 0.0
    %5320 = vmatprep.subr.mxu0 0.0
    %5321 = vmatpush1.xpose.msra.mxu0 0.0
    %5322 = vmatprep.subr.mxu0 0.0
    %5323 = vmatpush1.xpose.msra.mxu0 0.0
    %5324 = vmatprep.mubr.f32.mxu0 0.0
    %5325 = vmatmul.mubr.f32.gmra.mrb[0].mxu0 %v5256
    %v5326 = vpop.f32.mrb[0].mxu0
    %v5327 = vadd.f32 0.0, %v5326
    %v5328 = vpop.f32.mrb[0].mxu0
    %5329 = vdwg.mxu0
    %v5330 = vsel %vm2350, %v5327, -inf
    %5331 = vmax.xlane.f32.xlu0 %v5330
    %v5332 = vpop.xlane.xlu0 %5331
    %v5333 = vsub.f32 %v5327, %v5332
    %v5334 = vmul.f32 %v5333, 1.442695
    %v5335 = vpow.pop %v5334
    %v5336 = vsel %vm2350, %v5335, 0.0
    %5337 = vadd.xlane.f32.xlu0 %v5336
    %v5338 = vpop.xlane.xlu0 %5337
    %v5339 = vrcp.pop %v5338
    %v5340 = vmul.f32 %v5335, %v5339
    %v5341 = vadd.f32 %v5340, 0.0
    %5342 = vrot.lane.b32.xlu0 %v5248, 64
    %v5343 = vpop.permute.xlu0 %5342
    %v5346 = vsel %vm2350, %v5340, 0
    %5348 = vmatprep.subr.mxu0 0.0
    %5349 = vmatpush1.msra.mxu0 %v5343
    %5350 = vmatprep.subr.mxu0 0.0
    %5351 = vmatpush1.msra.mxu0 0.0
    %5352 = vmatprep.subr.mxu0 0.0
    %5353 = vmatpush1.msra.mxu0 0.0
    %5354 = vmatprep.subr.mxu0 0.0
    %5355 = vmatpush1.msra.mxu0 0.0
    %5356 = vmatprep.subr.mxu0 0.0
    %5357 = vmatpush1.msra.mxu0 0.0
    %5358 = vmatprep.subr.mxu0 0.0
    %5359 = vmatpush1.msra.mxu0 0.0
    %5360 = vmatprep.subr.mxu0 0.0
    %5361 = vmatpush1.msra.mxu0 0.0
    %5362 = vmatprep.subr.mxu0 0.0
    %5363 = vmatpush1.msra.mxu0 0.0
    %5364 = vmatprep.subr.mxu0 0.0
    %5365 = vmatpush1.msra.mxu0 0.0
    %5366 = vmatprep.subr.mxu0 0.0
    %5367 = vmatpush1.msra.mxu0 0.0
    %5368 = vmatprep.subr.mxu0 0.0
    %5369 = vmatpush1.msra.mxu0 0.0
    %5370 = vmatprep.subr.mxu0 0.0
    %5371 = vmatpush1.msra.mxu0 0.0
    %5372 = vmatprep.subr.mxu0 0.0
    %5373 = vmatpush1.msra.mxu0 0.0
    %5374 = vmatprep.subr.mxu0 0.0
    %5375 = vmatpush1.msra.mxu0 0.0
    %5376 = vmatprep.subr.mxu0 0.0
    %5377 = vmatpush1.msra.mxu0 0.0
    %5378 = vmatprep.subr.mxu0 0.0
    %5379 = vmatpush1.msra.mxu0 0.0
    %5380 = vmatprep.subr.mxu0 0.0
    %5381 = vmatpush1.msra.mxu0 0.0
    %5382 = vmatprep.subr.mxu0 0.0
    %5383 = vmatpush1.msra.mxu0 0.0
    %5384 = vmatprep.subr.mxu0 0.0
    %5385 = vmatpush1.msra.mxu0 0.0
    %5386 = vmatprep.subr.mxu0 0.0
    %5387 = vmatpush1.msra.mxu0 0.0
    %5388 = vmatprep.subr.mxu0 0.0
    %5389 = vmatpush1.msra.mxu0 0.0
    %5390 = vmatprep.subr.mxu0 0.0
    %5391 = vmatpush1.msra.mxu0 0.0
    %5392 = vmatprep.subr.mxu0 0.0
    %5393 = vmatpush1.msra.mxu0 0.0
    %5394 = vmatprep.subr.mxu0 0.0
    %5395 = vmatpush1.msra.mxu0 0.0
    %5396 = vmatprep.subr.mxu0 0.0
    %5397 = vmatpush1.msra.mxu0 0.0
    %5398 = vmatprep.subr.mxu0 0.0
    %5399 = vmatpush1.msra.mxu0 0.0
    %5400 = vmatprep.subr.mxu0 0.0
    %5401 = vmatpush1.msra.mxu0 0.0
    %5402 = vmatprep.subr.mxu0 0.0
    %5403 = vmatpush1.msra.mxu0 0.0
    %5404 = vmatprep.subr.mxu0 0.0
    %5405 = vmatpush1.msra.mxu0 0.0
    %5406 = vmatprep.subr.mxu0 0.0
    %5407 = vmatpush1.msra.mxu0 0.0
    %5408 = vmatprep.subr.mxu0 0.0
    %5409 = vmatpush1.msra.mxu0 0.0
    %5410 = vmatprep.subr.mxu0 0.0
    %5411 = vmatpush1.msra.mxu0 0.0
    %5412 = vmatprep.mubr.f32.mxu0 0.0
    %5413 = vmatmul.mubr.f32.gmra.mrb[0].mxu0 %v5346
    %v5414 = vpop.f32.mrb[0].mxu0
    %v5415 = vadd.f32 0.0, %v5414
    %v5416 = vpop.f32.mrb[0].mxu0
    %5417 = vdwg.mxu0
    %5418 = vrot.lane.b32.xlu0 %v5251, 120
    %v5419 = vpop.permute.xlu0 %5418
    %5420 = vrot.lane.b32.xlu0 %v5248, 88
    %v5421 = vpop.permute.xlu0 %5420
    %v5422 = vsel %vm2350, %v5419, 0
    %v5424 = vsel %vm2350, %v5421, 0
    %5426 = vmatprep.subr.mxu0 0.0
    %5427 = vmatpush1.xpose.msra.mxu0 %v5424
    %5428 = vmatprep.subr.mxu0 0.0
    %5429 = vmatpush1.xpose.msra.mxu0 0.0
    %5430 = vmatprep.subr.mxu0 0.0
    %5431 = vmatpush1.xpose.msra.mxu0 0.0
    %5432 = vmatprep.subr.mxu0 0.0
    %5433 = vmatpush1.xpose.msra.mxu0 0.0
    %5434 = vmatprep.subr.mxu0 0.0
    %5435 = vmatpush1.xpose.msra.mxu0 0.0
    %5436 = vmatprep.subr.mxu0 0.0
    %5437 = vmatpush1.xpose.msra.mxu0 0.0
    %5438 = vmatprep.subr.mxu0 0.0
    %5439 = vmatpush1.xpose.msra.mxu0 0.0
    %5440 = vmatprep.subr.mxu0 0.0
    %5441 = vmatpush1.xpose.msra.mxu0 0.0
    %5442 = vmatprep.subr.mxu0 0.0
    %5443 = vmatpush1.xpose.msra.mxu0 0.0
    %5444 = vmatprep.subr.mxu0 0.0
    %5445 = vmatpush1.xpose.msra.mxu0 0.0
    %5446 = vmatprep.subr.mxu0 0.0
    %5447 = vmatpush1.xpose.msra.mxu0 0.0
    %5448 = vmatprep.subr.mxu0 0.0
    %5449 = vmatpush1.xpose.msra.mxu0 0.0
    %5450 = vmatprep.subr.mxu0 0.0
    %5451 = vmatpush1.xpose.msra.mxu0 0.0
    %5452 = vmatprep.subr.mxu0 0.0
    %5453 = vmatpush1.xpose.msra.mxu0 0.0
    %5454 = vmatprep.subr.mxu0 0.0
    %5455 = vmatpush1.xpose.msra.mxu0 0.0
    %5456 = vmatprep.subr.mxu0 0.0
    %5457 = vmatpush1.xpose.msra.mxu0 0.0
    %5458 = vmatprep.subr.mxu0 0.0
    %5459 = vmatpush1.xpose.msra.mxu0 0.0
    %5460 = vmatprep.subr.mxu0 0.0
    %5461 = vmatpush1.xpose.msra.mxu0 0.0
    %5462 = vmatprep.subr.mxu0 0.0
    %5463 = vmatpush1.xpose.msra.mxu0 0.0
    %5464 = vmatprep.subr.mxu0 0.0
    %5465 = vmatpush1.xpose.msra.mxu0 0.0
    %5466 = vmatprep.subr.mxu0 0.0
    %5467 = vmatpush1.xpose.msra.mxu0 0.0
    %5468 = vmatprep.subr.mxu0 0.0
    %5469 = vmatpush1.xpose.msra.mxu0 0.0
    %5470 = vmatprep.subr.mxu0 0.0
    %5471 = vmatpush1.xpose.msra.mxu0 0.0
    %5472 = vmatprep.subr.mxu0 0.0
    %5473 = vmatpush1.xpose.msra.mxu0 0.0
    %5474 = vmatprep.subr.mxu0 0.0
    %5475 = vmatpush1.xpose.msra.mxu0 0.0
    %5476 = vmatprep.subr.mxu0 0.0
    %5477 = vmatpush1.xpose.msra.mxu0 0.0
    %5478 = vmatprep.subr.mxu0 0.0
    %5479 = vmatpush1.xpose.msra.mxu0 0.0
    %5480 = vmatprep.subr.mxu0 0.0
    %5481 = vmatpush1.xpose.msra.mxu0 0.0
    %5482 = vmatprep.subr.mxu0 0.0
    %5483 = vmatpush1.xpose.msra.mxu0 0.0
    %5484 = vmatprep.subr.mxu0 0.0
    %5485 = vmatpush1.xpose.msra.mxu0 0.0
    %5486 = vmatprep.subr.mxu0 0.0
    %5487 = vmatpush1.xpose.msra.mxu0 0.0
    %5488 = vmatprep.subr.mxu0 0.0
    %5489 = vmatpush1.xpose.msra.mxu0 0.0
    %5490 = vmatprep.mubr.f32.mxu0 0.0
    %5491 = vmatmul.mubr.f32.gmra.mrb[0].mxu0 %v5422
    %v5492 = vpop.f32.mrb[0].mxu0
    %v5493 = vadd.f32 0.0, %v5492
    %v5494 = vpop.f32.mrb[0].mxu0
    %5495 = vdwg.mxu0
    %v5496 = vsel %vm2350, %v5493, -inf
    %5497 = vmax.xlane.f32.xlu0 %v5496
    %v5498 = vpop.xlane.xlu0 %5497
    %v5499 = vsub.f32 %v5493, %v5498
    %v5500 = vmul.f32 %v5499, 1.442695
    %v5501 = vpow.pop %v5500
    %v5502 = vsel %vm2350, %v5501, 0.0
    %5503 = vadd.xlane.f32.xlu0 %v5502
    %v5504 = vpop.xlane.xlu0 %5503
    %v5505 = vrcp.pop %v5504
    %v5506 = vmul.f32 %v5501, %v5505
    %v5507 = vadd.f32 %v5341, %v5506
    %5508 = vrot.lane.b32.xlu0 %v5248, 56
    %v5509 = vpop.permute.xlu0 %5508
    %v5512 = vsel %vm2350, %v5506, 0
    %5514 = vmatprep.subr.mxu0 0.0
    %5515 = vmatpush1.msra.mxu0 %v5509
    %5516 = vmatprep.subr.mxu0 0.0
    %5517 = vmatpush1.msra.mxu0 0.0
    %5518 = vmatprep.subr.mxu0 0.0
    %5519 = vmatpush1.msra.mxu0 0.0
    %5520 = vmatprep.subr.mxu0 0.0
    %5521 = vmatpush1.msra.mxu0 0.0
    %5522 = vmatprep.subr.mxu0 0.0
    %5523 = vmatpush1.msra.mxu0 0.0
    %5524 = vmatprep.subr.mxu0 0.0
    %5525 = vmatpush1.msra.mxu0 0.0
    %5526 = vmatprep.subr.mxu0 0.0
    %5527 = vmatpush1.msra.mxu0 0.0
    %5528 = vmatprep.subr.mxu0 0.0
    %5529 = vmatpush1.msra.mxu0 0.0
    %5530 = vmatprep.subr.mxu0 0.0
    %5531 = vmatpush1.msra.mxu0 0.0
    %5532 = vmatprep.subr.mxu0 0.0
    %5533 = vmatpush1.msra.mxu0 0.0
    %5534 = vmatprep.subr.mxu0 0.0
    %5535 = vmatpush1.msra.mxu0 0.0
    %5536 = vmatprep.subr.mxu0 0.0
    %5537 = vmatpush1.msra.mxu0 0.0
    %5538 = vmatprep.subr.mxu0 0.0
    %5539 = vmatpush1.msra.mxu0 0.0
    %5540 = vmatprep.subr.mxu0 0.0
    %5541 = vmatpush1.msra.mxu0 0.0
    %5542 = vmatprep.subr.mxu0 0.0
    %5543 = vmatpush1.msra.mxu0 0.0
    %5544 = vmatprep.subr.mxu0 0.0
    %5545 = vmatpush1.msra.mxu0 0.0
    %5546 = vmatprep.subr.mxu0 0.0
    %5547 = vmatpush1.msra.mxu0 0.0
    %5548 = vmatprep.subr.mxu0 0.0
    %5549 = vmatpush1.msra.mxu0 0.0
    %5550 = vmatprep.subr.mxu0 0.0
    %5551 = vmatpush1.msra.mxu0 0.0
    %5552 = vmatprep.subr.mxu0 0.0
    %5553 = vmatpush1.msra.mxu0 0.0
    %5554 = vmatprep.subr.mxu0 0.0
    %5555 = vmatpush1.msra.mxu0 0.0
    %5556 = vmatprep.subr.mxu0 0.0
    %5557 = vmatpush1.msra.mxu0 0.0
    %5558 = vmatprep.subr.mxu0 0.0
    %5559 = vmatpush1.msra.mxu0 0.0
    %5560 = vmatprep.subr.mxu0 0.0
    %5561 = vmatpush1.msra.mxu0 0.0
    %5562 = vmatprep.subr.mxu0 0.0
    %5563 = vmatpush1.msra.mxu0 0.0
    %5564 = vmatprep.subr.mxu0 0.0
    %5565 = vmatpush1.msra.mxu0 0.0
    %5566 = vmatprep.subr.mxu0 0.0
    %5567 = vmatpush1.msra.mxu0 0.0
    %5568 = vmatprep.subr.mxu0 0.0
    %5569 = vmatpush1.msra.mxu0 0.0
    %5570 = vmatprep.subr.mxu0 0.0
    %5571 = vmatpush1.msra.mxu0 0.0
    %5572 = vmatprep.subr.mxu0 0.0
    %5573 = vmatpush1.msra.mxu0 0.0
    %5574 = vmatprep.subr.mxu0 0.0
    %5575 = vmatpush1.msra.mxu0 0.0
    %5576 = vmatprep.subr.mxu0 0.0
    %5577 = vmatpush1.msra.mxu0 0.0
    %5578 = vmatprep.mubr.f32.mxu0 0.0
    %5579 = vmatmul.mubr.f32.gmra.mrb[0].mxu0 %v5512
    %v5580 = vpop.f32.mrb[0].mxu0
    %v5581 = vadd.f32 0.0, %v5580
    %v5582 = vpop.f32.mrb[0].mxu0
    %5583 = vdwg.mxu0
    %5584 = vrot.lane.b32.xlu0 %v5251, 112
    %v5585 = vpop.permute.xlu0 %5584
    %5586 = vrot.lane.b32.xlu0 %v5248, 80
    %v5587 = vpop.permute.xlu0 %5586
    %v5588 = vsel %vm2350, %v5585, 0
    %v5590 = vsel %vm2350, %v5587, 0
    %5592 = vmatprep.subr.mxu0 0.0
    %5593 = vmatpush1.xpose.msra.mxu0 %v5590
    %5594 = vmatprep.subr.mxu0 0.0
    %5595 = vmatpush1.xpose.msra.mxu0 0.0
    %5596 = vmatprep.subr.mxu0 0.0
    %5597 = vmatpush1.xpose.msra.mxu0 0.0
    %5598 = vmatprep.subr.mxu0 0.0
    %5599 = vmatpush1.xpose.msra.mxu0 0.0
    %5600 = vmatprep.subr.mxu0 0.0
    %5601 = vmatpush1.xpose.msra.mxu0 0.0
    %5602 = vmatprep.subr.mxu0 0.0
    %5603 = vmatpush1.xpose.msra.mxu0 0.0
    %5604 = vmatprep.subr.mxu0 0.0
    %5605 = vmatpush1.xpose.msra.mxu0 0.0
    %5606 = vmatprep.subr.mxu0 0.0
    %5607 = vmatpush1.xpose.msra.mxu0 0.0
    %5608 = vmatprep.subr.mxu0 0.0
    %5609 = vmatpush1.xpose.msra.mxu0 0.0
    %5610 = vmatprep.subr.mxu0 0.0
    %5611 = vmatpush1.xpose.msra.mxu0 0.0
    %5612 = vmatprep.subr.mxu0 0.0
    %5613 = vmatpush1.xpose.msra.mxu0 0.0
    %5614 = vmatprep.subr.mxu0 0.0
    %5615 = vmatpush1.xpose.msra.mxu0 0.0
    %5616 = vmatprep.subr.mxu0 0.0
    %5617 = vmatpush1.xpose.msra.mxu0 0.0
    %5618 = vmatprep.subr.mxu0 0.0
    %5619 = vmatpush1.xpose.msra.mxu0 0.0
    %5620 = vmatprep.subr.mxu0 0.0
    %5621 = vmatpush1.xpose.msra.mxu0 0.0
    %5622 = vmatprep.subr.mxu0 0.0
    %5623 = vmatpush1.xpose.msra.mxu0 0.0
    %5624 = vmatprep.subr.mxu0 0.0
    %5625 = vmatpush1.xpose.msra.mxu0 0.0
    %5626 = vmatprep.subr.mxu0 0.0
    %5627 = vmatpush1.xpose.msra.mxu0 0.0
    %5628 = vmatprep.subr.mxu0 0.0
    %5629 = vmatpush1.xpose.msra.mxu0 0.0
    %5630 = vmatprep.subr.mxu0 0.0
    %5631 = vmatpush1.xpose.msra.mxu0 0.0
    %5632 = vmatprep.subr.mxu0 0.0
    %5633 = vmatpush1.xpose.msra.mxu0 0.0
    %5634 = vmatprep.subr.mxu0 0.0
    %5635 = vmatpush1.xpose.msra.mxu0 0.0
    %5636 = vmatprep.subr.mxu0 0.0
    %5637 = vmatpush1.xpose.msra.mxu0 0.0
    %5638 = vmatprep.subr.mxu0 0.0
    %5639 = vmatpush1.xpose.msra.mxu0 0.0
    %5640 = vmatprep.subr.mxu0 0.0
    %5641 = vmatpush1.xpose.msra.mxu0 0.0
    %5642 = vmatprep.subr.mxu0 0.0
    %5643 = vmatpush1.xpose.msra.mxu0 0.0
    %5644 = vmatprep.subr.mxu0 0.0
    %5645 = vmatpush1.xpose.msra.mxu0 0.0
    %5646 = vmatprep.subr.mxu0 0.0
    %5647 = vmatpush1.xpose.msra.mxu0 0.0
    %5648 = vmatprep.subr.mxu0 0.0
    %5649 = vmatpush1.xpose.msra.mxu0 0.0
    %5650 = vmatprep.subr.mxu0 0.0
    %5651 = vmatpush1.xpose.msra.mxu0 0.0
    %5652 = vmatprep.subr.mxu0 0.0
    %5653 = vmatpush1.xpose.msra.mxu0 0.0
    %5654 = vmatprep.subr.mxu0 0.0
    %5655 = vmatpush1.xpose.msra.mxu0 0.0
    %5656 = vmatprep.mubr.f32.mxu0 0.0
    %5657 = vmatmul.mubr.f32.gmra.mrb[0].mxu0 %v5588
    %v5658 = vpop.f32.mrb[0].mxu0
    %v5659 = vadd.f32 0.0, %v5658
    %v5660 = vpop.f32.mrb[0].mxu0
    %5661 = vdwg.mxu0
    %v5662 = vsel %vm2350, %v5659, -inf
    %5663 = vmax.xlane.f32.xlu0 %v5662
    %v5664 = vpop.xlane.xlu0 %5663
    %v5665 = vsub.f32 %v5659, %v5664
    %v5666 = vmul.f32 %v5665, 1.442695
    %v5667 = vpow.pop %v5666
    %v5668 = vsel %vm2350, %v5667, 0.0
    %5669 = vadd.xlane.f32.xlu0 %v5668
    %v5670 = vpop.xlane.xlu0 %5669
    %v5671 = vrcp.pop %v5670
    %v5672 = vmul.f32 %v5667, %v5671
    %v5673 = vadd.f32 %v5507, %v5672
    %5674 = vrot.lane.b32.xlu0 %v5248, 48
    %v5675 = vpop.permute.xlu0 %5674
    %v5678 = vsel %vm2350, %v5672, 0
    %5680 = vmatprep.subr.mxu0 0.0
    %5681 = vmatpush1.msra.mxu0 %v5675
    %5682 = vmatprep.subr.mxu0 0.0
    %5683 = vmatpush1.msra.mxu0 0.0
    %5684 = vmatprep.subr.mxu0 0.0
    %5685 = vmatpush1.msra.mxu0 0.0
    %5686 = vmatprep.subr.mxu0 0.0
    %5687 = vmatpush1.msra.mxu0 0.0
    %5688 = vmatprep.subr.mxu0 0.0
    %5689 = vmatpush1.msra.mxu0 0.0
    %5690 = vmatprep.subr.mxu0 0.0
    %5691 = vmatpush1.msra.mxu0 0.0
    %5692 = vmatprep.subr.mxu0 0.0
    %5693 = vmatpush1.msra.mxu0 0.0
    %5694 = vmatprep.subr.mxu0 0.0
    %5695 = vmatpush1.msra.mxu0 0.0
    %5696 = vmatprep.subr.mxu0 0.0
    %5697 = vmatpush1.msra.mxu0 0.0
    %5698 = vmatprep.subr.mxu0 0.0
    %5699 = vmatpush1.msra.mxu0 0.0
    %5700 = vmatprep.subr.mxu0 0.0
    %5701 = vmatpush1.msra.mxu0 0.0
    %5702 = vmatprep.subr.mxu0 0.0
    %5703 = vmatpush1.msra.mxu0 0.0
    %5704 = vmatprep.subr.mxu0 0.0
    %5705 = vmatpush1.msra.mxu0 0.0
    %5706 = vmatprep.subr.mxu0 0.0
    %5707 = vmatpush1.msra.mxu0 0.0
    %5708 = vmatprep.subr.mxu0 0.0
    %5709 = vmatpush1.msra.mxu0 0.0
    %5710 = vmatprep.subr.mxu0 0.0
    %5711 = vmatpush1.msra.mxu0 0.0
    %5712 = vmatprep.subr.mxu0 0.0
    %5713 = vmatpush1.msra.mxu0 0.0
    %5714 = vmatprep.subr.mxu0 0.0
    %5715 = vmatpush1.msra.mxu0 0.0
    %5716 = vmatprep.subr.mxu0 0.0
    %5717 = vmatpush1.msra.mxu0 0.0
    %5718 = vmatprep.subr.mxu0 0.0
    %5719 = vmatpush1.msra.mxu0 0.0
    %5720 = vmatprep.subr.mxu0 0.0
    %5721 = vmatpush1.msra.mxu0 0.0
    %5722 = vmatprep.subr.mxu0 0.0
    %5723 = vmatpush1.msra.mxu0 0.0
    %5724 = vmatprep.subr.mxu0 0.0
    %5725 = vmatpush1.msra.mxu0 0.0
    %5726 = vmatprep.subr.mxu0 0.0
    %5727 = vmatpush1.msra.mxu0 0.0
    %5728 = vmatprep.subr.mxu0 0.0
    %5729 = vmatpush1.msra.mxu0 0.0
    %5730 = vmatprep.subr.mxu0 0.0
    %5731 = vmatpush1.msra.mxu0 0.0
    %5732 = vmatprep.subr.mxu0 0.0
    %5733 = vmatpush1.msra.mxu0 0.0
    %5734 = vmatprep.subr.mxu0 0.0
    %5735 = vmatpush1.msra.mxu0 0.0
    %5736 = vmatprep.subr.mxu0 0.0
    %5737 = vmatpush1.msra.mxu0 0.0
    %5738 = vmatprep.subr.mxu0 0.0
    %5739 = vmatpush1.msra.mxu0 0.0
    %5740 = vmatprep.subr.mxu0 0.0
    %5741 = vmatpush1.msra.mxu0 0.0
    %5742 = vmatprep.subr.mxu0 0.0
    %5743 = vmatpush1.msra.mxu0 0.0
    %5744 = vmatprep.mubr.f32.mxu0 0.0
    %5745 = vmatmul.mubr.f32.gmra.mrb[0].mxu0 %v5678
    %v5746 = vpop.f32.mrb[0].mxu0
    %v5747 = vadd.f32 0.0, %v5746
    %v5748 = vpop.f32.mrb[0].mxu0
    %5749 = vdwg.mxu0
    %5750 = vrot.lane.b32.xlu0 %v5251, 104
    %v5751 = vpop.permute.xlu0 %5750
    %5752 = vrot.lane.b32.xlu0 %v5248, 72
    %v5753 = vpop.permute.xlu0 %5752
    %v5754 = vsel %vm2350, %v5751, 0
    %v5756 = vsel %vm2350, %v5753, 0
    %5758 = vmatprep.subr.mxu0 0.0
    %5759 = vmatpush1.xpose.msra.mxu0 %v5756
    %5760 = vmatprep.subr.mxu0 0.0
    %5761 = vmatpush1.xpose.msra.mxu0 0.0
    %5762 = vmatprep.subr.mxu0 0.0
    %5763 = vmatpush1.xpose.msra.mxu0 0.0
    %5764 = vmatprep.subr.mxu0 0.0
    %5765 = vmatpush1.xpose.msra.mxu0 0.0
    %5766 = vmatprep.subr.mxu0 0.0
    %5767 = vmatpush1.xpose.msra.mxu0 0.0
    %5768 = vmatprep.subr.mxu0 0.0
    %5769 = vmatpush1.xpose.msra.mxu0 0.0
    %5770 = vmatprep.subr.mxu0 0.0
    %5771 = vmatpush1.xpose.msra.mxu0 0.0
    %5772 = vmatprep.subr.mxu0 0.0
    %5773 = vmatpush1.xpose.msra.mxu0 0.0
    %5774 = vmatprep.subr.mxu0 0.0
    %5775 = vmatpush1.xpose.msra.mxu0 0.0
    %5776 = vmatprep.subr.mxu0 0.0
    %5777 = vmatpush1.xpose.msra.mxu0 0.0
    %5778 = vmatprep.subr.mxu0 0.0
    %5779 = vmatpush1.xpose.msra.mxu0 0.0
    %5780 = vmatprep.subr.mxu0 0.0
    %5781 = vmatpush1.xpose.msra.mxu0 0.0
    %5782 = vmatprep.subr.mxu0 0.0
    %5783 = vmatpush1.xpose.msra.mxu0 0.0
    %5784 = vmatprep.subr.mxu0 0.0
    %5785 = vmatpush1.xpose.msra.mxu0 0.0
    %5786 = vmatprep.subr.mxu0 0.0
    %5787 = vmatpush1.xpose.msra.mxu0 0.0
    %5788 = vmatprep.subr.mxu0 0.0
    %5789 = vmatpush1.xpose.msra.mxu0 0.0
    %5790 = vmatprep.subr.mxu0 0.0
    %5791 = vmatpush1.xpose.msra.mxu0 0.0
    %5792 = vmatprep.subr.mxu0 0.0
    %5793 = vmatpush1.xpose.msra.mxu0 0.0
    %5794 = vmatprep.subr.mxu0 0.0
    %5795 = vmatpush1.xpose.msra.mxu0 0.0
    %5796 = vmatprep.subr.mxu0 0.0
    %5797 = vmatpush1.xpose.msra.mxu0 0.0
    %5798 = vmatprep.subr.mxu0 0.0
    %5799 = vmatpush1.xpose.msra.mxu0 0.0
    %5800 = vmatprep.subr.mxu0 0.0
    %5801 = vmatpush1.xpose.msra.mxu0 0.0
    %5802 = vmatprep.subr.mxu0 0.0
    %5803 = vmatpush1.xpose.msra.mxu0 0.0
    %5804 = vmatprep.subr.mxu0 0.0
    %5805 = vmatpush1.xpose.msra.mxu0 0.0
    %5806 = vmatprep.subr.mxu0 0.0
    %5807 = vmatpush1.xpose.msra.mxu0 0.0
    %5808 = vmatprep.subr.mxu0 0.0
    %5809 = vmatpush1.xpose.msra.mxu0 0.0
    %5810 = vmatprep.subr.mxu0 0.0
    %5811 = vmatpush1.xpose.msra.mxu0 0.0
    %5812 = vmatprep.subr.mxu0 0.0
    %5813 = vmatpush1.xpose.msra.mxu0 0.0
    %5814 = vmatprep.subr.mxu0 0.0
    %5815 = vmatpush1.xpose.msra.mxu0 0.0
    %5816 = vmatprep.subr.mxu0 0.0
    %5817 = vmatpush1.xpose.msra.mxu0 0.0
    %5818 = vmatprep.subr.mxu0 0.0
    %5819 = vmatpush1.xpose.msra.mxu0 0.0
    %5820 = vmatprep.subr.mxu0 0.0
    %5821 = vmatpush1.xpose.msra.mxu0 0.0
    %5822 = vmatprep.mubr.f32.mxu0 0.0
    %5823 = vmatmul.mubr.f32.gmra.mrb[0].mxu0 %v5754
    %v5824 = vpop.f32.mrb[0].mxu0
    %v5825 = vadd.f32 0.0, %v5824
    %v5826 = vpop.f32.mrb[0].mxu0
    %5827 = vdwg.mxu0
    %v5828 = vsel %vm2350, %v5825, -inf
    %5829 = vmax.xlane.f32.xlu0 %v5828
    %v5830 = vpop.xlane.xlu0 %5829
    %v5831 = vsub.f32 %v5825, %v5830
    %v5832 = vmul.f32 %v5831, 1.442695
    %v5833 = vpow.pop %v5832
    %v5834 = vsel %vm2350, %v5833, 0.0
    %5835 = vadd.xlane.f32.xlu0 %v5834
    %v5836 = vpop.xlane.xlu0 %5835
    %v5837 = vrcp.pop %v5836
    %v5838 = vmul.f32 %v5833, %v5837
    %v5839 = vadd.f32 %v5673, %v5838
    %5840 = vrot.lane.b32.xlu0 %v5248, 40
    %v5841 = vpop.permute.xlu0 %5840
    %v5844 = vsel %vm2350, %v5838, 0
    %5846 = vmatprep.subr.mxu0 0.0
    %5847 = vmatpush1.msra.mxu0 %v5841
    %5848 = vmatprep.subr.mxu0 0.0
    %5849 = vmatpush1.msra.mxu0 0.0
    %5850 = vmatprep.subr.mxu0 0.0
    %5851 = vmatpush1.msra.mxu0 0.0
    %5852 = vmatprep.subr.mxu0 0.0
    %5853 = vmatpush1.msra.mxu0 0.0
    %5854 = vmatprep.subr.mxu0 0.0
    %5855 = vmatpush1.msra.mxu0 0.0
    %5856 = vmatprep.subr.mxu0 0.0
    %5857 = vmatpush1.msra.mxu0 0.0
    %5858 = vmatprep.subr.mxu0 0.0
    %5859 = vmatpush1.msra.mxu0 0.0
    %5860 = vmatprep.subr.mxu0 0.0
    %5861 = vmatpush1.msra.mxu0 0.0
    %5862 = vmatprep.subr.mxu0 0.0
    %5863 = vmatpush1.msra.mxu0 0.0
    %5864 = vmatprep.subr.mxu0 0.0
    %5865 = vmatpush1.msra.mxu0 0.0
    %5866 = vmatprep.subr.mxu0 0.0
    %5867 = vmatpush1.msra.mxu0 0.0
    %5868 = vmatprep.subr.mxu0 0.0
    %5869 = vmatpush1.msra.mxu0 0.0
    %5870 = vmatprep.subr.mxu0 0.0
    %5871 = vmatpush1.msra.mxu0 0.0
    %5872 = vmatprep.subr.mxu0 0.0
    %5873 = vmatpush1.msra.mxu0 0.0
    %5874 = vmatprep.subr.mxu0 0.0
    %5875 = vmatpush1.msra.mxu0 0.0
    %5876 = vmatprep.subr.mxu0 0.0
    %5877 = vmatpush1.msra.mxu0 0.0
    %5878 = vmatprep.subr.mxu0 0.0
    %5879 = vmatpush1.msra.mxu0 0.0
    %5880 = vmatprep.subr.mxu0 0.0
    %5881 = vmatpush1.msra.mxu0 0.0
    %5882 = vmatprep.subr.mxu0 0.0
    %5883 = vmatpush1.msra.mxu0 0.0
    %5884 = vmatprep.subr.mxu0 0.0
    %5885 = vmatpush1.msra.mxu0 0.0
    %5886 = vmatprep.subr.mxu0 0.0
    %5887 = vmatpush1.msra.mxu0 0.0
    %5888 = vmatprep.subr.mxu0 0.0
    %5889 = vmatpush1.msra.mxu0 0.0
    %5890 = vmatprep.subr.mxu0 0.0
    %5891 = vmatpush1.msra.mxu0 0.0
    %5892 = vmatprep.subr.mxu0 0.0
    %5893 = vmatpush1.msra.mxu0 0.0
    %5894 = vmatprep.subr.mxu0 0.0
    %5895 = vmatpush1.msra.mxu0 0.0
    %5896 = vmatprep.subr.mxu0 0.0
    %5897 = vmatpush1.msra.mxu0 0.0
    %5898 = vmatprep.subr.mxu0 0.0
    %5899 = vmatpush1.msra.mxu0 0.0
    %5900 = vmatprep.subr.mxu0 0.0
    %5901 = vmatpush1.msra.mxu0 0.0
    %5902 = vmatprep.subr.mxu0 0.0
    %5903 = vmatpush1.msra.mxu0 0.0
    %5904 = vmatprep.subr.mxu0 0.0
    %5905 = vmatpush1.msra.mxu0 0.0
    %5906 = vmatprep.subr.mxu0 0.0
    %5907 = vmatpush1.msra.mxu0 0.0
    %5908 = vmatprep.subr.mxu0 0.0
    %5909 = vmatpush1.msra.mxu0 0.0
    %5910 = vmatprep.mubr.f32.mxu0 0.0
    %5911 = vmatmul.mubr.f32.gmra.mrb[0].mxu0 %v5844
    %v5912 = vpop.f32.mrb[0].mxu0
    %v5913 = vadd.f32 0.0, %v5912
    %v5914 = vpop.f32.mrb[0].mxu0
    %5915 = vdwg.mxu0
    %5917 = vrot.lane.b32.xlu0 %v5581, 8
    %v5918 = vpop.permute.xlu0 %5917
    %5921 = vrot.lane.b32.xlu0 %v5747, 16
    %v5922 = vpop.permute.xlu0 %5921
    %5925 = vrot.lane.b32.xlu0 %v5913, 24
    %v5926 = vpop.permute.xlu0 %5925
    %v5928 = vsel %vm2350, %v5415, %v5918
    %v5929 = vsel %vm3025, %v5928, %v5922
    %v5930 = vsel %vm3027, %v5929, %v5926
    %v5931 = vld [vmem:[#allocation15] sm:$0xff]
    %v5932 = vld [vmem:[#allocation15 + $0x8] sm:$0xff]
    %v5933 = vld [vmem:[#allocation15 + $0x10] sm:$0xff]
    %v5934 = vld [vmem:[#allocation15 + $0x18] sm:$0xff]
    %v5935 = vld [vmem:[#allocation16] sm:$0x1]
    %v5937 = vlaneseq
    %v5938 = vshrl.u32 %v5937, 7
    %v5939 = vsub.s32 0, %v5938
    %v5940 = vrot.slane %v5935, %v5939
    %v5943 = vsel %vm209, %v5930, 0
    %5945 = vmatprep.subr.mxu0 0.0
    %5946 = vmatpush1.msra.mxu0 %v5931
    %5947 = vmatprep.subr.mxu0 0.0
    %5948 = vmatpush1.msra.mxu0 %v5932
    %5949 = vmatprep.subr.mxu0 0.0
    %5950 = vmatpush1.msra.mxu0 %v5933
    %5951 = vmatprep.subr.mxu0 0.0
    %5952 = vmatpush1.msra.mxu0 %v5934
    %5953 = vmatprep.subr.mxu0 0.0
    %5954 = vmatpush1.msra.mxu0 0.0
    %5955 = vmatprep.subr.mxu0 0.0
    %5956 = vmatpush1.msra.mxu0 0.0
    %5957 = vmatprep.subr.mxu0 0.0
    %5958 = vmatpush1.msra.mxu0 0.0
    %5959 = vmatprep.subr.mxu0 0.0
    %5960 = vmatpush1.msra.mxu0 0.0
    %5961 = vmatprep.subr.mxu0 0.0
    %5962 = vmatpush1.msra.mxu0 0.0
    %5963 = vmatprep.subr.mxu0 0.0
    %5964 = vmatpush1.msra.mxu0 0.0
    %5965 = vmatprep.subr.mxu0 0.0
    %5966 = vmatpush1.msra.mxu0 0.0
    %5967 = vmatprep.subr.mxu0 0.0
    %5968 = vmatpush1.msra.mxu0 0.0
    %5969 = vmatprep.subr.mxu0 0.0
    %5970 = vmatpush1.msra.mxu0 0.0
    %5971 = vmatprep.subr.mxu0 0.0
    %5972 = vmatpush1.msra.mxu0 0.0
    %5973 = vmatprep.subr.mxu0 0.0
    %5974 = vmatpush1.msra.mxu0 0.0
    %5975 = vmatprep.subr.mxu0 0.0
    %5976 = vmatpush1.msra.mxu0 0.0
    %5977 = vmatprep.subr.mxu0 0.0
    %5978 = vmatpush1.msra.mxu0 0.0
    %5979 = vmatprep.subr.mxu0 0.0
    %5980 = vmatpush1.msra.mxu0 0.0
    %5981 = vmatprep.subr.mxu0 0.0
    %5982 = vmatpush1.msra.mxu0 0.0
    %5983 = vmatprep.subr.mxu0 0.0
    %5984 = vmatpush1.msra.mxu0 0.0
    %5985 = vmatprep.subr.mxu0 0.0
    %5986 = vmatpush1.msra.mxu0 0.0
    %5987 = vmatprep.subr.mxu0 0.0
    %5988 = vmatpush1.msra.mxu0 0.0
    %5989 = vmatprep.subr.mxu0 0.0
    %5990 = vmatpush1.msra.mxu0 0.0
    %5991 = vmatprep.subr.mxu0 0.0
    %5992 = vmatpush1.msra.mxu0 0.0
    %5993 = vmatprep.subr.mxu0 0.0
    %5994 = vmatpush1.msra.mxu0 0.0
    %5995 = vmatprep.subr.mxu0 0.0
    %5996 = vmatpush1.msra.mxu0 0.0
    %5997 = vmatprep.subr.mxu0 0.0
    %5998 = vmatpush1.msra.mxu0 0.0
    %5999 = vmatprep.subr.mxu0 0.0
    %6000 = vmatpush1.msra.mxu0 0.0
    %6001 = vmatprep.subr.mxu0 0.0
    %6002 = vmatpush1.msra.mxu0 0.0
    %6003 = vmatprep.subr.mxu0 0.0
    %6004 = vmatpush1.msra.mxu0 0.0
    %6005 = vmatprep.subr.mxu0 0.0
    %6006 = vmatpush1.msra.mxu0 0.0
    %6007 = vmatprep.subr.mxu0 0.0
    %6008 = vmatpush1.msra.mxu0 0.0
    %6009 = vmatprep.mubr.f32.mxu0 0.0
    %6010 = vmatmul.mubr.f32.gmra.mrb[0].mxu0 %v5943
    %v6011 = vpop.f32.mrb[0].mxu0
    %v6012 = vadd.f32 %v5940, %v6011
    %v6013 = vpop.f32.mrb[0].mxu0
    %6014 = vdwg.mxu0
    %v6015 = vmul.f32 %v5839, 0.25
    %s6016 = scalar_lea.vmem [#allocation21], 8
    %6017 = vst.msk [vmem:[%s6016] sm:$0xff] %vm2350, %v6015
    %v6019 = vrot.slane %v3110, 7
    %v6022 = vrot.slane %v6012, 6
    %v6024 = vsel %vm1303, %v6019, %v6022
    %v6025 = vrot.slane %v197, 7
    %v6027 = vrot.slane %v3116, 6
    %v6029 = vsel %vm1303, %v6025, %v6027
    %v6030 = vld [vmem:[%s12] sm:$0xff]
    %v6031 = vld [vmem:[%s12 + $0x8] sm:$0xff]
    %v6032 = vld [vmem:[%s12 + $0x10] sm:$0xff]
    %v6033 = vld [vmem:[%s12 + $0x18] sm:$0xff]
    %v6034 = vld [vmem:[#allocation18] sm:$0x1]
    %v6036 = vlaneseq
    %v6037 = vshrl.u32 %v6036, 7
    %v6038 = vsub.s32 0, %v6037
    %v6039 = vrot.slane %v6034, %v6038
    %v6042 = vsel %vm209, %v6024, 0
    %6044 = vmatprep.subr.mxu0 0.0
    %6045 = vmatpush1.msra.mxu0 %v6030
    %6046 = vmatprep.subr.mxu0 0.0
    %6047 = vmatpush1.msra.mxu0 %v6031
    %6048 = vmatprep.subr.mxu0 0.0
    %6049 = vmatpush1.msra.mxu0 %v6032
    %6050 = vmatprep.subr.mxu0 0.0
    %6051 = vmatpush1.msra.mxu0 %v6033
    %6052 = vmatprep.subr.mxu0 0.0
    %6053 = vmatpush1.msra.mxu0 0.0
    %6054 = vmatprep.subr.mxu0 0.0
    %6055 = vmatpush1.msra.mxu0 0.0
    %6056 = vmatprep.subr.mxu0 0.0
    %6057 = vmatpush1.msra.mxu0 0.0
    %6058 = vmatprep.subr.mxu0 0.0
    %6059 = vmatpush1.msra.mxu0 0.0
    %6060 = vmatprep.subr.mxu0 0.0
    %6061 = vmatpush1.msra.mxu0 0.0
    %6062 = vmatprep.subr.mxu0 0.0
    %6063 = vmatpush1.msra.mxu0 0.0
    %6064 = vmatprep.subr.mxu0 0.0
    %6065 = vmatpush1.msra.mxu0 0.0
    %6066 = vmatprep.subr.mxu0 0.0
    %6067 = vmatpush1.msra.mxu0 0.0
    %6068 = vmatprep.subr.mxu0 0.0
    %6069 = vmatpush1.msra.mxu0 0.0
    %6070 = vmatprep.subr.mxu0 0.0
    %6071 = vmatpush1.msra.mxu0 0.0
    %6072 = vmatprep.subr.mxu0 0.0
    %6073 = vmatpush1.msra.mxu0 0.0
    %6074 = vmatprep.subr.mxu0 0.0
    %6075 = vmatpush1.msra.mxu0 0.0
    %6076 = vmatprep.subr.mxu0 0.0
    %6077 = vmatpush1.msra.mxu0 0.0
    %6078 = vmatprep.subr.mxu0 0.0
    %6079 = vmatpush1.msra.mxu0 0.0
    %6080 = vmatprep.subr.mxu0 0.0
    %6081 = vmatpush1.msra.mxu0 0.0
    %6082 = vmatprep.subr.mxu0 0.0
    %6083 = vmatpush1.msra.mxu0 0.0
    %6084 = vmatprep.subr.mxu0 0.0
    %6085 = vmatpush1.msra.mxu0 0.0
    %6086 = vmatprep.subr.mxu0 0.0
    %6087 = vmatpush1.msra.mxu0 0.0
    %6088 = vmatprep.subr.mxu0 0.0
    %6089 = vmatpush1.msra.mxu0 0.0
    %6090 = vmatprep.subr.mxu0 0.0
    %6091 = vmatpush1.msra.mxu0 0.0
    %6092 = vmatprep.subr.mxu0 0.0
    %6093 = vmatpush1.msra.mxu0 0.0
    %6094 = vmatprep.subr.mxu0 0.0
    %6095 = vmatpush1.msra.mxu0 0.0
    %6096 = vmatprep.subr.mxu0 0.0
    %6097 = vmatpush1.msra.mxu0 0.0
    %6098 = vmatprep.subr.mxu0 0.0
    %6099 = vmatpush1.msra.mxu0 0.0
    %6100 = vmatprep.subr.mxu0 0.0
    %6101 = vmatpush1.msra.mxu0 0.0
    %6102 = vmatprep.subr.mxu0 0.0
    %6103 = vmatpush1.msra.mxu0 0.0
    %6104 = vmatprep.subr.mxu0 0.0
    %6105 = vmatpush1.msra.mxu0 0.0
    %6106 = vmatprep.subr.mxu0 0.0
    %6107 = vmatpush1.msra.mxu0 0.0
    %6108 = vmatprep.mubr.f32.mxu0 0.0
    %6109 = vmatmul.mubr.f32.gmra.mrb[0].mxu0 %v6042
    %v6110 = vpop.f32.mrb[0].mxu0
    %v6111 = vadd.f32 %v6039, %v6110
    %v6112 = vpop.f32.mrb[0].mxu0
    %6113 = vdwg.mxu0
    %v6114 = vmax.f32 %v6111, 0.0
    %v6115 = vld [vmem:[%s14] sm:$0xff]
    %v6116 = vld [vmem:[%s14 + $0x8] sm:$0xff]
    %v6117 = vld [vmem:[#allocation2] sm:$0x1]
    %v6119 = vlaneseq
    %v6120 = vshrl.u32 %v6119, 7
    %v6121 = vsub.s32 0, %v6120
    %v6122 = vrot.slane %v6117, %v6121
    %v6125 = vsel %vm3025, %v6114, 0
    %6127 = vmatprep.subr.mxu0 0.0
    %6128 = vmatpush1.msra.mxu0 %v6115
    %6129 = vmatprep.subr.mxu0 0.0
    %6130 = vmatpush1.msra.mxu0 %v6116
    %6131 = vmatprep.subr.mxu0 0.0
    %6132 = vmatpush1.msra.mxu0 0.0
    %6133 = vmatprep.subr.mxu0 0.0
    %6134 = vmatpush1.msra.mxu0 0.0
    %6135 = vmatprep.subr.mxu0 0.0
    %6136 = vmatpush1.msra.mxu0 0.0
    %6137 = vmatprep.subr.mxu0 0.0
    %6138 = vmatpush1.msra.mxu0 0.0
    %6139 = vmatprep.subr.mxu0 0.0
    %6140 = vmatpush1.msra.mxu0 0.0
    %6141 = vmatprep.subr.mxu0 0.0
    %6142 = vmatpush1.msra.mxu0 0.0
    %6143 = vmatprep.subr.mxu0 0.0
    %6144 = vmatpush1.msra.mxu0 0.0
    %6145 = vmatprep.subr.mxu0 0.0
    %6146 = vmatpush1.msra.mxu0 0.0
    %6147 = vmatprep.subr.mxu0 0.0
    %6148 = vmatpush1.msra.mxu0 0.0
    %6149 = vmatprep.subr.mxu0 0.0
    %6150 = vmatpush1.msra.mxu0 0.0
    %6151 = vmatprep.subr.mxu0 0.0
    %6152 = vmatpush1.msra.mxu0 0.0
    %6153 = vmatprep.subr.mxu0 0.0
    %6154 = vmatpush1.msra.mxu0 0.0
    %6155 = vmatprep.subr.mxu0 0.0
    %6156 = vmatpush1.msra.mxu0 0.0
    %6157 = vmatprep.subr.mxu0 0.0
    %6158 = vmatpush1.msra.mxu0 0.0
    %6159 = vmatprep.subr.mxu0 0.0
    %6160 = vmatpush1.msra.mxu0 0.0
    %6161 = vmatprep.subr.mxu0 0.0
    %6162 = vmatpush1.msra.mxu0 0.0
    %6163 = vmatprep.subr.mxu0 0.0
    %6164 = vmatpush1.msra.mxu0 0.0
    %6165 = vmatprep.subr.mxu0 0.0
    %6166 = vmatpush1.msra.mxu0 0.0
    %6167 = vmatprep.subr.mxu0 0.0
    %6168 = vmatpush1.msra.mxu0 0.0
    %6169 = vmatprep.subr.mxu0 0.0
    %6170 = vmatpush1.msra.mxu0 0.0
    %6171 = vmatprep.subr.mxu0 0.0
    %6172 = vmatpush1.msra.mxu0 0.0
    %6173 = vmatprep.subr.mxu0 0.0
    %6174 = vmatpush1.msra.mxu0 0.0
    %6175 = vmatprep.subr.mxu0 0.0
    %6176 = vmatpush1.msra.mxu0 0.0
    %6177 = vmatprep.subr.mxu0 0.0
    %6178 = vmatpush1.msra.mxu0 0.0
    %6179 = vmatprep.subr.mxu0 0.0
    %6180 = vmatpush1.msra.mxu0 0.0
    %6181 = vmatprep.subr.mxu0 0.0
    %6182 = vmatpush1.msra.mxu0 0.0
    %6183 = vmatprep.subr.mxu0 0.0
    %6184 = vmatpush1.msra.mxu0 0.0
    %6185 = vmatprep.subr.mxu0 0.0
    %6186 = vmatpush1.msra.mxu0 0.0
    %6187 = vmatprep.subr.mxu0 0.0
    %6188 = vmatpush1.msra.mxu0 0.0
    %6189 = vmatprep.subr.mxu0 0.0
    %6190 = vmatpush1.msra.mxu0 0.0
    %6191 = vmatprep.mubr.f32.mxu0 0.0
    %6192 = vmatmul.mubr.f32.gmra.mrb[0].mxu0 %v6125
    %v6193 = vpop.f32.mrb[0].mxu0
    %v6194 = vadd.f32 %v6122, %v6193
    %v6195 = vpop.f32.mrb[0].mxu0
    %6196 = vdwg.mxu0
    %vm6197 = vcmask 1024
    %6198 = vst.msk [vmem:[%s20] sm:$0x3] %vm6197, %v6194
    %v6199 = vld [vmem:[%s16] sm:$0xff]
    %v6200 = vld [vmem:[%s16 + $0x8] sm:$0xff]
    %v6201 = vld [vmem:[%s16 + $0x10] sm:$0xff]
    %v6202 = vld [vmem:[%s16 + $0x18] sm:$0xff]
    %v6203 = vld [vmem:[#allocation19] sm:$0x1]
    %v6205 = vlaneseq
    %v6206 = vshrl.u32 %v6205, 7
    %v6207 = vsub.s32 0, %v6206
    %v6208 = vrot.slane %v6203, %v6207
    %v6211 = vsel %vm209, %v6029, 0
    %6213 = vmatprep.subr.mxu0 0.0
    %6214 = vmatpush1.msra.mxu0 %v6199
    %6215 = vmatprep.subr.mxu0 0.0
    %6216 = vmatpush1.msra.mxu0 %v6200
    %6217 = vmatprep.subr.mxu0 0.0
    %6218 = vmatpush1.msra.mxu0 %v6201
    %6219 = vmatprep.subr.mxu0 0.0
    %6220 = vmatpush1.msra.mxu0 %v6202
    %6221 = vmatprep.subr.mxu0 0.0
    %6222 = vmatpush1.msra.mxu0 0.0
    %6223 = vmatprep.subr.mxu0 0.0
    %6224 = vmatpush1.msra.mxu0 0.0
    %6225 = vmatprep.subr.mxu0 0.0
    %6226 = vmatpush1.msra.mxu0 0.0
    %6227 = vmatprep.subr.mxu0 0.0
    %6228 = vmatpush1.msra.mxu0 0.0
    %6229 = vmatprep.subr.mxu0 0.0
    %6230 = vmatpush1.msra.mxu0 0.0
    %6231 = vmatprep.subr.mxu0 0.0
    %6232 = vmatpush1.msra.mxu0 0.0
    %6233 = vmatprep.subr.mxu0 0.0
    %6234 = vmatpush1.msra.mxu0 0.0
    %6235 = vmatprep.subr.mxu0 0.0
    %6236 = vmatpush1.msra.mxu0 0.0
    %6237 = vmatprep.subr.mxu0 0.0
    %6238 = vmatpush1.msra.mxu0 0.0
    %6239 = vmatprep.subr.mxu0 0.0
    %6240 = vmatpush1.msra.mxu0 0.0
    %6241 = vmatprep.subr.mxu0 0.0
    %6242 = vmatpush1.msra.mxu0 0.0
    %6243 = vmatprep.subr.mxu0 0.0
    %6244 = vmatpush1.msra.mxu0 0.0
    %6245 = vmatprep.subr.mxu0 0.0
    %6246 = vmatpush1.msra.mxu0 0.0
    %6247 = vmatprep.subr.mxu0 0.0
    %6248 = vmatpush1.msra.mxu0 0.0
    %6249 = vmatprep.subr.mxu0 0.0
    %6250 = vmatpush1.msra.mxu0 0.0
    %6251 = vmatprep.subr.mxu0 0.0
    %6252 = vmatpush1.msra.mxu0 0.0
    %6253 = vmatprep.subr.mxu0 0.0
    %6254 = vmatpush1.msra.mxu0 0.0
    %6255 = vmatprep.subr.mxu0 0.0
    %6256 = vmatpush1.msra.mxu0 0.0
    %6257 = vmatprep.subr.mxu0 0.0
    %6258 = vmatpush1.msra.mxu0 0.0
    %6259 = vmatprep.subr.mxu0 0.0
    %6260 = vmatpush1.msra.mxu0 0.0
    %6261 = vmatprep.subr.mxu0 0.0
    %6262 = vmatpush1.msra.mxu0 0.0
    %6263 = vmatprep.subr.mxu0 0.0
    %6264 = vmatpush1.msra.mxu0 0.0
    %6265 = vmatprep.subr.mxu0 0.0
    %6266 = vmatpush1.msra.mxu0 0.0
    %6267 = vmatprep.subr.mxu0 0.0
    %6268 = vmatpush1.msra.mxu0 0.0
    %6269 = vmatprep.subr.mxu0 0.0
    %6270 = vmatpush1.msra.mxu0 0.0
    %6271 = vmatprep.subr.mxu0 0.0
    %6272 = vmatpush1.msra.mxu0 0.0
    %6273 = vmatprep.subr.mxu0 0.0
    %6274 = vmatpush1.msra.mxu0 0.0
    %6275 = vmatprep.subr.mxu0 0.0
    %6276 = vmatpush1.msra.mxu0 0.0
    %6277 = vmatprep.mubr.f32.mxu0 0.0
    %6278 = vmatmul.mubr.f32.gmra.mrb[0].mxu0 %v6211
    %v6279 = vpop.f32.mrb[0].mxu0
    %v6280 = vadd.f32 %v6208, %v6279
    %v6281 = vpop.f32.mrb[0].mxu0
    %6282 = vdwg.mxu0
    %v6283 = vmax.f32 %v6280, 0.0
    %v6284 = vld [vmem:[%s18] sm:$0xff]
    %v6285 = vld [vmem:[%s18 + $0x8] sm:$0xff]
    %v6286 = vld [vmem:[#allocation3] sm:$0x1]
    %v6288 = vlaneseq
    %v6289 = vshrl.u32 %v6288, 7
    %v6290 = vsub.s32 0, %v6289
    %v6291 = vrot.slane %v6286, %v6290
    %v6294 = vsel %vm3025, %v6283, 0
    %6296 = vmatprep.subr.mxu0 0.0
    %6297 = vmatpush1.msra.mxu0 %v6284
    %6298 = vmatprep.subr.mxu0 0.0
    %6299 = vmatpush1.msra.mxu0 %v6285
    %6300 = vmatprep.subr.mxu0 0.0
    %6301 = vmatpush1.msra.mxu0 0.0
    %6302 = vmatprep.subr.mxu0 0.0
    %6303 = vmatpush1.msra.mxu0 0.0
    %6304 = vmatprep.subr.mxu0 0.0
    %6305 = vmatpush1.msra.mxu0 0.0
    %6306 = vmatprep.subr.mxu0 0.0
    %6307 = vmatpush1.msra.mxu0 0.0
    %6308 = vmatprep.subr.mxu0 0.0
    %6309 = vmatpush1.msra.mxu0 0.0
    %6310 = vmatprep.subr.mxu0 0.0
    %6311 = vmatpush1.msra.mxu0 0.0
    %6312 = vmatprep.subr.mxu0 0.0
    %6313 = vmatpush1.msra.mxu0 0.0
    %6314 = vmatprep.subr.mxu0 0.0
    %6315 = vmatpush1.msra.mxu0 0.0
    %6316 = vmatprep.subr.mxu0 0.0
    %6317 = vmatpush1.msra.mxu0 0.0
    %6318 = vmatprep.subr.mxu0 0.0
    %6319 = vmatpush1.msra.mxu0 0.0
    %6320 = vmatprep.subr.mxu0 0.0
    %6321 = vmatpush1.msra.mxu0 0.0
    %6322 = vmatprep.subr.mxu0 0.0
    %6323 = vmatpush1.msra.mxu0 0.0
    %6324 = vmatprep.subr.mxu0 0.0
    %6325 = vmatpush1.msra.mxu0 0.0
    %6326 = vmatprep.subr.mxu0 0.0
    %6327 = vmatpush1.msra.mxu0 0.0
    %6328 = vmatprep.subr.mxu0 0.0
    %6329 = vmatpush1.msra.mxu0 0.0
    %6330 = vmatprep.subr.mxu0 0.0
    %6331 = vmatpush1.msra.mxu0 0.0
    %6332 = vmatprep.subr.mxu0 0.0
    %6333 = vmatpush1.msra.mxu0 0.0
    %6334 = vmatprep.subr.mxu0 0.0
    %6335 = vmatpush1.msra.mxu0 0.0
    %6336 = vmatprep.subr.mxu0 0.0
    %6337 = vmatpush1.msra.mxu0 0.0
    %6338 = vmatprep.subr.mxu0 0.0
    %6339 = vmatpush1.msra.mxu0 0.0
    %6340 = vmatprep.subr.mxu0 0.0
    %6341 = vmatpush1.msra.mxu0 0.0
    %6342 = vmatprep.subr.mxu0 0.0
    %6343 = vmatpush1.msra.mxu0 0.0
    %6344 = vmatprep.subr.mxu0 0.0
    %6345 = vmatpush1.msra.mxu0 0.0
    %6346 = vmatprep.subr.mxu0 0.0
    %6347 = vmatpush1.msra.mxu0 0.0
    %6348 = vmatprep.subr.mxu0 0.0
    %6349 = vmatpush1.msra.mxu0 0.0
    %6350 = vmatprep.subr.mxu0 0.0
    %6351 = vmatpush1.msra.mxu0 0.0
    %6352 = vmatprep.subr.mxu0 0.0
    %6353 = vmatpush1.msra.mxu0 0.0
    %6354 = vmatprep.subr.mxu0 0.0
    %6355 = vmatpush1.msra.mxu0 0.0
    %6356 = vmatprep.subr.mxu0 0.0
    %6357 = vmatpush1.msra.mxu0 0.0
    %6358 = vmatprep.subr.mxu0 0.0
    %6359 = vmatpush1.msra.mxu0 0.0
    %6360 = vmatprep.mubr.f32.mxu0 0.0
    %6361 = vmatmul.mubr.f32.gmra.mrb[0].mxu0 %v6294
    %v6362 = vpop.f32.mrb[0].mxu0
    %v6363 = vadd.f32 %v6291, %v6362
    %v6364 = vpop.f32.mrb[0].mxu0
    %6365 = vdwg.mxu0
    %vm6366 = vcmp.gt.f32.partialorder %v6363, 20.0
    %v6367 = vmin.f32 %v6363, 20.0
    %v6368 = vmul.f32 %v6367, 1.442695
    %v6369 = vpow.pop %v6368
    %v6370 = vadd.f32 %v6369, 1.0
    %v6371 = vlog2.pop %v6370
    %v6372 = vmul.f32 %v6371, 0.6931472
    %v6373 = vmul.f32 -0.5, %v6369
    %v6374 = vadd.f32 %v6373, 1.0
    %v6375 = vmul.f32 %v6374, %v6369
    %v6376 = vand.u32 2147483647, %v6369
    %vm6377 = vcmp.lt.f32.partialorder %v6376, 0.0004427343
    %v6378 = vsel %vm6377, %v6375, %v6372
    %v6379 = vsel %vm6366, %v6363, %v6378
    %6380 = vst.msk [vmem:[%s21] sm:$0x3] %vm6197, %v6379
    // Predicated region
    $region122: #{uncertainty_net_forward.1} parent=1 // pred_check
      _
    $region123: #{uncertainty_net_forward.1} parent=1 // pred_check_branch
      %6382 = sbr.rel (0) target = $region125
    $region124: #{uncertainty_net_forward.1} parent=1 // pred_region
      _
    $region125: #{uncertainty_net_forward.1} parent=1 // pred_fallthru
      _
    // Predicated region
    $region126: #{uncertainty_net_forward.1} parent=1 // pred_check
      _
    $region127: #{uncertainty_net_forward.1} parent=1 // pred_check_branch
      %6384 = sbr.rel (0) target = $region129
    $region128: #{uncertainty_net_forward.1} parent=1 // pred_region
      _
    $region129: #{uncertainty_net_forward.1} parent=1 // pred_fallthru
      _
    // Predicated region
    $region130: #{uncertainty_net_forward.1} parent=1 // pred_check
      _
    $region131: #{uncertainty_net_forward.1} parent=1 // pred_check_branch
      %6386 = sbr.rel (0) target = $region133
    $region132: #{uncertainty_net_forward.1} parent=1 // pred_region
      %s6388 = ssub.s32 256, 256
      %6389 = vsyncadd [#allocation6], %s6388
      %s6390 = sshll.u32 [#allocation21], 4
      %s6391 = int_to_ptr.vmem [resolvable:$true] %s6390
      %6396 = dma.vmem_to_hbm [thread:$0]  %s6391, 256, %s22, [#allocation6], 128, 128, 8
    $region133: #{uncertainty_net_forward.1} parent=1 // pred_fallthru
      _
    // Predicated region
    $region134: #{uncertainty_net_forward.1} parent=1 // pred_check
      _
    $region135: #{uncertainty_net_forward.1} parent=1 // pred_check_branch
      %6398 = sbr.rel (0) target = $region137
    $region136: #{uncertainty_net_forward.1} parent=1 // pred_region
      _
    $region137: #{uncertainty_net_forward.1} parent=1 // pred_fallthru
      _
    // Predicated region
    $region138: #{uncertainty_net_forward.1} parent=1 // pred_check
      _
    $region139: #{uncertainty_net_forward.1} parent=1 // pred_check_branch
      %6400 = sbr.rel (0) target = $region141
    $region140: #{uncertainty_net_forward.1} parent=1 // pred_region
      _
    $region141: #{uncertainty_net_forward.1} parent=1 // pred_fallthru
      _
    // Predicated region
    $region142: #{uncertainty_net_forward.1} parent=1 // pred_check
      _
    $region143: #{uncertainty_net_forward.1} parent=1 // pred_check_branch
      %6402 = sbr.rel (0) target = $region145
    $region144: #{uncertainty_net_forward.1} parent=1 // pred_region
      %6403 = dma.done [#allocation6], 256
    $region145: #{uncertainty_net_forward.1} parent=1 // pred_fallthru
      _
    %6404 = vsyncpa [#allocation5], 1
    %6405 = vsyncpa [#allocation8], 1
    %6406 = vsyncpa [#allocation11], 1
    %6407 = vsyncpa [#allocation14], 1
    %6408 = vsyncpa [#allocation17], 1
    %6409 = vsyncpa [#allocation20], 1
    %6410 = vsyncpa [#allocation6], 1

</llo_original>
